<compile_context>
chip_gen: v5e
topology: v5e:2x2
jax: 0.10.0
libtpu: 0.0.40
codegen_flags: <defaults>
</compile_context>

<pallas_src>
import functools

import jax
import jax.numpy as jnp
import numpy as np
from jax import lax
from jax.experimental import pallas as pl
from jax.experimental.pallas import tpu as pltpu


def _round_up(v, m):
    return (v + m - 1) // m * m


# ---------------------------------------------------------------------------
# Fused Conv3x3(pad=1) + folded BN + ReLU + MaxPool2x2.
#
# The wrapper zero-pads the image to (H+3, Wrow) (Wrow = round_up(W+2, 8)) and
# flattens it to (Lf, Cin).  Inside the kernel each of the 9 taps is a single
# contiguous slice of that flattened array (offset dy*Wrow + dx), so no shifted
# copies are needed.  Each grid step computes TH = 2*tp conv rows, applies the
# folded BN + ReLU, max-pools the row pairs via an aligned reshape/slice, then
# max-pools column pairs with two stride-2 reads from a small VMEM scratch and
# writes only the (tp, Wo, Cout) pooled block (garbage columns >= W excluded).
# ---------------------------------------------------------------------------
def _conv_bn_relu_pool_kernel(x_ref, w_ref, s_ref, b_ref, o_ref, zh_ref,
                              *, tp, wrow, wo, cout):
    th = 2 * tp
    m = th * wrow                                   # flattened conv rows / step
    row0 = pl.multiple_of(pl.program_id(1) * m, 8)

    acc = jnp.zeros((m, cout), jnp.float32)
    for dy in range(3):
        for dx in range(3):
            xs = x_ref[0, pl.ds(row0 + dy * wrow + dx, m), :]      # (m, Cin)
            acc = acc + jnp.dot(xs, w_ref[dy, dx],
                                preferred_element_type=jnp.float32)

    y = jnp.maximum(acc * s_ref[...] + b_ref[...], 0.0)            # (m, Cout)

    # H-pool: rows 2p / 2p+1 live in the first / second wrow entries of each
    # 2*wrow chunk (2*wrow is a multiple of 8 -> aligned reshape + slices).
    y = y.reshape(tp, 2 * wrow, cout)
    zh_ref[...] = jnp.maximum(y[:, :wrow, :], y[:, wrow:, :])      # (tp, wrow, C)

    # W-pool: stride-2 reads pick even/odd valid columns (cols >= W excluded).
    pooled = jnp.maximum(zh_ref[:, pl.ds(0, wo, 2), :],
                         zh_ref[:, pl.ds(1, wo, 2), :])            # (tp, wo, C)
    o_ref[0] = pooled


def conv_bn_relu_pool(x, w, scale, bias):
    """x: (B,H,W,Cin) f32, w: (3,3,Cin,Cout), scale/bias: (Cout,).  H,W even."""
    B, H, W, Cin = x.shape
    Cout = w.shape[-1]
    if Cin < 8:  # first layer has Cin=1: pad channels (zeros contribute 0)
        pad_c = 8 - Cin
        x = jnp.pad(x, ((0, 0), (0, 0), (0, 0), (0, pad_c)))
        w = jnp.pad(w, ((0, 0), (0, 0), (0, pad_c), (0, 0)))
        Cin = 8

    Ho, Wo = H // 2, W // 2
    Wrow = _round_up(W + 2, 8)          # padded row width (>= W+2, mult of 8)
    Lf = (H + 3) * Wrow                 # +1 top row, +2 bottom rows of zeros
                                        # (extra row absorbs the last tap's
                                        #  contiguous-slice overhang)

    xp = jnp.pad(x, ((0, 0), (1, 2), (1, Wrow - W - 1), (0, 0)))
    xf = xp.reshape(B, Lf, Cin)         # single padded, flattened copy

    # pooled rows per grid step: keep the live accumulator <= ~128 KB of vregs
    # (effective vreg bytes ~ m * 128 lanes * 4 B  ->  m = 2*tp*Wrow <= 256).
    tp = 1
    for cand in range(1, Ho + 1):
        if Ho % cand == 0 and 2 * cand * Wrow <= 256:
            tp = cand

    kernel = functools.partial(_conv_bn_relu_pool_kernel,
                               tp=tp, wrow=Wrow, wo=Wo, cout=Cout)
    return pl.pallas_call(
        kernel,
        out_shape=jax.ShapeDtypeStruct((B, Ho, Wo, Cout), jnp.float32),
        grid=(B, Ho // tp),
        in_specs=[
            pl.BlockSpec((1, Lf, Cin), lambda b, t: (b, 0, 0)),
            pl.BlockSpec((3, 3, Cin, Cout), lambda b, t: (0, 0, 0, 0)),
            pl.BlockSpec((1, Cout), lambda b, t: (0, 0)),
            pl.BlockSpec((1, Cout), lambda b, t: (0, 0)),
        ],
        out_specs=pl.BlockSpec((1, tp, Wo, Cout), lambda b, t: (b, t, 0, 0)),
        scratch_shapes=[pltpu.VMEM((tp, Wrow, Cout), jnp.float32)],
        compiler_params=pltpu.CompilerParams(
            dimension_semantics=("parallel", "parallel")),
    )(xf, w, scale.reshape(1, Cout), bias.reshape(1, Cout))


# ---------------------------------------------------------------------------
# Fused classifier: Linear(4608,512)+ReLU -> Linear(512,256)+ReLU -> Linear(256,7)
# fc0 is K-tiled (tk=1152) to stream its 9.4 MB weight; fc1/fc2 run in the
# epilogue on VMEM-resident intermediates.
# ---------------------------------------------------------------------------
def _mlp_kernel(x_ref, w0_ref, b0_ref, w1_ref, b1_ref, w2_ref, b2_ref,
                o_ref, acc_ref):
    @pl.when(pl.program_id(0) == 0)
    def _init():
        acc_ref[...] = jnp.zeros_like(acc_ref)

    acc_ref[...] += jnp.dot(x_ref[...], w0_ref[...],
                            preferred_element_type=jnp.float32)

    @pl.when(pl.program_id(0) == pl.num_programs(0) - 1)
    def _finish():
        h = jnp.maximum(acc_ref[...] + b0_ref[...], 0.0)
        h = jnp.maximum(
            jnp.dot(h, w1_ref[...], preferred_element_type=jnp.float32)
            + b1_ref[...], 0.0)
        o_ref[...] = (jnp.dot(h, w2_ref[...],
                              preferred_element_type=jnp.float32)
                      + b2_ref[...])
        # TODO(synk): train-mode Dropout between the linears is not modeled.


def mlp(x, w0, b0, w1, b1, w2, b2):
    """x: (B, 4608) -> (B, 7)."""
    B, K0 = x.shape
    N0, N1, N2 = w0.shape[1], w1.shape[1], w2.shape[1]
    tk = 1152 if K0 % 1152 == 0 else K0
    return pl.pallas_call(
        _mlp_kernel,
        out_shape=jax.ShapeDtypeStruct((B, N2), jnp.float32),
        grid=(K0 // tk,),
        in_specs=[
            pl.BlockSpec((B, tk), lambda k: (0, k)),
            pl.BlockSpec((tk, N0), lambda k: (k, 0)),
            pl.BlockSpec((1, N0), lambda k: (0, 0)),
            pl.BlockSpec((N0, N1), lambda k: (0, 0)),
            pl.BlockSpec((1, N1), lambda k: (0, 0)),
            pl.BlockSpec((N1, N2), lambda k: (0, 0)),
            pl.BlockSpec((1, N2), lambda k: (0, 0)),
        ],
        out_specs=pl.BlockSpec((B, N2), lambda k: (0, 0)),
        scratch_shapes=[pltpu.VMEM((B, N0), jnp.float32)],
        compiler_params=pltpu.CompilerParams(
            dimension_semantics=("arbitrary",)),
    )(x, w0, b0.reshape(1, N0), w1, b1.reshape(1, N1), w2, b2.reshape(1, N2))


# ---------------------------------------------------------------------------
# Parameters (deterministic synthetic init) and forward pass.
# ---------------------------------------------------------------------------
def fold_bn(conv_b, gamma, beta, mean, var, eps=1e-5):
    scale = gamma * lax.rsqrt(var + eps)
    bias = (conv_b - mean) * scale + beta
    return scale, bias


def init_params(key):
    ks = list(jax.random.split(key, 24))
    p = {}
    conv_dims = [(1, 64), (64, 128), (128, 128)]
    for i, (cin, cout) in enumerate(conv_dims):
        std = 1.0 / np.sqrt(cin * 9)
        p[f"conv{i}_w"] = std * jax.random.normal(ks.pop(), (3, 3, cin, cout), jnp.float32)
        p[f"conv{i}_b"] = 0.05 * jax.random.normal(ks.pop(), (cout,), jnp.float32)
        p[f"bn{i}_gamma"] = 1.0 + 0.1 * jax.random.normal(ks.pop(), (cout,), jnp.float32)
        p[f"bn{i}_beta"] = 0.1 * jax.random.normal(ks.pop(), (cout,), jnp.float32)
        p[f"bn{i}_mean"] = 0.1 * jax.random.normal(ks.pop(), (cout,), jnp.float32)
        p[f"bn{i}_var"] = 1.0 + 0.5 * jnp.abs(jax.random.normal(ks.pop(), (cout,), jnp.float32))
    fc_dims = [(128 * 6 * 6, 512), (512, 256), (256, 7)]
    for i, (kin, nout) in enumerate(fc_dims):
        std = 1.0 / np.sqrt(kin)
        p[f"fc{i}_w"] = std * jax.random.normal(ks.pop(), (kin, nout), jnp.float32)
        p[f"fc{i}_b"] = 0.05 * jax.random.normal(ks.pop(), (nout,), jnp.float32)
    return p


def vgg16_forward(x_nchw, p):
    x = jnp.transpose(x_nchw, (0, 2, 3, 1)).astype(jnp.float32)   # NCHW -> NHWC
    for i in range(3):
        scale, bias = fold_bn(p[f"conv{i}_b"], p[f"bn{i}_gamma"], p[f"bn{i}_beta"],
                              p[f"bn{i}_mean"], p[f"bn{i}_var"])
        x = conv_bn_relu_pool(x, p[f"conv{i}_w"], scale, bias)
        # Dropout(p=0.25): identity in eval mode.
    B = x.shape[0]
    # match torch.nn.Flatten on NCHW: flatten in (C, H, W) order (tiny tensor)
    x = jnp.transpose(x, (0, 3, 1, 2)).reshape(B, -1)
    return mlp(x, p["fc0_w"], p["fc0_b"], p["fc1_w"], p["fc1_b"],
               p["fc2_w"], p["fc2_b"])


def vgg16_reference(x_nchw, p):
    """Pure-JAX reference with identical (eval-mode) semantics."""
    hp = lax.Precision.HIGHEST
    x = jnp.transpose(x_nchw, (0, 2, 3, 1)).astype(jnp.float32)
    for i in range(3):
        scale, bias = fold_bn(p[f"conv{i}_b"], p[f"bn{i}_gamma"], p[f"bn{i}_beta"],
                              p[f"bn{i}_mean"], p[f"bn{i}_var"])
        y = lax.conv_general_dilated(
            x, p[f"conv{i}_w"], window_strides=(1, 1), padding="SAME",
            dimension_numbers=("NHWC", "HWIO", "NHWC"), precision=hp)
        y = jnp.maximum(y * scale + bias, 0.0)
        B, H, W, C = y.shape
        x = y.reshape(B, H // 2, 2, W // 2, 2, C).max(axis=(2, 4))
    B = x.shape[0]
    x = jnp.transpose(x, (0, 3, 1, 2)).reshape(B, -1)
    x = jnp.maximum(jnp.dot(x, p["fc0_w"], precision=hp) + p["fc0_b"], 0.0)
    x = jnp.maximum(jnp.dot(x, p["fc1_w"], precision=hp) + p["fc1_b"], 0.0)
    return jnp.dot(x, p["fc2_w"], precision=hp) + p["fc2_b"]


if __name__ == "__main__":
    key = jax.random.PRNGKey(0)
    kx, kp = jax.random.split(key)
    # classifier expects 128*6*6 after three /2 pools -> input is 1x48x48 (NCHW)
    x = jax.random.normal(kx, (2, 1, 48, 48), jnp.float32)
    params = init_params(kp)

    out = jax.block_until_ready(jax.jit(vgg16_forward)(x, params))
    assert out.shape == (2, 7)
    assert np.isfinite(np.asarray(out)).all()

    ref = jax.block_until_ready(vgg16_reference(x, params))
    rel_err = float(jnp.max(jnp.abs(out - ref)) / (jnp.max(jnp.abs(ref)) + 1e-6))
    # typical rel_err is ~1e-6; 2e-2 leaves margin for MXU precision-mode
    # differences while still catching any tap/shift/pool-alignment bug (O(1)).
    assert rel_err < 2e-2, f"mismatch vs reference: rel_err={rel_err}"

    print("KERNEL_OK")
</pallas_src>

<mosaic_0001>
module attributes {stable_mosaic.version = 11 : i64} {
  func.func @_conv_bn_relu_pool_kernel(%arg0: i32, %arg1: i32, %arg2: memref<1x2856x8xf32, #tpu.memory_space<vmem>>, %arg3: memref<3x3x8x64xf32, #tpu.memory_space<vmem>>, %arg4: memref<1x64xf32, #tpu.memory_space<vmem>>, %arg5: memref<1x64xf32, #tpu.memory_space<vmem>>, %arg6: memref<1x2x24x64xf32, #tpu.memory_space<vmem>>, %arg7: memref<2x56x64xf32, #tpu.memory_space<vmem>>) attributes {dimension_semantics = [#tpu.dimension_semantics<parallel>, #tpu.dimension_semantics<parallel>], iteration_bounds = array<i64: 2, 12>, scalar_prefetch = 0 : i64, scratch_operands = 1 : i64, tpu.core_type = #tpu.core_type<tc>, window_params = [{transform_indices = @transform_0, window_bounds = array<i64: 1, 2856, 8>}, {pipeline_mode = #tpu.pipeline_mode<synchronous>, transform_indices = @transform_1, window_bounds = array<i64: 3, 3, 8, 64>}, {pipeline_mode = #tpu.pipeline_mode<synchronous>, transform_indices = @transform_2, window_bounds = array<i64: 1, 64>}, {pipeline_mode = #tpu.pipeline_mode<synchronous>, transform_indices = @transform_3, window_bounds = array<i64: 1, 64>}, {transform_indices = @transform_4, window_bounds = array<i64: 1, 2, 24, 64>}]} {
    %c224_i32 = arith.constant 224 : i32
    %0 = arith.muli %arg1, %c224_i32 : i32
    %1 = tpu.assume_multiple %0, 8 : i32
    %cst = arith.constant 0.000000e+00 : f32
    %2 = vector.broadcast %cst : f32 to vector<224x64xf32>
    %c0_i32 = arith.constant 0 : i32
    %3 = arith.addi %1, %c0_i32 : i32
    %c0_i32_0 = arith.constant 0 : i32
    %4 = arith.addi %3, %c0_i32_0 : i32
    %c0 = arith.constant 0 : index
    %5 = arith.index_cast %4 : i32 to index
    %c0_1 = arith.constant 0 : index
    %6 = vector.load %arg2[%c0, %5, %c0_1] : memref<1x2856x8xf32, #tpu.memory_space<vmem>>, vector<1x224x8xf32>
    %7 = vector.shape_cast %6 : vector<1x224x8xf32> to vector<224x8xf32>
    %c0_2 = arith.constant 0 : index
    %c0_3 = arith.constant 0 : index
    %c0_4 = arith.constant 0 : index
    %c0_5 = arith.constant 0 : index
    %8 = vector.load %arg3[%c0_2, %c0_3, %c0_4, %c0_5] : memref<3x3x8x64xf32, #tpu.memory_space<vmem>>, vector<1x1x8x64xf32>
    %9 = vector.shape_cast %8 : vector<1x1x8x64xf32> to vector<8x64xf32>
    %cst_6 = arith.constant dense<0.000000e+00> : vector<224x64xf32>
    %10 = tpu.matmul %7, %9, %cst_6 {dimension_numbers = #tpu.dot_dimension_numbers<[1], [0], [0], [1], [0, 0, 1, 1], [], []>} : vector<224x8xf32>, vector<8x64xf32>, vector<224x64xf32> -> vector<224x64xf32>
    %11 = arith.addf %2, %10 : vector<224x64xf32>
    %c0_i32_7 = arith.constant 0 : i32
    %12 = arith.addi %1, %c0_i32_7 : i32
    %c1_i32 = arith.constant 1 : i32
    %13 = arith.addi %12, %c1_i32 : i32
    %c0_8 = arith.constant 0 : index
    %14 = arith.index_cast %13 : i32 to index
    %c0_9 = arith.constant 0 : index
    %15 = vector.load %arg2[%c0_8, %14, %c0_9] : memref<1x2856x8xf32, #tpu.memory_space<vmem>>, vector<1x224x8xf32>
    %16 = vector.shape_cast %15 : vector<1x224x8xf32> to vector<224x8xf32>
    %c0_10 = arith.constant 0 : index
    %c1 = arith.constant 1 : index
    %c0_11 = arith.constant 0 : index
    %c0_12 = arith.constant 0 : index
    %17 = vector.load %arg3[%c0_10, %c1, %c0_11, %c0_12] : memref<3x3x8x64xf32, #tpu.memory_space<vmem>>, vector<1x1x8x64xf32>
    %18 = vector.shape_cast %17 : vector<1x1x8x64xf32> to vector<8x64xf32>
    %cst_13 = arith.constant dense<0.000000e+00> : vector<224x64xf32>
    %19 = tpu.matmul %16, %18, %cst_13 {dimension_numbers = #tpu.dot_dimension_numbers<[1], [0], [0], [1], [0, 0, 1, 1], [], []>} : vector<224x8xf32>, vector<8x64xf32>, vector<224x64xf32> -> vector<224x64xf32>
    %20 = arith.addf %11, %19 : vector<224x64xf32>
    %c0_i32_14 = arith.constant 0 : i32
    %21 = arith.addi %1, %c0_i32_14 : i32
    %c2_i32 = arith.constant 2 : i32
    %22 = arith.addi %21, %c2_i32 : i32
    %c0_15 = arith.constant 0 : index
    %23 = arith.index_cast %22 : i32 to index
    %c0_16 = arith.constant 0 : index
    %24 = vector.load %arg2[%c0_15, %23, %c0_16] : memref<1x2856x8xf32, #tpu.memory_space<vmem>>, vector<1x224x8xf32>
    %25 = vector.shape_cast %24 : vector<1x224x8xf32> to vector<224x8xf32>
    %c0_17 = arith.constant 0 : index
    %c2 = arith.constant 2 : index
    %c0_18 = arith.constant 0 : index
    %c0_19 = arith.constant 0 : index
    %26 = vector.load %arg3[%c0_17, %c2, %c0_18, %c0_19] : memref<3x3x8x64xf32, #tpu.memory_space<vmem>>, vector<1x1x8x64xf32>
    %27 = vector.shape_cast %26 : vector<1x1x8x64xf32> to vector<8x64xf32>
    %cst_20 = arith.constant dense<0.000000e+00> : vector<224x64xf32>
    %28 = tpu.matmul %25, %27, %cst_20 {dimension_numbers = #tpu.dot_dimension_numbers<[1], [0], [0], [1], [0, 0, 1, 1], [], []>} : vector<224x8xf32>, vector<8x64xf32>, vector<224x64xf32> -> vector<224x64xf32>
    %29 = arith.addf %20, %28 : vector<224x64xf32>
    %c56_i32 = arith.constant 56 : i32
    %30 = arith.addi %1, %c56_i32 : i32
    %c0_i32_21 = arith.constant 0 : i32
    %31 = arith.addi %30, %c0_i32_21 : i32
    %c0_22 = arith.constant 0 : index
    %32 = arith.index_cast %31 : i32 to index
    %c0_23 = arith.constant 0 : index
    %33 = vector.load %arg2[%c0_22, %32, %c0_23] : memref<1x2856x8xf32, #tpu.memory_space<vmem>>, vector<1x224x8xf32>
    %34 = vector.shape_cast %33 : vector<1x224x8xf32> to vector<224x8xf32>
    %c1_24 = arith.constant 1 : index
    %c0_25 = arith.constant 0 : index
    %c0_26 = arith.constant 0 : index
    %c0_27 = arith.constant 0 : index
    %35 = vector.load %arg3[%c1_24, %c0_25, %c0_26, %c0_27] : memref<3x3x8x64xf32, #tpu.memory_space<vmem>>, vector<1x1x8x64xf32>
    %36 = vector.shape_cast %35 : vector<1x1x8x64xf32> to vector<8x64xf32>
    %cst_28 = arith.constant dense<0.000000e+00> : vector<224x64xf32>
    %37 = tpu.matmul %34, %36, %cst_28 {dimension_numbers = #tpu.dot_dimension_numbers<[1], [0], [0], [1], [0, 0, 1, 1], [], []>} : vector<224x8xf32>, vector<8x64xf32>, vector<224x64xf32> -> vector<224x64xf32>
    %38 = arith.addf %29, %37 : vector<224x64xf32>
    %c56_i32_29 = arith.constant 56 : i32
    %39 = arith.addi %1, %c56_i32_29 : i32
    %c1_i32_30 = arith.constant 1 : i32
    %40 = arith.addi %39, %c1_i32_30 : i32
    %c0_31 = arith.constant 0 : index
    %41 = arith.index_cast %40 : i32 to index
    %c0_32 = arith.constant 0 : index
    %42 = vector.load %arg2[%c0_31, %41, %c0_32] : memref<1x2856x8xf32, #tpu.memory_space<vmem>>, vector<1x224x8xf32>
    %43 = vector.shape_cast %42 : vector<1x224x8xf32> to vector<224x8xf32>
    %c1_33 = arith.constant 1 : index
    %c1_34 = arith.constant 1 : index
    %c0_35 = arith.constant 0 : index
    %c0_36 = arith.constant 0 : index
    %44 = vector.load %arg3[%c1_33, %c1_34, %c0_35, %c0_36] : memref<3x3x8x64xf32, #tpu.memory_space<vmem>>, vector<1x1x8x64xf32>
    %45 = vector.shape_cast %44 : vector<1x1x8x64xf32> to vector<8x64xf32>
    %cst_37 = arith.constant dense<0.000000e+00> : vector<224x64xf32>
    %46 = tpu.matmul %43, %45, %cst_37 {dimension_numbers = #tpu.dot_dimension_numbers<[1], [0], [0], [1], [0, 0, 1, 1], [], []>} : vector<224x8xf32>, vector<8x64xf32>, vector<224x64xf32> -> vector<224x64xf32>
    %47 = arith.addf %38, %46 : vector<224x64xf32>
    %c56_i32_38 = arith.constant 56 : i32
    %48 = arith.addi %1, %c56_i32_38 : i32
    %c2_i32_39 = arith.constant 2 : i32
    %49 = arith.addi %48, %c2_i32_39 : i32
    %c0_40 = arith.constant 0 : index
    %50 = arith.index_cast %49 : i32 to index
    %c0_41 = arith.constant 0 : index
    %51 = vector.load %arg2[%c0_40, %50, %c0_41] : memref<1x2856x8xf32, #tpu.memory_space<vmem>>, vector<1x224x8xf32>
    %52 = vector.shape_cast %51 : vector<1x224x8xf32> to vector<224x8xf32>
    %c1_42 = arith.constant 1 : index
    %c2_43 = arith.constant 2 : index
    %c0_44 = arith.constant 0 : index
    %c0_45 = arith.constant 0 : index
    %53 = vector.load %arg3[%c1_42, %c2_43, %c0_44, %c0_45] : memref<3x3x8x64xf32, #tpu.memory_space<vmem>>, vector<1x1x8x64xf32>
    %54 = vector.shape_cast %53 : vector<1x1x8x64xf32> to vector<8x64xf32>
    %cst_46 = arith.constant dense<0.000000e+00> : vector<224x64xf32>
    %55 = tpu.matmul %52, %54, %cst_46 {dimension_numbers = #tpu.dot_dimension_numbers<[1], [0], [0], [1], [0, 0, 1, 1], [], []>} : vector<224x8xf32>, vector<8x64xf32>, vector<224x64xf32> -> vector<224x64xf32>
    %56 = arith.addf %47, %55 : vector<224x64xf32>
    %c112_i32 = arith.constant 112 : i32
    %57 = arith.addi %1, %c112_i32 : i32
    %c0_i32_47 = arith.constant 0 : i32
    %58 = arith.addi %57, %c0_i32_47 : i32
    %c0_48 = arith.constant 0 : index
    %59 = arith.index_cast %58 : i32 to index
    %c0_49 = arith.constant 0 : index
    %60 = vector.load %arg2[%c0_48, %59, %c0_49] : memref<1x2856x8xf32, #tpu.memory_space<vmem>>, vector<1x224x8xf32>
    %61 = vector.shape_cast %60 : vector<1x224x8xf32> to vector<224x8xf32>
    %c2_50 = arith.constant 2 : index
    %c0_51 = arith.constant 0 : index
    %c0_52 = arith.constant 0 : index
    %c0_53 = arith.constant 0 : index
    %62 = vector.load %arg3[%c2_50, %c0_51, %c0_52, %c0_53] : memref<3x3x8x64xf32, #tpu.memory_space<vmem>>, vector<1x1x8x64xf32>
    %63 = vector.shape_cast %62 : vector<1x1x8x64xf32> to vector<8x64xf32>
    %cst_54 = arith.constant dense<0.000000e+00> : vector<224x64xf32>
    %64 = tpu.matmul %61, %63, %cst_54 {dimension_numbers = #tpu.dot_dimension_numbers<[1], [0], [0], [1], [0, 0, 1, 1], [], []>} : vector<224x8xf32>, vector<8x64xf32>, vector<224x64xf32> -> vector<224x64xf32>
    %65 = arith.addf %56, %64 : vector<224x64xf32>
    %c112_i32_55 = arith.constant 112 : i32
    %66 = arith.addi %1, %c112_i32_55 : i32
    %c1_i32_56 = arith.constant 1 : i32
    %67 = arith.addi %66, %c1_i32_56 : i32
    %c0_57 = arith.constant 0 : index
    %68 = arith.index_cast %67 : i32 to index
    %c0_58 = arith.constant 0 : index
    %69 = vector.load %arg2[%c0_57, %68, %c0_58] : memref<1x2856x8xf32, #tpu.memory_space<vmem>>, vector<1x224x8xf32>
    %70 = vector.shape_cast %69 : vector<1x224x8xf32> to vector<224x8xf32>
    %c2_59 = arith.constant 2 : index
    %c1_60 = arith.constant 1 : index
    %c0_61 = arith.constant 0 : index
    %c0_62 = arith.constant 0 : index
    %71 = vector.load %arg3[%c2_59, %c1_60, %c0_61, %c0_62] : memref<3x3x8x64xf32, #tpu.memory_space<vmem>>, vector<1x1x8x64xf32>
    %72 = vector.shape_cast %71 : vector<1x1x8x64xf32> to vector<8x64xf32>
    %cst_63 = arith.constant dense<0.000000e+00> : vector<224x64xf32>
    %73 = tpu.matmul %70, %72, %cst_63 {dimension_numbers = #tpu.dot_dimension_numbers<[1], [0], [0], [1], [0, 0, 1, 1], [], []>} : vector<224x8xf32>, vector<8x64xf32>, vector<224x64xf32> -> vector<224x64xf32>
    %74 = arith.addf %65, %73 : vector<224x64xf32>
    %c112_i32_64 = arith.constant 112 : i32
    %75 = arith.addi %1, %c112_i32_64 : i32
    %c2_i32_65 = arith.constant 2 : i32
    %76 = arith.addi %75, %c2_i32_65 : i32
    %c0_66 = arith.constant 0 : index
    %77 = arith.index_cast %76 : i32 to index
    %c0_67 = arith.constant 0 : index
    %78 = vector.load %arg2[%c0_66, %77, %c0_67] : memref<1x2856x8xf32, #tpu.memory_space<vmem>>, vector<1x224x8xf32>
    %79 = vector.shape_cast %78 : vector<1x224x8xf32> to vector<224x8xf32>
    %c2_68 = arith.constant 2 : index
    %c2_69 = arith.constant 2 : index
    %c0_70 = arith.constant 0 : index
    %c0_71 = arith.constant 0 : index
    %80 = vector.load %arg3[%c2_68, %c2_69, %c0_70, %c0_71] : memref<3x3x8x64xf32, #tpu.memory_space<vmem>>, vector<1x1x8x64xf32>
    %81 = vector.shape_cast %80 : vector<1x1x8x64xf32> to vector<8x64xf32>
    %cst_72 = arith.constant dense<0.000000e+00> : vector<224x64xf32>
    %82 = tpu.matmul %79, %81, %cst_72 {dimension_numbers = #tpu.dot_dimension_numbers<[1], [0], [0], [1], [0, 0, 1, 1], [], []>} : vector<224x8xf32>, vector<8x64xf32>, vector<224x64xf32> -> vector<224x64xf32>
    %83 = arith.addf %74, %82 : vector<224x64xf32>
    %c0_73 = arith.constant 0 : index
    %c0_74 = arith.constant 0 : index
    %84 = vector.load %arg4[%c0_73, %c0_74] : memref<1x64xf32, #tpu.memory_space<vmem>>, vector<1x64xf32>
    %85 = vector.broadcast %84 : vector<1x64xf32> to vector<224x64xf32>
    %86 = arith.mulf %83, %85 : vector<224x64xf32>
    %c0_75 = arith.constant 0 : index
    %c0_76 = arith.constant 0 : index
    %87 = vector.load %arg5[%c0_75, %c0_76] : memref<1x64xf32, #tpu.memory_space<vmem>>, vector<1x64xf32>
    %88 = vector.broadcast %87 : vector<1x64xf32> to vector<224x64xf32>
    %89 = arith.addf %86, %88 : vector<224x64xf32>
    %cst_77 = arith.constant 0.000000e+00 : f32
    %90 = vector.broadcast %cst_77 : f32 to vector<224x64xf32>
    %91 = arith.maximumf %89, %90 : vector<224x64xf32>
    %92 = vector.shape_cast %91 : vector<224x64xf32> to vector<2x112x64xf32>
    %93 = vector.extract_strided_slice %92 {offsets = [0, 0, 0], sizes = [2, 56, 64], strides = [1, 1, 1]} : vector<2x112x64xf32> to vector<2x56x64xf32>
    %94 = vector.extract_strided_slice %92 {offsets = [0, 56, 0], sizes = [2, 56, 64], strides = [1, 1, 1]} : vector<2x112x64xf32> to vector<2x56x64xf32>
    %95 = arith.maximumf %93, %94 : vector<2x56x64xf32>
    %c0_78 = arith.constant 0 : index
    %c0_79 = arith.constant 0 : index
    %c0_80 = arith.constant 0 : index
    %96 = vector.load %arg7[%c0_78, %c0_79, %c0_80] : memref<2x56x64xf32, #tpu.memory_space<vmem>>, vector<2x56x64xf32>
    tpu.vector_store %arg7[%c0_78, %c0_79, %c0_80], %95 {strides = array<i32>} : memref<2x56x64xf32, #tpu.memory_space<vmem>>, vector<2x56x64xf32>,
    %c0_81 = arith.constant 0 : index
    %c0_82 = arith.constant 0 : index
    %c0_83 = arith.constant 0 : index
    %97 = tpu.strided_load %arg7[%c0_81, %c0_82, %c0_83] {strides = array<i32: 1, 2, 1>} : memref<2x56x64xf32, #tpu.memory_space<vmem>>, vector<2x24x64xf32>
    %c0_84 = arith.constant 0 : index
    %c1_85 = arith.constant 1 : index
    %c0_86 = arith.constant 0 : index
    %98 = tpu.strided_load %arg7[%c0_84, %c1_85, %c0_86] {strides = array<i32: 1, 2, 1>} : memref<2x56x64xf32, #tpu.memory_space<vmem>>, vector<2x24x64xf32>
    %99 = arith.maximumf %97, %98 : vector<2x24x64xf32>
    %c0_87 = arith.constant 0 : index
    %c0_88 = arith.constant 0 : index
    %c0_89 = arith.constant 0 : index
    %c0_90 = arith.constant 0 : index
    %100 = vector.load %arg6[%c0_87, %c0_88, %c0_89, %c0_90] : memref<1x2x24x64xf32, #tpu.memory_space<vmem>>, vector<1x2x24x64xf32>
    %101 = vector.shape_cast %100 : vector<1x2x24x64xf32> to vector<2x24x64xf32>
    %102 = vector.shape_cast %99 : vector<2x24x64xf32> to vector<1x2x24x64xf32>
    tpu.vector_store %arg6[%c0_87, %c0_88, %c0_89, %c0_90], %102 {strides = array<i32>} : memref<1x2x24x64xf32, #tpu.memory_space<vmem>>, vector<1x2x24x64xf32>,
    return
  }
  func.func @transform_0(%arg0: i32, %arg1: i32) -> (i32, i32, i32) {
    %c0_i32 = arith.constant 0 : i32
    %c0_i32_0 = arith.constant 0 : i32
    %c0_i32_1 = arith.constant 0 : i32
    return %arg0, %c0_i32, %c0_i32_0 : i32, i32, i32
  }
  func.func @transform_1(%arg0: i32, %arg1: i32) -> (i32, i32, i32, i32) {
    %c0_i32 = arith.constant 0 : i32
    %c0_i32_0 = arith.constant 0 : i32
    %c0_i32_1 = arith.constant 0 : i32
    %c0_i32_2 = arith.constant 0 : i32
    %c0_i32_3 = arith.constant 0 : i32
    return %c0_i32, %c0_i32_0, %c0_i32_1, %c0_i32_2 : i32, i32, i32, i32
  }
  func.func @transform_2(%arg0: i32, %arg1: i32) -> (i32, i32) {
    %c0_i32 = arith.constant 0 : i32
    %c0_i32_0 = arith.constant 0 : i32
    %c0_i32_1 = arith.constant 0 : i32
    return %c0_i32, %c0_i32_0 : i32, i32
  }
  func.func @transform_3(%arg0: i32, %arg1: i32) -> (i32, i32) {
    %c0_i32 = arith.constant 0 : i32
    %c0_i32_0 = arith.constant 0 : i32
    %c0_i32_1 = arith.constant 0 : i32
    return %c0_i32, %c0_i32_0 : i32, i32
  }
  func.func @transform_4(%arg0: i32, %arg1: i32) -> (i32, i32, i32, i32) {
    %c0_i32 = arith.constant 0 : i32
    %c0_i32_0 = arith.constant 0 : i32
    %c0_i32_1 = arith.constant 0 : i32
    return %arg0, %arg1, %c0_i32, %c0_i32_0 : i32, i32, i32, i32
  }
}

module attributes {stable_mosaic.version = 11 : i64} {
  func.func @_conv_bn_relu_pool_kernel(%arg0: i32, %arg1: i32, %arg2: memref<1x864x64xf32, #tpu.memory_space<vmem>>, %arg3: memref<3x3x64x128xf32, #tpu.memory_space<vmem>>, %arg4: memref<1x128xf32, #tpu.memory_space<vmem>>, %arg5: memref<1x128xf32, #tpu.memory_space<vmem>>, %arg6: memref<1x4x12x128xf32, #tpu.memory_space<vmem>>, %arg7: memref<4x32x128xf32, #tpu.memory_space<vmem>>) attributes {dimension_semantics = [#tpu.dimension_semantics<parallel>, #tpu.dimension_semantics<parallel>], iteration_bounds = array<i64: 2, 3>, scalar_prefetch = 0 : i64, scratch_operands = 1 : i64, tpu.core_type = #tpu.core_type<tc>, window_params = [{transform_indices = @transform_0, window_bounds = array<i64: 1, 864, 64>}, {pipeline_mode = #tpu.pipeline_mode<synchronous>, transform_indices = @transform_1, window_bounds = array<i64: 3, 3, 64, 128>}, {pipeline_mode = #tpu.pipeline_mode<synchronous>, transform_indices = @transform_2, window_bounds = array<i64: 1, 128>}, {pipeline_mode = #tpu.pipeline_mode<synchronous>, transform_indices = @transform_3, window_bounds = array<i64: 1, 128>}, {transform_indices = @transform_4, window_bounds = array<i64: 1, 4, 12, 128>}]} {
    %c256_i32 = arith.constant 256 : i32
    %0 = arith.muli %arg1, %c256_i32 : i32
    %1 = tpu.assume_multiple %0, 8 : i32
    %cst = arith.constant 0.000000e+00 : f32
    %2 = vector.broadcast %cst : f32 to vector<256x128xf32>
    %c0_i32 = arith.constant 0 : i32
    %3 = arith.addi %1, %c0_i32 : i32
    %c0_i32_0 = arith.constant 0 : i32
    %4 = arith.addi %3, %c0_i32_0 : i32
    %c0 = arith.constant 0 : index
    %5 = arith.index_cast %4 : i32 to index
    %c0_1 = arith.constant 0 : index
    %6 = vector.load %arg2[%c0, %5, %c0_1] : memref<1x864x64xf32, #tpu.memory_space<vmem>>, vector<1x256x64xf32>
    %7 = vector.shape_cast %6 : vector<1x256x64xf32> to vector<256x64xf32>
    %c0_2 = arith.constant 0 : index
    %c0_3 = arith.constant 0 : index
    %c0_4 = arith.constant 0 : index
    %c0_5 = arith.constant 0 : index
    %8 = vector.load %arg3[%c0_2, %c0_3, %c0_4, %c0_5] : memref<3x3x64x128xf32, #tpu.memory_space<vmem>>, vector<1x1x64x128xf32>
    %9 = vector.shape_cast %8 : vector<1x1x64x128xf32> to vector<64x128xf32>
    %cst_6 = arith.constant dense<0.000000e+00> : vector<256x128xf32>
    %10 = tpu.matmul %7, %9, %cst_6 {dimension_numbers = #tpu.dot_dimension_numbers<[1], [0], [0], [1], [0, 0, 1, 1], [], []>} : vector<256x64xf32>, vector<64x128xf32>, vector<256x128xf32> -> vector<256x128xf32>
    %11 = arith.addf %2, %10 : vector<256x128xf32>
    %c0_i32_7 = arith.constant 0 : i32
    %12 = arith.addi %1, %c0_i32_7 : i32
    %c1_i32 = arith.constant 1 : i32
    %13 = arith.addi %12, %c1_i32 : i32
    %c0_8 = arith.constant 0 : index
    %14 = arith.index_cast %13 : i32 to index
    %c0_9 = arith.constant 0 : index
    %15 = vector.load %arg2[%c0_8, %14, %c0_9] : memref<1x864x64xf32, #tpu.memory_space<vmem>>, vector<1x256x64xf32>
    %16 = vector.shape_cast %15 : vector<1x256x64xf32> to vector<256x64xf32>
    %c0_10 = arith.constant 0 : index
    %c1 = arith.constant 1 : index
    %c0_11 = arith.constant 0 : index
    %c0_12 = arith.constant 0 : index
    %17 = vector.load %arg3[%c0_10, %c1, %c0_11, %c0_12] : memref<3x3x64x128xf32, #tpu.memory_space<vmem>>, vector<1x1x64x128xf32>
    %18 = vector.shape_cast %17 : vector<1x1x64x128xf32> to vector<64x128xf32>
    %cst_13 = arith.constant dense<0.000000e+00> : vector<256x128xf32>
    %19 = tpu.matmul %16, %18, %cst_13 {dimension_numbers = #tpu.dot_dimension_numbers<[1], [0], [0], [1], [0, 0, 1, 1], [], []>} : vector<256x64xf32>, vector<64x128xf32>, vector<256x128xf32> -> vector<256x128xf32>
    %20 = arith.addf %11, %19 : vector<256x128xf32>
    %c0_i32_14 = arith.constant 0 : i32
    %21 = arith.addi %1, %c0_i32_14 : i32
    %c2_i32 = arith.constant 2 : i32
    %22 = arith.addi %21, %c2_i32 : i32
    %c0_15 = arith.constant 0 : index
    %23 = arith.index_cast %22 : i32 to index
    %c0_16 = arith.constant 0 : index
    %24 = vector.load %arg2[%c0_15, %23, %c0_16] : memref<1x864x64xf32, #tpu.memory_space<vmem>>, vector<1x256x64xf32>
    %25 = vector.shape_cast %24 : vector<1x256x64xf32> to vector<256x64xf32>
    %c0_17 = arith.constant 0 : index
    %c2 = arith.constant 2 : index
    %c0_18 = arith.constant 0 : index
    %c0_19 = arith.constant 0 : index
    %26 = vector.load %arg3[%c0_17, %c2, %c0_18, %c0_19] : memref<3x3x64x128xf32, #tpu.memory_space<vmem>>, vector<1x1x64x128xf32>
    %27 = vector.shape_cast %26 : vector<1x1x64x128xf32> to vector<64x128xf32>
    %cst_20 = arith.constant dense<0.000000e+00> : vector<256x128xf32>
    %28 = tpu.matmul %25, %27, %cst_20 {dimension_numbers = #tpu.dot_dimension_numbers<[1], [0], [0], [1], [0, 0, 1, 1], [], []>} : vector<256x64xf32>, vector<64x128xf32>, vector<256x128xf32> -> vector<256x128xf32>
    %29 = arith.addf %20, %28 : vector<256x128xf32>
    %c32_i32 = arith.constant 32 : i32
    %30 = arith.addi %1, %c32_i32 : i32
    %c0_i32_21 = arith.constant 0 : i32
    %31 = arith.addi %30, %c0_i32_21 : i32
    %c0_22 = arith.constant 0 : index
    %32 = arith.index_cast %31 : i32 to index
    %c0_23 = arith.constant 0 : index
    %33 = vector.load %arg2[%c0_22, %32, %c0_23] : memref<1x864x64xf32, #tpu.memory_space<vmem>>, vector<1x256x64xf32>
    %34 = vector.shape_cast %33 : vector<1x256x64xf32> to vector<256x64xf32>
    %c1_24 = arith.constant 1 : index
    %c0_25 = arith.constant 0 : index
    %c0_26 = arith.constant 0 : index
    %c0_27 = arith.constant 0 : index
    %35 = vector.load %arg3[%c1_24, %c0_25, %c0_26, %c0_27] : memref<3x3x64x128xf32, #tpu.memory_space<vmem>>, vector<1x1x64x128xf32>
    %36 = vector.shape_cast %35 : vector<1x1x64x128xf32> to vector<64x128xf32>
    %cst_28 = arith.constant dense<0.000000e+00> : vector<256x128xf32>
    %37 = tpu.matmul %34, %36, %cst_28 {dimension_numbers = #tpu.dot_dimension_numbers<[1], [0], [0], [1], [0, 0, 1, 1], [], []>} : vector<256x64xf32>, vector<64x128xf32>, vector<256x128xf32> -> vector<256x128xf32>
    %38 = arith.addf %29, %37 : vector<256x128xf32>
    %c32_i32_29 = arith.constant 32 : i32
    %39 = arith.addi %1, %c32_i32_29 : i32
    %c1_i32_30 = arith.constant 1 : i32
    %40 = arith.addi %39, %c1_i32_30 : i32
    %c0_31 = arith.constant 0 : index
    %41 = arith.index_cast %40 : i32 to index
    %c0_32 = arith.constant 0 : index
    %42 = vector.load %arg2[%c0_31, %41, %c0_32] : memref<1x864x64xf32, #tpu.memory_space<vmem>>, vector<1x256x64xf32>
    %43 = vector.shape_cast %42 : vector<1x256x64xf32> to vector<256x64xf32>
    %c1_33 = arith.constant 1 : index
    %c1_34 = arith.constant 1 : index
    %c0_35 = arith.constant 0 : index
    %c0_36 = arith.constant 0 : index
    %44 = vector.load %arg3[%c1_33, %c1_34, %c0_35, %c0_36] : memref<3x3x64x128xf32, #tpu.memory_space<vmem>>, vector<1x1x64x128xf32>
    %45 = vector.shape_cast %44 : vector<1x1x64x128xf32> to vector<64x128xf32>
    %cst_37 = arith.constant dense<0.000000e+00> : vector<256x128xf32>
    %46 = tpu.matmul %43, %45, %cst_37 {dimension_numbers = #tpu.dot_dimension_numbers<[1], [0], [0], [1], [0, 0, 1, 1], [], []>} : vector<256x64xf32>, vector<64x128xf32>, vector<256x128xf32> -> vector<256x128xf32>
    %47 = arith.addf %38, %46 : vector<256x128xf32>
    %c32_i32_38 = arith.constant 32 : i32
    %48 = arith.addi %1, %c32_i32_38 : i32
    %c2_i32_39 = arith.constant 2 : i32
    %49 = arith.addi %48, %c2_i32_39 : i32
    %c0_40 = arith.constant 0 : index
    %50 = arith.index_cast %49 : i32 to index
    %c0_41 = arith.constant 0 : index
    %51 = vector.load %arg2[%c0_40, %50, %c0_41] : memref<1x864x64xf32, #tpu.memory_space<vmem>>, vector<1x256x64xf32>
    %52 = vector.shape_cast %51 : vector<1x256x64xf32> to vector<256x64xf32>
    %c1_42 = arith.constant 1 : index
    %c2_43 = arith.constant 2 : index
    %c0_44 = arith.constant 0 : index
    %c0_45 = arith.constant 0 : index
    %53 = vector.load %arg3[%c1_42, %c2_43, %c0_44, %c0_45] : memref<3x3x64x128xf32, #tpu.memory_space<vmem>>, vector<1x1x64x128xf32>
    %54 = vector.shape_cast %53 : vector<1x1x64x128xf32> to vector<64x128xf32>
    %cst_46 = arith.constant dense<0.000000e+00> : vector<256x128xf32>
    %55 = tpu.matmul %52, %54, %cst_46 {dimension_numbers = #tpu.dot_dimension_numbers<[1], [0], [0], [1], [0, 0, 1, 1], [], []>} : vector<256x64xf32>, vector<64x128xf32>, vector<256x128xf32> -> vector<256x128xf32>
    %56 = arith.addf %47, %55 : vector<256x128xf32>
    %c64_i32 = arith.constant 64 : i32
    %57 = arith.addi %1, %c64_i32 : i32
    %c0_i32_47 = arith.constant 0 : i32
    %58 = arith.addi %57, %c0_i32_47 : i32
    %c0_48 = arith.constant 0 : index
    %59 = arith.index_cast %58 : i32 to index
    %c0_49 = arith.constant 0 : index
    %60 = vector.load %arg2[%c0_48, %59, %c0_49] : memref<1x864x64xf32, #tpu.memory_space<vmem>>, vector<1x256x64xf32>
    %61 = vector.shape_cast %60 : vector<1x256x64xf32> to vector<256x64xf32>
    %c2_50 = arith.constant 2 : index
    %c0_51 = arith.constant 0 : index
    %c0_52 = arith.constant 0 : index
    %c0_53 = arith.constant 0 : index
    %62 = vector.load %arg3[%c2_50, %c0_51, %c0_52, %c0_53] : memref<3x3x64x128xf32, #tpu.memory_space<vmem>>, vector<1x1x64x128xf32>
    %63 = vector.shape_cast %62 : vector<1x1x64x128xf32> to vector<64x128xf32>
    %cst_54 = arith.constant dense<0.000000e+00> : vector<256x128xf32>
    %64 = tpu.matmul %61, %63, %cst_54 {dimension_numbers = #tpu.dot_dimension_numbers<[1], [0], [0], [1], [0, 0, 1, 1], [], []>} : vector<256x64xf32>, vector<64x128xf32>, vector<256x128xf32> -> vector<256x128xf32>
    %65 = arith.addf %56, %64 : vector<256x128xf32>
    %c64_i32_55 = arith.constant 64 : i32
    %66 = arith.addi %1, %c64_i32_55 : i32
    %c1_i32_56 = arith.constant 1 : i32
    %67 = arith.addi %66, %c1_i32_56 : i32
    %c0_57 = arith.constant 0 : index
    %68 = arith.index_cast %67 : i32 to index
    %c0_58 = arith.constant 0 : index
    %69 = vector.load %arg2[%c0_57, %68, %c0_58] : memref<1x864x64xf32, #tpu.memory_space<vmem>>, vector<1x256x64xf32>
    %70 = vector.shape_cast %69 : vector<1x256x64xf32> to vector<256x64xf32>
    %c2_59 = arith.constant 2 : index
    %c1_60 = arith.constant 1 : index
    %c0_61 = arith.constant 0 : index
    %c0_62 = arith.constant 0 : index
    %71 = vector.load %arg3[%c2_59, %c1_60, %c0_61, %c0_62] : memref<3x3x64x128xf32, #tpu.memory_space<vmem>>, vector<1x1x64x128xf32>
    %72 = vector.shape_cast %71 : vector<1x1x64x128xf32> to vector<64x128xf32>
    %cst_63 = arith.constant dense<0.000000e+00> : vector<256x128xf32>
    %73 = tpu.matmul %70, %72, %cst_63 {dimension_numbers = #tpu.dot_dimension_numbers<[1], [0], [0], [1], [0, 0, 1, 1], [], []>} : vector<256x64xf32>, vector<64x128xf32>, vector<256x128xf32> -> vector<256x128xf32>
    %74 = arith.addf %65, %73 : vector<256x128xf32>
    %c64_i32_64 = arith.constant 64 : i32
    %75 = arith.addi %1, %c64_i32_64 : i32
    %c2_i32_65 = arith.constant 2 : i32
    %76 = arith.addi %75, %c2_i32_65 : i32
    %c0_66 = arith.constant 0 : index
    %77 = arith.index_cast %76 : i32 to index
    %c0_67 = arith.constant 0 : index
    %78 = vector.load %arg2[%c0_66, %77, %c0_67] : memref<1x864x64xf32, #tpu.memory_space<vmem>>, vector<1x256x64xf32>
    %79 = vector.shape_cast %78 : vector<1x256x64xf32> to vector<256x64xf32>
    %c2_68 = arith.constant 2 : index
    %c2_69 = arith.constant 2 : index
    %c0_70 = arith.constant 0 : index
    %c0_71 = arith.constant 0 : index
    %80 = vector.load %arg3[%c2_68, %c2_69, %c0_70, %c0_71] : memref<3x3x64x128xf32, #tpu.memory_space<vmem>>, vector<1x1x64x128xf32>
    %81 = vector.shape_cast %80 : vector<1x1x64x128xf32> to vector<64x128xf32>
    %cst_72 = arith.constant dense<0.000000e+00> : vector<256x128xf32>
    %82 = tpu.matmul %79, %81, %cst_72 {dimension_numbers = #tpu.dot_dimension_numbers<[1], [0], [0], [1], [0, 0, 1, 1], [], []>} : vector<256x64xf32>, vector<64x128xf32>, vector<256x128xf32> -> vector<256x128xf32>
    %83 = arith.addf %74, %82 : vector<256x128xf32>
    %c0_73 = arith.constant 0 : index
    %c0_74 = arith.constant 0 : index
    %84 = vector.load %arg4[%c0_73, %c0_74] : memref<1x128xf32, #tpu.memory_space<vmem>>, vector<1x128xf32>
    %85 = vector.broadcast %84 : vector<1x128xf32> to vector<256x128xf32>
    %86 = arith.mulf %83, %85 : vector<256x128xf32>
    %c0_75 = arith.constant 0 : index
    %c0_76 = arith.constant 0 : index
    %87 = vector.load %arg5[%c0_75, %c0_76] : memref<1x128xf32, #tpu.memory_space<vmem>>, vector<1x128xf32>
    %88 = vector.broadcast %87 : vector<1x128xf32> to vector<256x128xf32>
    %89 = arith.addf %86, %88 : vector<256x128xf32>
    %cst_77 = arith.constant 0.000000e+00 : f32
    %90 = vector.broadcast %cst_77 : f32 to vector<256x128xf32>
    %91 = arith.maximumf %89, %90 : vector<256x128xf32>
    %92 = vector.shape_cast %91 : vector<256x128xf32> to vector<4x64x128xf32>
    %93 = vector.extract_strided_slice %92 {offsets = [0, 0, 0], sizes = [4, 32, 128], strides = [1, 1, 1]} : vector<4x64x128xf32> to vector<4x32x128xf32>
    %94 = vector.extract_strided_slice %92 {offsets = [0, 32, 0], sizes = [4, 32, 128], strides = [1, 1, 1]} : vector<4x64x128xf32> to vector<4x32x128xf32>
    %95 = arith.maximumf %93, %94 : vector<4x32x128xf32>
    %c0_78 = arith.constant 0 : index
    %c0_79 = arith.constant 0 : index
    %c0_80 = arith.constant 0 : index
    %96 = vector.load %arg7[%c0_78, %c0_79, %c0_80] : memref<4x32x128xf32, #tpu.memory_space<vmem>>, vector<4x32x128xf32>
    tpu.vector_store %arg7[%c0_78, %c0_79, %c0_80], %95 {strides = array<i32>} : memref<4x32x128xf32, #tpu.memory_space<vmem>>, vector<4x32x128xf32>,
    %c0_81 = arith.constant 0 : index
    %c0_82 = arith.constant 0 : index
    %c0_83 = arith.constant 0 : index
    %97 = tpu.strided_load %arg7[%c0_81, %c0_82, %c0_83] {strides = array<i32: 1, 2, 1>} : memref<4x32x128xf32, #tpu.memory_space<vmem>>, vector<4x12x128xf32>
    %c0_84 = arith.constant 0 : index
    %c1_85 = arith.constant 1 : index
    %c0_86 = arith.constant 0 : index
    %98 = tpu.strided_load %arg7[%c0_84, %c1_85, %c0_86] {strides = array<i32: 1, 2, 1>} : memref<4x32x128xf32, #tpu.memory_space<vmem>>, vector<4x12x128xf32>
    %99 = arith.maximumf %97, %98 : vector<4x12x128xf32>
    %c0_87 = arith.constant 0 : index
    %c0_88 = arith.constant 0 : index
    %c0_89 = arith.constant 0 : index
    %c0_90 = arith.constant 0 : index
    %100 = vector.load %arg6[%c0_87, %c0_88, %c0_89, %c0_90] : memref<1x4x12x128xf32, #tpu.memory_space<vmem>>, vector<1x4x12x128xf32>
    %101 = vector.shape_cast %100 : vector<1x4x12x128xf32> to vector<4x12x128xf32>
    %102 = vector.shape_cast %99 : vector<4x12x128xf32> to vector<1x4x12x128xf32>
    tpu.vector_store %arg6[%c0_87, %c0_88, %c0_89, %c0_90], %102 {strides = array<i32>} : memref<1x4x12x128xf32, #tpu.memory_space<vmem>>, vector<1x4x12x128xf32>,
    return
  }
  func.func @transform_0(%arg0: i32, %arg1: i32) -> (i32, i32, i32) {
    %c0_i32 = arith.constant 0 : i32
    %c0_i32_0 = arith.constant 0 : i32
    %c0_i32_1 = arith.constant 0 : i32
    return %arg0, %c0_i32, %c0_i32_0 : i32, i32, i32
  }
  func.func @transform_1(%arg0: i32, %arg1: i32) -> (i32, i32, i32, i32) {
    %c0_i32 = arith.constant 0 : i32
    %c0_i32_0 = arith.constant 0 : i32
    %c0_i32_1 = arith.constant 0 : i32
    %c0_i32_2 = arith.constant 0 : i32
    %c0_i32_3 = arith.constant 0 : i32
    return %c0_i32, %c0_i32_0, %c0_i32_1, %c0_i32_2 : i32, i32, i32, i32
  }
  func.func @transform_2(%arg0: i32, %arg1: i32) -> (i32, i32) {
    %c0_i32 = arith.constant 0 : i32
    %c0_i32_0 = arith.constant 0 : i32
    %c0_i32_1 = arith.constant 0 : i32
    return %c0_i32, %c0_i32_0 : i32, i32
  }
  func.func @transform_3(%arg0: i32, %arg1: i32) -> (i32, i32) {
    %c0_i32 = arith.constant 0 : i32
    %c0_i32_0 = arith.constant 0 : i32
    %c0_i32_1 = arith.constant 0 : i32
    return %c0_i32, %c0_i32_0 : i32, i32
  }
  func.func @transform_4(%arg0: i32, %arg1: i32) -> (i32, i32, i32, i32) {
    %c0_i32 = arith.constant 0 : i32
    %c0_i32_0 = arith.constant 0 : i32
    %c0_i32_1 = arith.constant 0 : i32
    return %arg0, %arg1, %c0_i32, %c0_i32_0 : i32, i32, i32, i32
  }
}

module attributes {stable_mosaic.version = 11 : i64} {
  func.func @_conv_bn_relu_pool_kernel(%arg0: i32, %arg1: i32, %arg2: memref<1x240x128xf32, #tpu.memory_space<vmem>>, %arg3: memref<3x3x128x128xf32, #tpu.memory_space<vmem>>, %arg4: memref<1x128xf32, #tpu.memory_space<vmem>>, %arg5: memref<1x128xf32, #tpu.memory_space<vmem>>, %arg6: memref<1x6x6x128xf32, #tpu.memory_space<vmem>>, %arg7: memref<6x16x128xf32, #tpu.memory_space<vmem>>) attributes {dimension_semantics = [#tpu.dimension_semantics<parallel>, #tpu.dimension_semantics<parallel>], iteration_bounds = array<i64: 2, 1>, scalar_prefetch = 0 : i64, scratch_operands = 1 : i64, tpu.core_type = #tpu.core_type<tc>, window_params = [{transform_indices = @transform_0, window_bounds = array<i64: 1, 240, 128>}, {pipeline_mode = #tpu.pipeline_mode<synchronous>, transform_indices = @transform_1, window_bounds = array<i64: 3, 3, 128, 128>}, {pipeline_mode = #tpu.pipeline_mode<synchronous>, transform_indices = @transform_2, window_bounds = array<i64: 1, 128>}, {pipeline_mode = #tpu.pipeline_mode<synchronous>, transform_indices = @transform_3, window_bounds = array<i64: 1, 128>}, {transform_indices = @transform_4, window_bounds = array<i64: 1, 6, 6, 128>}]} {
    %c192_i32 = arith.constant 192 : i32
    %0 = arith.muli %arg1, %c192_i32 : i32
    %1 = tpu.assume_multiple %0, 8 : i32
    %cst = arith.constant 0.000000e+00 : f32
    %2 = vector.broadcast %cst : f32 to vector<192x128xf32>
    %c0_i32 = arith.constant 0 : i32
    %3 = arith.addi %1, %c0_i32 : i32
    %c0_i32_0 = arith.constant 0 : i32
    %4 = arith.addi %3, %c0_i32_0 : i32
    %c0 = arith.constant 0 : index
    %5 = arith.index_cast %4 : i32 to index
    %c0_1 = arith.constant 0 : index
    %6 = vector.load %arg2[%c0, %5, %c0_1] : memref<1x240x128xf32, #tpu.memory_space<vmem>>, vector<1x192x128xf32>
    %7 = vector.shape_cast %6 : vector<1x192x128xf32> to vector<192x128xf32>
    %c0_2 = arith.constant 0 : index
    %c0_3 = arith.constant 0 : index
    %c0_4 = arith.constant 0 : index
    %c0_5 = arith.constant 0 : index
    %8 = vector.load %arg3[%c0_2, %c0_3, %c0_4, %c0_5] : memref<3x3x128x128xf32, #tpu.memory_space<vmem>>, vector<1x1x128x128xf32>
    %9 = vector.shape_cast %8 : vector<1x1x128x128xf32> to vector<128x128xf32>
    %cst_6 = arith.constant dense<0.000000e+00> : vector<192x128xf32>
    %10 = tpu.matmul %7, %9, %cst_6 {dimension_numbers = #tpu.dot_dimension_numbers<[1], [0], [0], [1], [0, 0, 1, 1], [], []>} : vector<192x128xf32>, vector<128x128xf32>, vector<192x128xf32> -> vector<192x128xf32>
    %11 = arith.addf %2, %10 : vector<192x128xf32>
    %c0_i32_7 = arith.constant 0 : i32
    %12 = arith.addi %1, %c0_i32_7 : i32
    %c1_i32 = arith.constant 1 : i32
    %13 = arith.addi %12, %c1_i32 : i32
    %c0_8 = arith.constant 0 : index
    %14 = arith.index_cast %13 : i32 to index
    %c0_9 = arith.constant 0 : index
    %15 = vector.load %arg2[%c0_8, %14, %c0_9] : memref<1x240x128xf32, #tpu.memory_space<vmem>>, vector<1x192x128xf32>
    %16 = vector.shape_cast %15 : vector<1x192x128xf32> to vector<192x128xf32>
    %c0_10 = arith.constant 0 : index
    %c1 = arith.constant 1 : index
    %c0_11 = arith.constant 0 : index
    %c0_12 = arith.constant 0 : index
    %17 = vector.load %arg3[%c0_10, %c1, %c0_11, %c0_12] : memref<3x3x128x128xf32, #tpu.memory_space<vmem>>, vector<1x1x128x128xf32>
    %18 = vector.shape_cast %17 : vector<1x1x128x128xf32> to vector<128x128xf32>
    %cst_13 = arith.constant dense<0.000000e+00> : vector<192x128xf32>
    %19 = tpu.matmul %16, %18, %cst_13 {dimension_numbers = #tpu.dot_dimension_numbers<[1], [0], [0], [1], [0, 0, 1, 1], [], []>} : vector<192x128xf32>, vector<128x128xf32>, vector<192x128xf32> -> vector<192x128xf32>
    %20 = arith.addf %11, %19 : vector<192x128xf32>
    %c0_i32_14 = arith.constant 0 : i32
    %21 = arith.addi %1, %c0_i32_14 : i32
    %c2_i32 = arith.constant 2 : i32
    %22 = arith.addi %21, %c2_i32 : i32
    %c0_15 = arith.constant 0 : index
    %23 = arith.index_cast %22 : i32 to index
    %c0_16 = arith.constant 0 : index
    %24 = vector.load %arg2[%c0_15, %23, %c0_16] : memref<1x240x128xf32, #tpu.memory_space<vmem>>, vector<1x192x128xf32>
    %25 = vector.shape_cast %24 : vector<1x192x128xf32> to vector<192x128xf32>
    %c0_17 = arith.constant 0 : index
    %c2 = arith.constant 2 : index
    %c0_18 = arith.constant 0 : index
    %c0_19 = arith.constant 0 : index
    %26 = vector.load %arg3[%c0_17, %c2, %c0_18, %c0_19] : memref<3x3x128x128xf32, #tpu.memory_space<vmem>>, vector<1x1x128x128xf32>
    %27 = vector.shape_cast %26 : vector<1x1x128x128xf32> to vector<128x128xf32>
    %cst_20 = arith.constant dense<0.000000e+00> : vector<192x128xf32>
    %28 = tpu.matmul %25, %27, %cst_20 {dimension_numbers = #tpu.dot_dimension_numbers<[1], [0], [0], [1], [0, 0, 1, 1], [], []>} : vector<192x128xf32>, vector<128x128xf32>, vector<192x128xf32> -> vector<192x128xf32>
    %29 = arith.addf %20, %28 : vector<192x128xf32>
    %c16_i32 = arith.constant 16 : i32
    %30 = arith.addi %1, %c16_i32 : i32
    %c0_i32_21 = arith.constant 0 : i32
    %31 = arith.addi %30, %c0_i32_21 : i32
    %c0_22 = arith.constant 0 : index
    %32 = arith.index_cast %31 : i32 to index
    %c0_23 = arith.constant 0 : index
    %33 = vector.load %arg2[%c0_22, %32, %c0_23] : memref<1x240x128xf32, #tpu.memory_space<vmem>>, vector<1x192x128xf32>
    %34 = vector.shape_cast %33 : vector<1x192x128xf32> to vector<192x128xf32>
    %c1_24 = arith.constant 1 : index
    %c0_25 = arith.constant 0 : index
    %c0_26 = arith.constant 0 : index
    %c0_27 = arith.constant 0 : index
    %35 = vector.load %arg3[%c1_24, %c0_25, %c0_26, %c0_27] : memref<3x3x128x128xf32, #tpu.memory_space<vmem>>, vector<1x1x128x128xf32>
    %36 = vector.shape_cast %35 : vector<1x1x128x128xf32> to vector<128x128xf32>
    %cst_28 = arith.constant dense<0.000000e+00> : vector<192x128xf32>
    %37 = tpu.matmul %34, %36, %cst_28 {dimension_numbers = #tpu.dot_dimension_numbers<[1], [0], [0], [1], [0, 0, 1, 1], [], []>} : vector<192x128xf32>, vector<128x128xf32>, vector<192x128xf32> -> vector<192x128xf32>
    %38 = arith.addf %29, %37 : vector<192x128xf32>
    %c16_i32_29 = arith.constant 16 : i32
    %39 = arith.addi %1, %c16_i32_29 : i32
    %c1_i32_30 = arith.constant 1 : i32
    %40 = arith.addi %39, %c1_i32_30 : i32
    %c0_31 = arith.constant 0 : index
    %41 = arith.index_cast %40 : i32 to index
    %c0_32 = arith.constant 0 : index
    %42 = vector.load %arg2[%c0_31, %41, %c0_32] : memref<1x240x128xf32, #tpu.memory_space<vmem>>, vector<1x192x128xf32>
    %43 = vector.shape_cast %42 : vector<1x192x128xf32> to vector<192x128xf32>
    %c1_33 = arith.constant 1 : index
    %c1_34 = arith.constant 1 : index
    %c0_35 = arith.constant 0 : index
    %c0_36 = arith.constant 0 : index
    %44 = vector.load %arg3[%c1_33, %c1_34, %c0_35, %c0_36] : memref<3x3x128x128xf32, #tpu.memory_space<vmem>>, vector<1x1x128x128xf32>
    %45 = vector.shape_cast %44 : vector<1x1x128x128xf32> to vector<128x128xf32>
    %cst_37 = arith.constant dense<0.000000e+00> : vector<192x128xf32>
    %46 = tpu.matmul %43, %45, %cst_37 {dimension_numbers = #tpu.dot_dimension_numbers<[1], [0], [0], [1], [0, 0, 1, 1], [], []>} : vector<192x128xf32>, vector<128x128xf32>, vector<192x128xf32> -> vector<192x128xf32>
    %47 = arith.addf %38, %46 : vector<192x128xf32>
    %c16_i32_38 = arith.constant 16 : i32
    %48 = arith.addi %1, %c16_i32_38 : i32
    %c2_i32_39 = arith.constant 2 : i32
    %49 = arith.addi %48, %c2_i32_39 : i32
    %c0_40 = arith.constant 0 : index
    %50 = arith.index_cast %49 : i32 to index
    %c0_41 = arith.constant 0 : index
    %51 = vector.load %arg2[%c0_40, %50, %c0_41] : memref<1x240x128xf32, #tpu.memory_space<vmem>>, vector<1x192x128xf32>
    %52 = vector.shape_cast %51 : vector<1x192x128xf32> to vector<192x128xf32>
    %c1_42 = arith.constant 1 : index
    %c2_43 = arith.constant 2 : index
    %c0_44 = arith.constant 0 : index
    %c0_45 = arith.constant 0 : index
    %53 = vector.load %arg3[%c1_42, %c2_43, %c0_44, %c0_45] : memref<3x3x128x128xf32, #tpu.memory_space<vmem>>, vector<1x1x128x128xf32>
    %54 = vector.shape_cast %53 : vector<1x1x128x128xf32> to vector<128x128xf32>
    %cst_46 = arith.constant dense<0.000000e+00> : vector<192x128xf32>
    %55 = tpu.matmul %52, %54, %cst_46 {dimension_numbers = #tpu.dot_dimension_numbers<[1], [0], [0], [1], [0, 0, 1, 1], [], []>} : vector<192x128xf32>, vector<128x128xf32>, vector<192x128xf32> -> vector<192x128xf32>
    %56 = arith.addf %47, %55 : vector<192x128xf32>
    %c32_i32 = arith.constant 32 : i32
    %57 = arith.addi %1, %c32_i32 : i32
    %c0_i32_47 = arith.constant 0 : i32
    %58 = arith.addi %57, %c0_i32_47 : i32
    %c0_48 = arith.constant 0 : index
    %59 = arith.index_cast %58 : i32 to index
    %c0_49 = arith.constant 0 : index
    %60 = vector.load %arg2[%c0_48, %59, %c0_49] : memref<1x240x128xf32, #tpu.memory_space<vmem>>, vector<1x192x128xf32>
    %61 = vector.shape_cast %60 : vector<1x192x128xf32> to vector<192x128xf32>
    %c2_50 = arith.constant 2 : index
    %c0_51 = arith.constant 0 : index
    %c0_52 = arith.constant 0 : index
    %c0_53 = arith.constant 0 : index
    %62 = vector.load %arg3[%c2_50, %c0_51, %c0_52, %c0_53] : memref<3x3x128x128xf32, #tpu.memory_space<vmem>>, vector<1x1x128x128xf32>
    %63 = vector.shape_cast %62 : vector<1x1x128x128xf32> to vector<128x128xf32>
    %cst_54 = arith.constant dense<0.000000e+00> : vector<192x128xf32>
    %64 = tpu.matmul %61, %63, %cst_54 {dimension_numbers = #tpu.dot_dimension_numbers<[1], [0], [0], [1], [0, 0, 1, 1], [], []>} : vector<192x128xf32>, vector<128x128xf32>, vector<192x128xf32> -> vector<192x128xf32>
    %65 = arith.addf %56, %64 : vector<192x128xf32>
    %c32_i32_55 = arith.constant 32 : i32
    %66 = arith.addi %1, %c32_i32_55 : i32
    %c1_i32_56 = arith.constant 1 : i32
    %67 = arith.addi %66, %c1_i32_56 : i32
    %c0_57 = arith.constant 0 : index
    %68 = arith.index_cast %67 : i32 to index
    %c0_58 = arith.constant 0 : index
    %69 = vector.load %arg2[%c0_57, %68, %c0_58] : memref<1x240x128xf32, #tpu.memory_space<vmem>>, vector<1x192x128xf32>
    %70 = vector.shape_cast %69 : vector<1x192x128xf32> to vector<192x128xf32>
    %c2_59 = arith.constant 2 : index
    %c1_60 = arith.constant 1 : index
    %c0_61 = arith.constant 0 : index
    %c0_62 = arith.constant 0 : index
    %71 = vector.load %arg3[%c2_59, %c1_60, %c0_61, %c0_62] : memref<3x3x128x128xf32, #tpu.memory_space<vmem>>, vector<1x1x128x128xf32>
    %72 = vector.shape_cast %71 : vector<1x1x128x128xf32> to vector<128x128xf32>
    %cst_63 = arith.constant dense<0.000000e+00> : vector<192x128xf32>
    %73 = tpu.matmul %70, %72, %cst_63 {dimension_numbers = #tpu.dot_dimension_numbers<[1], [0], [0], [1], [0, 0, 1, 1], [], []>} : vector<192x128xf32>, vector<128x128xf32>, vector<192x128xf32> -> vector<192x128xf32>
    %74 = arith.addf %65, %73 : vector<192x128xf32>
    %c32_i32_64 = arith.constant 32 : i32
    %75 = arith.addi %1, %c32_i32_64 : i32
    %c2_i32_65 = arith.constant 2 : i32
    %76 = arith.addi %75, %c2_i32_65 : i32
    %c0_66 = arith.constant 0 : index
    %77 = arith.index_cast %76 : i32 to index
    %c0_67 = arith.constant 0 : index
    %78 = vector.load %arg2[%c0_66, %77, %c0_67] : memref<1x240x128xf32, #tpu.memory_space<vmem>>, vector<1x192x128xf32>
    %79 = vector.shape_cast %78 : vector<1x192x128xf32> to vector<192x128xf32>
    %c2_68 = arith.constant 2 : index
    %c2_69 = arith.constant 2 : index
    %c0_70 = arith.constant 0 : index
    %c0_71 = arith.constant 0 : index
    %80 = vector.load %arg3[%c2_68, %c2_69, %c0_70, %c0_71] : memref<3x3x128x128xf32, #tpu.memory_space<vmem>>, vector<1x1x128x128xf32>
    %81 = vector.shape_cast %80 : vector<1x1x128x128xf32> to vector<128x128xf32>
    %cst_72 = arith.constant dense<0.000000e+00> : vector<192x128xf32>
    %82 = tpu.matmul %79, %81, %cst_72 {dimension_numbers = #tpu.dot_dimension_numbers<[1], [0], [0], [1], [0, 0, 1, 1], [], []>} : vector<192x128xf32>, vector<128x128xf32>, vector<192x128xf32> -> vector<192x128xf32>
    %83 = arith.addf %74, %82 : vector<192x128xf32>
    %c0_73 = arith.constant 0 : index
    %c0_74 = arith.constant 0 : index
    %84 = vector.load %arg4[%c0_73, %c0_74] : memref<1x128xf32, #tpu.memory_space<vmem>>, vector<1x128xf32>
    %85 = vector.broadcast %84 : vector<1x128xf32> to vector<192x128xf32>
    %86 = arith.mulf %83, %85 : vector<192x128xf32>
    %c0_75 = arith.constant 0 : index
    %c0_76 = arith.constant 0 : index
    %87 = vector.load %arg5[%c0_75, %c0_76] : memref<1x128xf32, #tpu.memory_space<vmem>>, vector<1x128xf32>
    %88 = vector.broadcast %87 : vector<1x128xf32> to vector<192x128xf32>
    %89 = arith.addf %86, %88 : vector<192x128xf32>
    %cst_77 = arith.constant 0.000000e+00 : f32
    %90 = vector.broadcast %cst_77 : f32 to vector<192x128xf32>
    %91 = arith.maximumf %89, %90 : vector<192x128xf32>
    %92 = vector.shape_cast %91 : vector<192x128xf32> to vector<6x32x128xf32>
    %93 = vector.extract_strided_slice %92 {offsets = [0, 0, 0], sizes = [6, 16, 128], strides = [1, 1, 1]} : vector<6x32x128xf32> to vector<6x16x128xf32>
    %94 = vector.extract_strided_slice %92 {offsets = [0, 16, 0], sizes = [6, 16, 128], strides = [1, 1, 1]} : vector<6x32x128xf32> to vector<6x16x128xf32>
    %95 = arith.maximumf %93, %94 : vector<6x16x128xf32>
    %c0_78 = arith.constant 0 : index
    %c0_79 = arith.constant 0 : index
    %c0_80 = arith.constant 0 : index
    %96 = vector.load %arg7[%c0_78, %c0_79, %c0_80] : memref<6x16x128xf32, #tpu.memory_space<vmem>>, vector<6x16x128xf32>
    tpu.vector_store %arg7[%c0_78, %c0_79, %c0_80], %95 {strides = array<i32>} : memref<6x16x128xf32, #tpu.memory_space<vmem>>, vector<6x16x128xf32>,
    %c0_81 = arith.constant 0 : index
    %c0_82 = arith.constant 0 : index
    %c0_83 = arith.constant 0 : index
    %97 = tpu.strided_load %arg7[%c0_81, %c0_82, %c0_83] {strides = array<i32: 1, 2, 1>} : memref<6x16x128xf32, #tpu.memory_space<vmem>>, vector<6x6x128xf32>
    %c0_84 = arith.constant 0 : index
    %c1_85 = arith.constant 1 : index
    %c0_86 = arith.constant 0 : index
    %98 = tpu.strided_load %arg7[%c0_84, %c1_85, %c0_86] {strides = array<i32: 1, 2, 1>} : memref<6x16x128xf32, #tpu.memory_space<vmem>>, vector<6x6x128xf32>
    %99 = arith.maximumf %97, %98 : vector<6x6x128xf32>
    %c0_87 = arith.constant 0 : index
    %c0_88 = arith.constant 0 : index
    %c0_89 = arith.constant 0 : index
    %c0_90 = arith.constant 0 : index
    %100 = vector.load %arg6[%c0_87, %c0_88, %c0_89, %c0_90] : memref<1x6x6x128xf32, #tpu.memory_space<vmem>>, vector<1x6x6x128xf32>
    %101 = vector.shape_cast %100 : vector<1x6x6x128xf32> to vector<6x6x128xf32>
    %102 = vector.shape_cast %99 : vector<6x6x128xf32> to vector<1x6x6x128xf32>
    tpu.vector_store %arg6[%c0_87, %c0_88, %c0_89, %c0_90], %102 {strides = array<i32>} : memref<1x6x6x128xf32, #tpu.memory_space<vmem>>, vector<1x6x6x128xf32>,
    return
  }
  func.func @transform_0(%arg0: i32, %arg1: i32) -> (i32, i32, i32) {
    %c0_i32 = arith.constant 0 : i32
    %c0_i32_0 = arith.constant 0 : i32
    %c0_i32_1 = arith.constant 0 : i32
    return %arg0, %c0_i32, %c0_i32_0 : i32, i32, i32
  }
  func.func @transform_1(%arg0: i32, %arg1: i32) -> (i32, i32, i32, i32) {
    %c0_i32 = arith.constant 0 : i32
    %c0_i32_0 = arith.constant 0 : i32
    %c0_i32_1 = arith.constant 0 : i32
    %c0_i32_2 = arith.constant 0 : i32
    %c0_i32_3 = arith.constant 0 : i32
    return %c0_i32, %c0_i32_0, %c0_i32_1, %c0_i32_2 : i32, i32, i32, i32
  }
  func.func @transform_2(%arg0: i32, %arg1: i32) -> (i32, i32) {
    %c0_i32 = arith.constant 0 : i32
    %c0_i32_0 = arith.constant 0 : i32
    %c0_i32_1 = arith.constant 0 : i32
    return %c0_i32, %c0_i32_0 : i32, i32
  }
  func.func @transform_3(%arg0: i32, %arg1: i32) -> (i32, i32) {
    %c0_i32 = arith.constant 0 : i32
    %c0_i32_0 = arith.constant 0 : i32
    %c0_i32_1 = arith.constant 0 : i32
    return %c0_i32, %c0_i32_0 : i32, i32
  }
  func.func @transform_4(%arg0: i32, %arg1: i32) -> (i32, i32, i32, i32) {
    %c0_i32 = arith.constant 0 : i32
    %c0_i32_0 = arith.constant 0 : i32
    %c0_i32_1 = arith.constant 0 : i32
    return %arg0, %arg1, %c0_i32, %c0_i32_0 : i32, i32, i32, i32
  }
}

module attributes {stable_mosaic.version = 11 : i64} {
  func.func @_mlp_kernel(%arg0: i32, %arg1: memref<2x1152xf32, #tpu.memory_space<vmem>>, %arg2: memref<1152x512xf32, #tpu.memory_space<vmem>>, %arg3: memref<1x512xf32, #tpu.memory_space<vmem>>, %arg4: memref<512x256xf32, #tpu.memory_space<vmem>>, %arg5: memref<1x256xf32, #tpu.memory_space<vmem>>, %arg6: memref<256x7xf32, #tpu.memory_space<vmem>>, %arg7: memref<1x7xf32, #tpu.memory_space<vmem>>, %arg8: memref<2x7xf32, #tpu.memory_space<vmem>>, %arg9: memref<2x512xf32, #tpu.memory_space<vmem>>) attributes {dimension_semantics = [#tpu.dimension_semantics<arbitrary>], iteration_bounds = array<i64: 4>, scalar_prefetch = 0 : i64, scratch_operands = 1 : i64, tpu.core_type = #tpu.core_type<tc>, window_params = [{transform_indices = @transform_0, window_bounds = array<i64: 2, 1152>}, {transform_indices = @transform_1, window_bounds = array<i64: 1152, 512>}, {pipeline_mode = #tpu.pipeline_mode<synchronous>, transform_indices = @transform_2, window_bounds = array<i64: 1, 512>}, {pipeline_mode = #tpu.pipeline_mode<synchronous>, transform_indices = @transform_3, window_bounds = array<i64: 512, 256>}, {pipeline_mode = #tpu.pipeline_mode<synchronous>, transform_indices = @transform_4, window_bounds = array<i64: 1, 256>}, {pipeline_mode = #tpu.pipeline_mode<synchronous>, transform_indices = @transform_5, window_bounds = array<i64: 256, 7>}, {pipeline_mode = #tpu.pipeline_mode<synchronous>, transform_indices = @transform_6, window_bounds = array<i64: 1, 7>}, {pipeline_mode = #tpu.pipeline_mode<synchronous>, transform_indices = @transform_7, window_bounds = array<i64: 2, 7>}]} {
    %c0_i32 = arith.constant 0 : i32
    %0 = arith.cmpi eq, %arg0, %c0_i32 : i32
    %1 = arith.extui %0 : i1 to i32
    %c0_i32_0 = arith.constant 0 : i32
    %2 = arith.cmpi ne, %1, %c0_i32_0 : i32
    scf.if %2 {
      %cst_9 = arith.constant 0.000000e+00 : f32
      %12 = vector.broadcast %cst_9 : f32 to vector<2x512xf32>
      %c0_10 = arith.constant 0 : index
      %c0_11 = arith.constant 0 : index
      %13 = vector.load %arg9[%c0_10, %c0_11] : memref<2x512xf32, #tpu.memory_space<vmem>>, vector<2x512xf32>
      tpu.vector_store %arg9[%c0_10, %c0_11], %12 {strides = array<i32>} : memref<2x512xf32, #tpu.memory_space<vmem>>, vector<2x512xf32>,
    } else {
    }
    %c0 = arith.constant 0 : index
    %c0_1 = arith.constant 0 : index
    %3 = vector.load %arg9[%c0, %c0_1] : memref<2x512xf32, #tpu.memory_space<vmem>>, vector<2x512xf32>
    %c0_2 = arith.constant 0 : index
    %c0_3 = arith.constant 0 : index
    %4 = vector.load %arg1[%c0_2, %c0_3] : memref<2x1152xf32, #tpu.memory_space<vmem>>, vector<2x1152xf32>
    %c0_4 = arith.constant 0 : index
    %c0_5 = arith.constant 0 : index
    %5 = vector.load %arg2[%c0_4, %c0_5] : memref<1152x512xf32, #tpu.memory_space<vmem>>, vector<1152x512xf32>
    %cst = arith.constant dense<0.000000e+00> : vector<2x512xf32>
    %6 = tpu.matmul %4, %5, %cst {dimension_numbers = #tpu.dot_dimension_numbers<[1], [0], [0], [1], [0, 0, 1, 1], [], []>} : vector<2x1152xf32>, vector<1152x512xf32>, vector<2x512xf32> -> vector<2x512xf32>
    %7 = arith.addf %3, %6 : vector<2x512xf32>
    %c0_6 = arith.constant 0 : index
    %c0_7 = arith.constant 0 : index
    %8 = vector.load %arg9[%c0_6, %c0_7] : memref<2x512xf32, #tpu.memory_space<vmem>>, vector<2x512xf32>
    tpu.vector_store %arg9[%c0_6, %c0_7], %7 {strides = array<i32>} : memref<2x512xf32, #tpu.memory_space<vmem>>, vector<2x512xf32>,
    %c3_i32 = arith.constant 3 : i32
    %9 = arith.cmpi eq, %arg0, %c3_i32 : i32
    %10 = arith.extui %9 : i1 to i32
    %c0_i32_8 = arith.constant 0 : i32
    %11 = arith.cmpi ne, %10, %c0_i32_8 : i32
    scf.if %11 {
      %c0_9 = arith.constant 0 : index
      %c0_10 = arith.constant 0 : index
      %12 = vector.load %arg9[%c0_9, %c0_10] : memref<2x512xf32, #tpu.memory_space<vmem>>, vector<2x512xf32>
      %c0_11 = arith.constant 0 : index
      %c0_12 = arith.constant 0 : index
      %13 = vector.load %arg3[%c0_11, %c0_12] : memref<1x512xf32, #tpu.memory_space<vmem>>, vector<1x512xf32>
      %14 = vector.broadcast %13 : vector<1x512xf32> to vector<2x512xf32>
      %15 = arith.addf %12, %14 : vector<2x512xf32>
      %cst_13 = arith.constant 0.000000e+00 : f32
      %16 = vector.broadcast %cst_13 : f32 to vector<2x512xf32>
      %17 = arith.maximumf %15, %16 : vector<2x512xf32>
      %c0_14 = arith.constant 0 : index
      %c0_15 = arith.constant 0 : index
      %18 = vector.load %arg4[%c0_14, %c0_15] : memref<512x256xf32, #tpu.memory_space<vmem>>, vector<512x256xf32>
      %cst_16 = arith.constant dense<0.000000e+00> : vector<2x256xf32>
      %19 = tpu.matmul %17, %18, %cst_16 {dimension_numbers = #tpu.dot_dimension_numbers<[1], [0], [0], [1], [0, 0, 1, 1], [], []>} : vector<2x512xf32>, vector<512x256xf32>, vector<2x256xf32> -> vector<2x256xf32>
      %c0_17 = arith.constant 0 : index
      %c0_18 = arith.constant 0 : index
      %20 = vector.load %arg5[%c0_17, %c0_18] : memref<1x256xf32, #tpu.memory_space<vmem>>, vector<1x256xf32>
      %21 = vector.broadcast %20 : vector<1x256xf32> to vector<2x256xf32>
      %22 = arith.addf %19, %21 : vector<2x256xf32>
      %cst_19 = arith.constant 0.000000e+00 : f32
      %23 = vector.broadcast %cst_19 : f32 to vector<2x256xf32>
      %24 = arith.maximumf %22, %23 : vector<2x256xf32>
      %c0_20 = arith.constant 0 : index
      %c0_21 = arith.constant 0 : index
      %25 = vector.load %arg6[%c0_20, %c0_21] : memref<256x7xf32, #tpu.memory_space<vmem>>, vector<256x7xf32>
      %cst_22 = arith.constant dense<0.000000e+00> : vector<2x7xf32>
      %26 = tpu.matmul %24, %25, %cst_22 {dimension_numbers = #tpu.dot_dimension_numbers<[1], [0], [0], [1], [0, 0, 1, 1], [], []>} : vector<2x256xf32>, vector<256x7xf32>, vector<2x7xf32> -> vector<2x7xf32>
      %c0_23 = arith.constant 0 : index
      %c0_24 = arith.constant 0 : index
      %27 = vector.load %arg7[%c0_23, %c0_24] : memref<1x7xf32, #tpu.memory_space<vmem>>, vector<1x7xf32>
      %28 = vector.broadcast %27 : vector<1x7xf32> to vector<2x7xf32>
      %29 = arith.addf %26, %28 : vector<2x7xf32>
      %c0_25 = arith.constant 0 : index
      %c0_26 = arith.constant 0 : index
      %30 = vector.load %arg8[%c0_25, %c0_26] : memref<2x7xf32, #tpu.memory_space<vmem>>, vector<2x7xf32>
      tpu.vector_store %arg8[%c0_25, %c0_26], %29 {strides = array<i32>} : memref<2x7xf32, #tpu.memory_space<vmem>>, vector<2x7xf32>,
    } else {
    }
    return
  }
  func.func @transform_0(%arg0: i32) -> (i32, i32) {
    %c0_i32 = arith.constant 0 : i32
    %c0_i32_0 = arith.constant 0 : i32
    return %c0_i32, %arg0 : i32, i32
  }
  func.func @transform_1(%arg0: i32) -> (i32, i32) {
    %c0_i32 = arith.constant 0 : i32
    %c0_i32_0 = arith.constant 0 : i32
    return %arg0, %c0_i32 : i32, i32
  }
  func.func @transform_2(%arg0: i32) -> (i32, i32) {
    %c0_i32 = arith.constant 0 : i32
    %c0_i32_0 = arith.constant 0 : i32
    %c0_i32_1 = arith.constant 0 : i32
    return %c0_i32, %c0_i32_0 : i32, i32
  }
  func.func @transform_3(%arg0: i32) -> (i32, i32) {
    %c0_i32 = arith.constant 0 : i32
    %c0_i32_0 = arith.constant 0 : i32
    %c0_i32_1 = arith.constant 0 : i32
    return %c0_i32, %c0_i32_0 : i32, i32
  }
  func.func @transform_4(%arg0: i32) -> (i32, i32) {
    %c0_i32 = arith.constant 0 : i32
    %c0_i32_0 = arith.constant 0 : i32
    %c0_i32_1 = arith.constant 0 : i32
    return %c0_i32, %c0_i32_0 : i32, i32
  }
  func.func @transform_5(%arg0: i32) -> (i32, i32) {
    %c0_i32 = arith.constant 0 : i32
    %c0_i32_0 = arith.constant 0 : i32
    %c0_i32_1 = arith.constant 0 : i32
    return %c0_i32, %c0_i32_0 : i32, i32
  }
  func.func @transform_6(%arg0: i32) -> (i32, i32) {
    %c0_i32 = arith.constant 0 : i32
    %c0_i32_0 = arith.constant 0 : i32
    %c0_i32_1 = arith.constant 0 : i32
    return %c0_i32, %c0_i32_0 : i32, i32
  }
  func.func @transform_7(%arg0: i32) -> (i32, i32) {
    %c0_i32 = arith.constant 0 : i32
    %c0_i32_0 = arith.constant 0 : i32
    %c0_i32_1 = arith.constant 0 : i32
    return %c0_i32, %c0_i32_0 : i32, i32
  }
}

</mosaic_0001>

<llo_original>
// kernel: vgg16_forward.4
$region0: #{vgg16_forward.4}
  #allocation0 [shape = 'u32[]', space=smem, size = 0x4, offset = 0x4, fixed_abs, tag = 'smem constant byte address 0x4 - core index']
  #allocation1 [shape = 'u32[72,128]{1,0:T(1,128)}', space=vmem, size = 0x9000, scoped, tag = 'internal scratch']
  #allocation2 [shape = 'f32[2,56,64]{2,1,0:T(8,128)}', space=vmem, size = 0xe000, scoped, tag = 'scratch operand']
  %s0 = inlined_call_operand.vmem [shape: f32[2,2856,8], index: 0, kind: input, shape index: {}]
  %s1 = inlined_call_operand.vmem [shape: f32[3,3,8,64], index: 1, kind: input, shape index: {}]
  %s2 = inlined_call_operand.vmem [shape: f32[1,64], index: 2, kind: input, shape index: {}]
  %s3 = inlined_call_operand.vmem [shape: f32[1,64], index: 3, kind: input, shape index: {}]
  %s4 = inlined_call_operand.vmem [shape: f32[2,24,24,64], index: 4, kind: output, shape index: {}]
  %s5 = sld [smem:[#allocation0]]
  $region49: #{vgg16_forward.4} parent=0
    _
  %s7 = ssub.s32 1, %s5
  %s8 = scalar_select 0, %s7, %s5
  loop: start=0, step=1, limit=26
  $region2: #{vgg16_forward.4} parent=0 // loop_pre_header
    _
  $region3: #{vgg16_forward.4} parent=0 // loop_header
    %s10 = sphi 0, %s14
    %p11 = scmp.ge.s32.totalorder %s10, 26
    %s17 = sphi 0, %s29
    %s18 = sphi 0, %s25
    %s19 = sphi 0, %s17
    %s20 = sphi 0, %s18
    %s21 = sphi 0, %s19
    %s22 = sphi 0, %s20
    %s32 = sphi 0, %s34
    %s35 = sphi 0, %s32
    %s36 = sphi 0, %s35
    %s52 = sphi 0, %s36
    %s56 = sphi 0, %s56
    %s58 = sphi 0, %s56
    %s59 = sphi 0, %s58
    %s73 = sphi 0, %s59
    %s77 = sphi 0, %s77
    %s79 = sphi 0, %s77
    %s80 = sphi 0, %s79
    %s94 = sphi 0, %s80
    %s98 = sphi 0, %s98
    %s100 = sphi 0, %s98
    %s101 = sphi 0, %s100
    %s115 = sphi 0, %s101
    %s123 = sphi 0, %s125
    %s126 = sphi 0, %s123
    %s127 = sphi 0, %s126
    %s143 = sphi 0, %s127
  $region4: #{vgg16_forward.4} parent=0 // loop_header_branch
    %13 = sbr.rel (%p11) target = $region8
  $region5: #{vgg16_forward.4} parent=0 // loop_body
    %s15 = ssub.s32 %s10, 1
    %s16 = ssub.s32 %s10, 2
    %s23 = sadd.s32 1, %s18
    %p24 = scmp.ge.s32.totalorder %s23, 12
    %s25 = scalar_select %p24, 0, %s23
    %s26 = sadd.s32 1, %s17
    %s27 = scalar_select %p24, %s26, %s17
    %p28 = scmp.ge.s32.totalorder %s27, 2
    %s29 = scalar_select %p28, 0, %s27
    %s30 = ssub.s32 %s17, %s29
    %p31 = scmp.eq.s32.totalorder %s30, 0
    %s33 = sadd.s32 %s32, 1
    %s34 = scalar_select %p31, %s32, %s33
    %p37 = pneg %p31
    %p38 = scmp.eq.s32.totalorder %s10, 23
    %p39 = por %p37, %p38
    %p40 = scmp.ne.s32.totalorder %s32, %s35
    %p41 = scmp.eq.s32.totalorder %s10, 0
    %p42 = por %p40, %p41
    %p43 = scmp.ne.s32.totalorder %s32, %s35
    %p44 = scmp.eq.s32.totalorder %s15, 23
    %p45 = por %p43, %p44
    %p46 = scmp.ne.s32.totalorder %s35, %s36
    %p47 = scmp.eq.s32.totalorder %s15, 0
    %p48 = por %p46, %p47
    %p49 = scmp.ne.s32.totalorder %s35, %s36
    %p50 = scmp.eq.s32.totalorder %s16, 23
    %p51 = por %p49, %p50
    %p53 = scmp.ne.s32.totalorder %s36, %s52
    %p54 = scmp.eq.s32.totalorder %s16, 0
    %p55 = por %p53, %p54
    %s57 = sadd.s32 %s56, 1
    %p60 = scmp.eq.s32.totalorder %s10, 23
    %p61 = scmp.ne.s32.totalorder %s56, %s58
    %p62 = scmp.eq.s32.totalorder %s10, 0
    %p63 = por %p61, %p62
    %p64 = scmp.ne.s32.totalorder %s56, %s58
    %p65 = scmp.eq.s32.totalorder %s15, 23
    %p66 = por %p64, %p65
    %p67 = scmp.ne.s32.totalorder %s58, %s59
    %p68 = scmp.eq.s32.totalorder %s15, 0
    %p69 = por %p67, %p68
    %p70 = scmp.ne.s32.totalorder %s58, %s59
    %p71 = scmp.eq.s32.totalorder %s16, 23
    %p72 = por %p70, %p71
    %p74 = scmp.ne.s32.totalorder %s59, %s73
    %p75 = scmp.eq.s32.totalorder %s16, 0
    %p76 = por %p74, %p75
    %s78 = sadd.s32 %s77, 1
    %p81 = scmp.eq.s32.totalorder %s10, 23
    %p82 = scmp.ne.s32.totalorder %s77, %s79
    %p83 = scmp.eq.s32.totalorder %s10, 0
    %p84 = por %p82, %p83
    %p85 = scmp.ne.s32.totalorder %s77, %s79
    %p86 = scmp.eq.s32.totalorder %s15, 23
    %p87 = por %p85, %p86
    %p88 = scmp.ne.s32.totalorder %s79, %s80
    %p89 = scmp.eq.s32.totalorder %s15, 0
    %p90 = por %p88, %p89
    %p91 = scmp.ne.s32.totalorder %s79, %s80
    %p92 = scmp.eq.s32.totalorder %s16, 23
    %p93 = por %p91, %p92
    %p95 = scmp.ne.s32.totalorder %s80, %s94
    %p96 = scmp.eq.s32.totalorder %s16, 0
    %p97 = por %p95, %p96
    %s99 = sadd.s32 %s98, 1
    %p102 = scmp.eq.s32.totalorder %s10, 23
    %p103 = scmp.ne.s32.totalorder %s98, %s100
    %p104 = scmp.eq.s32.totalorder %s10, 0
    %p105 = por %p103, %p104
    %p106 = scmp.ne.s32.totalorder %s98, %s100
    %p107 = scmp.eq.s32.totalorder %s15, 23
    %p108 = por %p106, %p107
    %p109 = scmp.ne.s32.totalorder %s100, %s101
    %p110 = scmp.eq.s32.totalorder %s15, 0
    %p111 = por %p109, %p110
    %p112 = scmp.ne.s32.totalorder %s100, %s101
    %p113 = scmp.eq.s32.totalorder %s16, 23
    %p114 = por %p112, %p113
    %p116 = scmp.ne.s32.totalorder %s101, %s115
    %p117 = scmp.eq.s32.totalorder %s16, 0
    %p118 = por %p116, %p117
    %s119 = ssub.s32 %s17, %s29
    %s120 = ssub.s32 %s18, %s25
    %s121 = sor.u32 %s119, %s120
    %p122 = scmp.eq.s32.totalorder %s121, 0
    %s124 = sadd.s32 %s123, 1
    %s125 = scalar_select %p122, %s123, %s124
    %p128 = pneg %p122
    %p129 = scmp.eq.s32.totalorder %s10, 23
    %p130 = por %p128, %p129
    %p131 = scmp.ne.s32.totalorder %s123, %s126
    %p132 = scmp.eq.s32.totalorder %s10, 0
    %p133 = por %p131, %p132
    %p134 = scmp.ne.s32.totalorder %s123, %s126
    %p135 = scmp.eq.s32.totalorder %s15, 23
    %p136 = por %p134, %p135
    %p137 = scmp.ne.s32.totalorder %s126, %s127
    %p138 = scmp.eq.s32.totalorder %s15, 0
    %p139 = por %p137, %p138
    %p140 = scmp.ne.s32.totalorder %s126, %s127
    %p141 = scmp.eq.s32.totalorder %s16, 23
    %p142 = por %p140, %p141
    %p144 = scmp.ne.s32.totalorder %s127, %s143
    %p145 = scmp.eq.s32.totalorder %s16, 0
    %p146 = por %p144, %p145
    %p147 = scmp.le.s32.totalorder 1, %s10
    %p148 = scmp.lt.s32.totalorder %s10, 25
    %p149 = pnand %p147, %p148
    %p150 = pneg %p149
    // Predicated region
    $region9: #{vgg16_forward.4} parent=5 // pred_check
      _
    $region10: #{vgg16_forward.4} parent=5 // pred_check_branch
      %152 = sbr.rel (%p149) target = $region12
    $region11: #{vgg16_forward.4} parent=5 // pred_region
      %s153 = ssub.s32 %s10, 1
      // Predicated region
      $region13: #{vgg16_forward.4} parent=11 // pred_check
        %p154 = pneg %p69
      $region14: #{vgg16_forward.4} parent=11 // pred_check_branch
        %156 = sbr.rel (%p154) target = $region16
      $region15: #{vgg16_forward.4} parent=11 // pred_region
        _
      $region16: #{vgg16_forward.4} parent=11 // pred_fallthru
        _
      // Predicated region
      $region17: #{vgg16_forward.4} parent=11 // pred_check
        %p157 = pneg %p90
      $region18: #{vgg16_forward.4} parent=11 // pred_check_branch
        %159 = sbr.rel (%p157) target = $region20
      $region19: #{vgg16_forward.4} parent=11 // pred_region
        _
      $region20: #{vgg16_forward.4} parent=11 // pred_fallthru
        _
      // Predicated region
      $region21: #{vgg16_forward.4} parent=11 // pred_check
        %p160 = pneg %p111
      $region22: #{vgg16_forward.4} parent=11 // pred_check_branch
        %162 = sbr.rel (%p160) target = $region24
      $region23: #{vgg16_forward.4} parent=11 // pred_region
        _
      $region24: #{vgg16_forward.4} parent=11 // pred_fallthru
        _
    $region12: #{vgg16_forward.4} parent=5 // pred_fallthru
      _
    %p163 = scmp.lt.s32.totalorder %s10, 24
    // Predicated region
    $region25: #{vgg16_forward.4} parent=5 // pred_check
      %p164 = pneg %p163
    $region26: #{vgg16_forward.4} parent=5 // pred_check_branch
      %166 = sbr.rel (%p164) target = $region28
    $region27: #{vgg16_forward.4} parent=5 // pred_region
      // Predicated region
      $region29: #{vgg16_forward.4} parent=27 // pred_check
        %p167 = pneg %p42
      $region30: #{vgg16_forward.4} parent=27 // pred_check_branch
        %169 = sbr.rel (%p167) target = $region32
      $region31: #{vgg16_forward.4} parent=27 // pred_region
        %p170 = scmp.lt.s32.totalorder %s17, 1
        %s171 = scalar_select %p170, %s17, 1
        %s172 = smul.addr %s171, 357
        %s173 = smul.addr %s172, 8
        %s174 = scalar_lea.vmem %s0, %s173
      $region32: #{vgg16_forward.4} parent=27 // pred_fallthru
        _
    $region28: #{vgg16_forward.4} parent=5 // pred_fallthru
      _
    %p175 = scmp.le.s32.totalorder 1, %s10
    %p176 = scmp.lt.s32.totalorder %s10, 25
    %p177 = pnand %p175, %p176
    %p178 = pneg %p177
    // Predicated region
    $region33: #{vgg16_forward.4} parent=5 // pred_check
      _
    $region34: #{vgg16_forward.4} parent=5 // pred_check_branch
      %180 = sbr.rel (%p177) target = $region36
    $region35: #{vgg16_forward.4} parent=5 // pred_region
      %s181 = ssub.s32 %s10, 1
      %p182 = scmp.lt.s32.totalorder %s19, 1
      %s183 = scalar_select %p182, %s19, 1
      %s184 = smul.addr %s183, 357
      %s185 = smul.addr %s184, 8
      %s186 = scalar_lea.vmem %s0, %s185
      %p187 = pneg %p48
      %p188 = pneg %p45
      %p189 = pneg %p69
      %p190 = pneg %p66
      %p191 = pneg %p90
      %p192 = pneg %p87
      %p193 = pneg %p111
      %p194 = pneg %p108
      %p195 = pneg %p139
      %p196 = pneg %p136
      %s197 = smul.u32 2, %s20
      %p198 = scmp.lt.s32.totalorder %s19, 1
      %s199 = scalar_select %p198, %s19, 1
      %p200 = scmp.lt.s32.totalorder %s197, 23
      %s201 = scalar_select %p200, %s197, 23
      %s202 = smul.addr %s201, 3
      %s203 = smul.addr %s199, 72
      %s204 = sadd.s32 %s202, %s203
      %s205 = smul.addr %s204, 8
      %s206 = scalar_lea.vmem %s4, %s205
      %p207 = scmp.lt.s32.totalorder %s19, 1
      %s208 = scalar_select %p207, %s19, 1
      %s209 = smul.addr %s208, 357
      %s210 = smul.addr %s209, 8
      %s211 = scalar_lea.vmem %s0, %s210
      %s212 = smul.u32 2, %s20
      %p213 = scmp.lt.s32.totalorder %s19, 1
      %s214 = scalar_select %p213, %s19, 1
      %p215 = scmp.lt.s32.totalorder %s212, 23
      %s216 = scalar_select %p215, %s212, 23
      %s217 = smul.addr %s216, 3
      %s218 = smul.addr %s214, 72
      %s219 = sadd.s32 %s217, %s218
      %s220 = smul.addr %s219, 8
      %s221 = scalar_lea.vmem %s4, %s220
      %s222 = smul.u32 2, %s20
      %s223 = smul.u32 %s20, 224
      %s224 = scalar_lea.vmem %s211, %s223
      %v225 = vld [vmem:[%s224] sm:$0xff]
      %v226 = vld [vmem:[%s224 + $0x8] sm:$0xff]
      %v227 = vld [vmem:[%s224 + $0x10] sm:$0xff]
      %v228 = vld [vmem:[%s224 + $0x18] sm:$0xff]
      %v229 = vld [vmem:[%s224 + $0x20] sm:$0xff]
      %v230 = vld [vmem:[%s224 + $0x28] sm:$0xff]
      %v231 = vld [vmem:[%s224 + $0x30] sm:$0xff]
      %v232 = vld [vmem:[%s224 + $0x38] sm:$0xff]
      %v233 = vld [vmem:[%s224 + $0x40] sm:$0xff]
      %v234 = vld [vmem:[%s224 + $0x48] sm:$0xff]
      %v235 = vld [vmem:[%s224 + $0x50] sm:$0xff]
      %v236 = vld [vmem:[%s224 + $0x58] sm:$0xff]
      %v237 = vld [vmem:[%s224 + $0x60] sm:$0xff]
      %v238 = vld [vmem:[%s224 + $0x68] sm:$0xff]
      %v239 = vld [vmem:[%s224 + $0x70] sm:$0xff]
      %v240 = vld [vmem:[%s224 + $0x78] sm:$0xff]
      %v241 = vld [vmem:[%s224 + $0x80] sm:$0xff]
      %v242 = vld [vmem:[%s224 + $0x88] sm:$0xff]
      %v243 = vld [vmem:[%s224 + $0x90] sm:$0xff]
      %v244 = vld [vmem:[%s224 + $0x98] sm:$0xff]
      %v245 = vld [vmem:[%s224 + $0xa0] sm:$0xff]
      %v246 = vld [vmem:[%s224 + $0xa8] sm:$0xff]
      %v247 = vld [vmem:[%s224 + $0xb0] sm:$0xff]
      %v248 = vld [vmem:[%s224 + $0xb8] sm:$0xff]
      %v249 = vld [vmem:[%s224 + $0xc0] sm:$0xff]
      %v250 = vld [vmem:[%s224 + $0xc8] sm:$0xff]
      %v251 = vld [vmem:[%s224 + $0xd0] sm:$0xff]
      %v252 = vld [vmem:[%s224 + $0xd8] sm:$0xff]
      %v253 = vld [vmem:[%s1] sm:$0xff]
      %s254 = sadd.s32 %s223, 1
      %s255 = scalar_lea.vmem %s211, %s254
      %v256 = vld [vmem:[%s255] sm:$0xff]
      %v257 = vld [vmem:[%s255 + $0x8] sm:$0xff]
      %v258 = vld [vmem:[%s255 + $0x10] sm:$0xff]
      %v259 = vld [vmem:[%s255 + $0x18] sm:$0xff]
      %v260 = vld [vmem:[%s255 + $0x20] sm:$0xff]
      %v261 = vld [vmem:[%s255 + $0x28] sm:$0xff]
      %v262 = vld [vmem:[%s255 + $0x30] sm:$0xff]
      %v263 = vld [vmem:[%s255 + $0x38] sm:$0xff]
      %v264 = vld [vmem:[%s255 + $0x40] sm:$0xff]
      %v265 = vld [vmem:[%s255 + $0x48] sm:$0xff]
      %v266 = vld [vmem:[%s255 + $0x50] sm:$0xff]
      %v267 = vld [vmem:[%s255 + $0x58] sm:$0xff]
      %v268 = vld [vmem:[%s255 + $0x60] sm:$0xff]
      %v269 = vld [vmem:[%s255 + $0x68] sm:$0xff]
      %v270 = vld [vmem:[%s255 + $0x70] sm:$0xff]
      %v271 = vld [vmem:[%s255 + $0x78] sm:$0xff]
      %v272 = vld [vmem:[%s255 + $0x80] sm:$0xff]
      %v273 = vld [vmem:[%s255 + $0x88] sm:$0xff]
      %v274 = vld [vmem:[%s255 + $0x90] sm:$0xff]
      %v275 = vld [vmem:[%s255 + $0x98] sm:$0xff]
      %v276 = vld [vmem:[%s255 + $0xa0] sm:$0xff]
      %v277 = vld [vmem:[%s255 + $0xa8] sm:$0xff]
      %v278 = vld [vmem:[%s255 + $0xb0] sm:$0xff]
      %v279 = vld [vmem:[%s255 + $0xb8] sm:$0xff]
      %v280 = vld [vmem:[%s255 + $0xc0] sm:$0xff]
      %v281 = vld [vmem:[%s255 + $0xc8] sm:$0xff]
      %v282 = vld [vmem:[%s255 + $0xd0] sm:$0xff]
      %v283 = vld [vmem:[%s255 + $0xd8] sm:$0xff]
      %s284 = scalar_lea.vmem %s1, 8
      %v285 = vld [vmem:[%s284] sm:$0xff]
      %vm286 = vcmask 64512
      %v288 = vsel %vm286, %v256, 0
      %v291 = vsel %vm286, %v257, 0
      %v294 = vsel %vm286, %v258, 0
      %v297 = vsel %vm286, %v259, 0
      %v300 = vsel %vm286, %v260, 0
      %v303 = vsel %vm286, %v261, 0
      %v306 = vsel %vm286, %v262, 0
      %v309 = vsel %vm286, %v263, 0
      %v312 = vsel %vm286, %v264, 0
      %v315 = vsel %vm286, %v265, 0
      %v318 = vsel %vm286, %v266, 0
      %v321 = vsel %vm286, %v267, 0
      %v324 = vsel %vm286, %v268, 0
      %v327 = vsel %vm286, %v269, 0
      %v330 = vsel %vm286, %v270, 0
      %v333 = vsel %vm286, %v271, 0
      %v336 = vsel %vm286, %v272, 0
      %v339 = vsel %vm286, %v273, 0
      %v342 = vsel %vm286, %v274, 0
      %v345 = vsel %vm286, %v275, 0
      %v348 = vsel %vm286, %v276, 0
      %v351 = vsel %vm286, %v277, 0
      %v354 = vsel %vm286, %v278, 0
      %v357 = vsel %vm286, %v279, 0
      %v360 = vsel %vm286, %v280, 0
      %v363 = vsel %vm286, %v281, 0
      %v366 = vsel %vm286, %v282, 0
      %v369 = vsel %vm286, %v283, 0
      %371 = vmatpush.msra.mxu0 0.0
      %372 = vmatpush.msra.mxu0 0.0
      %373 = vmatpush.msra.mxu0 0.0
      %374 = vmatpush.msra.mxu0 0.0
      %375 = vmatpush.msra.mxu0 0.0
      %376 = vmatpush.msra.mxu0 0.0
      %377 = vmatpush.msra.mxu0 0.0
      %378 = vmatpush.msra.mxu0 0.0
      %379 = vmatpush.msra.mxu0 0.0
      %380 = vmatpush.msra.mxu0 0.0
      %381 = vmatpush.msra.mxu0 0.0
      %382 = vmatpush.msra.mxu0 0.0
      %383 = vmatpush.msra.mxu0 0.0
      %384 = vmatpush.msra.mxu0 0.0
      %385 = vmatpush.msra.mxu0 0.0
      %386 = vmatpush.msra.mxu0 %v285
      %387 = vmatmul.f32.gmra.mxu0 %v288
      %v388 = vpop.f32.mrf.mxu0
      %v389 = vadd.f32 0.0, %v388
      %390 = vmatmul.f32.gmra.mxu0 %v291
      %v391 = vpop.f32.mrf.mxu0
      %v392 = vadd.f32 0.0, %v391
      %393 = vmatmul.f32.gmra.mxu0 %v294
      %v394 = vpop.f32.mrf.mxu0
      %v395 = vadd.f32 0.0, %v394
      %396 = vmatmul.f32.gmra.mxu0 %v297
      %v397 = vpop.f32.mrf.mxu0
      %v398 = vadd.f32 0.0, %v397
      %399 = vmatmul.f32.gmra.mxu0 %v300
      %v400 = vpop.f32.mrf.mxu0
      %v401 = vadd.f32 0.0, %v400
      %402 = vmatmul.f32.gmra.mxu0 %v303
      %v403 = vpop.f32.mrf.mxu0
      %v404 = vadd.f32 0.0, %v403
      %405 = vmatmul.f32.gmra.mxu0 %v306
      %v406 = vpop.f32.mrf.mxu0
      %v407 = vadd.f32 0.0, %v406
      %408 = vmatmul.f32.gmra.mxu0 %v309
      %v409 = vpop.f32.mrf.mxu0
      %v410 = vadd.f32 0.0, %v409
      %411 = vmatmul.f32.gmra.mxu0 %v312
      %v412 = vpop.f32.mrf.mxu0
      %v413 = vadd.f32 0.0, %v412
      %414 = vmatmul.f32.gmra.mxu0 %v315
      %v415 = vpop.f32.mrf.mxu0
      %v416 = vadd.f32 0.0, %v415
      %417 = vmatmul.f32.gmra.mxu0 %v318
      %v418 = vpop.f32.mrf.mxu0
      %v419 = vadd.f32 0.0, %v418
      %420 = vmatmul.f32.gmra.mxu0 %v321
      %v421 = vpop.f32.mrf.mxu0
      %v422 = vadd.f32 0.0, %v421
      %423 = vmatmul.f32.gmra.mxu0 %v324
      %v424 = vpop.f32.mrf.mxu0
      %v425 = vadd.f32 0.0, %v424
      %426 = vmatmul.f32.gmra.mxu0 %v327
      %v427 = vpop.f32.mrf.mxu0
      %v428 = vadd.f32 0.0, %v427
      %429 = vmatmul.f32.gmra.mxu0 %v330
      %v430 = vpop.f32.mrf.mxu0
      %v431 = vadd.f32 0.0, %v430
      %432 = vmatmul.f32.gmra.mxu0 %v333
      %v433 = vpop.f32.mrf.mxu0
      %v434 = vadd.f32 0.0, %v433
      %435 = vmatmul.f32.gmra.mxu0 %v336
      %v436 = vpop.f32.mrf.mxu0
      %v437 = vadd.f32 0.0, %v436
      %438 = vmatmul.f32.gmra.mxu0 %v339
      %v439 = vpop.f32.mrf.mxu0
      %v440 = vadd.f32 0.0, %v439
      %441 = vmatmul.f32.gmra.mxu0 %v342
      %v442 = vpop.f32.mrf.mxu0
      %v443 = vadd.f32 0.0, %v442
      %444 = vmatmul.f32.gmra.mxu0 %v345
      %v445 = vpop.f32.mrf.mxu0
      %v446 = vadd.f32 0.0, %v445
      %447 = vmatmul.f32.gmra.mxu0 %v348
      %v448 = vpop.f32.mrf.mxu0
      %v449 = vadd.f32 0.0, %v448
      %450 = vmatmul.f32.gmra.mxu0 %v351
      %v451 = vpop.f32.mrf.mxu0
      %v452 = vadd.f32 0.0, %v451
      %453 = vmatmul.f32.gmra.mxu0 %v354
      %v454 = vpop.f32.mrf.mxu0
      %v455 = vadd.f32 0.0, %v454
      %456 = vmatmul.f32.gmra.mxu0 %v357
      %v457 = vpop.f32.mrf.mxu0
      %v458 = vadd.f32 0.0, %v457
      %459 = vmatmul.f32.gmra.mxu0 %v360
      %v460 = vpop.f32.mrf.mxu0
      %v461 = vadd.f32 0.0, %v460
      %462 = vmatmul.f32.gmra.mxu0 %v363
      %v463 = vpop.f32.mrf.mxu0
      %v464 = vadd.f32 0.0, %v463
      %465 = vmatmul.f32.gmra.mxu0 %v366
      %v466 = vpop.f32.mrf.mxu0
      %v467 = vadd.f32 0.0, %v466
      %468 = vmatmul.f32.gmra.mxu0 %v369
      %v469 = vpop.f32.mrf.mxu0
      %v470 = vadd.f32 0.0, %v469
      %471 = vdwg.mxu0
      %v473 = vsel %vm286, %v225, 0
      %v476 = vsel %vm286, %v226, 0
      %v479 = vsel %vm286, %v227, 0
      %v482 = vsel %vm286, %v228, 0
      %v485 = vsel %vm286, %v229, 0
      %v488 = vsel %vm286, %v230, 0
      %v491 = vsel %vm286, %v231, 0
      %v494 = vsel %vm286, %v232, 0
      %v497 = vsel %vm286, %v233, 0
      %v500 = vsel %vm286, %v234, 0
      %v503 = vsel %vm286, %v235, 0
      %v506 = vsel %vm286, %v236, 0
      %v509 = vsel %vm286, %v237, 0
      %v512 = vsel %vm286, %v238, 0
      %v515 = vsel %vm286, %v239, 0
      %v518 = vsel %vm286, %v240, 0
      %v521 = vsel %vm286, %v241, 0
      %v524 = vsel %vm286, %v242, 0
      %v527 = vsel %vm286, %v243, 0
      %v530 = vsel %vm286, %v244, 0
      %v533 = vsel %vm286, %v245, 0
      %v536 = vsel %vm286, %v246, 0
      %v539 = vsel %vm286, %v247, 0
      %v542 = vsel %vm286, %v248, 0
      %v545 = vsel %vm286, %v249, 0
      %v548 = vsel %vm286, %v250, 0
      %v551 = vsel %vm286, %v251, 0
      %v554 = vsel %vm286, %v252, 0
      %556 = vmatpush.msra.mxu0 0.0
      %557 = vmatpush.msra.mxu0 0.0
      %558 = vmatpush.msra.mxu0 0.0
      %559 = vmatpush.msra.mxu0 0.0
      %560 = vmatpush.msra.mxu0 0.0
      %561 = vmatpush.msra.mxu0 0.0
      %562 = vmatpush.msra.mxu0 0.0
      %563 = vmatpush.msra.mxu0 0.0
      %564 = vmatpush.msra.mxu0 0.0
      %565 = vmatpush.msra.mxu0 0.0
      %566 = vmatpush.msra.mxu0 0.0
      %567 = vmatpush.msra.mxu0 0.0
      %568 = vmatpush.msra.mxu0 0.0
      %569 = vmatpush.msra.mxu0 0.0
      %570 = vmatpush.msra.mxu0 0.0
      %571 = vmatpush.msra.mxu0 %v253
      %572 = vmatmul.f32.gmra.mxu0 %v473
      %v573 = vpop.f32.mrf.mxu0
      %v574 = vadd.f32 %v389, %v573
      %575 = vmatmul.f32.gmra.mxu0 %v476
      %v576 = vpop.f32.mrf.mxu0
      %v577 = vadd.f32 %v392, %v576
      %578 = vmatmul.f32.gmra.mxu0 %v479
      %v579 = vpop.f32.mrf.mxu0
      %v580 = vadd.f32 %v395, %v579
      %581 = vmatmul.f32.gmra.mxu0 %v482
      %v582 = vpop.f32.mrf.mxu0
      %v583 = vadd.f32 %v398, %v582
      %584 = vmatmul.f32.gmra.mxu0 %v485
      %v585 = vpop.f32.mrf.mxu0
      %v586 = vadd.f32 %v401, %v585
      %587 = vmatmul.f32.gmra.mxu0 %v488
      %v588 = vpop.f32.mrf.mxu0
      %v589 = vadd.f32 %v404, %v588
      %590 = vmatmul.f32.gmra.mxu0 %v491
      %v591 = vpop.f32.mrf.mxu0
      %v592 = vadd.f32 %v407, %v591
      %593 = vmatmul.f32.gmra.mxu0 %v494
      %v594 = vpop.f32.mrf.mxu0
      %v595 = vadd.f32 %v410, %v594
      %596 = vmatmul.f32.gmra.mxu0 %v497
      %v597 = vpop.f32.mrf.mxu0
      %v598 = vadd.f32 %v413, %v597
      %599 = vmatmul.f32.gmra.mxu0 %v500
      %v600 = vpop.f32.mrf.mxu0
      %v601 = vadd.f32 %v416, %v600
      %602 = vmatmul.f32.gmra.mxu0 %v503
      %v603 = vpop.f32.mrf.mxu0
      %v604 = vadd.f32 %v419, %v603
      %605 = vmatmul.f32.gmra.mxu0 %v506
      %v606 = vpop.f32.mrf.mxu0
      %v607 = vadd.f32 %v422, %v606
      %608 = vmatmul.f32.gmra.mxu0 %v509
      %v609 = vpop.f32.mrf.mxu0
      %v610 = vadd.f32 %v425, %v609
      %611 = vmatmul.f32.gmra.mxu0 %v512
      %v612 = vpop.f32.mrf.mxu0
      %v613 = vadd.f32 %v428, %v612
      %614 = vmatmul.f32.gmra.mxu0 %v515
      %v615 = vpop.f32.mrf.mxu0
      %v616 = vadd.f32 %v431, %v615
      %617 = vmatmul.f32.gmra.mxu0 %v518
      %v618 = vpop.f32.mrf.mxu0
      %v619 = vadd.f32 %v434, %v618
      %620 = vmatmul.f32.gmra.mxu0 %v521
      %v621 = vpop.f32.mrf.mxu0
      %v622 = vadd.f32 %v437, %v621
      %623 = vmatmul.f32.gmra.mxu0 %v524
      %v624 = vpop.f32.mrf.mxu0
      %v625 = vadd.f32 %v440, %v624
      %626 = vmatmul.f32.gmra.mxu0 %v527
      %v627 = vpop.f32.mrf.mxu0
      %v628 = vadd.f32 %v443, %v627
      %629 = vmatmul.f32.gmra.mxu0 %v530
      %v630 = vpop.f32.mrf.mxu0
      %v631 = vadd.f32 %v446, %v630
      %632 = vmatmul.f32.gmra.mxu0 %v533
      %v633 = vpop.f32.mrf.mxu0
      %v634 = vadd.f32 %v449, %v633
      %635 = vmatmul.f32.gmra.mxu0 %v536
      %v636 = vpop.f32.mrf.mxu0
      %v637 = vadd.f32 %v452, %v636
      %638 = vmatmul.f32.gmra.mxu0 %v539
      %v639 = vpop.f32.mrf.mxu0
      %v640 = vadd.f32 %v455, %v639
      %641 = vmatmul.f32.gmra.mxu0 %v542
      %v642 = vpop.f32.mrf.mxu0
      %v643 = vadd.f32 %v458, %v642
      %644 = vmatmul.f32.gmra.mxu0 %v545
      %v645 = vpop.f32.mrf.mxu0
      %v646 = vadd.f32 %v461, %v645
      %647 = vmatmul.f32.gmra.mxu0 %v548
      %v648 = vpop.f32.mrf.mxu0
      %v649 = vadd.f32 %v464, %v648
      %650 = vmatmul.f32.gmra.mxu0 %v551
      %v651 = vpop.f32.mrf.mxu0
      %v652 = vadd.f32 %v467, %v651
      %653 = vmatmul.f32.gmra.mxu0 %v554
      %v654 = vpop.f32.mrf.mxu0
      %v655 = vadd.f32 %v470, %v654
      %656 = vdwg.mxu0
      %s657 = sadd.s32 %s223, 2
      %s658 = scalar_lea.vmem %s211, %s657
      %v659 = vld [vmem:[%s658] sm:$0xff]
      %v660 = vld [vmem:[%s658 + $0x8] sm:$0xff]
      %v661 = vld [vmem:[%s658 + $0x10] sm:$0xff]
      %v662 = vld [vmem:[%s658 + $0x18] sm:$0xff]
      %v663 = vld [vmem:[%s658 + $0x20] sm:$0xff]
      %v664 = vld [vmem:[%s658 + $0x28] sm:$0xff]
      %v665 = vld [vmem:[%s658 + $0x30] sm:$0xff]
      %v666 = vld [vmem:[%s658 + $0x38] sm:$0xff]
      %v667 = vld [vmem:[%s658 + $0x40] sm:$0xff]
      %v668 = vld [vmem:[%s658 + $0x48] sm:$0xff]
      %v669 = vld [vmem:[%s658 + $0x50] sm:$0xff]
      %v670 = vld [vmem:[%s658 + $0x58] sm:$0xff]
      %v671 = vld [vmem:[%s658 + $0x60] sm:$0xff]
      %v672 = vld [vmem:[%s658 + $0x68] sm:$0xff]
      %v673 = vld [vmem:[%s658 + $0x70] sm:$0xff]
      %v674 = vld [vmem:[%s658 + $0x78] sm:$0xff]
      %v675 = vld [vmem:[%s658 + $0x80] sm:$0xff]
      %v676 = vld [vmem:[%s658 + $0x88] sm:$0xff]
      %v677 = vld [vmem:[%s658 + $0x90] sm:$0xff]
      %v678 = vld [vmem:[%s658 + $0x98] sm:$0xff]
      %v679 = vld [vmem:[%s658 + $0xa0] sm:$0xff]
      %v680 = vld [vmem:[%s658 + $0xa8] sm:$0xff]
      %v681 = vld [vmem:[%s658 + $0xb0] sm:$0xff]
      %v682 = vld [vmem:[%s658 + $0xb8] sm:$0xff]
      %v683 = vld [vmem:[%s658 + $0xc0] sm:$0xff]
      %v684 = vld [vmem:[%s658 + $0xc8] sm:$0xff]
      %v685 = vld [vmem:[%s658 + $0xd0] sm:$0xff]
      %v686 = vld [vmem:[%s658 + $0xd8] sm:$0xff]
      %s687 = scalar_lea.vmem %s1, 16
      %v688 = vld [vmem:[%s687] sm:$0xff]
      %v690 = vsel %vm286, %v659, 0
      %v693 = vsel %vm286, %v660, 0
      %v696 = vsel %vm286, %v661, 0
      %v699 = vsel %vm286, %v662, 0
      %v702 = vsel %vm286, %v663, 0
      %v705 = vsel %vm286, %v664, 0
      %v708 = vsel %vm286, %v665, 0
      %v711 = vsel %vm286, %v666, 0
      %v714 = vsel %vm286, %v667, 0
      %v717 = vsel %vm286, %v668, 0
      %v720 = vsel %vm286, %v669, 0
      %v723 = vsel %vm286, %v670, 0
      %v726 = vsel %vm286, %v671, 0
      %v729 = vsel %vm286, %v672, 0
      %v732 = vsel %vm286, %v673, 0
      %v735 = vsel %vm286, %v674, 0
      %v738 = vsel %vm286, %v675, 0
      %v741 = vsel %vm286, %v676, 0
      %v744 = vsel %vm286, %v677, 0
      %v747 = vsel %vm286, %v678, 0
      %v750 = vsel %vm286, %v679, 0
      %v753 = vsel %vm286, %v680, 0
      %v756 = vsel %vm286, %v681, 0
      %v759 = vsel %vm286, %v682, 0
      %v762 = vsel %vm286, %v683, 0
      %v765 = vsel %vm286, %v684, 0
      %v768 = vsel %vm286, %v685, 0
      %v771 = vsel %vm286, %v686, 0
      %773 = vmatpush.msra.mxu0 0.0
      %774 = vmatpush.msra.mxu0 0.0
      %775 = vmatpush.msra.mxu0 0.0
      %776 = vmatpush.msra.mxu0 0.0
      %777 = vmatpush.msra.mxu0 0.0
      %778 = vmatpush.msra.mxu0 0.0
      %779 = vmatpush.msra.mxu0 0.0
      %780 = vmatpush.msra.mxu0 0.0
      %781 = vmatpush.msra.mxu0 0.0
      %782 = vmatpush.msra.mxu0 0.0
      %783 = vmatpush.msra.mxu0 0.0
      %784 = vmatpush.msra.mxu0 0.0
      %785 = vmatpush.msra.mxu0 0.0
      %786 = vmatpush.msra.mxu0 0.0
      %787 = vmatpush.msra.mxu0 0.0
      %788 = vmatpush.msra.mxu0 %v688
      %789 = vmatmul.f32.gmra.mxu0 %v690
      %v790 = vpop.f32.mrf.mxu0
      %v791 = vadd.f32 0.0, %v790
      %792 = vmatmul.f32.gmra.mxu0 %v693
      %v793 = vpop.f32.mrf.mxu0
      %v794 = vadd.f32 0.0, %v793
      %795 = vmatmul.f32.gmra.mxu0 %v696
      %v796 = vpop.f32.mrf.mxu0
      %v797 = vadd.f32 0.0, %v796
      %798 = vmatmul.f32.gmra.mxu0 %v699
      %v799 = vpop.f32.mrf.mxu0
      %v800 = vadd.f32 0.0, %v799
      %801 = vmatmul.f32.gmra.mxu0 %v702
      %v802 = vpop.f32.mrf.mxu0
      %v803 = vadd.f32 0.0, %v802
      %804 = vmatmul.f32.gmra.mxu0 %v705
      %v805 = vpop.f32.mrf.mxu0
      %v806 = vadd.f32 0.0, %v805
      %807 = vmatmul.f32.gmra.mxu0 %v708
      %v808 = vpop.f32.mrf.mxu0
      %v809 = vadd.f32 0.0, %v808
      %810 = vmatmul.f32.gmra.mxu0 %v711
      %v811 = vpop.f32.mrf.mxu0
      %v812 = vadd.f32 0.0, %v811
      %813 = vmatmul.f32.gmra.mxu0 %v714
      %v814 = vpop.f32.mrf.mxu0
      %v815 = vadd.f32 0.0, %v814
      %816 = vmatmul.f32.gmra.mxu0 %v717
      %v817 = vpop.f32.mrf.mxu0
      %v818 = vadd.f32 0.0, %v817
      %819 = vmatmul.f32.gmra.mxu0 %v720
      %v820 = vpop.f32.mrf.mxu0
      %v821 = vadd.f32 0.0, %v820
      %822 = vmatmul.f32.gmra.mxu0 %v723
      %v823 = vpop.f32.mrf.mxu0
      %v824 = vadd.f32 0.0, %v823
      %825 = vmatmul.f32.gmra.mxu0 %v726
      %v826 = vpop.f32.mrf.mxu0
      %v827 = vadd.f32 0.0, %v826
      %828 = vmatmul.f32.gmra.mxu0 %v729
      %v829 = vpop.f32.mrf.mxu0
      %v830 = vadd.f32 0.0, %v829
      %831 = vmatmul.f32.gmra.mxu0 %v732
      %v832 = vpop.f32.mrf.mxu0
      %v833 = vadd.f32 0.0, %v832
      %834 = vmatmul.f32.gmra.mxu0 %v735
      %v835 = vpop.f32.mrf.mxu0
      %v836 = vadd.f32 0.0, %v835
      %837 = vmatmul.f32.gmra.mxu0 %v738
      %v838 = vpop.f32.mrf.mxu0
      %v839 = vadd.f32 0.0, %v838
      %840 = vmatmul.f32.gmra.mxu0 %v741
      %v841 = vpop.f32.mrf.mxu0
      %v842 = vadd.f32 0.0, %v841
      %843 = vmatmul.f32.gmra.mxu0 %v744
      %v844 = vpop.f32.mrf.mxu0
      %v845 = vadd.f32 0.0, %v844
      %846 = vmatmul.f32.gmra.mxu0 %v747
      %v847 = vpop.f32.mrf.mxu0
      %v848 = vadd.f32 0.0, %v847
      %849 = vmatmul.f32.gmra.mxu0 %v750
      %v850 = vpop.f32.mrf.mxu0
      %v851 = vadd.f32 0.0, %v850
      %852 = vmatmul.f32.gmra.mxu0 %v753
      %v853 = vpop.f32.mrf.mxu0
      %v854 = vadd.f32 0.0, %v853
      %855 = vmatmul.f32.gmra.mxu0 %v756
      %v856 = vpop.f32.mrf.mxu0
      %v857 = vadd.f32 0.0, %v856
      %858 = vmatmul.f32.gmra.mxu0 %v759
      %v859 = vpop.f32.mrf.mxu0
      %v860 = vadd.f32 0.0, %v859
      %861 = vmatmul.f32.gmra.mxu0 %v762
      %v862 = vpop.f32.mrf.mxu0
      %v863 = vadd.f32 0.0, %v862
      %864 = vmatmul.f32.gmra.mxu0 %v765
      %v865 = vpop.f32.mrf.mxu0
      %v866 = vadd.f32 0.0, %v865
      %867 = vmatmul.f32.gmra.mxu0 %v768
      %v868 = vpop.f32.mrf.mxu0
      %v869 = vadd.f32 0.0, %v868
      %870 = vmatmul.f32.gmra.mxu0 %v771
      %v871 = vpop.f32.mrf.mxu0
      %v872 = vadd.f32 0.0, %v871
      %873 = vdwg.mxu0
      %v874 = vadd.f32 %v574, %v791
      %v875 = vadd.f32 %v577, %v794
      %v876 = vadd.f32 %v580, %v797
      %v877 = vadd.f32 %v583, %v800
      %v878 = vadd.f32 %v586, %v803
      %v879 = vadd.f32 %v589, %v806
      %v880 = vadd.f32 %v592, %v809
      %v881 = vadd.f32 %v595, %v812
      %v882 = vadd.f32 %v598, %v815
      %v883 = vadd.f32 %v601, %v818
      %v884 = vadd.f32 %v604, %v821
      %v885 = vadd.f32 %v607, %v824
      %v886 = vadd.f32 %v610, %v827
      %v887 = vadd.f32 %v613, %v830
      %v888 = vadd.f32 %v616, %v833
      %v889 = vadd.f32 %v619, %v836
      %v890 = vadd.f32 %v622, %v839
      %v891 = vadd.f32 %v625, %v842
      %v892 = vadd.f32 %v628, %v845
      %v893 = vadd.f32 %v631, %v848
      %v894 = vadd.f32 %v634, %v851
      %v895 = vadd.f32 %v637, %v854
      %v896 = vadd.f32 %v640, %v857
      %v897 = vadd.f32 %v643, %v860
      %v898 = vadd.f32 %v646, %v863
      %v899 = vadd.f32 %v649, %v866
      %v900 = vadd.f32 %v652, %v869
      %v901 = vadd.f32 %v655, %v872
      %s902 = sadd.s32 %s223, 56
      %s903 = scalar_lea.vmem %s211, %s902
      %v904 = vld [vmem:[%s903] sm:$0xff]
      %v905 = vld [vmem:[%s903 + $0x8] sm:$0xff]
      %v906 = vld [vmem:[%s903 + $0x10] sm:$0xff]
      %v907 = vld [vmem:[%s903 + $0x18] sm:$0xff]
      %v908 = vld [vmem:[%s903 + $0x20] sm:$0xff]
      %v909 = vld [vmem:[%s903 + $0x28] sm:$0xff]
      %v910 = vld [vmem:[%s903 + $0x30] sm:$0xff]
      %v911 = vld [vmem:[%s903 + $0x38] sm:$0xff]
      %v912 = vld [vmem:[%s903 + $0x40] sm:$0xff]
      %v913 = vld [vmem:[%s903 + $0x48] sm:$0xff]
      %v914 = vld [vmem:[%s903 + $0x50] sm:$0xff]
      %v915 = vld [vmem:[%s903 + $0x58] sm:$0xff]
      %v916 = vld [vmem:[%s903 + $0x60] sm:$0xff]
      %v917 = vld [vmem:[%s903 + $0x68] sm:$0xff]
      %v918 = vld [vmem:[%s903 + $0x70] sm:$0xff]
      %v919 = vld [vmem:[%s903 + $0x78] sm:$0xff]
      %v920 = vld [vmem:[%s903 + $0x80] sm:$0xff]
      %v921 = vld [vmem:[%s903 + $0x88] sm:$0xff]
      %v922 = vld [vmem:[%s903 + $0x90] sm:$0xff]
      %v923 = vld [vmem:[%s903 + $0x98] sm:$0xff]
      %v924 = vld [vmem:[%s903 + $0xa0] sm:$0xff]
      %v925 = vld [vmem:[%s903 + $0xa8] sm:$0xff]
      %v926 = vld [vmem:[%s903 + $0xb0] sm:$0xff]
      %v927 = vld [vmem:[%s903 + $0xb8] sm:$0xff]
      %v928 = vld [vmem:[%s903 + $0xc0] sm:$0xff]
      %v929 = vld [vmem:[%s903 + $0xc8] sm:$0xff]
      %v930 = vld [vmem:[%s903 + $0xd0] sm:$0xff]
      %v931 = vld [vmem:[%s903 + $0xd8] sm:$0xff]
      %s932 = scalar_lea.vmem %s1, 24
      %v933 = vld [vmem:[%s932] sm:$0xff]
      %v935 = vsel %vm286, %v904, 0
      %v938 = vsel %vm286, %v905, 0
      %v941 = vsel %vm286, %v906, 0
      %v944 = vsel %vm286, %v907, 0
      %v947 = vsel %vm286, %v908, 0
      %v950 = vsel %vm286, %v909, 0
      %v953 = vsel %vm286, %v910, 0
      %v956 = vsel %vm286, %v911, 0
      %v959 = vsel %vm286, %v912, 0
      %v962 = vsel %vm286, %v913, 0
      %v965 = vsel %vm286, %v914, 0
      %v968 = vsel %vm286, %v915, 0
      %v971 = vsel %vm286, %v916, 0
      %v974 = vsel %vm286, %v917, 0
      %v977 = vsel %vm286, %v918, 0
      %v980 = vsel %vm286, %v919, 0
      %v983 = vsel %vm286, %v920, 0
      %v986 = vsel %vm286, %v921, 0
      %v989 = vsel %vm286, %v922, 0
      %v992 = vsel %vm286, %v923, 0
      %v995 = vsel %vm286, %v924, 0
      %v998 = vsel %vm286, %v925, 0
      %v1001 = vsel %vm286, %v926, 0
      %v1004 = vsel %vm286, %v927, 0
      %v1007 = vsel %vm286, %v928, 0
      %v1010 = vsel %vm286, %v929, 0
      %v1013 = vsel %vm286, %v930, 0
      %v1016 = vsel %vm286, %v931, 0
      %1018 = vmatpush.msra.mxu0 0.0
      %1019 = vmatpush.msra.mxu0 0.0
      %1020 = vmatpush.msra.mxu0 0.0
      %1021 = vmatpush.msra.mxu0 0.0
      %1022 = vmatpush.msra.mxu0 0.0
      %1023 = vmatpush.msra.mxu0 0.0
      %1024 = vmatpush.msra.mxu0 0.0
      %1025 = vmatpush.msra.mxu0 0.0
      %1026 = vmatpush.msra.mxu0 0.0
      %1027 = vmatpush.msra.mxu0 0.0
      %1028 = vmatpush.msra.mxu0 0.0
      %1029 = vmatpush.msra.mxu0 0.0
      %1030 = vmatpush.msra.mxu0 0.0
      %1031 = vmatpush.msra.mxu0 0.0
      %1032 = vmatpush.msra.mxu0 0.0
      %1033 = vmatpush.msra.mxu0 %v933
      %1034 = vmatmul.f32.gmra.mxu0 %v935
      %v1035 = vpop.f32.mrf.mxu0
      %v1036 = vadd.f32 0.0, %v1035
      %1037 = vmatmul.f32.gmra.mxu0 %v938
      %v1038 = vpop.f32.mrf.mxu0
      %v1039 = vadd.f32 0.0, %v1038
      %1040 = vmatmul.f32.gmra.mxu0 %v941
      %v1041 = vpop.f32.mrf.mxu0
      %v1042 = vadd.f32 0.0, %v1041
      %1043 = vmatmul.f32.gmra.mxu0 %v944
      %v1044 = vpop.f32.mrf.mxu0
      %v1045 = vadd.f32 0.0, %v1044
      %1046 = vmatmul.f32.gmra.mxu0 %v947
      %v1047 = vpop.f32.mrf.mxu0
      %v1048 = vadd.f32 0.0, %v1047
      %1049 = vmatmul.f32.gmra.mxu0 %v950
      %v1050 = vpop.f32.mrf.mxu0
      %v1051 = vadd.f32 0.0, %v1050
      %1052 = vmatmul.f32.gmra.mxu0 %v953
      %v1053 = vpop.f32.mrf.mxu0
      %v1054 = vadd.f32 0.0, %v1053
      %1055 = vmatmul.f32.gmra.mxu0 %v956
      %v1056 = vpop.f32.mrf.mxu0
      %v1057 = vadd.f32 0.0, %v1056
      %1058 = vmatmul.f32.gmra.mxu0 %v959
      %v1059 = vpop.f32.mrf.mxu0
      %v1060 = vadd.f32 0.0, %v1059
      %1061 = vmatmul.f32.gmra.mxu0 %v962
      %v1062 = vpop.f32.mrf.mxu0
      %v1063 = vadd.f32 0.0, %v1062
      %1064 = vmatmul.f32.gmra.mxu0 %v965
      %v1065 = vpop.f32.mrf.mxu0
      %v1066 = vadd.f32 0.0, %v1065
      %1067 = vmatmul.f32.gmra.mxu0 %v968
      %v1068 = vpop.f32.mrf.mxu0
      %v1069 = vadd.f32 0.0, %v1068
      %1070 = vmatmul.f32.gmra.mxu0 %v971
      %v1071 = vpop.f32.mrf.mxu0
      %v1072 = vadd.f32 0.0, %v1071
      %1073 = vmatmul.f32.gmra.mxu0 %v974
      %v1074 = vpop.f32.mrf.mxu0
      %v1075 = vadd.f32 0.0, %v1074
      %1076 = vmatmul.f32.gmra.mxu0 %v977
      %v1077 = vpop.f32.mrf.mxu0
      %v1078 = vadd.f32 0.0, %v1077
      %1079 = vmatmul.f32.gmra.mxu0 %v980
      %v1080 = vpop.f32.mrf.mxu0
      %v1081 = vadd.f32 0.0, %v1080
      %1082 = vmatmul.f32.gmra.mxu0 %v983
      %v1083 = vpop.f32.mrf.mxu0
      %v1084 = vadd.f32 0.0, %v1083
      %1085 = vmatmul.f32.gmra.mxu0 %v986
      %v1086 = vpop.f32.mrf.mxu0
      %v1087 = vadd.f32 0.0, %v1086
      %1088 = vmatmul.f32.gmra.mxu0 %v989
      %v1089 = vpop.f32.mrf.mxu0
      %v1090 = vadd.f32 0.0, %v1089
      %1091 = vmatmul.f32.gmra.mxu0 %v992
      %v1092 = vpop.f32.mrf.mxu0
      %v1093 = vadd.f32 0.0, %v1092
      %1094 = vmatmul.f32.gmra.mxu0 %v995
      %v1095 = vpop.f32.mrf.mxu0
      %v1096 = vadd.f32 0.0, %v1095
      %1097 = vmatmul.f32.gmra.mxu0 %v998
      %v1098 = vpop.f32.mrf.mxu0
      %v1099 = vadd.f32 0.0, %v1098
      %1100 = vmatmul.f32.gmra.mxu0 %v1001
      %v1101 = vpop.f32.mrf.mxu0
      %v1102 = vadd.f32 0.0, %v1101
      %1103 = vmatmul.f32.gmra.mxu0 %v1004
      %v1104 = vpop.f32.mrf.mxu0
      %v1105 = vadd.f32 0.0, %v1104
      %1106 = vmatmul.f32.gmra.mxu0 %v1007
      %v1107 = vpop.f32.mrf.mxu0
      %v1108 = vadd.f32 0.0, %v1107
      %1109 = vmatmul.f32.gmra.mxu0 %v1010
      %v1110 = vpop.f32.mrf.mxu0
      %v1111 = vadd.f32 0.0, %v1110
      %1112 = vmatmul.f32.gmra.mxu0 %v1013
      %v1113 = vpop.f32.mrf.mxu0
      %v1114 = vadd.f32 0.0, %v1113
      %1115 = vmatmul.f32.gmra.mxu0 %v1016
      %v1116 = vpop.f32.mrf.mxu0
      %v1117 = vadd.f32 0.0, %v1116
      %1118 = vdwg.mxu0
      %v1119 = vadd.f32 %v874, %v1036
      %v1120 = vadd.f32 %v875, %v1039
      %v1121 = vadd.f32 %v876, %v1042
      %v1122 = vadd.f32 %v877, %v1045
      %v1123 = vadd.f32 %v878, %v1048
      %v1124 = vadd.f32 %v879, %v1051
      %v1125 = vadd.f32 %v880, %v1054
      %v1126 = vadd.f32 %v881, %v1057
      %v1127 = vadd.f32 %v882, %v1060
      %v1128 = vadd.f32 %v883, %v1063
      %v1129 = vadd.f32 %v884, %v1066
      %v1130 = vadd.f32 %v885, %v1069
      %v1131 = vadd.f32 %v886, %v1072
      %v1132 = vadd.f32 %v887, %v1075
      %v1133 = vadd.f32 %v888, %v1078
      %v1134 = vadd.f32 %v889, %v1081
      %v1135 = vadd.f32 %v890, %v1084
      %v1136 = vadd.f32 %v891, %v1087
      %v1137 = vadd.f32 %v892, %v1090
      %v1138 = vadd.f32 %v893, %v1093
      %v1139 = vadd.f32 %v894, %v1096
      %v1140 = vadd.f32 %v895, %v1099
      %v1141 = vadd.f32 %v896, %v1102
      %v1142 = vadd.f32 %v897, %v1105
      %v1143 = vadd.f32 %v898, %v1108
      %v1144 = vadd.f32 %v899, %v1111
      %v1145 = vadd.f32 %v900, %v1114
      %v1146 = vadd.f32 %v901, %v1117
      %s1147 = sadd.s32 %s223, 57
      %s1148 = scalar_lea.vmem %s211, %s1147
      %v1149 = vld [vmem:[%s1148] sm:$0xff]
      %v1150 = vld [vmem:[%s1148 + $0x8] sm:$0xff]
      %v1151 = vld [vmem:[%s1148 + $0x10] sm:$0xff]
      %v1152 = vld [vmem:[%s1148 + $0x18] sm:$0xff]
      %v1153 = vld [vmem:[%s1148 + $0x20] sm:$0xff]
      %v1154 = vld [vmem:[%s1148 + $0x28] sm:$0xff]
      %v1155 = vld [vmem:[%s1148 + $0x30] sm:$0xff]
      %v1156 = vld [vmem:[%s1148 + $0x38] sm:$0xff]
      %v1157 = vld [vmem:[%s1148 + $0x40] sm:$0xff]
      %v1158 = vld [vmem:[%s1148 + $0x48] sm:$0xff]
      %v1159 = vld [vmem:[%s1148 + $0x50] sm:$0xff]
      %v1160 = vld [vmem:[%s1148 + $0x58] sm:$0xff]
      %v1161 = vld [vmem:[%s1148 + $0x60] sm:$0xff]
      %v1162 = vld [vmem:[%s1148 + $0x68] sm:$0xff]
      %v1163 = vld [vmem:[%s1148 + $0x70] sm:$0xff]
      %v1164 = vld [vmem:[%s1148 + $0x78] sm:$0xff]
      %v1165 = vld [vmem:[%s1148 + $0x80] sm:$0xff]
      %v1166 = vld [vmem:[%s1148 + $0x88] sm:$0xff]
      %v1167 = vld [vmem:[%s1148 + $0x90] sm:$0xff]
      %v1168 = vld [vmem:[%s1148 + $0x98] sm:$0xff]
      %v1169 = vld [vmem:[%s1148 + $0xa0] sm:$0xff]
      %v1170 = vld [vmem:[%s1148 + $0xa8] sm:$0xff]
      %v1171 = vld [vmem:[%s1148 + $0xb0] sm:$0xff]
      %v1172 = vld [vmem:[%s1148 + $0xb8] sm:$0xff]
      %v1173 = vld [vmem:[%s1148 + $0xc0] sm:$0xff]
      %v1174 = vld [vmem:[%s1148 + $0xc8] sm:$0xff]
      %v1175 = vld [vmem:[%s1148 + $0xd0] sm:$0xff]
      %v1176 = vld [vmem:[%s1148 + $0xd8] sm:$0xff]
      %s1177 = scalar_lea.vmem %s1, 32
      %v1178 = vld [vmem:[%s1177] sm:$0xff]
      %v1180 = vsel %vm286, %v1149, 0
      %v1183 = vsel %vm286, %v1150, 0
      %v1186 = vsel %vm286, %v1151, 0
      %v1189 = vsel %vm286, %v1152, 0
      %v1192 = vsel %vm286, %v1153, 0
      %v1195 = vsel %vm286, %v1154, 0
      %v1198 = vsel %vm286, %v1155, 0
      %v1201 = vsel %vm286, %v1156, 0
      %v1204 = vsel %vm286, %v1157, 0
      %v1207 = vsel %vm286, %v1158, 0
      %v1210 = vsel %vm286, %v1159, 0
      %v1213 = vsel %vm286, %v1160, 0
      %v1216 = vsel %vm286, %v1161, 0
      %v1219 = vsel %vm286, %v1162, 0
      %v1222 = vsel %vm286, %v1163, 0
      %v1225 = vsel %vm286, %v1164, 0
      %v1228 = vsel %vm286, %v1165, 0
      %v1231 = vsel %vm286, %v1166, 0
      %v1234 = vsel %vm286, %v1167, 0
      %v1237 = vsel %vm286, %v1168, 0
      %v1240 = vsel %vm286, %v1169, 0
      %v1243 = vsel %vm286, %v1170, 0
      %v1246 = vsel %vm286, %v1171, 0
      %v1249 = vsel %vm286, %v1172, 0
      %v1252 = vsel %vm286, %v1173, 0
      %v1255 = vsel %vm286, %v1174, 0
      %v1258 = vsel %vm286, %v1175, 0
      %v1261 = vsel %vm286, %v1176, 0
      %1263 = vmatpush.msra.mxu0 0.0
      %1264 = vmatpush.msra.mxu0 0.0
      %1265 = vmatpush.msra.mxu0 0.0
      %1266 = vmatpush.msra.mxu0 0.0
      %1267 = vmatpush.msra.mxu0 0.0
      %1268 = vmatpush.msra.mxu0 0.0
      %1269 = vmatpush.msra.mxu0 0.0
      %1270 = vmatpush.msra.mxu0 0.0
      %1271 = vmatpush.msra.mxu0 0.0
      %1272 = vmatpush.msra.mxu0 0.0
      %1273 = vmatpush.msra.mxu0 0.0
      %1274 = vmatpush.msra.mxu0 0.0
      %1275 = vmatpush.msra.mxu0 0.0
      %1276 = vmatpush.msra.mxu0 0.0
      %1277 = vmatpush.msra.mxu0 0.0
      %1278 = vmatpush.msra.mxu0 %v1178
      %1279 = vmatmul.f32.gmra.mxu0 %v1180
      %v1280 = vpop.f32.mrf.mxu0
      %v1281 = vadd.f32 0.0, %v1280
      %1282 = vmatmul.f32.gmra.mxu0 %v1183
      %v1283 = vpop.f32.mrf.mxu0
      %v1284 = vadd.f32 0.0, %v1283
      %1285 = vmatmul.f32.gmra.mxu0 %v1186
      %v1286 = vpop.f32.mrf.mxu0
      %v1287 = vadd.f32 0.0, %v1286
      %1288 = vmatmul.f32.gmra.mxu0 %v1189
      %v1289 = vpop.f32.mrf.mxu0
      %v1290 = vadd.f32 0.0, %v1289
      %1291 = vmatmul.f32.gmra.mxu0 %v1192
      %v1292 = vpop.f32.mrf.mxu0
      %v1293 = vadd.f32 0.0, %v1292
      %1294 = vmatmul.f32.gmra.mxu0 %v1195
      %v1295 = vpop.f32.mrf.mxu0
      %v1296 = vadd.f32 0.0, %v1295
      %1297 = vmatmul.f32.gmra.mxu0 %v1198
      %v1298 = vpop.f32.mrf.mxu0
      %v1299 = vadd.f32 0.0, %v1298
      %1300 = vmatmul.f32.gmra.mxu0 %v1201
      %v1301 = vpop.f32.mrf.mxu0
      %v1302 = vadd.f32 0.0, %v1301
      %1303 = vmatmul.f32.gmra.mxu0 %v1204
      %v1304 = vpop.f32.mrf.mxu0
      %v1305 = vadd.f32 0.0, %v1304
      %1306 = vmatmul.f32.gmra.mxu0 %v1207
      %v1307 = vpop.f32.mrf.mxu0
      %v1308 = vadd.f32 0.0, %v1307
      %1309 = vmatmul.f32.gmra.mxu0 %v1210
      %v1310 = vpop.f32.mrf.mxu0
      %v1311 = vadd.f32 0.0, %v1310
      %1312 = vmatmul.f32.gmra.mxu0 %v1213
      %v1313 = vpop.f32.mrf.mxu0
      %v1314 = vadd.f32 0.0, %v1313
      %1315 = vmatmul.f32.gmra.mxu0 %v1216
      %v1316 = vpop.f32.mrf.mxu0
      %v1317 = vadd.f32 0.0, %v1316
      %1318 = vmatmul.f32.gmra.mxu0 %v1219
      %v1319 = vpop.f32.mrf.mxu0
      %v1320 = vadd.f32 0.0, %v1319
      %1321 = vmatmul.f32.gmra.mxu0 %v1222
      %v1322 = vpop.f32.mrf.mxu0
      %v1323 = vadd.f32 0.0, %v1322
      %1324 = vmatmul.f32.gmra.mxu0 %v1225
      %v1325 = vpop.f32.mrf.mxu0
      %v1326 = vadd.f32 0.0, %v1325
      %1327 = vmatmul.f32.gmra.mxu0 %v1228
      %v1328 = vpop.f32.mrf.mxu0
      %v1329 = vadd.f32 0.0, %v1328
      %1330 = vmatmul.f32.gmra.mxu0 %v1231
      %v1331 = vpop.f32.mrf.mxu0
      %v1332 = vadd.f32 0.0, %v1331
      %1333 = vmatmul.f32.gmra.mxu0 %v1234
      %v1334 = vpop.f32.mrf.mxu0
      %v1335 = vadd.f32 0.0, %v1334
      %1336 = vmatmul.f32.gmra.mxu0 %v1237
      %v1337 = vpop.f32.mrf.mxu0
      %v1338 = vadd.f32 0.0, %v1337
      %1339 = vmatmul.f32.gmra.mxu0 %v1240
      %v1340 = vpop.f32.mrf.mxu0
      %v1341 = vadd.f32 0.0, %v1340
      %1342 = vmatmul.f32.gmra.mxu0 %v1243
      %v1343 = vpop.f32.mrf.mxu0
      %v1344 = vadd.f32 0.0, %v1343
      %1345 = vmatmul.f32.gmra.mxu0 %v1246
      %v1346 = vpop.f32.mrf.mxu0
      %v1347 = vadd.f32 0.0, %v1346
      %1348 = vmatmul.f32.gmra.mxu0 %v1249
      %v1349 = vpop.f32.mrf.mxu0
      %v1350 = vadd.f32 0.0, %v1349
      %1351 = vmatmul.f32.gmra.mxu0 %v1252
      %v1352 = vpop.f32.mrf.mxu0
      %v1353 = vadd.f32 0.0, %v1352
      %1354 = vmatmul.f32.gmra.mxu0 %v1255
      %v1355 = vpop.f32.mrf.mxu0
      %v1356 = vadd.f32 0.0, %v1355
      %1357 = vmatmul.f32.gmra.mxu0 %v1258
      %v1358 = vpop.f32.mrf.mxu0
      %v1359 = vadd.f32 0.0, %v1358
      %1360 = vmatmul.f32.gmra.mxu0 %v1261
      %v1361 = vpop.f32.mrf.mxu0
      %v1362 = vadd.f32 0.0, %v1361
      %1363 = vdwg.mxu0
      %v1364 = vadd.f32 %v1119, %v1281
      %v1365 = vadd.f32 %v1120, %v1284
      %v1366 = vadd.f32 %v1121, %v1287
      %v1367 = vadd.f32 %v1122, %v1290
      %v1368 = vadd.f32 %v1123, %v1293
      %v1369 = vadd.f32 %v1124, %v1296
      %v1370 = vadd.f32 %v1125, %v1299
      %v1371 = vadd.f32 %v1126, %v1302
      %v1372 = vadd.f32 %v1127, %v1305
      %v1373 = vadd.f32 %v1128, %v1308
      %v1374 = vadd.f32 %v1129, %v1311
      %v1375 = vadd.f32 %v1130, %v1314
      %v1376 = vadd.f32 %v1131, %v1317
      %v1377 = vadd.f32 %v1132, %v1320
      %v1378 = vadd.f32 %v1133, %v1323
      %v1379 = vadd.f32 %v1134, %v1326
      %v1380 = vadd.f32 %v1135, %v1329
      %v1381 = vadd.f32 %v1136, %v1332
      %v1382 = vadd.f32 %v1137, %v1335
      %v1383 = vadd.f32 %v1138, %v1338
      %v1384 = vadd.f32 %v1139, %v1341
      %v1385 = vadd.f32 %v1140, %v1344
      %v1386 = vadd.f32 %v1141, %v1347
      %v1387 = vadd.f32 %v1142, %v1350
      %v1388 = vadd.f32 %v1143, %v1353
      %v1389 = vadd.f32 %v1144, %v1356
      %v1390 = vadd.f32 %v1145, %v1359
      %v1391 = vadd.f32 %v1146, %v1362
      %s1392 = sadd.s32 %s223, 58
      %s1393 = scalar_lea.vmem %s211, %s1392
      %v1394 = vld [vmem:[%s1393] sm:$0xff]
      %v1395 = vld [vmem:[%s1393 + $0x8] sm:$0xff]
      %v1396 = vld [vmem:[%s1393 + $0x10] sm:$0xff]
      %v1397 = vld [vmem:[%s1393 + $0x18] sm:$0xff]
      %v1398 = vld [vmem:[%s1393 + $0x20] sm:$0xff]
      %v1399 = vld [vmem:[%s1393 + $0x28] sm:$0xff]
      %v1400 = vld [vmem:[%s1393 + $0x30] sm:$0xff]
      %v1401 = vld [vmem:[%s1393 + $0x38] sm:$0xff]
      %v1402 = vld [vmem:[%s1393 + $0x40] sm:$0xff]
      %v1403 = vld [vmem:[%s1393 + $0x48] sm:$0xff]
      %v1404 = vld [vmem:[%s1393 + $0x50] sm:$0xff]
      %v1405 = vld [vmem:[%s1393 + $0x58] sm:$0xff]
      %v1406 = vld [vmem:[%s1393 + $0x60] sm:$0xff]
      %v1407 = vld [vmem:[%s1393 + $0x68] sm:$0xff]
      %v1408 = vld [vmem:[%s1393 + $0x70] sm:$0xff]
      %v1409 = vld [vmem:[%s1393 + $0x78] sm:$0xff]
      %v1410 = vld [vmem:[%s1393 + $0x80] sm:$0xff]
      %v1411 = vld [vmem:[%s1393 + $0x88] sm:$0xff]
      %v1412 = vld [vmem:[%s1393 + $0x90] sm:$0xff]
      %v1413 = vld [vmem:[%s1393 + $0x98] sm:$0xff]
      %v1414 = vld [vmem:[%s1393 + $0xa0] sm:$0xff]
      %v1415 = vld [vmem:[%s1393 + $0xa8] sm:$0xff]
      %v1416 = vld [vmem:[%s1393 + $0xb0] sm:$0xff]
      %v1417 = vld [vmem:[%s1393 + $0xb8] sm:$0xff]
      %v1418 = vld [vmem:[%s1393 + $0xc0] sm:$0xff]
      %v1419 = vld [vmem:[%s1393 + $0xc8] sm:$0xff]
      %v1420 = vld [vmem:[%s1393 + $0xd0] sm:$0xff]
      %v1421 = vld [vmem:[%s1393 + $0xd8] sm:$0xff]
      %s1422 = scalar_lea.vmem %s1, 40
      %v1423 = vld [vmem:[%s1422] sm:$0xff]
      %v1425 = vsel %vm286, %v1394, 0
      %v1428 = vsel %vm286, %v1395, 0
      %v1431 = vsel %vm286, %v1396, 0
      %v1434 = vsel %vm286, %v1397, 0
      %v1437 = vsel %vm286, %v1398, 0
      %v1440 = vsel %vm286, %v1399, 0
      %v1443 = vsel %vm286, %v1400, 0
      %v1446 = vsel %vm286, %v1401, 0
      %v1449 = vsel %vm286, %v1402, 0
      %v1452 = vsel %vm286, %v1403, 0
      %v1455 = vsel %vm286, %v1404, 0
      %v1458 = vsel %vm286, %v1405, 0
      %v1461 = vsel %vm286, %v1406, 0
      %v1464 = vsel %vm286, %v1407, 0
      %v1467 = vsel %vm286, %v1408, 0
      %v1470 = vsel %vm286, %v1409, 0
      %v1473 = vsel %vm286, %v1410, 0
      %v1476 = vsel %vm286, %v1411, 0
      %v1479 = vsel %vm286, %v1412, 0
      %v1482 = vsel %vm286, %v1413, 0
      %v1485 = vsel %vm286, %v1414, 0
      %v1488 = vsel %vm286, %v1415, 0
      %v1491 = vsel %vm286, %v1416, 0
      %v1494 = vsel %vm286, %v1417, 0
      %v1497 = vsel %vm286, %v1418, 0
      %v1500 = vsel %vm286, %v1419, 0
      %v1503 = vsel %vm286, %v1420, 0
      %v1506 = vsel %vm286, %v1421, 0
      %1508 = vmatpush.msra.mxu0 0.0
      %1509 = vmatpush.msra.mxu0 0.0
      %1510 = vmatpush.msra.mxu0 0.0
      %1511 = vmatpush.msra.mxu0 0.0
      %1512 = vmatpush.msra.mxu0 0.0
      %1513 = vmatpush.msra.mxu0 0.0
      %1514 = vmatpush.msra.mxu0 0.0
      %1515 = vmatpush.msra.mxu0 0.0
      %1516 = vmatpush.msra.mxu0 0.0
      %1517 = vmatpush.msra.mxu0 0.0
      %1518 = vmatpush.msra.mxu0 0.0
      %1519 = vmatpush.msra.mxu0 0.0
      %1520 = vmatpush.msra.mxu0 0.0
      %1521 = vmatpush.msra.mxu0 0.0
      %1522 = vmatpush.msra.mxu0 0.0
      %1523 = vmatpush.msra.mxu0 %v1423
      %1524 = vmatmul.f32.gmra.mxu0 %v1425
      %v1525 = vpop.f32.mrf.mxu0
      %v1526 = vadd.f32 0.0, %v1525
      %1527 = vmatmul.f32.gmra.mxu0 %v1428
      %v1528 = vpop.f32.mrf.mxu0
      %v1529 = vadd.f32 0.0, %v1528
      %1530 = vmatmul.f32.gmra.mxu0 %v1431
      %v1531 = vpop.f32.mrf.mxu0
      %v1532 = vadd.f32 0.0, %v1531
      %1533 = vmatmul.f32.gmra.mxu0 %v1434
      %v1534 = vpop.f32.mrf.mxu0
      %v1535 = vadd.f32 0.0, %v1534
      %1536 = vmatmul.f32.gmra.mxu0 %v1437
      %v1537 = vpop.f32.mrf.mxu0
      %v1538 = vadd.f32 0.0, %v1537
      %1539 = vmatmul.f32.gmra.mxu0 %v1440
      %v1540 = vpop.f32.mrf.mxu0
      %v1541 = vadd.f32 0.0, %v1540
      %1542 = vmatmul.f32.gmra.mxu0 %v1443
      %v1543 = vpop.f32.mrf.mxu0
      %v1544 = vadd.f32 0.0, %v1543
      %1545 = vmatmul.f32.gmra.mxu0 %v1446
      %v1546 = vpop.f32.mrf.mxu0
      %v1547 = vadd.f32 0.0, %v1546
      %1548 = vmatmul.f32.gmra.mxu0 %v1449
      %v1549 = vpop.f32.mrf.mxu0
      %v1550 = vadd.f32 0.0, %v1549
      %1551 = vmatmul.f32.gmra.mxu0 %v1452
      %v1552 = vpop.f32.mrf.mxu0
      %v1553 = vadd.f32 0.0, %v1552
      %1554 = vmatmul.f32.gmra.mxu0 %v1455
      %v1555 = vpop.f32.mrf.mxu0
      %v1556 = vadd.f32 0.0, %v1555
      %1557 = vmatmul.f32.gmra.mxu0 %v1458
      %v1558 = vpop.f32.mrf.mxu0
      %v1559 = vadd.f32 0.0, %v1558
      %1560 = vmatmul.f32.gmra.mxu0 %v1461
      %v1561 = vpop.f32.mrf.mxu0
      %v1562 = vadd.f32 0.0, %v1561
      %1563 = vmatmul.f32.gmra.mxu0 %v1464
      %v1564 = vpop.f32.mrf.mxu0
      %v1565 = vadd.f32 0.0, %v1564
      %1566 = vmatmul.f32.gmra.mxu0 %v1467
      %v1567 = vpop.f32.mrf.mxu0
      %v1568 = vadd.f32 0.0, %v1567
      %1569 = vmatmul.f32.gmra.mxu0 %v1470
      %v1570 = vpop.f32.mrf.mxu0
      %v1571 = vadd.f32 0.0, %v1570
      %1572 = vmatmul.f32.gmra.mxu0 %v1473
      %v1573 = vpop.f32.mrf.mxu0
      %v1574 = vadd.f32 0.0, %v1573
      %1575 = vmatmul.f32.gmra.mxu0 %v1476
      %v1576 = vpop.f32.mrf.mxu0
      %v1577 = vadd.f32 0.0, %v1576
      %1578 = vmatmul.f32.gmra.mxu0 %v1479
      %v1579 = vpop.f32.mrf.mxu0
      %v1580 = vadd.f32 0.0, %v1579
      %1581 = vmatmul.f32.gmra.mxu0 %v1482
      %v1582 = vpop.f32.mrf.mxu0
      %v1583 = vadd.f32 0.0, %v1582
      %1584 = vmatmul.f32.gmra.mxu0 %v1485
      %v1585 = vpop.f32.mrf.mxu0
      %v1586 = vadd.f32 0.0, %v1585
      %1587 = vmatmul.f32.gmra.mxu0 %v1488
      %v1588 = vpop.f32.mrf.mxu0
      %v1589 = vadd.f32 0.0, %v1588
      %1590 = vmatmul.f32.gmra.mxu0 %v1491
      %v1591 = vpop.f32.mrf.mxu0
      %v1592 = vadd.f32 0.0, %v1591
      %1593 = vmatmul.f32.gmra.mxu0 %v1494
      %v1594 = vpop.f32.mrf.mxu0
      %v1595 = vadd.f32 0.0, %v1594
      %1596 = vmatmul.f32.gmra.mxu0 %v1497
      %v1597 = vpop.f32.mrf.mxu0
      %v1598 = vadd.f32 0.0, %v1597
      %1599 = vmatmul.f32.gmra.mxu0 %v1500
      %v1600 = vpop.f32.mrf.mxu0
      %v1601 = vadd.f32 0.0, %v1600
      %1602 = vmatmul.f32.gmra.mxu0 %v1503
      %v1603 = vpop.f32.mrf.mxu0
      %v1604 = vadd.f32 0.0, %v1603
      %1605 = vmatmul.f32.gmra.mxu0 %v1506
      %v1606 = vpop.f32.mrf.mxu0
      %v1607 = vadd.f32 0.0, %v1606
      %1608 = vdwg.mxu0
      %v1609 = vadd.f32 %v1364, %v1526
      %v1610 = vadd.f32 %v1365, %v1529
      %v1611 = vadd.f32 %v1366, %v1532
      %v1612 = vadd.f32 %v1367, %v1535
      %v1613 = vadd.f32 %v1368, %v1538
      %v1614 = vadd.f32 %v1369, %v1541
      %v1615 = vadd.f32 %v1370, %v1544
      %v1616 = vadd.f32 %v1371, %v1547
      %v1617 = vadd.f32 %v1372, %v1550
      %v1618 = vadd.f32 %v1373, %v1553
      %v1619 = vadd.f32 %v1374, %v1556
      %v1620 = vadd.f32 %v1375, %v1559
      %v1621 = vadd.f32 %v1376, %v1562
      %v1622 = vadd.f32 %v1377, %v1565
      %v1623 = vadd.f32 %v1378, %v1568
      %v1624 = vadd.f32 %v1379, %v1571
      %v1625 = vadd.f32 %v1380, %v1574
      %v1626 = vadd.f32 %v1381, %v1577
      %v1627 = vadd.f32 %v1382, %v1580
      %v1628 = vadd.f32 %v1383, %v1583
      %v1629 = vadd.f32 %v1384, %v1586
      %v1630 = vadd.f32 %v1385, %v1589
      %v1631 = vadd.f32 %v1386, %v1592
      %v1632 = vadd.f32 %v1387, %v1595
      %v1633 = vadd.f32 %v1388, %v1598
      %v1634 = vadd.f32 %v1389, %v1601
      %v1635 = vadd.f32 %v1390, %v1604
      %v1636 = vadd.f32 %v1391, %v1607
      %s1637 = sadd.s32 %s223, 112
      %s1638 = scalar_lea.vmem %s211, %s1637
      %v1639 = vld [vmem:[%s1638] sm:$0xff]
      %v1640 = vld [vmem:[%s1638 + $0x8] sm:$0xff]
      %v1641 = vld [vmem:[%s1638 + $0x10] sm:$0xff]
      %v1642 = vld [vmem:[%s1638 + $0x18] sm:$0xff]
      %v1643 = vld [vmem:[%s1638 + $0x20] sm:$0xff]
      %v1644 = vld [vmem:[%s1638 + $0x28] sm:$0xff]
      %v1645 = vld [vmem:[%s1638 + $0x30] sm:$0xff]
      %v1646 = vld [vmem:[%s1638 + $0x38] sm:$0xff]
      %v1647 = vld [vmem:[%s1638 + $0x40] sm:$0xff]
      %v1648 = vld [vmem:[%s1638 + $0x48] sm:$0xff]
      %v1649 = vld [vmem:[%s1638 + $0x50] sm:$0xff]
      %v1650 = vld [vmem:[%s1638 + $0x58] sm:$0xff]
      %v1651 = vld [vmem:[%s1638 + $0x60] sm:$0xff]
      %v1652 = vld [vmem:[%s1638 + $0x68] sm:$0xff]
      %v1653 = vld [vmem:[%s1638 + $0x70] sm:$0xff]
      %v1654 = vld [vmem:[%s1638 + $0x78] sm:$0xff]
      %v1655 = vld [vmem:[%s1638 + $0x80] sm:$0xff]
      %v1656 = vld [vmem:[%s1638 + $0x88] sm:$0xff]
      %v1657 = vld [vmem:[%s1638 + $0x90] sm:$0xff]
      %v1658 = vld [vmem:[%s1638 + $0x98] sm:$0xff]
      %v1659 = vld [vmem:[%s1638 + $0xa0] sm:$0xff]
      %v1660 = vld [vmem:[%s1638 + $0xa8] sm:$0xff]
      %v1661 = vld [vmem:[%s1638 + $0xb0] sm:$0xff]
      %v1662 = vld [vmem:[%s1638 + $0xb8] sm:$0xff]
      %v1663 = vld [vmem:[%s1638 + $0xc0] sm:$0xff]
      %v1664 = vld [vmem:[%s1638 + $0xc8] sm:$0xff]
      %v1665 = vld [vmem:[%s1638 + $0xd0] sm:$0xff]
      %v1666 = vld [vmem:[%s1638 + $0xd8] sm:$0xff]
      %s1667 = scalar_lea.vmem %s1, 48
      %v1668 = vld [vmem:[%s1667] sm:$0xff]
      %v1670 = vsel %vm286, %v1639, 0
      %v1673 = vsel %vm286, %v1640, 0
      %v1676 = vsel %vm286, %v1641, 0
      %v1679 = vsel %vm286, %v1642, 0
      %v1682 = vsel %vm286, %v1643, 0
      %v1685 = vsel %vm286, %v1644, 0
      %v1688 = vsel %vm286, %v1645, 0
      %v1691 = vsel %vm286, %v1646, 0
      %v1694 = vsel %vm286, %v1647, 0
      %v1697 = vsel %vm286, %v1648, 0
      %v1700 = vsel %vm286, %v1649, 0
      %v1703 = vsel %vm286, %v1650, 0
      %v1706 = vsel %vm286, %v1651, 0
      %v1709 = vsel %vm286, %v1652, 0
      %v1712 = vsel %vm286, %v1653, 0
      %v1715 = vsel %vm286, %v1654, 0
      %v1718 = vsel %vm286, %v1655, 0
      %v1721 = vsel %vm286, %v1656, 0
      %v1724 = vsel %vm286, %v1657, 0
      %v1727 = vsel %vm286, %v1658, 0
      %v1730 = vsel %vm286, %v1659, 0
      %v1733 = vsel %vm286, %v1660, 0
      %v1736 = vsel %vm286, %v1661, 0
      %v1739 = vsel %vm286, %v1662, 0
      %v1742 = vsel %vm286, %v1663, 0
      %v1745 = vsel %vm286, %v1664, 0
      %v1748 = vsel %vm286, %v1665, 0
      %v1751 = vsel %vm286, %v1666, 0
      %1753 = vmatpush.msra.mxu0 0.0
      %1754 = vmatpush.msra.mxu0 0.0
      %1755 = vmatpush.msra.mxu0 0.0
      %1756 = vmatpush.msra.mxu0 0.0
      %1757 = vmatpush.msra.mxu0 0.0
      %1758 = vmatpush.msra.mxu0 0.0
      %1759 = vmatpush.msra.mxu0 0.0
      %1760 = vmatpush.msra.mxu0 0.0
      %1761 = vmatpush.msra.mxu0 0.0
      %1762 = vmatpush.msra.mxu0 0.0
      %1763 = vmatpush.msra.mxu0 0.0
      %1764 = vmatpush.msra.mxu0 0.0
      %1765 = vmatpush.msra.mxu0 0.0
      %1766 = vmatpush.msra.mxu0 0.0
      %1767 = vmatpush.msra.mxu0 0.0
      %1768 = vmatpush.msra.mxu0 %v1668
      %1769 = vmatmul.f32.gmra.mxu0 %v1670
      %v1770 = vpop.f32.mrf.mxu0
      %v1771 = vadd.f32 0.0, %v1770
      %1772 = vmatmul.f32.gmra.mxu0 %v1673
      %v1773 = vpop.f32.mrf.mxu0
      %v1774 = vadd.f32 0.0, %v1773
      %1775 = vmatmul.f32.gmra.mxu0 %v1676
      %v1776 = vpop.f32.mrf.mxu0
      %v1777 = vadd.f32 0.0, %v1776
      %1778 = vmatmul.f32.gmra.mxu0 %v1679
      %v1779 = vpop.f32.mrf.mxu0
      %v1780 = vadd.f32 0.0, %v1779
      %1781 = vmatmul.f32.gmra.mxu0 %v1682
      %v1782 = vpop.f32.mrf.mxu0
      %v1783 = vadd.f32 0.0, %v1782
      %1784 = vmatmul.f32.gmra.mxu0 %v1685
      %v1785 = vpop.f32.mrf.mxu0
      %v1786 = vadd.f32 0.0, %v1785
      %1787 = vmatmul.f32.gmra.mxu0 %v1688
      %v1788 = vpop.f32.mrf.mxu0
      %v1789 = vadd.f32 0.0, %v1788
      %1790 = vmatmul.f32.gmra.mxu0 %v1691
      %v1791 = vpop.f32.mrf.mxu0
      %v1792 = vadd.f32 0.0, %v1791
      %1793 = vmatmul.f32.gmra.mxu0 %v1694
      %v1794 = vpop.f32.mrf.mxu0
      %v1795 = vadd.f32 0.0, %v1794
      %1796 = vmatmul.f32.gmra.mxu0 %v1697
      %v1797 = vpop.f32.mrf.mxu0
      %v1798 = vadd.f32 0.0, %v1797
      %1799 = vmatmul.f32.gmra.mxu0 %v1700
      %v1800 = vpop.f32.mrf.mxu0
      %v1801 = vadd.f32 0.0, %v1800
      %1802 = vmatmul.f32.gmra.mxu0 %v1703
      %v1803 = vpop.f32.mrf.mxu0
      %v1804 = vadd.f32 0.0, %v1803
      %1805 = vmatmul.f32.gmra.mxu0 %v1706
      %v1806 = vpop.f32.mrf.mxu0
      %v1807 = vadd.f32 0.0, %v1806
      %1808 = vmatmul.f32.gmra.mxu0 %v1709
      %v1809 = vpop.f32.mrf.mxu0
      %v1810 = vadd.f32 0.0, %v1809
      %1811 = vmatmul.f32.gmra.mxu0 %v1712
      %v1812 = vpop.f32.mrf.mxu0
      %v1813 = vadd.f32 0.0, %v1812
      %1814 = vmatmul.f32.gmra.mxu0 %v1715
      %v1815 = vpop.f32.mrf.mxu0
      %v1816 = vadd.f32 0.0, %v1815
      %1817 = vmatmul.f32.gmra.mxu0 %v1718
      %v1818 = vpop.f32.mrf.mxu0
      %v1819 = vadd.f32 0.0, %v1818
      %1820 = vmatmul.f32.gmra.mxu0 %v1721
      %v1821 = vpop.f32.mrf.mxu0
      %v1822 = vadd.f32 0.0, %v1821
      %1823 = vmatmul.f32.gmra.mxu0 %v1724
      %v1824 = vpop.f32.mrf.mxu0
      %v1825 = vadd.f32 0.0, %v1824
      %1826 = vmatmul.f32.gmra.mxu0 %v1727
      %v1827 = vpop.f32.mrf.mxu0
      %v1828 = vadd.f32 0.0, %v1827
      %1829 = vmatmul.f32.gmra.mxu0 %v1730
      %v1830 = vpop.f32.mrf.mxu0
      %v1831 = vadd.f32 0.0, %v1830
      %1832 = vmatmul.f32.gmra.mxu0 %v1733
      %v1833 = vpop.f32.mrf.mxu0
      %v1834 = vadd.f32 0.0, %v1833
      %1835 = vmatmul.f32.gmra.mxu0 %v1736
      %v1836 = vpop.f32.mrf.mxu0
      %v1837 = vadd.f32 0.0, %v1836
      %1838 = vmatmul.f32.gmra.mxu0 %v1739
      %v1839 = vpop.f32.mrf.mxu0
      %v1840 = vadd.f32 0.0, %v1839
      %1841 = vmatmul.f32.gmra.mxu0 %v1742
      %v1842 = vpop.f32.mrf.mxu0
      %v1843 = vadd.f32 0.0, %v1842
      %1844 = vmatmul.f32.gmra.mxu0 %v1745
      %v1845 = vpop.f32.mrf.mxu0
      %v1846 = vadd.f32 0.0, %v1845
      %1847 = vmatmul.f32.gmra.mxu0 %v1748
      %v1848 = vpop.f32.mrf.mxu0
      %v1849 = vadd.f32 0.0, %v1848
      %1850 = vmatmul.f32.gmra.mxu0 %v1751
      %v1851 = vpop.f32.mrf.mxu0
      %v1852 = vadd.f32 0.0, %v1851
      %1853 = vdwg.mxu0
      %v1854 = vadd.f32 %v1609, %v1771
      %v1855 = vadd.f32 %v1610, %v1774
      %v1856 = vadd.f32 %v1611, %v1777
      %v1857 = vadd.f32 %v1612, %v1780
      %v1858 = vadd.f32 %v1613, %v1783
      %v1859 = vadd.f32 %v1614, %v1786
      %v1860 = vadd.f32 %v1615, %v1789
      %v1861 = vadd.f32 %v1616, %v1792
      %v1862 = vadd.f32 %v1617, %v1795
      %v1863 = vadd.f32 %v1618, %v1798
      %v1864 = vadd.f32 %v1619, %v1801
      %v1865 = vadd.f32 %v1620, %v1804
      %v1866 = vadd.f32 %v1621, %v1807
      %v1867 = vadd.f32 %v1622, %v1810
      %v1868 = vadd.f32 %v1623, %v1813
      %v1869 = vadd.f32 %v1624, %v1816
      %v1870 = vadd.f32 %v1625, %v1819
      %v1871 = vadd.f32 %v1626, %v1822
      %v1872 = vadd.f32 %v1627, %v1825
      %v1873 = vadd.f32 %v1628, %v1828
      %v1874 = vadd.f32 %v1629, %v1831
      %v1875 = vadd.f32 %v1630, %v1834
      %v1876 = vadd.f32 %v1631, %v1837
      %v1877 = vadd.f32 %v1632, %v1840
      %v1878 = vadd.f32 %v1633, %v1843
      %v1879 = vadd.f32 %v1634, %v1846
      %v1880 = vadd.f32 %v1635, %v1849
      %v1881 = vadd.f32 %v1636, %v1852
      %s1882 = sadd.s32 %s223, 113
      %s1883 = scalar_lea.vmem %s211, %s1882
      %v1884 = vld [vmem:[%s1883] sm:$0xff]
      %v1885 = vld [vmem:[%s1883 + $0x8] sm:$0xff]
      %v1886 = vld [vmem:[%s1883 + $0x10] sm:$0xff]
      %v1887 = vld [vmem:[%s1883 + $0x18] sm:$0xff]
      %v1888 = vld [vmem:[%s1883 + $0x20] sm:$0xff]
      %v1889 = vld [vmem:[%s1883 + $0x28] sm:$0xff]
      %v1890 = vld [vmem:[%s1883 + $0x30] sm:$0xff]
      %v1891 = vld [vmem:[%s1883 + $0x38] sm:$0xff]
      %v1892 = vld [vmem:[%s1883 + $0x40] sm:$0xff]
      %v1893 = vld [vmem:[%s1883 + $0x48] sm:$0xff]
      %v1894 = vld [vmem:[%s1883 + $0x50] sm:$0xff]
      %v1895 = vld [vmem:[%s1883 + $0x58] sm:$0xff]
      %v1896 = vld [vmem:[%s1883 + $0x60] sm:$0xff]
      %v1897 = vld [vmem:[%s1883 + $0x68] sm:$0xff]
      %v1898 = vld [vmem:[%s1883 + $0x70] sm:$0xff]
      %v1899 = vld [vmem:[%s1883 + $0x78] sm:$0xff]
      %v1900 = vld [vmem:[%s1883 + $0x80] sm:$0xff]
      %v1901 = vld [vmem:[%s1883 + $0x88] sm:$0xff]
      %v1902 = vld [vmem:[%s1883 + $0x90] sm:$0xff]
      %v1903 = vld [vmem:[%s1883 + $0x98] sm:$0xff]
      %v1904 = vld [vmem:[%s1883 + $0xa0] sm:$0xff]
      %v1905 = vld [vmem:[%s1883 + $0xa8] sm:$0xff]
      %v1906 = vld [vmem:[%s1883 + $0xb0] sm:$0xff]
      %v1907 = vld [vmem:[%s1883 + $0xb8] sm:$0xff]
      %v1908 = vld [vmem:[%s1883 + $0xc0] sm:$0xff]
      %v1909 = vld [vmem:[%s1883 + $0xc8] sm:$0xff]
      %v1910 = vld [vmem:[%s1883 + $0xd0] sm:$0xff]
      %v1911 = vld [vmem:[%s1883 + $0xd8] sm:$0xff]
      %s1912 = scalar_lea.vmem %s1, 56
      %v1913 = vld [vmem:[%s1912] sm:$0xff]
      %v1915 = vsel %vm286, %v1884, 0
      %v1918 = vsel %vm286, %v1885, 0
      %v1921 = vsel %vm286, %v1886, 0
      %v1924 = vsel %vm286, %v1887, 0
      %v1927 = vsel %vm286, %v1888, 0
      %v1930 = vsel %vm286, %v1889, 0
      %v1933 = vsel %vm286, %v1890, 0
      %v1936 = vsel %vm286, %v1891, 0
      %v1939 = vsel %vm286, %v1892, 0
      %v1942 = vsel %vm286, %v1893, 0
      %v1945 = vsel %vm286, %v1894, 0
      %v1948 = vsel %vm286, %v1895, 0
      %v1951 = vsel %vm286, %v1896, 0
      %v1954 = vsel %vm286, %v1897, 0
      %v1957 = vsel %vm286, %v1898, 0
      %v1960 = vsel %vm286, %v1899, 0
      %v1963 = vsel %vm286, %v1900, 0
      %v1966 = vsel %vm286, %v1901, 0
      %v1969 = vsel %vm286, %v1902, 0
      %v1972 = vsel %vm286, %v1903, 0
      %v1975 = vsel %vm286, %v1904, 0
      %v1978 = vsel %vm286, %v1905, 0
      %v1981 = vsel %vm286, %v1906, 0
      %v1984 = vsel %vm286, %v1907, 0
      %v1987 = vsel %vm286, %v1908, 0
      %v1990 = vsel %vm286, %v1909, 0
      %v1993 = vsel %vm286, %v1910, 0
      %v1996 = vsel %vm286, %v1911, 0
      %1998 = vmatpush.msra.mxu0 0.0
      %1999 = vmatpush.msra.mxu0 0.0
      %2000 = vmatpush.msra.mxu0 0.0
      %2001 = vmatpush.msra.mxu0 0.0
      %2002 = vmatpush.msra.mxu0 0.0
      %2003 = vmatpush.msra.mxu0 0.0
      %2004 = vmatpush.msra.mxu0 0.0
      %2005 = vmatpush.msra.mxu0 0.0
      %2006 = vmatpush.msra.mxu0 0.0
      %2007 = vmatpush.msra.mxu0 0.0
      %2008 = vmatpush.msra.mxu0 0.0
      %2009 = vmatpush.msra.mxu0 0.0
      %2010 = vmatpush.msra.mxu0 0.0
      %2011 = vmatpush.msra.mxu0 0.0
      %2012 = vmatpush.msra.mxu0 0.0
      %2013 = vmatpush.msra.mxu0 %v1913
      %2014 = vmatmul.f32.gmra.mxu0 %v1915
      %v2015 = vpop.f32.mrf.mxu0
      %v2016 = vadd.f32 0.0, %v2015
      %2017 = vmatmul.f32.gmra.mxu0 %v1918
      %v2018 = vpop.f32.mrf.mxu0
      %v2019 = vadd.f32 0.0, %v2018
      %2020 = vmatmul.f32.gmra.mxu0 %v1921
      %v2021 = vpop.f32.mrf.mxu0
      %v2022 = vadd.f32 0.0, %v2021
      %2023 = vmatmul.f32.gmra.mxu0 %v1924
      %v2024 = vpop.f32.mrf.mxu0
      %v2025 = vadd.f32 0.0, %v2024
      %2026 = vmatmul.f32.gmra.mxu0 %v1927
      %v2027 = vpop.f32.mrf.mxu0
      %v2028 = vadd.f32 0.0, %v2027
      %2029 = vmatmul.f32.gmra.mxu0 %v1930
      %v2030 = vpop.f32.mrf.mxu0
      %v2031 = vadd.f32 0.0, %v2030
      %2032 = vmatmul.f32.gmra.mxu0 %v1933
      %v2033 = vpop.f32.mrf.mxu0
      %v2034 = vadd.f32 0.0, %v2033
      %2035 = vmatmul.f32.gmra.mxu0 %v1936
      %v2036 = vpop.f32.mrf.mxu0
      %v2037 = vadd.f32 0.0, %v2036
      %2038 = vmatmul.f32.gmra.mxu0 %v1939
      %v2039 = vpop.f32.mrf.mxu0
      %v2040 = vadd.f32 0.0, %v2039
      %2041 = vmatmul.f32.gmra.mxu0 %v1942
      %v2042 = vpop.f32.mrf.mxu0
      %v2043 = vadd.f32 0.0, %v2042
      %2044 = vmatmul.f32.gmra.mxu0 %v1945
      %v2045 = vpop.f32.mrf.mxu0
      %v2046 = vadd.f32 0.0, %v2045
      %2047 = vmatmul.f32.gmra.mxu0 %v1948
      %v2048 = vpop.f32.mrf.mxu0
      %v2049 = vadd.f32 0.0, %v2048
      %2050 = vmatmul.f32.gmra.mxu0 %v1951
      %v2051 = vpop.f32.mrf.mxu0
      %v2052 = vadd.f32 0.0, %v2051
      %2053 = vmatmul.f32.gmra.mxu0 %v1954
      %v2054 = vpop.f32.mrf.mxu0
      %v2055 = vadd.f32 0.0, %v2054
      %2056 = vmatmul.f32.gmra.mxu0 %v1957
      %v2057 = vpop.f32.mrf.mxu0
      %v2058 = vadd.f32 0.0, %v2057
      %2059 = vmatmul.f32.gmra.mxu0 %v1960
      %v2060 = vpop.f32.mrf.mxu0
      %v2061 = vadd.f32 0.0, %v2060
      %2062 = vmatmul.f32.gmra.mxu0 %v1963
      %v2063 = vpop.f32.mrf.mxu0
      %v2064 = vadd.f32 0.0, %v2063
      %2065 = vmatmul.f32.gmra.mxu0 %v1966
      %v2066 = vpop.f32.mrf.mxu0
      %v2067 = vadd.f32 0.0, %v2066
      %2068 = vmatmul.f32.gmra.mxu0 %v1969
      %v2069 = vpop.f32.mrf.mxu0
      %v2070 = vadd.f32 0.0, %v2069
      %2071 = vmatmul.f32.gmra.mxu0 %v1972
      %v2072 = vpop.f32.mrf.mxu0
      %v2073 = vadd.f32 0.0, %v2072
      %2074 = vmatmul.f32.gmra.mxu0 %v1975
      %v2075 = vpop.f32.mrf.mxu0
      %v2076 = vadd.f32 0.0, %v2075
      %2077 = vmatmul.f32.gmra.mxu0 %v1978
      %v2078 = vpop.f32.mrf.mxu0
      %v2079 = vadd.f32 0.0, %v2078
      %2080 = vmatmul.f32.gmra.mxu0 %v1981
      %v2081 = vpop.f32.mrf.mxu0
      %v2082 = vadd.f32 0.0, %v2081
      %2083 = vmatmul.f32.gmra.mxu0 %v1984
      %v2084 = vpop.f32.mrf.mxu0
      %v2085 = vadd.f32 0.0, %v2084
      %2086 = vmatmul.f32.gmra.mxu0 %v1987
      %v2087 = vpop.f32.mrf.mxu0
      %v2088 = vadd.f32 0.0, %v2087
      %2089 = vmatmul.f32.gmra.mxu0 %v1990
      %v2090 = vpop.f32.mrf.mxu0
      %v2091 = vadd.f32 0.0, %v2090
      %2092 = vmatmul.f32.gmra.mxu0 %v1993
      %v2093 = vpop.f32.mrf.mxu0
      %v2094 = vadd.f32 0.0, %v2093
      %2095 = vmatmul.f32.gmra.mxu0 %v1996
      %v2096 = vpop.f32.mrf.mxu0
      %v2097 = vadd.f32 0.0, %v2096
      %2098 = vdwg.mxu0
      %v2099 = vadd.f32 %v1854, %v2016
      %v2100 = vadd.f32 %v1855, %v2019
      %v2101 = vadd.f32 %v1856, %v2022
      %v2102 = vadd.f32 %v1857, %v2025
      %v2103 = vadd.f32 %v1858, %v2028
      %v2104 = vadd.f32 %v1859, %v2031
      %v2105 = vadd.f32 %v1860, %v2034
      %v2106 = vadd.f32 %v1861, %v2037
      %v2107 = vadd.f32 %v1862, %v2040
      %v2108 = vadd.f32 %v1863, %v2043
      %v2109 = vadd.f32 %v1864, %v2046
      %v2110 = vadd.f32 %v1865, %v2049
      %v2111 = vadd.f32 %v1866, %v2052
      %v2112 = vadd.f32 %v1867, %v2055
      %v2113 = vadd.f32 %v1868, %v2058
      %v2114 = vadd.f32 %v1869, %v2061
      %v2115 = vadd.f32 %v1870, %v2064
      %v2116 = vadd.f32 %v1871, %v2067
      %v2117 = vadd.f32 %v1872, %v2070
      %v2118 = vadd.f32 %v1873, %v2073
      %v2119 = vadd.f32 %v1874, %v2076
      %v2120 = vadd.f32 %v1875, %v2079
      %v2121 = vadd.f32 %v1876, %v2082
      %v2122 = vadd.f32 %v1877, %v2085
      %v2123 = vadd.f32 %v1878, %v2088
      %v2124 = vadd.f32 %v1879, %v2091
      %v2125 = vadd.f32 %v1880, %v2094
      %v2126 = vadd.f32 %v1881, %v2097
      %s2127 = sadd.s32 %s223, 114
      %s2128 = scalar_lea.vmem %s211, %s2127
      %v2129 = vld [vmem:[%s2128] sm:$0xff]
      %v2130 = vld [vmem:[%s2128 + $0x8] sm:$0xff]
      %v2131 = vld [vmem:[%s2128 + $0x10] sm:$0xff]
      %v2132 = vld [vmem:[%s2128 + $0x18] sm:$0xff]
      %v2133 = vld [vmem:[%s2128 + $0x20] sm:$0xff]
      %v2134 = vld [vmem:[%s2128 + $0x28] sm:$0xff]
      %v2135 = vld [vmem:[%s2128 + $0x30] sm:$0xff]
      %v2136 = vld [vmem:[%s2128 + $0x38] sm:$0xff]
      %v2137 = vld [vmem:[%s2128 + $0x40] sm:$0xff]
      %v2138 = vld [vmem:[%s2128 + $0x48] sm:$0xff]
      %v2139 = vld [vmem:[%s2128 + $0x50] sm:$0xff]
      %v2140 = vld [vmem:[%s2128 + $0x58] sm:$0xff]
      %v2141 = vld [vmem:[%s2128 + $0x60] sm:$0xff]
      %v2142 = vld [vmem:[%s2128 + $0x68] sm:$0xff]
      %v2143 = vld [vmem:[%s2128 + $0x70] sm:$0xff]
      %v2144 = vld [vmem:[%s2128 + $0x78] sm:$0xff]
      %v2145 = vld [vmem:[%s2128 + $0x80] sm:$0xff]
      %v2146 = vld [vmem:[%s2128 + $0x88] sm:$0xff]
      %v2147 = vld [vmem:[%s2128 + $0x90] sm:$0xff]
      %v2148 = vld [vmem:[%s2128 + $0x98] sm:$0xff]
      %v2149 = vld [vmem:[%s2128 + $0xa0] sm:$0xff]
      %v2150 = vld [vmem:[%s2128 + $0xa8] sm:$0xff]
      %v2151 = vld [vmem:[%s2128 + $0xb0] sm:$0xff]
      %v2152 = vld [vmem:[%s2128 + $0xb8] sm:$0xff]
      %v2153 = vld [vmem:[%s2128 + $0xc0] sm:$0xff]
      %v2154 = vld [vmem:[%s2128 + $0xc8] sm:$0xff]
      %v2155 = vld [vmem:[%s2128 + $0xd0] sm:$0xff]
      %v2156 = vld [vmem:[%s2128 + $0xd8] sm:$0xff]
      %s2157 = scalar_lea.vmem %s1, 64
      %v2158 = vld [vmem:[%s2157] sm:$0xff]
      %v2160 = vsel %vm286, %v2129, 0
      %v2163 = vsel %vm286, %v2130, 0
      %v2166 = vsel %vm286, %v2131, 0
      %v2169 = vsel %vm286, %v2132, 0
      %v2172 = vsel %vm286, %v2133, 0
      %v2175 = vsel %vm286, %v2134, 0
      %v2178 = vsel %vm286, %v2135, 0
      %v2181 = vsel %vm286, %v2136, 0
      %v2184 = vsel %vm286, %v2137, 0
      %v2187 = vsel %vm286, %v2138, 0
      %v2190 = vsel %vm286, %v2139, 0
      %v2193 = vsel %vm286, %v2140, 0
      %v2196 = vsel %vm286, %v2141, 0
      %v2199 = vsel %vm286, %v2142, 0
      %v2202 = vsel %vm286, %v2143, 0
      %v2205 = vsel %vm286, %v2144, 0
      %v2208 = vsel %vm286, %v2145, 0
      %v2211 = vsel %vm286, %v2146, 0
      %v2214 = vsel %vm286, %v2147, 0
      %v2217 = vsel %vm286, %v2148, 0
      %v2220 = vsel %vm286, %v2149, 0
      %v2223 = vsel %vm286, %v2150, 0
      %v2226 = vsel %vm286, %v2151, 0
      %v2229 = vsel %vm286, %v2152, 0
      %v2232 = vsel %vm286, %v2153, 0
      %v2235 = vsel %vm286, %v2154, 0
      %v2238 = vsel %vm286, %v2155, 0
      %v2241 = vsel %vm286, %v2156, 0
      %2243 = vmatpush.msra.mxu0 0.0
      %2244 = vmatpush.msra.mxu0 0.0
      %2245 = vmatpush.msra.mxu0 0.0
      %2246 = vmatpush.msra.mxu0 0.0
      %2247 = vmatpush.msra.mxu0 0.0
      %2248 = vmatpush.msra.mxu0 0.0
      %2249 = vmatpush.msra.mxu0 0.0
      %2250 = vmatpush.msra.mxu0 0.0
      %2251 = vmatpush.msra.mxu0 0.0
      %2252 = vmatpush.msra.mxu0 0.0
      %2253 = vmatpush.msra.mxu0 0.0
      %2254 = vmatpush.msra.mxu0 0.0
      %2255 = vmatpush.msra.mxu0 0.0
      %2256 = vmatpush.msra.mxu0 0.0
      %2257 = vmatpush.msra.mxu0 0.0
      %2258 = vmatpush.msra.mxu0 %v2158
      %2259 = vmatmul.f32.gmra.mxu0 %v2160
      %v2260 = vpop.f32.mrf.mxu0
      %v2261 = vadd.f32 0.0, %v2260
      %2262 = vmatmul.f32.gmra.mxu0 %v2163
      %v2263 = vpop.f32.mrf.mxu0
      %v2264 = vadd.f32 0.0, %v2263
      %2265 = vmatmul.f32.gmra.mxu0 %v2166
      %v2266 = vpop.f32.mrf.mxu0
      %v2267 = vadd.f32 0.0, %v2266
      %2268 = vmatmul.f32.gmra.mxu0 %v2169
      %v2269 = vpop.f32.mrf.mxu0
      %v2270 = vadd.f32 0.0, %v2269
      %2271 = vmatmul.f32.gmra.mxu0 %v2172
      %v2272 = vpop.f32.mrf.mxu0
      %v2273 = vadd.f32 0.0, %v2272
      %2274 = vmatmul.f32.gmra.mxu0 %v2175
      %v2275 = vpop.f32.mrf.mxu0
      %v2276 = vadd.f32 0.0, %v2275
      %2277 = vmatmul.f32.gmra.mxu0 %v2178
      %v2278 = vpop.f32.mrf.mxu0
      %v2279 = vadd.f32 0.0, %v2278
      %2280 = vmatmul.f32.gmra.mxu0 %v2181
      %v2281 = vpop.f32.mrf.mxu0
      %v2282 = vadd.f32 0.0, %v2281
      %2283 = vmatmul.f32.gmra.mxu0 %v2184
      %v2284 = vpop.f32.mrf.mxu0
      %v2285 = vadd.f32 0.0, %v2284
      %2286 = vmatmul.f32.gmra.mxu0 %v2187
      %v2287 = vpop.f32.mrf.mxu0
      %v2288 = vadd.f32 0.0, %v2287
      %2289 = vmatmul.f32.gmra.mxu0 %v2190
      %v2290 = vpop.f32.mrf.mxu0
      %v2291 = vadd.f32 0.0, %v2290
      %2292 = vmatmul.f32.gmra.mxu0 %v2193
      %v2293 = vpop.f32.mrf.mxu0
      %v2294 = vadd.f32 0.0, %v2293
      %2295 = vmatmul.f32.gmra.mxu0 %v2196
      %v2296 = vpop.f32.mrf.mxu0
      %v2297 = vadd.f32 0.0, %v2296
      %2298 = vmatmul.f32.gmra.mxu0 %v2199
      %v2299 = vpop.f32.mrf.mxu0
      %v2300 = vadd.f32 0.0, %v2299
      %2301 = vmatmul.f32.gmra.mxu0 %v2202
      %v2302 = vpop.f32.mrf.mxu0
      %v2303 = vadd.f32 0.0, %v2302
      %2304 = vmatmul.f32.gmra.mxu0 %v2205
      %v2305 = vpop.f32.mrf.mxu0
      %v2306 = vadd.f32 0.0, %v2305
      %2307 = vmatmul.f32.gmra.mxu0 %v2208
      %v2308 = vpop.f32.mrf.mxu0
      %v2309 = vadd.f32 0.0, %v2308
      %2310 = vmatmul.f32.gmra.mxu0 %v2211
      %v2311 = vpop.f32.mrf.mxu0
      %v2312 = vadd.f32 0.0, %v2311
      %2313 = vmatmul.f32.gmra.mxu0 %v2214
      %v2314 = vpop.f32.mrf.mxu0
      %v2315 = vadd.f32 0.0, %v2314
      %2316 = vmatmul.f32.gmra.mxu0 %v2217
      %v2317 = vpop.f32.mrf.mxu0
      %v2318 = vadd.f32 0.0, %v2317
      %2319 = vmatmul.f32.gmra.mxu0 %v2220
      %v2320 = vpop.f32.mrf.mxu0
      %v2321 = vadd.f32 0.0, %v2320
      %2322 = vmatmul.f32.gmra.mxu0 %v2223
      %v2323 = vpop.f32.mrf.mxu0
      %v2324 = vadd.f32 0.0, %v2323
      %2325 = vmatmul.f32.gmra.mxu0 %v2226
      %v2326 = vpop.f32.mrf.mxu0
      %v2327 = vadd.f32 0.0, %v2326
      %2328 = vmatmul.f32.gmra.mxu0 %v2229
      %v2329 = vpop.f32.mrf.mxu0
      %v2330 = vadd.f32 0.0, %v2329
      %2331 = vmatmul.f32.gmra.mxu0 %v2232
      %v2332 = vpop.f32.mrf.mxu0
      %v2333 = vadd.f32 0.0, %v2332
      %2334 = vmatmul.f32.gmra.mxu0 %v2235
      %v2335 = vpop.f32.mrf.mxu0
      %v2336 = vadd.f32 0.0, %v2335
      %2337 = vmatmul.f32.gmra.mxu0 %v2238
      %v2338 = vpop.f32.mrf.mxu0
      %v2339 = vadd.f32 0.0, %v2338
      %2340 = vmatmul.f32.gmra.mxu0 %v2241
      %v2341 = vpop.f32.mrf.mxu0
      %v2342 = vadd.f32 0.0, %v2341
      %2343 = vdwg.mxu0
      %v2344 = vadd.f32 %v2099, %v2261
      %v2345 = vadd.f32 %v2100, %v2264
      %v2346 = vadd.f32 %v2101, %v2267
      %v2347 = vadd.f32 %v2102, %v2270
      %v2348 = vadd.f32 %v2103, %v2273
      %v2349 = vadd.f32 %v2104, %v2276
      %v2350 = vadd.f32 %v2105, %v2279
      %v2351 = vadd.f32 %v2106, %v2282
      %v2352 = vadd.f32 %v2107, %v2285
      %v2353 = vadd.f32 %v2108, %v2288
      %v2354 = vadd.f32 %v2109, %v2291
      %v2355 = vadd.f32 %v2110, %v2294
      %v2356 = vadd.f32 %v2111, %v2297
      %v2357 = vadd.f32 %v2112, %v2300
      %v2358 = vadd.f32 %v2113, %v2303
      %v2359 = vadd.f32 %v2114, %v2306
      %v2360 = vadd.f32 %v2115, %v2309
      %v2361 = vadd.f32 %v2116, %v2312
      %v2362 = vadd.f32 %v2117, %v2315
      %v2363 = vadd.f32 %v2118, %v2318
      %v2364 = vadd.f32 %v2119, %v2321
      %v2365 = vadd.f32 %v2120, %v2324
      %v2366 = vadd.f32 %v2121, %v2327
      %v2367 = vadd.f32 %v2122, %v2330
      %v2368 = vadd.f32 %v2123, %v2333
      %v2369 = vadd.f32 %v2124, %v2336
      %v2370 = vadd.f32 %v2125, %v2339
      %v2371 = vadd.f32 %v2126, %v2342
      %v2372 = vld [vmem:[%s2] sm:$0x1]
      %v2374 = vperm.slane %v2372, 0
      %v2376 = vmul.f32 %v2344, %v2374
      %v2377 = vmul.f32 %v2345, %v2374
      %v2378 = vmul.f32 %v2346, %v2374
      %v2379 = vmul.f32 %v2347, %v2374
      %v2380 = vmul.f32 %v2348, %v2374
      %v2381 = vmul.f32 %v2349, %v2374
      %v2382 = vmul.f32 %v2350, %v2374
      %v2383 = vmul.f32 %v2351, %v2374
      %v2384 = vmul.f32 %v2352, %v2374
      %v2385 = vmul.f32 %v2353, %v2374
      %v2386 = vmul.f32 %v2354, %v2374
      %v2387 = vmul.f32 %v2355, %v2374
      %v2388 = vmul.f32 %v2356, %v2374
      %v2389 = vmul.f32 %v2357, %v2374
      %v2390 = vmul.f32 %v2358, %v2374
      %v2391 = vmul.f32 %v2359, %v2374
      %v2392 = vmul.f32 %v2360, %v2374
      %v2393 = vmul.f32 %v2361, %v2374
      %v2394 = vmul.f32 %v2362, %v2374
      %v2395 = vmul.f32 %v2363, %v2374
      %v2396 = vmul.f32 %v2364, %v2374
      %v2397 = vmul.f32 %v2365, %v2374
      %v2398 = vmul.f32 %v2366, %v2374
      %v2399 = vmul.f32 %v2367, %v2374
      %v2400 = vmul.f32 %v2368, %v2374
      %v2401 = vmul.f32 %v2369, %v2374
      %v2402 = vmul.f32 %v2370, %v2374
      %v2403 = vmul.f32 %v2371, %v2374
      %v2404 = vld [vmem:[%s3] sm:$0x1]
      %v2406 = vperm.slane %v2404, 0
      %v2408 = vadd.f32 %v2376, %v2406
      %v2409 = vadd.f32 %v2377, %v2406
      %v2410 = vadd.f32 %v2378, %v2406
      %v2411 = vadd.f32 %v2379, %v2406
      %v2412 = vadd.f32 %v2380, %v2406
      %v2413 = vadd.f32 %v2381, %v2406
      %v2414 = vadd.f32 %v2382, %v2406
      %v2415 = vadd.f32 %v2383, %v2406
      %v2416 = vadd.f32 %v2384, %v2406
      %v2417 = vadd.f32 %v2385, %v2406
      %v2418 = vadd.f32 %v2386, %v2406
      %v2419 = vadd.f32 %v2387, %v2406
      %v2420 = vadd.f32 %v2388, %v2406
      %v2421 = vadd.f32 %v2389, %v2406
      %v2422 = vadd.f32 %v2390, %v2406
      %v2423 = vadd.f32 %v2391, %v2406
      %v2424 = vadd.f32 %v2392, %v2406
      %v2425 = vadd.f32 %v2393, %v2406
      %v2426 = vadd.f32 %v2394, %v2406
      %v2427 = vadd.f32 %v2395, %v2406
      %v2428 = vadd.f32 %v2396, %v2406
      %v2429 = vadd.f32 %v2397, %v2406
      %v2430 = vadd.f32 %v2398, %v2406
      %v2431 = vadd.f32 %v2399, %v2406
      %v2432 = vadd.f32 %v2400, %v2406
      %v2433 = vadd.f32 %v2401, %v2406
      %v2434 = vadd.f32 %v2402, %v2406
      %v2435 = vadd.f32 %v2403, %v2406
      %v2436 = vmax.f32 %v2408, 0.0
      %v2437 = vmax.f32 %v2409, 0.0
      %v2438 = vmax.f32 %v2410, 0.0
      %v2439 = vmax.f32 %v2411, 0.0
      %v2440 = vmax.f32 %v2412, 0.0
      %v2441 = vmax.f32 %v2413, 0.0
      %v2442 = vmax.f32 %v2414, 0.0
      %v2443 = vmax.f32 %v2415, 0.0
      %v2444 = vmax.f32 %v2416, 0.0
      %v2445 = vmax.f32 %v2417, 0.0
      %v2446 = vmax.f32 %v2418, 0.0
      %v2447 = vmax.f32 %v2419, 0.0
      %v2448 = vmax.f32 %v2420, 0.0
      %v2449 = vmax.f32 %v2421, 0.0
      %v2450 = vmax.f32 %v2422, 0.0
      %v2451 = vmax.f32 %v2423, 0.0
      %v2452 = vmax.f32 %v2424, 0.0
      %v2453 = vmax.f32 %v2425, 0.0
      %v2454 = vmax.f32 %v2426, 0.0
      %v2455 = vmax.f32 %v2427, 0.0
      %v2456 = vmax.f32 %v2428, 0.0
      %v2457 = vmax.f32 %v2429, 0.0
      %v2458 = vmax.f32 %v2430, 0.0
      %v2459 = vmax.f32 %v2431, 0.0
      %v2460 = vmax.f32 %v2432, 0.0
      %v2461 = vmax.f32 %v2433, 0.0
      %v2462 = vmax.f32 %v2434, 0.0
      %v2463 = vmax.f32 %v2435, 0.0
      %v2464 = vmax.f32 %v2436, %v2443
      %v2465 = vmax.f32 %v2437, %v2444
      %v2466 = vmax.f32 %v2438, %v2445
      %v2467 = vmax.f32 %v2439, %v2446
      %v2468 = vmax.f32 %v2440, %v2447
      %v2469 = vmax.f32 %v2441, %v2448
      %v2470 = vmax.f32 %v2442, %v2449
      %v2471 = vmax.f32 %v2450, %v2457
      %v2472 = vmax.f32 %v2451, %v2458
      %v2473 = vmax.f32 %v2452, %v2459
      %v2474 = vmax.f32 %v2453, %v2460
      %v2475 = vmax.f32 %v2454, %v2461
      %v2476 = vmax.f32 %v2455, %v2462
      %v2477 = vmax.f32 %v2456, %v2463
      %vm2478 = vcmask 523264
      %2479 = vst.msk [vmem:[#allocation2] sm:$0xff] %vm2478, %v2464
      %2480 = vst.msk [vmem:[#allocation2 + $0x8] sm:$0xff] %vm2478, %v2465
      %2481 = vst.msk [vmem:[#allocation2 + $0x10] sm:$0xff] %vm2478, %v2466
      %2482 = vst.msk [vmem:[#allocation2 + $0x18] sm:$0xff] %vm2478, %v2467
      %2483 = vst.msk [vmem:[#allocation2 + $0x20] sm:$0xff] %vm2478, %v2468
      %2484 = vst.msk [vmem:[#allocation2 + $0x28] sm:$0xff] %vm2478, %v2469
      %2485 = vst.msk [vmem:[#allocation2 + $0x30] sm:$0xff] %vm2478, %v2470
      %2486 = vst.msk [vmem:[#allocation2 + $0x38] sm:$0xff] %vm2478, %v2471
      %2487 = vst.msk [vmem:[#allocation2 + $0x40] sm:$0xff] %vm2478, %v2472
      %2488 = vst.msk [vmem:[#allocation2 + $0x48] sm:$0xff] %vm2478, %v2473
      %2489 = vst.msk [vmem:[#allocation2 + $0x50] sm:$0xff] %vm2478, %v2474
      %2490 = vst.msk [vmem:[#allocation2 + $0x58] sm:$0xff] %vm2478, %v2475
      %2491 = vst.msk [vmem:[#allocation2 + $0x60] sm:$0xff] %vm2478, %v2476
      %2492 = vst.msk [vmem:[#allocation2 + $0x68] sm:$0xff] %vm2478, %v2477
      %v2493 = vld [vmem:[#allocation2] ss:$2 sm:$0xff]
      %s2494 = scalar_lea.vmem [#allocation2], 16
      %v2495 = vld [vmem:[%s2494] ss:$2 sm:$0xff]
      %s2496 = scalar_lea.vmem [#allocation2], 32
      %v2497 = vld [vmem:[%s2496] ss:$2 sm:$0xff]
      %s2498 = scalar_lea.vmem [#allocation2], 56
      %v2499 = vld [vmem:[%s2498] ss:$2 sm:$0xff]
      %s2500 = scalar_lea.vmem [#allocation2], 72
      %v2501 = vld [vmem:[%s2500] ss:$2 sm:$0xff]
      %s2502 = scalar_lea.vmem [#allocation2], 88
      %v2503 = vld [vmem:[%s2502] ss:$2 sm:$0xff]
      %s2504 = scalar_lea.vmem [#allocation2], 1
      %v2505 = vld [vmem:[%s2504] ss:$2 sm:$0xff]
      %s2506 = scalar_lea.vmem [#allocation2], 17
      %v2507 = vld [vmem:[%s2506] ss:$2 sm:$0xff]
      %s2508 = scalar_lea.vmem [#allocation2], 33
      %v2509 = vld [vmem:[%s2508] ss:$2 sm:$0xff]
      %s2510 = scalar_lea.vmem [#allocation2], 57
      %v2511 = vld [vmem:[%s2510] ss:$2 sm:$0xff]
      %s2512 = scalar_lea.vmem [#allocation2], 73
      %v2513 = vld [vmem:[%s2512] ss:$2 sm:$0xff]
      %s2514 = scalar_lea.vmem [#allocation2], 89
      %v2515 = vld [vmem:[%s2514] ss:$2 sm:$0xff]
      %v2516 = vmax.f32 %v2493, %v2505
      %v2517 = vmax.f32 %v2495, %v2507
      %v2518 = vmax.f32 %v2497, %v2509
      %v2519 = vmax.f32 %v2499, %v2511
      %v2520 = vmax.f32 %v2501, %v2513
      %v2521 = vmax.f32 %v2503, %v2515
      %2522 = vst.msk [vmem:[%s221] sm:$0xff] %vm2478, %v2516
      %2523 = vst.msk [vmem:[%s221 + $0x8] sm:$0xff] %vm2478, %v2517
      %2524 = vst.msk [vmem:[%s221 + $0x10] sm:$0xff] %vm2478, %v2518
      %2525 = vst.msk [vmem:[%s221 + $0x18] sm:$0xff] %vm2478, %v2519
      %2526 = vst.msk [vmem:[%s221 + $0x20] sm:$0xff] %vm2478, %v2520
      %2527 = vst.msk [vmem:[%s221 + $0x28] sm:$0xff] %vm2478, %v2521
      %s2528 = smul.u32 2, %s20
      %p2529 = scmp.lt.s32.totalorder %s19, 1
      %s2530 = scalar_select %p2529, %s19, 1
      %p2531 = scmp.lt.s32.totalorder %s2528, 23
      %s2532 = scalar_select %p2531, %s2528, 23
      %s2533 = smul.addr %s2532, 3
      %s2534 = smul.addr %s2530, 72
      %s2535 = sadd.s32 %s2533, %s2534
      %s2536 = smul.addr %s2535, 8
      %s2537 = scalar_lea.vmem %s4, %s2536
      // Predicated region
      $region37: #{vgg16_forward.4} parent=35 // pred_check
        %p2538 = pneg %p136
      $region38: #{vgg16_forward.4} parent=35 // pred_check_branch
        %2540 = sbr.rel (%p2538) target = $region40
      $region39: #{vgg16_forward.4} parent=35 // pred_region
        %s2541 = smul.u32 2, %s20
      $region40: #{vgg16_forward.4} parent=35 // pred_fallthru
        _
    $region36: #{vgg16_forward.4} parent=5 // pred_fallthru
      _
    %p2542 = scmp.le.s32.totalorder 2, %s10
    // Predicated region
    $region41: #{vgg16_forward.4} parent=5 // pred_check
      %p2543 = pneg %p2542
    $region42: #{vgg16_forward.4} parent=5 // pred_check_branch
      %2545 = sbr.rel (%p2543) target = $region44
    $region43: #{vgg16_forward.4} parent=5 // pred_region
      %s2546 = ssub.s32 %s10, 2
      // Predicated region
      $region45: #{vgg16_forward.4} parent=43 // pred_check
        %p2547 = pneg %p142
      $region46: #{vgg16_forward.4} parent=43 // pred_check_branch
        %2549 = sbr.rel (%p2547) target = $region48
      $region47: #{vgg16_forward.4} parent=43 // pred_region
        %s2550 = smul.u32 2, %s22
        %p2551 = scmp.lt.s32.totalorder %s21, 1
        %s2552 = scalar_select %p2551, %s21, 1
        %p2553 = scmp.lt.s32.totalorder %s2550, 23
        %s2554 = scalar_select %p2553, %s2550, 23
        %s2555 = smul.addr %s2554, 3
        %s2556 = smul.addr %s2552, 72
        %s2557 = sadd.s32 %s2555, %s2556
        %s2558 = smul.addr %s2557, 8
        %s2559 = scalar_lea.vmem %s4, %s2558
      $region48: #{vgg16_forward.4} parent=43 // pred_fallthru
        _
    $region44: #{vgg16_forward.4} parent=5 // pred_fallthru
      _
  $region6: #{vgg16_forward.4} parent=0 // loop_footer
    %s14 = sadd.s32 1, %s10
  $region7: #{vgg16_forward.4} parent=0 // loop_footer_branch
    %9 = sbr.rel target = $region3
  $region8: #{vgg16_forward.4} parent=0 // loop_exit
    _

// kernel: vgg16_forward.5
$region0: #{vgg16_forward.5}
  #allocation0 [shape = 'u32[]', space=smem, size = 0x4, offset = 0x4, fixed_abs, tag = 'smem constant byte address 0x4 - core index']
  #allocation1 [shape = 'u32[72,128]{1,0:T(1,128)}', space=vmem, size = 0x9000, scoped, tag = 'internal scratch']
  #allocation2 [shape = 'f32[4,32,128]{2,1,0:T(8,128)}', space=vmem, size = 0x10000, scoped, tag = 'scratch operand']
  %s0 = inlined_call_operand.vmem [shape: f32[2,864,64], index: 0, kind: input, shape index: {}]
  %s1 = inlined_call_operand.vmem [shape: f32[3,3,64,128], index: 1, kind: input, shape index: {}]
  %s2 = inlined_call_operand.vmem [shape: f32[1,128], index: 2, kind: input, shape index: {}]
  %s3 = inlined_call_operand.vmem [shape: f32[1,128], index: 3, kind: input, shape index: {}]
  %s4 = inlined_call_operand.vmem [shape: f32[2,12,12,128], index: 4, kind: output, shape index: {}]
  %s5 = sld [smem:[#allocation0]]
  $region49: #{vgg16_forward.5} parent=0
    _
  %s7 = ssub.s32 1, %s5
  %s8 = scalar_select 0, %s7, %s5
  loop: start=0, step=1, limit=8
  $region2: #{vgg16_forward.5} parent=0 // loop_pre_header
    _
  $region3: #{vgg16_forward.5} parent=0 // loop_header
    %s10 = sphi 0, %s14
    %p11 = scmp.ge.s32.totalorder %s10, 8
    %s17 = sphi 0, %s29
    %s18 = sphi 0, %s25
    %s19 = sphi 0, %s17
    %s20 = sphi 0, %s18
    %s21 = sphi 0, %s19
    %s22 = sphi 0, %s20
    %s32 = sphi 0, %s34
    %s35 = sphi 0, %s32
    %s36 = sphi 0, %s35
    %s52 = sphi 0, %s36
    %s56 = sphi 0, %s56
    %s58 = sphi 0, %s56
    %s59 = sphi 0, %s58
    %s73 = sphi 0, %s59
    %s77 = sphi 0, %s77
    %s79 = sphi 0, %s77
    %s80 = sphi 0, %s79
    %s94 = sphi 0, %s80
    %s98 = sphi 0, %s98
    %s100 = sphi 0, %s98
    %s101 = sphi 0, %s100
    %s115 = sphi 0, %s101
    %s123 = sphi 0, %s125
    %s126 = sphi 0, %s123
    %s127 = sphi 0, %s126
    %s143 = sphi 0, %s127
  $region4: #{vgg16_forward.5} parent=0 // loop_header_branch
    %13 = sbr.rel (%p11) target = $region8
  $region5: #{vgg16_forward.5} parent=0 // loop_body
    %s15 = ssub.s32 %s10, 1
    %s16 = ssub.s32 %s10, 2
    %s23 = sadd.s32 1, %s18
    %p24 = scmp.ge.s32.totalorder %s23, 3
    %s25 = scalar_select %p24, 0, %s23
    %s26 = sadd.s32 1, %s17
    %s27 = scalar_select %p24, %s26, %s17
    %p28 = scmp.ge.s32.totalorder %s27, 2
    %s29 = scalar_select %p28, 0, %s27
    %s30 = ssub.s32 %s17, %s29
    %p31 = scmp.eq.s32.totalorder %s30, 0
    %s33 = sadd.s32 %s32, 1
    %s34 = scalar_select %p31, %s32, %s33
    %p37 = pneg %p31
    %p38 = scmp.eq.s32.totalorder %s10, 5
    %p39 = por %p37, %p38
    %p40 = scmp.ne.s32.totalorder %s32, %s35
    %p41 = scmp.eq.s32.totalorder %s10, 0
    %p42 = por %p40, %p41
    %p43 = scmp.ne.s32.totalorder %s32, %s35
    %p44 = scmp.eq.s32.totalorder %s15, 5
    %p45 = por %p43, %p44
    %p46 = scmp.ne.s32.totalorder %s35, %s36
    %p47 = scmp.eq.s32.totalorder %s15, 0
    %p48 = por %p46, %p47
    %p49 = scmp.ne.s32.totalorder %s35, %s36
    %p50 = scmp.eq.s32.totalorder %s16, 5
    %p51 = por %p49, %p50
    %p53 = scmp.ne.s32.totalorder %s36, %s52
    %p54 = scmp.eq.s32.totalorder %s16, 0
    %p55 = por %p53, %p54
    %s57 = sadd.s32 %s56, 1
    %p60 = scmp.eq.s32.totalorder %s10, 5
    %p61 = scmp.ne.s32.totalorder %s56, %s58
    %p62 = scmp.eq.s32.totalorder %s10, 0
    %p63 = por %p61, %p62
    %p64 = scmp.ne.s32.totalorder %s56, %s58
    %p65 = scmp.eq.s32.totalorder %s15, 5
    %p66 = por %p64, %p65
    %p67 = scmp.ne.s32.totalorder %s58, %s59
    %p68 = scmp.eq.s32.totalorder %s15, 0
    %p69 = por %p67, %p68
    %p70 = scmp.ne.s32.totalorder %s58, %s59
    %p71 = scmp.eq.s32.totalorder %s16, 5
    %p72 = por %p70, %p71
    %p74 = scmp.ne.s32.totalorder %s59, %s73
    %p75 = scmp.eq.s32.totalorder %s16, 0
    %p76 = por %p74, %p75
    %s78 = sadd.s32 %s77, 1
    %p81 = scmp.eq.s32.totalorder %s10, 5
    %p82 = scmp.ne.s32.totalorder %s77, %s79
    %p83 = scmp.eq.s32.totalorder %s10, 0
    %p84 = por %p82, %p83
    %p85 = scmp.ne.s32.totalorder %s77, %s79
    %p86 = scmp.eq.s32.totalorder %s15, 5
    %p87 = por %p85, %p86
    %p88 = scmp.ne.s32.totalorder %s79, %s80
    %p89 = scmp.eq.s32.totalorder %s15, 0
    %p90 = por %p88, %p89
    %p91 = scmp.ne.s32.totalorder %s79, %s80
    %p92 = scmp.eq.s32.totalorder %s16, 5
    %p93 = por %p91, %p92
    %p95 = scmp.ne.s32.totalorder %s80, %s94
    %p96 = scmp.eq.s32.totalorder %s16, 0
    %p97 = por %p95, %p96
    %s99 = sadd.s32 %s98, 1
    %p102 = scmp.eq.s32.totalorder %s10, 5
    %p103 = scmp.ne.s32.totalorder %s98, %s100
    %p104 = scmp.eq.s32.totalorder %s10, 0
    %p105 = por %p103, %p104
    %p106 = scmp.ne.s32.totalorder %s98, %s100
    %p107 = scmp.eq.s32.totalorder %s15, 5
    %p108 = por %p106, %p107
    %p109 = scmp.ne.s32.totalorder %s100, %s101
    %p110 = scmp.eq.s32.totalorder %s15, 0
    %p111 = por %p109, %p110
    %p112 = scmp.ne.s32.totalorder %s100, %s101
    %p113 = scmp.eq.s32.totalorder %s16, 5
    %p114 = por %p112, %p113
    %p116 = scmp.ne.s32.totalorder %s101, %s115
    %p117 = scmp.eq.s32.totalorder %s16, 0
    %p118 = por %p116, %p117
    %s119 = ssub.s32 %s17, %s29
    %s120 = ssub.s32 %s18, %s25
    %s121 = sor.u32 %s119, %s120
    %p122 = scmp.eq.s32.totalorder %s121, 0
    %s124 = sadd.s32 %s123, 1
    %s125 = scalar_select %p122, %s123, %s124
    %p128 = pneg %p122
    %p129 = scmp.eq.s32.totalorder %s10, 5
    %p130 = por %p128, %p129
    %p131 = scmp.ne.s32.totalorder %s123, %s126
    %p132 = scmp.eq.s32.totalorder %s10, 0
    %p133 = por %p131, %p132
    %p134 = scmp.ne.s32.totalorder %s123, %s126
    %p135 = scmp.eq.s32.totalorder %s15, 5
    %p136 = por %p134, %p135
    %p137 = scmp.ne.s32.totalorder %s126, %s127
    %p138 = scmp.eq.s32.totalorder %s15, 0
    %p139 = por %p137, %p138
    %p140 = scmp.ne.s32.totalorder %s126, %s127
    %p141 = scmp.eq.s32.totalorder %s16, 5
    %p142 = por %p140, %p141
    %p144 = scmp.ne.s32.totalorder %s127, %s143
    %p145 = scmp.eq.s32.totalorder %s16, 0
    %p146 = por %p144, %p145
    %p147 = scmp.le.s32.totalorder 1, %s10
    %p148 = scmp.lt.s32.totalorder %s10, 7
    %p149 = pnand %p147, %p148
    %p150 = pneg %p149
    // Predicated region
    $region9: #{vgg16_forward.5} parent=5 // pred_check
      _
    $region10: #{vgg16_forward.5} parent=5 // pred_check_branch
      %152 = sbr.rel (%p149) target = $region12
    $region11: #{vgg16_forward.5} parent=5 // pred_region
      %s153 = ssub.s32 %s10, 1
      // Predicated region
      $region13: #{vgg16_forward.5} parent=11 // pred_check
        %p154 = pneg %p69
      $region14: #{vgg16_forward.5} parent=11 // pred_check_branch
        %156 = sbr.rel (%p154) target = $region16
      $region15: #{vgg16_forward.5} parent=11 // pred_region
        _
      $region16: #{vgg16_forward.5} parent=11 // pred_fallthru
        _
      // Predicated region
      $region17: #{vgg16_forward.5} parent=11 // pred_check
        %p157 = pneg %p90
      $region18: #{vgg16_forward.5} parent=11 // pred_check_branch
        %159 = sbr.rel (%p157) target = $region20
      $region19: #{vgg16_forward.5} parent=11 // pred_region
        _
      $region20: #{vgg16_forward.5} parent=11 // pred_fallthru
        _
      // Predicated region
      $region21: #{vgg16_forward.5} parent=11 // pred_check
        %p160 = pneg %p111
      $region22: #{vgg16_forward.5} parent=11 // pred_check_branch
        %162 = sbr.rel (%p160) target = $region24
      $region23: #{vgg16_forward.5} parent=11 // pred_region
        _
      $region24: #{vgg16_forward.5} parent=11 // pred_fallthru
        _
    $region12: #{vgg16_forward.5} parent=5 // pred_fallthru
      _
    %p163 = scmp.lt.s32.totalorder %s10, 6
    // Predicated region
    $region25: #{vgg16_forward.5} parent=5 // pred_check
      %p164 = pneg %p163
    $region26: #{vgg16_forward.5} parent=5 // pred_check_branch
      %166 = sbr.rel (%p164) target = $region28
    $region27: #{vgg16_forward.5} parent=5 // pred_region
      // Predicated region
      $region29: #{vgg16_forward.5} parent=27 // pred_check
        %p167 = pneg %p42
      $region30: #{vgg16_forward.5} parent=27 // pred_check_branch
        %169 = sbr.rel (%p167) target = $region32
      $region31: #{vgg16_forward.5} parent=27 // pred_region
        %p170 = scmp.lt.s32.totalorder %s17, 1
        %s171 = scalar_select %p170, %s17, 1
        %s172 = smul.addr %s171, 108
        %s173 = smul.addr %s172, 8
        %s174 = scalar_lea.vmem %s0, %s173
      $region32: #{vgg16_forward.5} parent=27 // pred_fallthru
        _
    $region28: #{vgg16_forward.5} parent=5 // pred_fallthru
      _
    %p175 = scmp.le.s32.totalorder 1, %s10
    %p176 = scmp.lt.s32.totalorder %s10, 7
    %p177 = pnand %p175, %p176
    %p178 = pneg %p177
    // Predicated region
    $region33: #{vgg16_forward.5} parent=5 // pred_check
      _
    $region34: #{vgg16_forward.5} parent=5 // pred_check_branch
      %180 = sbr.rel (%p177) target = $region36
    $region35: #{vgg16_forward.5} parent=5 // pred_region
      %s181 = ssub.s32 %s10, 1
      %p182 = scmp.lt.s32.totalorder %s19, 1
      %s183 = scalar_select %p182, %s19, 1
      %s184 = smul.addr %s183, 108
      %s185 = smul.addr %s184, 8
      %s186 = scalar_lea.vmem %s0, %s185
      %p187 = pneg %p48
      %p188 = pneg %p45
      %p189 = pneg %p69
      %p190 = pneg %p66
      %p191 = pneg %p90
      %p192 = pneg %p87
      %p193 = pneg %p111
      %p194 = pneg %p108
      %p195 = pneg %p139
      %p196 = pneg %p136
      %s197 = smul.u32 4, %s20
      %p198 = scmp.lt.s32.totalorder %s19, 1
      %s199 = scalar_select %p198, %s19, 1
      %p200 = scmp.lt.s32.totalorder %s197, 11
      %s201 = scalar_select %p200, %s197, 11
      %s202 = smul.addr %s201, 2
      %s203 = smul.addr %s199, 24
      %s204 = sadd.s32 %s202, %s203
      %s205 = smul.addr %s204, 8
      %s206 = scalar_lea.vmem %s4, %s205
      %p207 = scmp.lt.s32.totalorder %s19, 1
      %s208 = scalar_select %p207, %s19, 1
      %s209 = smul.addr %s208, 108
      %s210 = smul.addr %s209, 8
      %s211 = scalar_lea.vmem %s0, %s210
      %s212 = smul.u32 4, %s20
      %p213 = scmp.lt.s32.totalorder %s19, 1
      %s214 = scalar_select %p213, %s19, 1
      %p215 = scmp.lt.s32.totalorder %s212, 11
      %s216 = scalar_select %p215, %s212, 11
      %s217 = smul.addr %s216, 2
      %s218 = smul.addr %s214, 24
      %s219 = sadd.s32 %s217, %s218
      %s220 = smul.addr %s219, 8
      %s221 = scalar_lea.vmem %s4, %s220
      %s222 = smul.u32 4, %s20
      %s223 = smul.u32 %s20, 256
      %s224 = scalar_lea.vmem %s211, %s223
      %v225 = vld [vmem:[%s224] sm:$0xff]
      %v226 = vld [vmem:[%s224 + $0x8] sm:$0xff]
      %v227 = vld [vmem:[%s224 + $0x10] sm:$0xff]
      %v228 = vld [vmem:[%s224 + $0x18] sm:$0xff]
      %v229 = vld [vmem:[%s224 + $0x20] sm:$0xff]
      %v230 = vld [vmem:[%s224 + $0x28] sm:$0xff]
      %v231 = vld [vmem:[%s224 + $0x30] sm:$0xff]
      %v232 = vld [vmem:[%s224 + $0x38] sm:$0xff]
      %v233 = vld [vmem:[%s224 + $0x40] sm:$0xff]
      %v234 = vld [vmem:[%s224 + $0x48] sm:$0xff]
      %v235 = vld [vmem:[%s224 + $0x50] sm:$0xff]
      %v236 = vld [vmem:[%s224 + $0x58] sm:$0xff]
      %v237 = vld [vmem:[%s224 + $0x60] sm:$0xff]
      %v238 = vld [vmem:[%s224 + $0x68] sm:$0xff]
      %v239 = vld [vmem:[%s224 + $0x70] sm:$0xff]
      %v240 = vld [vmem:[%s224 + $0x78] sm:$0xff]
      %v241 = vld [vmem:[%s224 + $0x80] sm:$0xff]
      %v242 = vld [vmem:[%s224 + $0x88] sm:$0xff]
      %v243 = vld [vmem:[%s224 + $0x90] sm:$0xff]
      %v244 = vld [vmem:[%s224 + $0x98] sm:$0xff]
      %v245 = vld [vmem:[%s224 + $0xa0] sm:$0xff]
      %v246 = vld [vmem:[%s224 + $0xa8] sm:$0xff]
      %v247 = vld [vmem:[%s224 + $0xb0] sm:$0xff]
      %v248 = vld [vmem:[%s224 + $0xb8] sm:$0xff]
      %v249 = vld [vmem:[%s224 + $0xc0] sm:$0xff]
      %v250 = vld [vmem:[%s224 + $0xc8] sm:$0xff]
      %v251 = vld [vmem:[%s224 + $0xd0] sm:$0xff]
      %v252 = vld [vmem:[%s224 + $0xd8] sm:$0xff]
      %v253 = vld [vmem:[%s224 + $0xe0] sm:$0xff]
      %v254 = vld [vmem:[%s224 + $0xe8] sm:$0xff]
      %v255 = vld [vmem:[%s224 + $0xf0] sm:$0xff]
      %v256 = vld [vmem:[%s224 + $0xf8] sm:$0xff]
      %v257 = vld [vmem:[%s1] sm:$0xff]
      %v258 = vld [vmem:[%s1 + $0x8] sm:$0xff]
      %v259 = vld [vmem:[%s1 + $0x10] sm:$0xff]
      %v260 = vld [vmem:[%s1 + $0x18] sm:$0xff]
      %v261 = vld [vmem:[%s1 + $0x20] sm:$0xff]
      %v262 = vld [vmem:[%s1 + $0x28] sm:$0xff]
      %v263 = vld [vmem:[%s1 + $0x30] sm:$0xff]
      %v264 = vld [vmem:[%s1 + $0x38] sm:$0xff]
      %s265 = sadd.s32 %s223, 1
      %s266 = scalar_lea.vmem %s211, %s265
      %v267 = vld [vmem:[%s266] sm:$0xff]
      %v268 = vld [vmem:[%s266 + $0x8] sm:$0xff]
      %v269 = vld [vmem:[%s266 + $0x10] sm:$0xff]
      %v270 = vld [vmem:[%s266 + $0x18] sm:$0xff]
      %v271 = vld [vmem:[%s266 + $0x20] sm:$0xff]
      %v272 = vld [vmem:[%s266 + $0x28] sm:$0xff]
      %v273 = vld [vmem:[%s266 + $0x30] sm:$0xff]
      %v274 = vld [vmem:[%s266 + $0x38] sm:$0xff]
      %v275 = vld [vmem:[%s266 + $0x40] sm:$0xff]
      %v276 = vld [vmem:[%s266 + $0x48] sm:$0xff]
      %v277 = vld [vmem:[%s266 + $0x50] sm:$0xff]
      %v278 = vld [vmem:[%s266 + $0x58] sm:$0xff]
      %v279 = vld [vmem:[%s266 + $0x60] sm:$0xff]
      %v280 = vld [vmem:[%s266 + $0x68] sm:$0xff]
      %v281 = vld [vmem:[%s266 + $0x70] sm:$0xff]
      %v282 = vld [vmem:[%s266 + $0x78] sm:$0xff]
      %v283 = vld [vmem:[%s266 + $0x80] sm:$0xff]
      %v284 = vld [vmem:[%s266 + $0x88] sm:$0xff]
      %v285 = vld [vmem:[%s266 + $0x90] sm:$0xff]
      %v286 = vld [vmem:[%s266 + $0x98] sm:$0xff]
      %v287 = vld [vmem:[%s266 + $0xa0] sm:$0xff]
      %v288 = vld [vmem:[%s266 + $0xa8] sm:$0xff]
      %v289 = vld [vmem:[%s266 + $0xb0] sm:$0xff]
      %v290 = vld [vmem:[%s266 + $0xb8] sm:$0xff]
      %v291 = vld [vmem:[%s266 + $0xc0] sm:$0xff]
      %v292 = vld [vmem:[%s266 + $0xc8] sm:$0xff]
      %v293 = vld [vmem:[%s266 + $0xd0] sm:$0xff]
      %v294 = vld [vmem:[%s266 + $0xd8] sm:$0xff]
      %v295 = vld [vmem:[%s266 + $0xe0] sm:$0xff]
      %v296 = vld [vmem:[%s266 + $0xe8] sm:$0xff]
      %v297 = vld [vmem:[%s266 + $0xf0] sm:$0xff]
      %v298 = vld [vmem:[%s266 + $0xf8] sm:$0xff]
      %s299 = scalar_lea.vmem %s1, 64
      %v300 = vld [vmem:[%s299] sm:$0xff]
      %v301 = vld [vmem:[%s299 + $0x8] sm:$0xff]
      %v302 = vld [vmem:[%s299 + $0x10] sm:$0xff]
      %v303 = vld [vmem:[%s299 + $0x18] sm:$0xff]
      %v304 = vld [vmem:[%s299 + $0x20] sm:$0xff]
      %v305 = vld [vmem:[%s299 + $0x28] sm:$0xff]
      %v306 = vld [vmem:[%s299 + $0x30] sm:$0xff]
      %v307 = vld [vmem:[%s299 + $0x38] sm:$0xff]
      %vm308 = vcmask 523264
      %v310 = vsel %vm308, %v267, 0
      %v313 = vsel %vm308, %v268, 0
      %v316 = vsel %vm308, %v269, 0
      %v319 = vsel %vm308, %v270, 0
      %v322 = vsel %vm308, %v271, 0
      %v325 = vsel %vm308, %v272, 0
      %v328 = vsel %vm308, %v273, 0
      %v331 = vsel %vm308, %v274, 0
      %v334 = vsel %vm308, %v275, 0
      %v337 = vsel %vm308, %v276, 0
      %v340 = vsel %vm308, %v277, 0
      %v343 = vsel %vm308, %v278, 0
      %v346 = vsel %vm308, %v279, 0
      %v349 = vsel %vm308, %v280, 0
      %v352 = vsel %vm308, %v281, 0
      %v355 = vsel %vm308, %v282, 0
      %v358 = vsel %vm308, %v283, 0
      %v361 = vsel %vm308, %v284, 0
      %v364 = vsel %vm308, %v285, 0
      %v367 = vsel %vm308, %v286, 0
      %v370 = vsel %vm308, %v287, 0
      %v373 = vsel %vm308, %v288, 0
      %v376 = vsel %vm308, %v289, 0
      %v379 = vsel %vm308, %v290, 0
      %v382 = vsel %vm308, %v291, 0
      %v385 = vsel %vm308, %v292, 0
      %v388 = vsel %vm308, %v293, 0
      %v391 = vsel %vm308, %v294, 0
      %v394 = vsel %vm308, %v295, 0
      %v397 = vsel %vm308, %v296, 0
      %v400 = vsel %vm308, %v297, 0
      %v403 = vsel %vm308, %v298, 0
      %405 = vmatpush.msra.mxu0 0.0
      %406 = vmatpush.msra.mxu0 0.0
      %407 = vmatpush.msra.mxu0 0.0
      %408 = vmatpush.msra.mxu0 0.0
      %409 = vmatpush.msra.mxu0 0.0
      %410 = vmatpush.msra.mxu0 0.0
      %411 = vmatpush.msra.mxu0 0.0
      %412 = vmatpush.msra.mxu0 0.0
      %413 = vmatpush.msra.mxu0 %v307
      %414 = vmatpush.msra.mxu0 %v306
      %415 = vmatpush.msra.mxu0 %v305
      %416 = vmatpush.msra.mxu0 %v304
      %417 = vmatpush.msra.mxu0 %v303
      %418 = vmatpush.msra.mxu0 %v302
      %419 = vmatpush.msra.mxu0 %v301
      %420 = vmatpush.msra.mxu0 %v300
      %421 = vmatmul.f32.gmra.mxu0 %v310
      %v422 = vpop.f32.mrf.mxu0
      %v423 = vadd.f32 0.0, %v422
      %424 = vmatmul.f32.gmra.mxu0 %v313
      %v425 = vpop.f32.mrf.mxu0
      %v426 = vadd.f32 0.0, %v425
      %427 = vmatmul.f32.gmra.mxu0 %v316
      %v428 = vpop.f32.mrf.mxu0
      %v429 = vadd.f32 0.0, %v428
      %430 = vmatmul.f32.gmra.mxu0 %v319
      %v431 = vpop.f32.mrf.mxu0
      %v432 = vadd.f32 0.0, %v431
      %433 = vmatmul.f32.gmra.mxu0 %v322
      %v434 = vpop.f32.mrf.mxu0
      %v435 = vadd.f32 0.0, %v434
      %436 = vmatmul.f32.gmra.mxu0 %v325
      %v437 = vpop.f32.mrf.mxu0
      %v438 = vadd.f32 0.0, %v437
      %439 = vmatmul.f32.gmra.mxu0 %v328
      %v440 = vpop.f32.mrf.mxu0
      %v441 = vadd.f32 0.0, %v440
      %442 = vmatmul.f32.gmra.mxu0 %v331
      %v443 = vpop.f32.mrf.mxu0
      %v444 = vadd.f32 0.0, %v443
      %445 = vmatmul.f32.gmra.mxu0 %v334
      %v446 = vpop.f32.mrf.mxu0
      %v447 = vadd.f32 0.0, %v446
      %448 = vmatmul.f32.gmra.mxu0 %v337
      %v449 = vpop.f32.mrf.mxu0
      %v450 = vadd.f32 0.0, %v449
      %451 = vmatmul.f32.gmra.mxu0 %v340
      %v452 = vpop.f32.mrf.mxu0
      %v453 = vadd.f32 0.0, %v452
      %454 = vmatmul.f32.gmra.mxu0 %v343
      %v455 = vpop.f32.mrf.mxu0
      %v456 = vadd.f32 0.0, %v455
      %457 = vmatmul.f32.gmra.mxu0 %v346
      %v458 = vpop.f32.mrf.mxu0
      %v459 = vadd.f32 0.0, %v458
      %460 = vmatmul.f32.gmra.mxu0 %v349
      %v461 = vpop.f32.mrf.mxu0
      %v462 = vadd.f32 0.0, %v461
      %463 = vmatmul.f32.gmra.mxu0 %v352
      %v464 = vpop.f32.mrf.mxu0
      %v465 = vadd.f32 0.0, %v464
      %466 = vmatmul.f32.gmra.mxu0 %v355
      %v467 = vpop.f32.mrf.mxu0
      %v468 = vadd.f32 0.0, %v467
      %469 = vmatmul.f32.gmra.mxu0 %v358
      %v470 = vpop.f32.mrf.mxu0
      %v471 = vadd.f32 0.0, %v470
      %472 = vmatmul.f32.gmra.mxu0 %v361
      %v473 = vpop.f32.mrf.mxu0
      %v474 = vadd.f32 0.0, %v473
      %475 = vmatmul.f32.gmra.mxu0 %v364
      %v476 = vpop.f32.mrf.mxu0
      %v477 = vadd.f32 0.0, %v476
      %478 = vmatmul.f32.gmra.mxu0 %v367
      %v479 = vpop.f32.mrf.mxu0
      %v480 = vadd.f32 0.0, %v479
      %481 = vmatmul.f32.gmra.mxu0 %v370
      %v482 = vpop.f32.mrf.mxu0
      %v483 = vadd.f32 0.0, %v482
      %484 = vmatmul.f32.gmra.mxu0 %v373
      %v485 = vpop.f32.mrf.mxu0
      %v486 = vadd.f32 0.0, %v485
      %487 = vmatmul.f32.gmra.mxu0 %v376
      %v488 = vpop.f32.mrf.mxu0
      %v489 = vadd.f32 0.0, %v488
      %490 = vmatmul.f32.gmra.mxu0 %v379
      %v491 = vpop.f32.mrf.mxu0
      %v492 = vadd.f32 0.0, %v491
      %493 = vmatmul.f32.gmra.mxu0 %v382
      %v494 = vpop.f32.mrf.mxu0
      %v495 = vadd.f32 0.0, %v494
      %496 = vmatmul.f32.gmra.mxu0 %v385
      %v497 = vpop.f32.mrf.mxu0
      %v498 = vadd.f32 0.0, %v497
      %499 = vmatmul.f32.gmra.mxu0 %v388
      %v500 = vpop.f32.mrf.mxu0
      %v501 = vadd.f32 0.0, %v500
      %502 = vmatmul.f32.gmra.mxu0 %v391
      %v503 = vpop.f32.mrf.mxu0
      %v504 = vadd.f32 0.0, %v503
      %505 = vmatmul.f32.gmra.mxu0 %v394
      %v506 = vpop.f32.mrf.mxu0
      %v507 = vadd.f32 0.0, %v506
      %508 = vmatmul.f32.gmra.mxu0 %v397
      %v509 = vpop.f32.mrf.mxu0
      %v510 = vadd.f32 0.0, %v509
      %511 = vmatmul.f32.gmra.mxu0 %v400
      %v512 = vpop.f32.mrf.mxu0
      %v513 = vadd.f32 0.0, %v512
      %514 = vmatmul.f32.gmra.mxu0 %v403
      %v515 = vpop.f32.mrf.mxu0
      %v516 = vadd.f32 0.0, %v515
      %517 = vdwg.mxu0
      %v519 = vsel %vm308, %v225, 0
      %v522 = vsel %vm308, %v226, 0
      %v525 = vsel %vm308, %v227, 0
      %v528 = vsel %vm308, %v228, 0
      %v531 = vsel %vm308, %v229, 0
      %v534 = vsel %vm308, %v230, 0
      %v537 = vsel %vm308, %v231, 0
      %v540 = vsel %vm308, %v232, 0
      %v543 = vsel %vm308, %v233, 0
      %v546 = vsel %vm308, %v234, 0
      %v549 = vsel %vm308, %v235, 0
      %v552 = vsel %vm308, %v236, 0
      %v555 = vsel %vm308, %v237, 0
      %v558 = vsel %vm308, %v238, 0
      %v561 = vsel %vm308, %v239, 0
      %v564 = vsel %vm308, %v240, 0
      %v567 = vsel %vm308, %v241, 0
      %v570 = vsel %vm308, %v242, 0
      %v573 = vsel %vm308, %v243, 0
      %v576 = vsel %vm308, %v244, 0
      %v579 = vsel %vm308, %v245, 0
      %v582 = vsel %vm308, %v246, 0
      %v585 = vsel %vm308, %v247, 0
      %v588 = vsel %vm308, %v248, 0
      %v591 = vsel %vm308, %v249, 0
      %v594 = vsel %vm308, %v250, 0
      %v597 = vsel %vm308, %v251, 0
      %v600 = vsel %vm308, %v252, 0
      %v603 = vsel %vm308, %v253, 0
      %v606 = vsel %vm308, %v254, 0
      %v609 = vsel %vm308, %v255, 0
      %v612 = vsel %vm308, %v256, 0
      %614 = vmatpush.msra.mxu0 0.0
      %615 = vmatpush.msra.mxu0 0.0
      %616 = vmatpush.msra.mxu0 0.0
      %617 = vmatpush.msra.mxu0 0.0
      %618 = vmatpush.msra.mxu0 0.0
      %619 = vmatpush.msra.mxu0 0.0
      %620 = vmatpush.msra.mxu0 0.0
      %621 = vmatpush.msra.mxu0 0.0
      %622 = vmatpush.msra.mxu0 %v264
      %623 = vmatpush.msra.mxu0 %v263
      %624 = vmatpush.msra.mxu0 %v262
      %625 = vmatpush.msra.mxu0 %v261
      %626 = vmatpush.msra.mxu0 %v260
      %627 = vmatpush.msra.mxu0 %v259
      %628 = vmatpush.msra.mxu0 %v258
      %629 = vmatpush.msra.mxu0 %v257
      %630 = vmatmul.f32.gmra.mxu0 %v519
      %v631 = vpop.f32.mrf.mxu0
      %v632 = vadd.f32 %v423, %v631
      %633 = vmatmul.f32.gmra.mxu0 %v522
      %v634 = vpop.f32.mrf.mxu0
      %v635 = vadd.f32 %v426, %v634
      %636 = vmatmul.f32.gmra.mxu0 %v525
      %v637 = vpop.f32.mrf.mxu0
      %v638 = vadd.f32 %v429, %v637
      %639 = vmatmul.f32.gmra.mxu0 %v528
      %v640 = vpop.f32.mrf.mxu0
      %v641 = vadd.f32 %v432, %v640
      %642 = vmatmul.f32.gmra.mxu0 %v531
      %v643 = vpop.f32.mrf.mxu0
      %v644 = vadd.f32 %v435, %v643
      %645 = vmatmul.f32.gmra.mxu0 %v534
      %v646 = vpop.f32.mrf.mxu0
      %v647 = vadd.f32 %v438, %v646
      %648 = vmatmul.f32.gmra.mxu0 %v537
      %v649 = vpop.f32.mrf.mxu0
      %v650 = vadd.f32 %v441, %v649
      %651 = vmatmul.f32.gmra.mxu0 %v540
      %v652 = vpop.f32.mrf.mxu0
      %v653 = vadd.f32 %v444, %v652
      %654 = vmatmul.f32.gmra.mxu0 %v543
      %v655 = vpop.f32.mrf.mxu0
      %v656 = vadd.f32 %v447, %v655
      %657 = vmatmul.f32.gmra.mxu0 %v546
      %v658 = vpop.f32.mrf.mxu0
      %v659 = vadd.f32 %v450, %v658
      %660 = vmatmul.f32.gmra.mxu0 %v549
      %v661 = vpop.f32.mrf.mxu0
      %v662 = vadd.f32 %v453, %v661
      %663 = vmatmul.f32.gmra.mxu0 %v552
      %v664 = vpop.f32.mrf.mxu0
      %v665 = vadd.f32 %v456, %v664
      %666 = vmatmul.f32.gmra.mxu0 %v555
      %v667 = vpop.f32.mrf.mxu0
      %v668 = vadd.f32 %v459, %v667
      %669 = vmatmul.f32.gmra.mxu0 %v558
      %v670 = vpop.f32.mrf.mxu0
      %v671 = vadd.f32 %v462, %v670
      %672 = vmatmul.f32.gmra.mxu0 %v561
      %v673 = vpop.f32.mrf.mxu0
      %v674 = vadd.f32 %v465, %v673
      %675 = vmatmul.f32.gmra.mxu0 %v564
      %v676 = vpop.f32.mrf.mxu0
      %v677 = vadd.f32 %v468, %v676
      %678 = vmatmul.f32.gmra.mxu0 %v567
      %v679 = vpop.f32.mrf.mxu0
      %v680 = vadd.f32 %v471, %v679
      %681 = vmatmul.f32.gmra.mxu0 %v570
      %v682 = vpop.f32.mrf.mxu0
      %v683 = vadd.f32 %v474, %v682
      %684 = vmatmul.f32.gmra.mxu0 %v573
      %v685 = vpop.f32.mrf.mxu0
      %v686 = vadd.f32 %v477, %v685
      %687 = vmatmul.f32.gmra.mxu0 %v576
      %v688 = vpop.f32.mrf.mxu0
      %v689 = vadd.f32 %v480, %v688
      %690 = vmatmul.f32.gmra.mxu0 %v579
      %v691 = vpop.f32.mrf.mxu0
      %v692 = vadd.f32 %v483, %v691
      %693 = vmatmul.f32.gmra.mxu0 %v582
      %v694 = vpop.f32.mrf.mxu0
      %v695 = vadd.f32 %v486, %v694
      %696 = vmatmul.f32.gmra.mxu0 %v585
      %v697 = vpop.f32.mrf.mxu0
      %v698 = vadd.f32 %v489, %v697
      %699 = vmatmul.f32.gmra.mxu0 %v588
      %v700 = vpop.f32.mrf.mxu0
      %v701 = vadd.f32 %v492, %v700
      %702 = vmatmul.f32.gmra.mxu0 %v591
      %v703 = vpop.f32.mrf.mxu0
      %v704 = vadd.f32 %v495, %v703
      %705 = vmatmul.f32.gmra.mxu0 %v594
      %v706 = vpop.f32.mrf.mxu0
      %v707 = vadd.f32 %v498, %v706
      %708 = vmatmul.f32.gmra.mxu0 %v597
      %v709 = vpop.f32.mrf.mxu0
      %v710 = vadd.f32 %v501, %v709
      %711 = vmatmul.f32.gmra.mxu0 %v600
      %v712 = vpop.f32.mrf.mxu0
      %v713 = vadd.f32 %v504, %v712
      %714 = vmatmul.f32.gmra.mxu0 %v603
      %v715 = vpop.f32.mrf.mxu0
      %v716 = vadd.f32 %v507, %v715
      %717 = vmatmul.f32.gmra.mxu0 %v606
      %v718 = vpop.f32.mrf.mxu0
      %v719 = vadd.f32 %v510, %v718
      %720 = vmatmul.f32.gmra.mxu0 %v609
      %v721 = vpop.f32.mrf.mxu0
      %v722 = vadd.f32 %v513, %v721
      %723 = vmatmul.f32.gmra.mxu0 %v612
      %v724 = vpop.f32.mrf.mxu0
      %v725 = vadd.f32 %v516, %v724
      %726 = vdwg.mxu0
      %s727 = sadd.s32 %s223, 2
      %s728 = scalar_lea.vmem %s211, %s727
      %v729 = vld [vmem:[%s728] sm:$0xff]
      %v730 = vld [vmem:[%s728 + $0x8] sm:$0xff]
      %v731 = vld [vmem:[%s728 + $0x10] sm:$0xff]
      %v732 = vld [vmem:[%s728 + $0x18] sm:$0xff]
      %v733 = vld [vmem:[%s728 + $0x20] sm:$0xff]
      %v734 = vld [vmem:[%s728 + $0x28] sm:$0xff]
      %v735 = vld [vmem:[%s728 + $0x30] sm:$0xff]
      %v736 = vld [vmem:[%s728 + $0x38] sm:$0xff]
      %v737 = vld [vmem:[%s728 + $0x40] sm:$0xff]
      %v738 = vld [vmem:[%s728 + $0x48] sm:$0xff]
      %v739 = vld [vmem:[%s728 + $0x50] sm:$0xff]
      %v740 = vld [vmem:[%s728 + $0x58] sm:$0xff]
      %v741 = vld [vmem:[%s728 + $0x60] sm:$0xff]
      %v742 = vld [vmem:[%s728 + $0x68] sm:$0xff]
      %v743 = vld [vmem:[%s728 + $0x70] sm:$0xff]
      %v744 = vld [vmem:[%s728 + $0x78] sm:$0xff]
      %v745 = vld [vmem:[%s728 + $0x80] sm:$0xff]
      %v746 = vld [vmem:[%s728 + $0x88] sm:$0xff]
      %v747 = vld [vmem:[%s728 + $0x90] sm:$0xff]
      %v748 = vld [vmem:[%s728 + $0x98] sm:$0xff]
      %v749 = vld [vmem:[%s728 + $0xa0] sm:$0xff]
      %v750 = vld [vmem:[%s728 + $0xa8] sm:$0xff]
      %v751 = vld [vmem:[%s728 + $0xb0] sm:$0xff]
      %v752 = vld [vmem:[%s728 + $0xb8] sm:$0xff]
      %v753 = vld [vmem:[%s728 + $0xc0] sm:$0xff]
      %v754 = vld [vmem:[%s728 + $0xc8] sm:$0xff]
      %v755 = vld [vmem:[%s728 + $0xd0] sm:$0xff]
      %v756 = vld [vmem:[%s728 + $0xd8] sm:$0xff]
      %v757 = vld [vmem:[%s728 + $0xe0] sm:$0xff]
      %v758 = vld [vmem:[%s728 + $0xe8] sm:$0xff]
      %v759 = vld [vmem:[%s728 + $0xf0] sm:$0xff]
      %v760 = vld [vmem:[%s728 + $0xf8] sm:$0xff]
      %s761 = scalar_lea.vmem %s1, 128
      %v762 = vld [vmem:[%s761] sm:$0xff]
      %v763 = vld [vmem:[%s761 + $0x8] sm:$0xff]
      %v764 = vld [vmem:[%s761 + $0x10] sm:$0xff]
      %v765 = vld [vmem:[%s761 + $0x18] sm:$0xff]
      %v766 = vld [vmem:[%s761 + $0x20] sm:$0xff]
      %v767 = vld [vmem:[%s761 + $0x28] sm:$0xff]
      %v768 = vld [vmem:[%s761 + $0x30] sm:$0xff]
      %v769 = vld [vmem:[%s761 + $0x38] sm:$0xff]
      %v771 = vsel %vm308, %v729, 0
      %v774 = vsel %vm308, %v730, 0
      %v777 = vsel %vm308, %v731, 0
      %v780 = vsel %vm308, %v732, 0
      %v783 = vsel %vm308, %v733, 0
      %v786 = vsel %vm308, %v734, 0
      %v789 = vsel %vm308, %v735, 0
      %v792 = vsel %vm308, %v736, 0
      %v795 = vsel %vm308, %v737, 0
      %v798 = vsel %vm308, %v738, 0
      %v801 = vsel %vm308, %v739, 0
      %v804 = vsel %vm308, %v740, 0
      %v807 = vsel %vm308, %v741, 0
      %v810 = vsel %vm308, %v742, 0
      %v813 = vsel %vm308, %v743, 0
      %v816 = vsel %vm308, %v744, 0
      %v819 = vsel %vm308, %v745, 0
      %v822 = vsel %vm308, %v746, 0
      %v825 = vsel %vm308, %v747, 0
      %v828 = vsel %vm308, %v748, 0
      %v831 = vsel %vm308, %v749, 0
      %v834 = vsel %vm308, %v750, 0
      %v837 = vsel %vm308, %v751, 0
      %v840 = vsel %vm308, %v752, 0
      %v843 = vsel %vm308, %v753, 0
      %v846 = vsel %vm308, %v754, 0
      %v849 = vsel %vm308, %v755, 0
      %v852 = vsel %vm308, %v756, 0
      %v855 = vsel %vm308, %v757, 0
      %v858 = vsel %vm308, %v758, 0
      %v861 = vsel %vm308, %v759, 0
      %v864 = vsel %vm308, %v760, 0
      %866 = vmatpush.msra.mxu0 0.0
      %867 = vmatpush.msra.mxu0 0.0
      %868 = vmatpush.msra.mxu0 0.0
      %869 = vmatpush.msra.mxu0 0.0
      %870 = vmatpush.msra.mxu0 0.0
      %871 = vmatpush.msra.mxu0 0.0
      %872 = vmatpush.msra.mxu0 0.0
      %873 = vmatpush.msra.mxu0 0.0
      %874 = vmatpush.msra.mxu0 %v769
      %875 = vmatpush.msra.mxu0 %v768
      %876 = vmatpush.msra.mxu0 %v767
      %877 = vmatpush.msra.mxu0 %v766
      %878 = vmatpush.msra.mxu0 %v765
      %879 = vmatpush.msra.mxu0 %v764
      %880 = vmatpush.msra.mxu0 %v763
      %881 = vmatpush.msra.mxu0 %v762
      %882 = vmatmul.f32.gmra.mxu0 %v771
      %v883 = vpop.f32.mrf.mxu0
      %v884 = vadd.f32 0.0, %v883
      %885 = vmatmul.f32.gmra.mxu0 %v774
      %v886 = vpop.f32.mrf.mxu0
      %v887 = vadd.f32 0.0, %v886
      %888 = vmatmul.f32.gmra.mxu0 %v777
      %v889 = vpop.f32.mrf.mxu0
      %v890 = vadd.f32 0.0, %v889
      %891 = vmatmul.f32.gmra.mxu0 %v780
      %v892 = vpop.f32.mrf.mxu0
      %v893 = vadd.f32 0.0, %v892
      %894 = vmatmul.f32.gmra.mxu0 %v783
      %v895 = vpop.f32.mrf.mxu0
      %v896 = vadd.f32 0.0, %v895
      %897 = vmatmul.f32.gmra.mxu0 %v786
      %v898 = vpop.f32.mrf.mxu0
      %v899 = vadd.f32 0.0, %v898
      %900 = vmatmul.f32.gmra.mxu0 %v789
      %v901 = vpop.f32.mrf.mxu0
      %v902 = vadd.f32 0.0, %v901
      %903 = vmatmul.f32.gmra.mxu0 %v792
      %v904 = vpop.f32.mrf.mxu0
      %v905 = vadd.f32 0.0, %v904
      %906 = vmatmul.f32.gmra.mxu0 %v795
      %v907 = vpop.f32.mrf.mxu0
      %v908 = vadd.f32 0.0, %v907
      %909 = vmatmul.f32.gmra.mxu0 %v798
      %v910 = vpop.f32.mrf.mxu0
      %v911 = vadd.f32 0.0, %v910
      %912 = vmatmul.f32.gmra.mxu0 %v801
      %v913 = vpop.f32.mrf.mxu0
      %v914 = vadd.f32 0.0, %v913
      %915 = vmatmul.f32.gmra.mxu0 %v804
      %v916 = vpop.f32.mrf.mxu0
      %v917 = vadd.f32 0.0, %v916
      %918 = vmatmul.f32.gmra.mxu0 %v807
      %v919 = vpop.f32.mrf.mxu0
      %v920 = vadd.f32 0.0, %v919
      %921 = vmatmul.f32.gmra.mxu0 %v810
      %v922 = vpop.f32.mrf.mxu0
      %v923 = vadd.f32 0.0, %v922
      %924 = vmatmul.f32.gmra.mxu0 %v813
      %v925 = vpop.f32.mrf.mxu0
      %v926 = vadd.f32 0.0, %v925
      %927 = vmatmul.f32.gmra.mxu0 %v816
      %v928 = vpop.f32.mrf.mxu0
      %v929 = vadd.f32 0.0, %v928
      %930 = vmatmul.f32.gmra.mxu0 %v819
      %v931 = vpop.f32.mrf.mxu0
      %v932 = vadd.f32 0.0, %v931
      %933 = vmatmul.f32.gmra.mxu0 %v822
      %v934 = vpop.f32.mrf.mxu0
      %v935 = vadd.f32 0.0, %v934
      %936 = vmatmul.f32.gmra.mxu0 %v825
      %v937 = vpop.f32.mrf.mxu0
      %v938 = vadd.f32 0.0, %v937
      %939 = vmatmul.f32.gmra.mxu0 %v828
      %v940 = vpop.f32.mrf.mxu0
      %v941 = vadd.f32 0.0, %v940
      %942 = vmatmul.f32.gmra.mxu0 %v831
      %v943 = vpop.f32.mrf.mxu0
      %v944 = vadd.f32 0.0, %v943
      %945 = vmatmul.f32.gmra.mxu0 %v834
      %v946 = vpop.f32.mrf.mxu0
      %v947 = vadd.f32 0.0, %v946
      %948 = vmatmul.f32.gmra.mxu0 %v837
      %v949 = vpop.f32.mrf.mxu0
      %v950 = vadd.f32 0.0, %v949
      %951 = vmatmul.f32.gmra.mxu0 %v840
      %v952 = vpop.f32.mrf.mxu0
      %v953 = vadd.f32 0.0, %v952
      %954 = vmatmul.f32.gmra.mxu0 %v843
      %v955 = vpop.f32.mrf.mxu0
      %v956 = vadd.f32 0.0, %v955
      %957 = vmatmul.f32.gmra.mxu0 %v846
      %v958 = vpop.f32.mrf.mxu0
      %v959 = vadd.f32 0.0, %v958
      %960 = vmatmul.f32.gmra.mxu0 %v849
      %v961 = vpop.f32.mrf.mxu0
      %v962 = vadd.f32 0.0, %v961
      %963 = vmatmul.f32.gmra.mxu0 %v852
      %v964 = vpop.f32.mrf.mxu0
      %v965 = vadd.f32 0.0, %v964
      %966 = vmatmul.f32.gmra.mxu0 %v855
      %v967 = vpop.f32.mrf.mxu0
      %v968 = vadd.f32 0.0, %v967
      %969 = vmatmul.f32.gmra.mxu0 %v858
      %v970 = vpop.f32.mrf.mxu0
      %v971 = vadd.f32 0.0, %v970
      %972 = vmatmul.f32.gmra.mxu0 %v861
      %v973 = vpop.f32.mrf.mxu0
      %v974 = vadd.f32 0.0, %v973
      %975 = vmatmul.f32.gmra.mxu0 %v864
      %v976 = vpop.f32.mrf.mxu0
      %v977 = vadd.f32 0.0, %v976
      %978 = vdwg.mxu0
      %v979 = vadd.f32 %v632, %v884
      %v980 = vadd.f32 %v635, %v887
      %v981 = vadd.f32 %v638, %v890
      %v982 = vadd.f32 %v641, %v893
      %v983 = vadd.f32 %v644, %v896
      %v984 = vadd.f32 %v647, %v899
      %v985 = vadd.f32 %v650, %v902
      %v986 = vadd.f32 %v653, %v905
      %v987 = vadd.f32 %v656, %v908
      %v988 = vadd.f32 %v659, %v911
      %v989 = vadd.f32 %v662, %v914
      %v990 = vadd.f32 %v665, %v917
      %v991 = vadd.f32 %v668, %v920
      %v992 = vadd.f32 %v671, %v923
      %v993 = vadd.f32 %v674, %v926
      %v994 = vadd.f32 %v677, %v929
      %v995 = vadd.f32 %v680, %v932
      %v996 = vadd.f32 %v683, %v935
      %v997 = vadd.f32 %v686, %v938
      %v998 = vadd.f32 %v689, %v941
      %v999 = vadd.f32 %v692, %v944
      %v1000 = vadd.f32 %v695, %v947
      %v1001 = vadd.f32 %v698, %v950
      %v1002 = vadd.f32 %v701, %v953
      %v1003 = vadd.f32 %v704, %v956
      %v1004 = vadd.f32 %v707, %v959
      %v1005 = vadd.f32 %v710, %v962
      %v1006 = vadd.f32 %v713, %v965
      %v1007 = vadd.f32 %v716, %v968
      %v1008 = vadd.f32 %v719, %v971
      %v1009 = vadd.f32 %v722, %v974
      %v1010 = vadd.f32 %v725, %v977
      %s1011 = sadd.s32 %s223, 32
      %s1012 = scalar_lea.vmem %s211, %s1011
      %v1013 = vld [vmem:[%s1012] sm:$0xff]
      %v1014 = vld [vmem:[%s1012 + $0x8] sm:$0xff]
      %v1015 = vld [vmem:[%s1012 + $0x10] sm:$0xff]
      %v1016 = vld [vmem:[%s1012 + $0x18] sm:$0xff]
      %v1017 = vld [vmem:[%s1012 + $0x20] sm:$0xff]
      %v1018 = vld [vmem:[%s1012 + $0x28] sm:$0xff]
      %v1019 = vld [vmem:[%s1012 + $0x30] sm:$0xff]
      %v1020 = vld [vmem:[%s1012 + $0x38] sm:$0xff]
      %v1021 = vld [vmem:[%s1012 + $0x40] sm:$0xff]
      %v1022 = vld [vmem:[%s1012 + $0x48] sm:$0xff]
      %v1023 = vld [vmem:[%s1012 + $0x50] sm:$0xff]
      %v1024 = vld [vmem:[%s1012 + $0x58] sm:$0xff]
      %v1025 = vld [vmem:[%s1012 + $0x60] sm:$0xff]
      %v1026 = vld [vmem:[%s1012 + $0x68] sm:$0xff]
      %v1027 = vld [vmem:[%s1012 + $0x70] sm:$0xff]
      %v1028 = vld [vmem:[%s1012 + $0x78] sm:$0xff]
      %v1029 = vld [vmem:[%s1012 + $0x80] sm:$0xff]
      %v1030 = vld [vmem:[%s1012 + $0x88] sm:$0xff]
      %v1031 = vld [vmem:[%s1012 + $0x90] sm:$0xff]
      %v1032 = vld [vmem:[%s1012 + $0x98] sm:$0xff]
      %v1033 = vld [vmem:[%s1012 + $0xa0] sm:$0xff]
      %v1034 = vld [vmem:[%s1012 + $0xa8] sm:$0xff]
      %v1035 = vld [vmem:[%s1012 + $0xb0] sm:$0xff]
      %v1036 = vld [vmem:[%s1012 + $0xb8] sm:$0xff]
      %v1037 = vld [vmem:[%s1012 + $0xc0] sm:$0xff]
      %v1038 = vld [vmem:[%s1012 + $0xc8] sm:$0xff]
      %v1039 = vld [vmem:[%s1012 + $0xd0] sm:$0xff]
      %v1040 = vld [vmem:[%s1012 + $0xd8] sm:$0xff]
      %v1041 = vld [vmem:[%s1012 + $0xe0] sm:$0xff]
      %v1042 = vld [vmem:[%s1012 + $0xe8] sm:$0xff]
      %v1043 = vld [vmem:[%s1012 + $0xf0] sm:$0xff]
      %v1044 = vld [vmem:[%s1012 + $0xf8] sm:$0xff]
      %s1045 = scalar_lea.vmem %s1, 192
      %v1046 = vld [vmem:[%s1045] sm:$0xff]
      %v1047 = vld [vmem:[%s1045 + $0x8] sm:$0xff]
      %v1048 = vld [vmem:[%s1045 + $0x10] sm:$0xff]
      %v1049 = vld [vmem:[%s1045 + $0x18] sm:$0xff]
      %v1050 = vld [vmem:[%s1045 + $0x20] sm:$0xff]
      %v1051 = vld [vmem:[%s1045 + $0x28] sm:$0xff]
      %v1052 = vld [vmem:[%s1045 + $0x30] sm:$0xff]
      %v1053 = vld [vmem:[%s1045 + $0x38] sm:$0xff]
      %v1055 = vsel %vm308, %v1013, 0
      %v1058 = vsel %vm308, %v1014, 0
      %v1061 = vsel %vm308, %v1015, 0
      %v1064 = vsel %vm308, %v1016, 0
      %v1067 = vsel %vm308, %v1017, 0
      %v1070 = vsel %vm308, %v1018, 0
      %v1073 = vsel %vm308, %v1019, 0
      %v1076 = vsel %vm308, %v1020, 0
      %v1079 = vsel %vm308, %v1021, 0
      %v1082 = vsel %vm308, %v1022, 0
      %v1085 = vsel %vm308, %v1023, 0
      %v1088 = vsel %vm308, %v1024, 0
      %v1091 = vsel %vm308, %v1025, 0
      %v1094 = vsel %vm308, %v1026, 0
      %v1097 = vsel %vm308, %v1027, 0
      %v1100 = vsel %vm308, %v1028, 0
      %v1103 = vsel %vm308, %v1029, 0
      %v1106 = vsel %vm308, %v1030, 0
      %v1109 = vsel %vm308, %v1031, 0
      %v1112 = vsel %vm308, %v1032, 0
      %v1115 = vsel %vm308, %v1033, 0
      %v1118 = vsel %vm308, %v1034, 0
      %v1121 = vsel %vm308, %v1035, 0
      %v1124 = vsel %vm308, %v1036, 0
      %v1127 = vsel %vm308, %v1037, 0
      %v1130 = vsel %vm308, %v1038, 0
      %v1133 = vsel %vm308, %v1039, 0
      %v1136 = vsel %vm308, %v1040, 0
      %v1139 = vsel %vm308, %v1041, 0
      %v1142 = vsel %vm308, %v1042, 0
      %v1145 = vsel %vm308, %v1043, 0
      %v1148 = vsel %vm308, %v1044, 0
      %1150 = vmatpush.msra.mxu0 0.0
      %1151 = vmatpush.msra.mxu0 0.0
      %1152 = vmatpush.msra.mxu0 0.0
      %1153 = vmatpush.msra.mxu0 0.0
      %1154 = vmatpush.msra.mxu0 0.0
      %1155 = vmatpush.msra.mxu0 0.0
      %1156 = vmatpush.msra.mxu0 0.0
      %1157 = vmatpush.msra.mxu0 0.0
      %1158 = vmatpush.msra.mxu0 %v1053
      %1159 = vmatpush.msra.mxu0 %v1052
      %1160 = vmatpush.msra.mxu0 %v1051
      %1161 = vmatpush.msra.mxu0 %v1050
      %1162 = vmatpush.msra.mxu0 %v1049
      %1163 = vmatpush.msra.mxu0 %v1048
      %1164 = vmatpush.msra.mxu0 %v1047
      %1165 = vmatpush.msra.mxu0 %v1046
      %1166 = vmatmul.f32.gmra.mxu0 %v1055
      %v1167 = vpop.f32.mrf.mxu0
      %v1168 = vadd.f32 0.0, %v1167
      %1169 = vmatmul.f32.gmra.mxu0 %v1058
      %v1170 = vpop.f32.mrf.mxu0
      %v1171 = vadd.f32 0.0, %v1170
      %1172 = vmatmul.f32.gmra.mxu0 %v1061
      %v1173 = vpop.f32.mrf.mxu0
      %v1174 = vadd.f32 0.0, %v1173
      %1175 = vmatmul.f32.gmra.mxu0 %v1064
      %v1176 = vpop.f32.mrf.mxu0
      %v1177 = vadd.f32 0.0, %v1176
      %1178 = vmatmul.f32.gmra.mxu0 %v1067
      %v1179 = vpop.f32.mrf.mxu0
      %v1180 = vadd.f32 0.0, %v1179
      %1181 = vmatmul.f32.gmra.mxu0 %v1070
      %v1182 = vpop.f32.mrf.mxu0
      %v1183 = vadd.f32 0.0, %v1182
      %1184 = vmatmul.f32.gmra.mxu0 %v1073
      %v1185 = vpop.f32.mrf.mxu0
      %v1186 = vadd.f32 0.0, %v1185
      %1187 = vmatmul.f32.gmra.mxu0 %v1076
      %v1188 = vpop.f32.mrf.mxu0
      %v1189 = vadd.f32 0.0, %v1188
      %1190 = vmatmul.f32.gmra.mxu0 %v1079
      %v1191 = vpop.f32.mrf.mxu0
      %v1192 = vadd.f32 0.0, %v1191
      %1193 = vmatmul.f32.gmra.mxu0 %v1082
      %v1194 = vpop.f32.mrf.mxu0
      %v1195 = vadd.f32 0.0, %v1194
      %1196 = vmatmul.f32.gmra.mxu0 %v1085
      %v1197 = vpop.f32.mrf.mxu0
      %v1198 = vadd.f32 0.0, %v1197
      %1199 = vmatmul.f32.gmra.mxu0 %v1088
      %v1200 = vpop.f32.mrf.mxu0
      %v1201 = vadd.f32 0.0, %v1200
      %1202 = vmatmul.f32.gmra.mxu0 %v1091
      %v1203 = vpop.f32.mrf.mxu0
      %v1204 = vadd.f32 0.0, %v1203
      %1205 = vmatmul.f32.gmra.mxu0 %v1094
      %v1206 = vpop.f32.mrf.mxu0
      %v1207 = vadd.f32 0.0, %v1206
      %1208 = vmatmul.f32.gmra.mxu0 %v1097
      %v1209 = vpop.f32.mrf.mxu0
      %v1210 = vadd.f32 0.0, %v1209
      %1211 = vmatmul.f32.gmra.mxu0 %v1100
      %v1212 = vpop.f32.mrf.mxu0
      %v1213 = vadd.f32 0.0, %v1212
      %1214 = vmatmul.f32.gmra.mxu0 %v1103
      %v1215 = vpop.f32.mrf.mxu0
      %v1216 = vadd.f32 0.0, %v1215
      %1217 = vmatmul.f32.gmra.mxu0 %v1106
      %v1218 = vpop.f32.mrf.mxu0
      %v1219 = vadd.f32 0.0, %v1218
      %1220 = vmatmul.f32.gmra.mxu0 %v1109
      %v1221 = vpop.f32.mrf.mxu0
      %v1222 = vadd.f32 0.0, %v1221
      %1223 = vmatmul.f32.gmra.mxu0 %v1112
      %v1224 = vpop.f32.mrf.mxu0
      %v1225 = vadd.f32 0.0, %v1224
      %1226 = vmatmul.f32.gmra.mxu0 %v1115
      %v1227 = vpop.f32.mrf.mxu0
      %v1228 = vadd.f32 0.0, %v1227
      %1229 = vmatmul.f32.gmra.mxu0 %v1118
      %v1230 = vpop.f32.mrf.mxu0
      %v1231 = vadd.f32 0.0, %v1230
      %1232 = vmatmul.f32.gmra.mxu0 %v1121
      %v1233 = vpop.f32.mrf.mxu0
      %v1234 = vadd.f32 0.0, %v1233
      %1235 = vmatmul.f32.gmra.mxu0 %v1124
      %v1236 = vpop.f32.mrf.mxu0
      %v1237 = vadd.f32 0.0, %v1236
      %1238 = vmatmul.f32.gmra.mxu0 %v1127
      %v1239 = vpop.f32.mrf.mxu0
      %v1240 = vadd.f32 0.0, %v1239
      %1241 = vmatmul.f32.gmra.mxu0 %v1130
      %v1242 = vpop.f32.mrf.mxu0
      %v1243 = vadd.f32 0.0, %v1242
      %1244 = vmatmul.f32.gmra.mxu0 %v1133
      %v1245 = vpop.f32.mrf.mxu0
      %v1246 = vadd.f32 0.0, %v1245
      %1247 = vmatmul.f32.gmra.mxu0 %v1136
      %v1248 = vpop.f32.mrf.mxu0
      %v1249 = vadd.f32 0.0, %v1248
      %1250 = vmatmul.f32.gmra.mxu0 %v1139
      %v1251 = vpop.f32.mrf.mxu0
      %v1252 = vadd.f32 0.0, %v1251
      %1253 = vmatmul.f32.gmra.mxu0 %v1142
      %v1254 = vpop.f32.mrf.mxu0
      %v1255 = vadd.f32 0.0, %v1254
      %1256 = vmatmul.f32.gmra.mxu0 %v1145
      %v1257 = vpop.f32.mrf.mxu0
      %v1258 = vadd.f32 0.0, %v1257
      %1259 = vmatmul.f32.gmra.mxu0 %v1148
      %v1260 = vpop.f32.mrf.mxu0
      %v1261 = vadd.f32 0.0, %v1260
      %1262 = vdwg.mxu0
      %v1263 = vadd.f32 %v979, %v1168
      %v1264 = vadd.f32 %v980, %v1171
      %v1265 = vadd.f32 %v981, %v1174
      %v1266 = vadd.f32 %v982, %v1177
      %v1267 = vadd.f32 %v983, %v1180
      %v1268 = vadd.f32 %v984, %v1183
      %v1269 = vadd.f32 %v985, %v1186
      %v1270 = vadd.f32 %v986, %v1189
      %v1271 = vadd.f32 %v987, %v1192
      %v1272 = vadd.f32 %v988, %v1195
      %v1273 = vadd.f32 %v989, %v1198
      %v1274 = vadd.f32 %v990, %v1201
      %v1275 = vadd.f32 %v991, %v1204
      %v1276 = vadd.f32 %v992, %v1207
      %v1277 = vadd.f32 %v993, %v1210
      %v1278 = vadd.f32 %v994, %v1213
      %v1279 = vadd.f32 %v995, %v1216
      %v1280 = vadd.f32 %v996, %v1219
      %v1281 = vadd.f32 %v997, %v1222
      %v1282 = vadd.f32 %v998, %v1225
      %v1283 = vadd.f32 %v999, %v1228
      %v1284 = vadd.f32 %v1000, %v1231
      %v1285 = vadd.f32 %v1001, %v1234
      %v1286 = vadd.f32 %v1002, %v1237
      %v1287 = vadd.f32 %v1003, %v1240
      %v1288 = vadd.f32 %v1004, %v1243
      %v1289 = vadd.f32 %v1005, %v1246
      %v1290 = vadd.f32 %v1006, %v1249
      %v1291 = vadd.f32 %v1007, %v1252
      %v1292 = vadd.f32 %v1008, %v1255
      %v1293 = vadd.f32 %v1009, %v1258
      %v1294 = vadd.f32 %v1010, %v1261
      %s1295 = sadd.s32 %s223, 33
      %s1296 = scalar_lea.vmem %s211, %s1295
      %v1297 = vld [vmem:[%s1296] sm:$0xff]
      %v1298 = vld [vmem:[%s1296 + $0x8] sm:$0xff]
      %v1299 = vld [vmem:[%s1296 + $0x10] sm:$0xff]
      %v1300 = vld [vmem:[%s1296 + $0x18] sm:$0xff]
      %v1301 = vld [vmem:[%s1296 + $0x20] sm:$0xff]
      %v1302 = vld [vmem:[%s1296 + $0x28] sm:$0xff]
      %v1303 = vld [vmem:[%s1296 + $0x30] sm:$0xff]
      %v1304 = vld [vmem:[%s1296 + $0x38] sm:$0xff]
      %v1305 = vld [vmem:[%s1296 + $0x40] sm:$0xff]
      %v1306 = vld [vmem:[%s1296 + $0x48] sm:$0xff]
      %v1307 = vld [vmem:[%s1296 + $0x50] sm:$0xff]
      %v1308 = vld [vmem:[%s1296 + $0x58] sm:$0xff]
      %v1309 = vld [vmem:[%s1296 + $0x60] sm:$0xff]
      %v1310 = vld [vmem:[%s1296 + $0x68] sm:$0xff]
      %v1311 = vld [vmem:[%s1296 + $0x70] sm:$0xff]
      %v1312 = vld [vmem:[%s1296 + $0x78] sm:$0xff]
      %v1313 = vld [vmem:[%s1296 + $0x80] sm:$0xff]
      %v1314 = vld [vmem:[%s1296 + $0x88] sm:$0xff]
      %v1315 = vld [vmem:[%s1296 + $0x90] sm:$0xff]
      %v1316 = vld [vmem:[%s1296 + $0x98] sm:$0xff]
      %v1317 = vld [vmem:[%s1296 + $0xa0] sm:$0xff]
      %v1318 = vld [vmem:[%s1296 + $0xa8] sm:$0xff]
      %v1319 = vld [vmem:[%s1296 + $0xb0] sm:$0xff]
      %v1320 = vld [vmem:[%s1296 + $0xb8] sm:$0xff]
      %v1321 = vld [vmem:[%s1296 + $0xc0] sm:$0xff]
      %v1322 = vld [vmem:[%s1296 + $0xc8] sm:$0xff]
      %v1323 = vld [vmem:[%s1296 + $0xd0] sm:$0xff]
      %v1324 = vld [vmem:[%s1296 + $0xd8] sm:$0xff]
      %v1325 = vld [vmem:[%s1296 + $0xe0] sm:$0xff]
      %v1326 = vld [vmem:[%s1296 + $0xe8] sm:$0xff]
      %v1327 = vld [vmem:[%s1296 + $0xf0] sm:$0xff]
      %v1328 = vld [vmem:[%s1296 + $0xf8] sm:$0xff]
      %s1329 = scalar_lea.vmem %s1, 256
      %v1330 = vld [vmem:[%s1329] sm:$0xff]
      %v1331 = vld [vmem:[%s1329 + $0x8] sm:$0xff]
      %v1332 = vld [vmem:[%s1329 + $0x10] sm:$0xff]
      %v1333 = vld [vmem:[%s1329 + $0x18] sm:$0xff]
      %v1334 = vld [vmem:[%s1329 + $0x20] sm:$0xff]
      %v1335 = vld [vmem:[%s1329 + $0x28] sm:$0xff]
      %v1336 = vld [vmem:[%s1329 + $0x30] sm:$0xff]
      %v1337 = vld [vmem:[%s1329 + $0x38] sm:$0xff]
      %v1339 = vsel %vm308, %v1297, 0
      %v1342 = vsel %vm308, %v1298, 0
      %v1345 = vsel %vm308, %v1299, 0
      %v1348 = vsel %vm308, %v1300, 0
      %v1351 = vsel %vm308, %v1301, 0
      %v1354 = vsel %vm308, %v1302, 0
      %v1357 = vsel %vm308, %v1303, 0
      %v1360 = vsel %vm308, %v1304, 0
      %v1363 = vsel %vm308, %v1305, 0
      %v1366 = vsel %vm308, %v1306, 0
      %v1369 = vsel %vm308, %v1307, 0
      %v1372 = vsel %vm308, %v1308, 0
      %v1375 = vsel %vm308, %v1309, 0
      %v1378 = vsel %vm308, %v1310, 0
      %v1381 = vsel %vm308, %v1311, 0
      %v1384 = vsel %vm308, %v1312, 0
      %v1387 = vsel %vm308, %v1313, 0
      %v1390 = vsel %vm308, %v1314, 0
      %v1393 = vsel %vm308, %v1315, 0
      %v1396 = vsel %vm308, %v1316, 0
      %v1399 = vsel %vm308, %v1317, 0
      %v1402 = vsel %vm308, %v1318, 0
      %v1405 = vsel %vm308, %v1319, 0
      %v1408 = vsel %vm308, %v1320, 0
      %v1411 = vsel %vm308, %v1321, 0
      %v1414 = vsel %vm308, %v1322, 0
      %v1417 = vsel %vm308, %v1323, 0
      %v1420 = vsel %vm308, %v1324, 0
      %v1423 = vsel %vm308, %v1325, 0
      %v1426 = vsel %vm308, %v1326, 0
      %v1429 = vsel %vm308, %v1327, 0
      %v1432 = vsel %vm308, %v1328, 0
      %1434 = vmatpush.msra.mxu0 0.0
      %1435 = vmatpush.msra.mxu0 0.0
      %1436 = vmatpush.msra.mxu0 0.0
      %1437 = vmatpush.msra.mxu0 0.0
      %1438 = vmatpush.msra.mxu0 0.0
      %1439 = vmatpush.msra.mxu0 0.0
      %1440 = vmatpush.msra.mxu0 0.0
      %1441 = vmatpush.msra.mxu0 0.0
      %1442 = vmatpush.msra.mxu0 %v1337
      %1443 = vmatpush.msra.mxu0 %v1336
      %1444 = vmatpush.msra.mxu0 %v1335
      %1445 = vmatpush.msra.mxu0 %v1334
      %1446 = vmatpush.msra.mxu0 %v1333
      %1447 = vmatpush.msra.mxu0 %v1332
      %1448 = vmatpush.msra.mxu0 %v1331
      %1449 = vmatpush.msra.mxu0 %v1330
      %1450 = vmatmul.f32.gmra.mxu0 %v1339
      %v1451 = vpop.f32.mrf.mxu0
      %v1452 = vadd.f32 0.0, %v1451
      %1453 = vmatmul.f32.gmra.mxu0 %v1342
      %v1454 = vpop.f32.mrf.mxu0
      %v1455 = vadd.f32 0.0, %v1454
      %1456 = vmatmul.f32.gmra.mxu0 %v1345
      %v1457 = vpop.f32.mrf.mxu0
      %v1458 = vadd.f32 0.0, %v1457
      %1459 = vmatmul.f32.gmra.mxu0 %v1348
      %v1460 = vpop.f32.mrf.mxu0
      %v1461 = vadd.f32 0.0, %v1460
      %1462 = vmatmul.f32.gmra.mxu0 %v1351
      %v1463 = vpop.f32.mrf.mxu0
      %v1464 = vadd.f32 0.0, %v1463
      %1465 = vmatmul.f32.gmra.mxu0 %v1354
      %v1466 = vpop.f32.mrf.mxu0
      %v1467 = vadd.f32 0.0, %v1466
      %1468 = vmatmul.f32.gmra.mxu0 %v1357
      %v1469 = vpop.f32.mrf.mxu0
      %v1470 = vadd.f32 0.0, %v1469
      %1471 = vmatmul.f32.gmra.mxu0 %v1360
      %v1472 = vpop.f32.mrf.mxu0
      %v1473 = vadd.f32 0.0, %v1472
      %1474 = vmatmul.f32.gmra.mxu0 %v1363
      %v1475 = vpop.f32.mrf.mxu0
      %v1476 = vadd.f32 0.0, %v1475
      %1477 = vmatmul.f32.gmra.mxu0 %v1366
      %v1478 = vpop.f32.mrf.mxu0
      %v1479 = vadd.f32 0.0, %v1478
      %1480 = vmatmul.f32.gmra.mxu0 %v1369
      %v1481 = vpop.f32.mrf.mxu0
      %v1482 = vadd.f32 0.0, %v1481
      %1483 = vmatmul.f32.gmra.mxu0 %v1372
      %v1484 = vpop.f32.mrf.mxu0
      %v1485 = vadd.f32 0.0, %v1484
      %1486 = vmatmul.f32.gmra.mxu0 %v1375
      %v1487 = vpop.f32.mrf.mxu0
      %v1488 = vadd.f32 0.0, %v1487
      %1489 = vmatmul.f32.gmra.mxu0 %v1378
      %v1490 = vpop.f32.mrf.mxu0
      %v1491 = vadd.f32 0.0, %v1490
      %1492 = vmatmul.f32.gmra.mxu0 %v1381
      %v1493 = vpop.f32.mrf.mxu0
      %v1494 = vadd.f32 0.0, %v1493
      %1495 = vmatmul.f32.gmra.mxu0 %v1384
      %v1496 = vpop.f32.mrf.mxu0
      %v1497 = vadd.f32 0.0, %v1496
      %1498 = vmatmul.f32.gmra.mxu0 %v1387
      %v1499 = vpop.f32.mrf.mxu0
      %v1500 = vadd.f32 0.0, %v1499
      %1501 = vmatmul.f32.gmra.mxu0 %v1390
      %v1502 = vpop.f32.mrf.mxu0
      %v1503 = vadd.f32 0.0, %v1502
      %1504 = vmatmul.f32.gmra.mxu0 %v1393
      %v1505 = vpop.f32.mrf.mxu0
      %v1506 = vadd.f32 0.0, %v1505
      %1507 = vmatmul.f32.gmra.mxu0 %v1396
      %v1508 = vpop.f32.mrf.mxu0
      %v1509 = vadd.f32 0.0, %v1508
      %1510 = vmatmul.f32.gmra.mxu0 %v1399
      %v1511 = vpop.f32.mrf.mxu0
      %v1512 = vadd.f32 0.0, %v1511
      %1513 = vmatmul.f32.gmra.mxu0 %v1402
      %v1514 = vpop.f32.mrf.mxu0
      %v1515 = vadd.f32 0.0, %v1514
      %1516 = vmatmul.f32.gmra.mxu0 %v1405
      %v1517 = vpop.f32.mrf.mxu0
      %v1518 = vadd.f32 0.0, %v1517
      %1519 = vmatmul.f32.gmra.mxu0 %v1408
      %v1520 = vpop.f32.mrf.mxu0
      %v1521 = vadd.f32 0.0, %v1520
      %1522 = vmatmul.f32.gmra.mxu0 %v1411
      %v1523 = vpop.f32.mrf.mxu0
      %v1524 = vadd.f32 0.0, %v1523
      %1525 = vmatmul.f32.gmra.mxu0 %v1414
      %v1526 = vpop.f32.mrf.mxu0
      %v1527 = vadd.f32 0.0, %v1526
      %1528 = vmatmul.f32.gmra.mxu0 %v1417
      %v1529 = vpop.f32.mrf.mxu0
      %v1530 = vadd.f32 0.0, %v1529
      %1531 = vmatmul.f32.gmra.mxu0 %v1420
      %v1532 = vpop.f32.mrf.mxu0
      %v1533 = vadd.f32 0.0, %v1532
      %1534 = vmatmul.f32.gmra.mxu0 %v1423
      %v1535 = vpop.f32.mrf.mxu0
      %v1536 = vadd.f32 0.0, %v1535
      %1537 = vmatmul.f32.gmra.mxu0 %v1426
      %v1538 = vpop.f32.mrf.mxu0
      %v1539 = vadd.f32 0.0, %v1538
      %1540 = vmatmul.f32.gmra.mxu0 %v1429
      %v1541 = vpop.f32.mrf.mxu0
      %v1542 = vadd.f32 0.0, %v1541
      %1543 = vmatmul.f32.gmra.mxu0 %v1432
      %v1544 = vpop.f32.mrf.mxu0
      %v1545 = vadd.f32 0.0, %v1544
      %1546 = vdwg.mxu0
      %v1547 = vadd.f32 %v1263, %v1452
      %v1548 = vadd.f32 %v1264, %v1455
      %v1549 = vadd.f32 %v1265, %v1458
      %v1550 = vadd.f32 %v1266, %v1461
      %v1551 = vadd.f32 %v1267, %v1464
      %v1552 = vadd.f32 %v1268, %v1467
      %v1553 = vadd.f32 %v1269, %v1470
      %v1554 = vadd.f32 %v1270, %v1473
      %v1555 = vadd.f32 %v1271, %v1476
      %v1556 = vadd.f32 %v1272, %v1479
      %v1557 = vadd.f32 %v1273, %v1482
      %v1558 = vadd.f32 %v1274, %v1485
      %v1559 = vadd.f32 %v1275, %v1488
      %v1560 = vadd.f32 %v1276, %v1491
      %v1561 = vadd.f32 %v1277, %v1494
      %v1562 = vadd.f32 %v1278, %v1497
      %v1563 = vadd.f32 %v1279, %v1500
      %v1564 = vadd.f32 %v1280, %v1503
      %v1565 = vadd.f32 %v1281, %v1506
      %v1566 = vadd.f32 %v1282, %v1509
      %v1567 = vadd.f32 %v1283, %v1512
      %v1568 = vadd.f32 %v1284, %v1515
      %v1569 = vadd.f32 %v1285, %v1518
      %v1570 = vadd.f32 %v1286, %v1521
      %v1571 = vadd.f32 %v1287, %v1524
      %v1572 = vadd.f32 %v1288, %v1527
      %v1573 = vadd.f32 %v1289, %v1530
      %v1574 = vadd.f32 %v1290, %v1533
      %v1575 = vadd.f32 %v1291, %v1536
      %v1576 = vadd.f32 %v1292, %v1539
      %v1577 = vadd.f32 %v1293, %v1542
      %v1578 = vadd.f32 %v1294, %v1545
      %s1579 = sadd.s32 %s223, 34
      %s1580 = scalar_lea.vmem %s211, %s1579
      %v1581 = vld [vmem:[%s1580] sm:$0xff]
      %v1582 = vld [vmem:[%s1580 + $0x8] sm:$0xff]
      %v1583 = vld [vmem:[%s1580 + $0x10] sm:$0xff]
      %v1584 = vld [vmem:[%s1580 + $0x18] sm:$0xff]
      %v1585 = vld [vmem:[%s1580 + $0x20] sm:$0xff]
      %v1586 = vld [vmem:[%s1580 + $0x28] sm:$0xff]
      %v1587 = vld [vmem:[%s1580 + $0x30] sm:$0xff]
      %v1588 = vld [vmem:[%s1580 + $0x38] sm:$0xff]
      %v1589 = vld [vmem:[%s1580 + $0x40] sm:$0xff]
      %v1590 = vld [vmem:[%s1580 + $0x48] sm:$0xff]
      %v1591 = vld [vmem:[%s1580 + $0x50] sm:$0xff]
      %v1592 = vld [vmem:[%s1580 + $0x58] sm:$0xff]
      %v1593 = vld [vmem:[%s1580 + $0x60] sm:$0xff]
      %v1594 = vld [vmem:[%s1580 + $0x68] sm:$0xff]
      %v1595 = vld [vmem:[%s1580 + $0x70] sm:$0xff]
      %v1596 = vld [vmem:[%s1580 + $0x78] sm:$0xff]
      %v1597 = vld [vmem:[%s1580 + $0x80] sm:$0xff]
      %v1598 = vld [vmem:[%s1580 + $0x88] sm:$0xff]
      %v1599 = vld [vmem:[%s1580 + $0x90] sm:$0xff]
      %v1600 = vld [vmem:[%s1580 + $0x98] sm:$0xff]
      %v1601 = vld [vmem:[%s1580 + $0xa0] sm:$0xff]
      %v1602 = vld [vmem:[%s1580 + $0xa8] sm:$0xff]
      %v1603 = vld [vmem:[%s1580 + $0xb0] sm:$0xff]
      %v1604 = vld [vmem:[%s1580 + $0xb8] sm:$0xff]
      %v1605 = vld [vmem:[%s1580 + $0xc0] sm:$0xff]
      %v1606 = vld [vmem:[%s1580 + $0xc8] sm:$0xff]
      %v1607 = vld [vmem:[%s1580 + $0xd0] sm:$0xff]
      %v1608 = vld [vmem:[%s1580 + $0xd8] sm:$0xff]
      %v1609 = vld [vmem:[%s1580 + $0xe0] sm:$0xff]
      %v1610 = vld [vmem:[%s1580 + $0xe8] sm:$0xff]
      %v1611 = vld [vmem:[%s1580 + $0xf0] sm:$0xff]
      %v1612 = vld [vmem:[%s1580 + $0xf8] sm:$0xff]
      %s1613 = scalar_lea.vmem %s1, 320
      %v1614 = vld [vmem:[%s1613] sm:$0xff]
      %v1615 = vld [vmem:[%s1613 + $0x8] sm:$0xff]
      %v1616 = vld [vmem:[%s1613 + $0x10] sm:$0xff]
      %v1617 = vld [vmem:[%s1613 + $0x18] sm:$0xff]
      %v1618 = vld [vmem:[%s1613 + $0x20] sm:$0xff]
      %v1619 = vld [vmem:[%s1613 + $0x28] sm:$0xff]
      %v1620 = vld [vmem:[%s1613 + $0x30] sm:$0xff]
      %v1621 = vld [vmem:[%s1613 + $0x38] sm:$0xff]
      %v1623 = vsel %vm308, %v1581, 0
      %v1626 = vsel %vm308, %v1582, 0
      %v1629 = vsel %vm308, %v1583, 0
      %v1632 = vsel %vm308, %v1584, 0
      %v1635 = vsel %vm308, %v1585, 0
      %v1638 = vsel %vm308, %v1586, 0
      %v1641 = vsel %vm308, %v1587, 0
      %v1644 = vsel %vm308, %v1588, 0
      %v1647 = vsel %vm308, %v1589, 0
      %v1650 = vsel %vm308, %v1590, 0
      %v1653 = vsel %vm308, %v1591, 0
      %v1656 = vsel %vm308, %v1592, 0
      %v1659 = vsel %vm308, %v1593, 0
      %v1662 = vsel %vm308, %v1594, 0
      %v1665 = vsel %vm308, %v1595, 0
      %v1668 = vsel %vm308, %v1596, 0
      %v1671 = vsel %vm308, %v1597, 0
      %v1674 = vsel %vm308, %v1598, 0
      %v1677 = vsel %vm308, %v1599, 0
      %v1680 = vsel %vm308, %v1600, 0
      %v1683 = vsel %vm308, %v1601, 0
      %v1686 = vsel %vm308, %v1602, 0
      %v1689 = vsel %vm308, %v1603, 0
      %v1692 = vsel %vm308, %v1604, 0
      %v1695 = vsel %vm308, %v1605, 0
      %v1698 = vsel %vm308, %v1606, 0
      %v1701 = vsel %vm308, %v1607, 0
      %v1704 = vsel %vm308, %v1608, 0
      %v1707 = vsel %vm308, %v1609, 0
      %v1710 = vsel %vm308, %v1610, 0
      %v1713 = vsel %vm308, %v1611, 0
      %v1716 = vsel %vm308, %v1612, 0
      %1718 = vmatpush.msra.mxu0 0.0
      %1719 = vmatpush.msra.mxu0 0.0
      %1720 = vmatpush.msra.mxu0 0.0
      %1721 = vmatpush.msra.mxu0 0.0
      %1722 = vmatpush.msra.mxu0 0.0
      %1723 = vmatpush.msra.mxu0 0.0
      %1724 = vmatpush.msra.mxu0 0.0
      %1725 = vmatpush.msra.mxu0 0.0
      %1726 = vmatpush.msra.mxu0 %v1621
      %1727 = vmatpush.msra.mxu0 %v1620
      %1728 = vmatpush.msra.mxu0 %v1619
      %1729 = vmatpush.msra.mxu0 %v1618
      %1730 = vmatpush.msra.mxu0 %v1617
      %1731 = vmatpush.msra.mxu0 %v1616
      %1732 = vmatpush.msra.mxu0 %v1615
      %1733 = vmatpush.msra.mxu0 %v1614
      %1734 = vmatmul.f32.gmra.mxu0 %v1623
      %v1735 = vpop.f32.mrf.mxu0
      %v1736 = vadd.f32 0.0, %v1735
      %1737 = vmatmul.f32.gmra.mxu0 %v1626
      %v1738 = vpop.f32.mrf.mxu0
      %v1739 = vadd.f32 0.0, %v1738
      %1740 = vmatmul.f32.gmra.mxu0 %v1629
      %v1741 = vpop.f32.mrf.mxu0
      %v1742 = vadd.f32 0.0, %v1741
      %1743 = vmatmul.f32.gmra.mxu0 %v1632
      %v1744 = vpop.f32.mrf.mxu0
      %v1745 = vadd.f32 0.0, %v1744
      %1746 = vmatmul.f32.gmra.mxu0 %v1635
      %v1747 = vpop.f32.mrf.mxu0
      %v1748 = vadd.f32 0.0, %v1747
      %1749 = vmatmul.f32.gmra.mxu0 %v1638
      %v1750 = vpop.f32.mrf.mxu0
      %v1751 = vadd.f32 0.0, %v1750
      %1752 = vmatmul.f32.gmra.mxu0 %v1641
      %v1753 = vpop.f32.mrf.mxu0
      %v1754 = vadd.f32 0.0, %v1753
      %1755 = vmatmul.f32.gmra.mxu0 %v1644
      %v1756 = vpop.f32.mrf.mxu0
      %v1757 = vadd.f32 0.0, %v1756
      %1758 = vmatmul.f32.gmra.mxu0 %v1647
      %v1759 = vpop.f32.mrf.mxu0
      %v1760 = vadd.f32 0.0, %v1759
      %1761 = vmatmul.f32.gmra.mxu0 %v1650
      %v1762 = vpop.f32.mrf.mxu0
      %v1763 = vadd.f32 0.0, %v1762
      %1764 = vmatmul.f32.gmra.mxu0 %v1653
      %v1765 = vpop.f32.mrf.mxu0
      %v1766 = vadd.f32 0.0, %v1765
      %1767 = vmatmul.f32.gmra.mxu0 %v1656
      %v1768 = vpop.f32.mrf.mxu0
      %v1769 = vadd.f32 0.0, %v1768
      %1770 = vmatmul.f32.gmra.mxu0 %v1659
      %v1771 = vpop.f32.mrf.mxu0
      %v1772 = vadd.f32 0.0, %v1771
      %1773 = vmatmul.f32.gmra.mxu0 %v1662
      %v1774 = vpop.f32.mrf.mxu0
      %v1775 = vadd.f32 0.0, %v1774
      %1776 = vmatmul.f32.gmra.mxu0 %v1665
      %v1777 = vpop.f32.mrf.mxu0
      %v1778 = vadd.f32 0.0, %v1777
      %1779 = vmatmul.f32.gmra.mxu0 %v1668
      %v1780 = vpop.f32.mrf.mxu0
      %v1781 = vadd.f32 0.0, %v1780
      %1782 = vmatmul.f32.gmra.mxu0 %v1671
      %v1783 = vpop.f32.mrf.mxu0
      %v1784 = vadd.f32 0.0, %v1783
      %1785 = vmatmul.f32.gmra.mxu0 %v1674
      %v1786 = vpop.f32.mrf.mxu0
      %v1787 = vadd.f32 0.0, %v1786
      %1788 = vmatmul.f32.gmra.mxu0 %v1677
      %v1789 = vpop.f32.mrf.mxu0
      %v1790 = vadd.f32 0.0, %v1789
      %1791 = vmatmul.f32.gmra.mxu0 %v1680
      %v1792 = vpop.f32.mrf.mxu0
      %v1793 = vadd.f32 0.0, %v1792
      %1794 = vmatmul.f32.gmra.mxu0 %v1683
      %v1795 = vpop.f32.mrf.mxu0
      %v1796 = vadd.f32 0.0, %v1795
      %1797 = vmatmul.f32.gmra.mxu0 %v1686
      %v1798 = vpop.f32.mrf.mxu0
      %v1799 = vadd.f32 0.0, %v1798
      %1800 = vmatmul.f32.gmra.mxu0 %v1689
      %v1801 = vpop.f32.mrf.mxu0
      %v1802 = vadd.f32 0.0, %v1801
      %1803 = vmatmul.f32.gmra.mxu0 %v1692
      %v1804 = vpop.f32.mrf.mxu0
      %v1805 = vadd.f32 0.0, %v1804
      %1806 = vmatmul.f32.gmra.mxu0 %v1695
      %v1807 = vpop.f32.mrf.mxu0
      %v1808 = vadd.f32 0.0, %v1807
      %1809 = vmatmul.f32.gmra.mxu0 %v1698
      %v1810 = vpop.f32.mrf.mxu0
      %v1811 = vadd.f32 0.0, %v1810
      %1812 = vmatmul.f32.gmra.mxu0 %v1701
      %v1813 = vpop.f32.mrf.mxu0
      %v1814 = vadd.f32 0.0, %v1813
      %1815 = vmatmul.f32.gmra.mxu0 %v1704
      %v1816 = vpop.f32.mrf.mxu0
      %v1817 = vadd.f32 0.0, %v1816
      %1818 = vmatmul.f32.gmra.mxu0 %v1707
      %v1819 = vpop.f32.mrf.mxu0
      %v1820 = vadd.f32 0.0, %v1819
      %1821 = vmatmul.f32.gmra.mxu0 %v1710
      %v1822 = vpop.f32.mrf.mxu0
      %v1823 = vadd.f32 0.0, %v1822
      %1824 = vmatmul.f32.gmra.mxu0 %v1713
      %v1825 = vpop.f32.mrf.mxu0
      %v1826 = vadd.f32 0.0, %v1825
      %1827 = vmatmul.f32.gmra.mxu0 %v1716
      %v1828 = vpop.f32.mrf.mxu0
      %v1829 = vadd.f32 0.0, %v1828
      %1830 = vdwg.mxu0
      %v1831 = vadd.f32 %v1547, %v1736
      %v1832 = vadd.f32 %v1548, %v1739
      %v1833 = vadd.f32 %v1549, %v1742
      %v1834 = vadd.f32 %v1550, %v1745
      %v1835 = vadd.f32 %v1551, %v1748
      %v1836 = vadd.f32 %v1552, %v1751
      %v1837 = vadd.f32 %v1553, %v1754
      %v1838 = vadd.f32 %v1554, %v1757
      %v1839 = vadd.f32 %v1555, %v1760
      %v1840 = vadd.f32 %v1556, %v1763
      %v1841 = vadd.f32 %v1557, %v1766
      %v1842 = vadd.f32 %v1558, %v1769
      %v1843 = vadd.f32 %v1559, %v1772
      %v1844 = vadd.f32 %v1560, %v1775
      %v1845 = vadd.f32 %v1561, %v1778
      %v1846 = vadd.f32 %v1562, %v1781
      %v1847 = vadd.f32 %v1563, %v1784
      %v1848 = vadd.f32 %v1564, %v1787
      %v1849 = vadd.f32 %v1565, %v1790
      %v1850 = vadd.f32 %v1566, %v1793
      %v1851 = vadd.f32 %v1567, %v1796
      %v1852 = vadd.f32 %v1568, %v1799
      %v1853 = vadd.f32 %v1569, %v1802
      %v1854 = vadd.f32 %v1570, %v1805
      %v1855 = vadd.f32 %v1571, %v1808
      %v1856 = vadd.f32 %v1572, %v1811
      %v1857 = vadd.f32 %v1573, %v1814
      %v1858 = vadd.f32 %v1574, %v1817
      %v1859 = vadd.f32 %v1575, %v1820
      %v1860 = vadd.f32 %v1576, %v1823
      %v1861 = vadd.f32 %v1577, %v1826
      %v1862 = vadd.f32 %v1578, %v1829
      %s1863 = sadd.s32 %s223, 64
      %s1864 = scalar_lea.vmem %s211, %s1863
      %v1865 = vld [vmem:[%s1864] sm:$0xff]
      %v1866 = vld [vmem:[%s1864 + $0x8] sm:$0xff]
      %v1867 = vld [vmem:[%s1864 + $0x10] sm:$0xff]
      %v1868 = vld [vmem:[%s1864 + $0x18] sm:$0xff]
      %v1869 = vld [vmem:[%s1864 + $0x20] sm:$0xff]
      %v1870 = vld [vmem:[%s1864 + $0x28] sm:$0xff]
      %v1871 = vld [vmem:[%s1864 + $0x30] sm:$0xff]
      %v1872 = vld [vmem:[%s1864 + $0x38] sm:$0xff]
      %v1873 = vld [vmem:[%s1864 + $0x40] sm:$0xff]
      %v1874 = vld [vmem:[%s1864 + $0x48] sm:$0xff]
      %v1875 = vld [vmem:[%s1864 + $0x50] sm:$0xff]
      %v1876 = vld [vmem:[%s1864 + $0x58] sm:$0xff]
      %v1877 = vld [vmem:[%s1864 + $0x60] sm:$0xff]
      %v1878 = vld [vmem:[%s1864 + $0x68] sm:$0xff]
      %v1879 = vld [vmem:[%s1864 + $0x70] sm:$0xff]
      %v1880 = vld [vmem:[%s1864 + $0x78] sm:$0xff]
      %v1881 = vld [vmem:[%s1864 + $0x80] sm:$0xff]
      %v1882 = vld [vmem:[%s1864 + $0x88] sm:$0xff]
      %v1883 = vld [vmem:[%s1864 + $0x90] sm:$0xff]
      %v1884 = vld [vmem:[%s1864 + $0x98] sm:$0xff]
      %v1885 = vld [vmem:[%s1864 + $0xa0] sm:$0xff]
      %v1886 = vld [vmem:[%s1864 + $0xa8] sm:$0xff]
      %v1887 = vld [vmem:[%s1864 + $0xb0] sm:$0xff]
      %v1888 = vld [vmem:[%s1864 + $0xb8] sm:$0xff]
      %v1889 = vld [vmem:[%s1864 + $0xc0] sm:$0xff]
      %v1890 = vld [vmem:[%s1864 + $0xc8] sm:$0xff]
      %v1891 = vld [vmem:[%s1864 + $0xd0] sm:$0xff]
      %v1892 = vld [vmem:[%s1864 + $0xd8] sm:$0xff]
      %v1893 = vld [vmem:[%s1864 + $0xe0] sm:$0xff]
      %v1894 = vld [vmem:[%s1864 + $0xe8] sm:$0xff]
      %v1895 = vld [vmem:[%s1864 + $0xf0] sm:$0xff]
      %v1896 = vld [vmem:[%s1864 + $0xf8] sm:$0xff]
      %s1897 = scalar_lea.vmem %s1, 384
      %v1898 = vld [vmem:[%s1897] sm:$0xff]
      %v1899 = vld [vmem:[%s1897 + $0x8] sm:$0xff]
      %v1900 = vld [vmem:[%s1897 + $0x10] sm:$0xff]
      %v1901 = vld [vmem:[%s1897 + $0x18] sm:$0xff]
      %v1902 = vld [vmem:[%s1897 + $0x20] sm:$0xff]
      %v1903 = vld [vmem:[%s1897 + $0x28] sm:$0xff]
      %v1904 = vld [vmem:[%s1897 + $0x30] sm:$0xff]
      %v1905 = vld [vmem:[%s1897 + $0x38] sm:$0xff]
      %v1907 = vsel %vm308, %v1865, 0
      %v1910 = vsel %vm308, %v1866, 0
      %v1913 = vsel %vm308, %v1867, 0
      %v1916 = vsel %vm308, %v1868, 0
      %v1919 = vsel %vm308, %v1869, 0
      %v1922 = vsel %vm308, %v1870, 0
      %v1925 = vsel %vm308, %v1871, 0
      %v1928 = vsel %vm308, %v1872, 0
      %v1931 = vsel %vm308, %v1873, 0
      %v1934 = vsel %vm308, %v1874, 0
      %v1937 = vsel %vm308, %v1875, 0
      %v1940 = vsel %vm308, %v1876, 0
      %v1943 = vsel %vm308, %v1877, 0
      %v1946 = vsel %vm308, %v1878, 0
      %v1949 = vsel %vm308, %v1879, 0
      %v1952 = vsel %vm308, %v1880, 0
      %v1955 = vsel %vm308, %v1881, 0
      %v1958 = vsel %vm308, %v1882, 0
      %v1961 = vsel %vm308, %v1883, 0
      %v1964 = vsel %vm308, %v1884, 0
      %v1967 = vsel %vm308, %v1885, 0
      %v1970 = vsel %vm308, %v1886, 0
      %v1973 = vsel %vm308, %v1887, 0
      %v1976 = vsel %vm308, %v1888, 0
      %v1979 = vsel %vm308, %v1889, 0
      %v1982 = vsel %vm308, %v1890, 0
      %v1985 = vsel %vm308, %v1891, 0
      %v1988 = vsel %vm308, %v1892, 0
      %v1991 = vsel %vm308, %v1893, 0
      %v1994 = vsel %vm308, %v1894, 0
      %v1997 = vsel %vm308, %v1895, 0
      %v2000 = vsel %vm308, %v1896, 0
      %2002 = vmatpush.msra.mxu0 0.0
      %2003 = vmatpush.msra.mxu0 0.0
      %2004 = vmatpush.msra.mxu0 0.0
      %2005 = vmatpush.msra.mxu0 0.0
      %2006 = vmatpush.msra.mxu0 0.0
      %2007 = vmatpush.msra.mxu0 0.0
      %2008 = vmatpush.msra.mxu0 0.0
      %2009 = vmatpush.msra.mxu0 0.0
      %2010 = vmatpush.msra.mxu0 %v1905
      %2011 = vmatpush.msra.mxu0 %v1904
      %2012 = vmatpush.msra.mxu0 %v1903
      %2013 = vmatpush.msra.mxu0 %v1902
      %2014 = vmatpush.msra.mxu0 %v1901
      %2015 = vmatpush.msra.mxu0 %v1900
      %2016 = vmatpush.msra.mxu0 %v1899
      %2017 = vmatpush.msra.mxu0 %v1898
      %2018 = vmatmul.f32.gmra.mxu0 %v1907
      %v2019 = vpop.f32.mrf.mxu0
      %v2020 = vadd.f32 0.0, %v2019
      %2021 = vmatmul.f32.gmra.mxu0 %v1910
      %v2022 = vpop.f32.mrf.mxu0
      %v2023 = vadd.f32 0.0, %v2022
      %2024 = vmatmul.f32.gmra.mxu0 %v1913
      %v2025 = vpop.f32.mrf.mxu0
      %v2026 = vadd.f32 0.0, %v2025
      %2027 = vmatmul.f32.gmra.mxu0 %v1916
      %v2028 = vpop.f32.mrf.mxu0
      %v2029 = vadd.f32 0.0, %v2028
      %2030 = vmatmul.f32.gmra.mxu0 %v1919
      %v2031 = vpop.f32.mrf.mxu0
      %v2032 = vadd.f32 0.0, %v2031
      %2033 = vmatmul.f32.gmra.mxu0 %v1922
      %v2034 = vpop.f32.mrf.mxu0
      %v2035 = vadd.f32 0.0, %v2034
      %2036 = vmatmul.f32.gmra.mxu0 %v1925
      %v2037 = vpop.f32.mrf.mxu0
      %v2038 = vadd.f32 0.0, %v2037
      %2039 = vmatmul.f32.gmra.mxu0 %v1928
      %v2040 = vpop.f32.mrf.mxu0
      %v2041 = vadd.f32 0.0, %v2040
      %2042 = vmatmul.f32.gmra.mxu0 %v1931
      %v2043 = vpop.f32.mrf.mxu0
      %v2044 = vadd.f32 0.0, %v2043
      %2045 = vmatmul.f32.gmra.mxu0 %v1934
      %v2046 = vpop.f32.mrf.mxu0
      %v2047 = vadd.f32 0.0, %v2046
      %2048 = vmatmul.f32.gmra.mxu0 %v1937
      %v2049 = vpop.f32.mrf.mxu0
      %v2050 = vadd.f32 0.0, %v2049
      %2051 = vmatmul.f32.gmra.mxu0 %v1940
      %v2052 = vpop.f32.mrf.mxu0
      %v2053 = vadd.f32 0.0, %v2052
      %2054 = vmatmul.f32.gmra.mxu0 %v1943
      %v2055 = vpop.f32.mrf.mxu0
      %v2056 = vadd.f32 0.0, %v2055
      %2057 = vmatmul.f32.gmra.mxu0 %v1946
      %v2058 = vpop.f32.mrf.mxu0
      %v2059 = vadd.f32 0.0, %v2058
      %2060 = vmatmul.f32.gmra.mxu0 %v1949
      %v2061 = vpop.f32.mrf.mxu0
      %v2062 = vadd.f32 0.0, %v2061
      %2063 = vmatmul.f32.gmra.mxu0 %v1952
      %v2064 = vpop.f32.mrf.mxu0
      %v2065 = vadd.f32 0.0, %v2064
      %2066 = vmatmul.f32.gmra.mxu0 %v1955
      %v2067 = vpop.f32.mrf.mxu0
      %v2068 = vadd.f32 0.0, %v2067
      %2069 = vmatmul.f32.gmra.mxu0 %v1958
      %v2070 = vpop.f32.mrf.mxu0
      %v2071 = vadd.f32 0.0, %v2070
      %2072 = vmatmul.f32.gmra.mxu0 %v1961
      %v2073 = vpop.f32.mrf.mxu0
      %v2074 = vadd.f32 0.0, %v2073
      %2075 = vmatmul.f32.gmra.mxu0 %v1964
      %v2076 = vpop.f32.mrf.mxu0
      %v2077 = vadd.f32 0.0, %v2076
      %2078 = vmatmul.f32.gmra.mxu0 %v1967
      %v2079 = vpop.f32.mrf.mxu0
      %v2080 = vadd.f32 0.0, %v2079
      %2081 = vmatmul.f32.gmra.mxu0 %v1970
      %v2082 = vpop.f32.mrf.mxu0
      %v2083 = vadd.f32 0.0, %v2082
      %2084 = vmatmul.f32.gmra.mxu0 %v1973
      %v2085 = vpop.f32.mrf.mxu0
      %v2086 = vadd.f32 0.0, %v2085
      %2087 = vmatmul.f32.gmra.mxu0 %v1976
      %v2088 = vpop.f32.mrf.mxu0
      %v2089 = vadd.f32 0.0, %v2088
      %2090 = vmatmul.f32.gmra.mxu0 %v1979
      %v2091 = vpop.f32.mrf.mxu0
      %v2092 = vadd.f32 0.0, %v2091
      %2093 = vmatmul.f32.gmra.mxu0 %v1982
      %v2094 = vpop.f32.mrf.mxu0
      %v2095 = vadd.f32 0.0, %v2094
      %2096 = vmatmul.f32.gmra.mxu0 %v1985
      %v2097 = vpop.f32.mrf.mxu0
      %v2098 = vadd.f32 0.0, %v2097
      %2099 = vmatmul.f32.gmra.mxu0 %v1988
      %v2100 = vpop.f32.mrf.mxu0
      %v2101 = vadd.f32 0.0, %v2100
      %2102 = vmatmul.f32.gmra.mxu0 %v1991
      %v2103 = vpop.f32.mrf.mxu0
      %v2104 = vadd.f32 0.0, %v2103
      %2105 = vmatmul.f32.gmra.mxu0 %v1994
      %v2106 = vpop.f32.mrf.mxu0
      %v2107 = vadd.f32 0.0, %v2106
      %2108 = vmatmul.f32.gmra.mxu0 %v1997
      %v2109 = vpop.f32.mrf.mxu0
      %v2110 = vadd.f32 0.0, %v2109
      %2111 = vmatmul.f32.gmra.mxu0 %v2000
      %v2112 = vpop.f32.mrf.mxu0
      %v2113 = vadd.f32 0.0, %v2112
      %2114 = vdwg.mxu0
      %v2115 = vadd.f32 %v1831, %v2020
      %v2116 = vadd.f32 %v1832, %v2023
      %v2117 = vadd.f32 %v1833, %v2026
      %v2118 = vadd.f32 %v1834, %v2029
      %v2119 = vadd.f32 %v1835, %v2032
      %v2120 = vadd.f32 %v1836, %v2035
      %v2121 = vadd.f32 %v1837, %v2038
      %v2122 = vadd.f32 %v1838, %v2041
      %v2123 = vadd.f32 %v1839, %v2044
      %v2124 = vadd.f32 %v1840, %v2047
      %v2125 = vadd.f32 %v1841, %v2050
      %v2126 = vadd.f32 %v1842, %v2053
      %v2127 = vadd.f32 %v1843, %v2056
      %v2128 = vadd.f32 %v1844, %v2059
      %v2129 = vadd.f32 %v1845, %v2062
      %v2130 = vadd.f32 %v1846, %v2065
      %v2131 = vadd.f32 %v1847, %v2068
      %v2132 = vadd.f32 %v1848, %v2071
      %v2133 = vadd.f32 %v1849, %v2074
      %v2134 = vadd.f32 %v1850, %v2077
      %v2135 = vadd.f32 %v1851, %v2080
      %v2136 = vadd.f32 %v1852, %v2083
      %v2137 = vadd.f32 %v1853, %v2086
      %v2138 = vadd.f32 %v1854, %v2089
      %v2139 = vadd.f32 %v1855, %v2092
      %v2140 = vadd.f32 %v1856, %v2095
      %v2141 = vadd.f32 %v1857, %v2098
      %v2142 = vadd.f32 %v1858, %v2101
      %v2143 = vadd.f32 %v1859, %v2104
      %v2144 = vadd.f32 %v1860, %v2107
      %v2145 = vadd.f32 %v1861, %v2110
      %v2146 = vadd.f32 %v1862, %v2113
      %s2147 = sadd.s32 %s223, 65
      %s2148 = scalar_lea.vmem %s211, %s2147
      %v2149 = vld [vmem:[%s2148] sm:$0xff]
      %v2150 = vld [vmem:[%s2148 + $0x8] sm:$0xff]
      %v2151 = vld [vmem:[%s2148 + $0x10] sm:$0xff]
      %v2152 = vld [vmem:[%s2148 + $0x18] sm:$0xff]
      %v2153 = vld [vmem:[%s2148 + $0x20] sm:$0xff]
      %v2154 = vld [vmem:[%s2148 + $0x28] sm:$0xff]
      %v2155 = vld [vmem:[%s2148 + $0x30] sm:$0xff]
      %v2156 = vld [vmem:[%s2148 + $0x38] sm:$0xff]
      %v2157 = vld [vmem:[%s2148 + $0x40] sm:$0xff]
      %v2158 = vld [vmem:[%s2148 + $0x48] sm:$0xff]
      %v2159 = vld [vmem:[%s2148 + $0x50] sm:$0xff]
      %v2160 = vld [vmem:[%s2148 + $0x58] sm:$0xff]
      %v2161 = vld [vmem:[%s2148 + $0x60] sm:$0xff]
      %v2162 = vld [vmem:[%s2148 + $0x68] sm:$0xff]
      %v2163 = vld [vmem:[%s2148 + $0x70] sm:$0xff]
      %v2164 = vld [vmem:[%s2148 + $0x78] sm:$0xff]
      %v2165 = vld [vmem:[%s2148 + $0x80] sm:$0xff]
      %v2166 = vld [vmem:[%s2148 + $0x88] sm:$0xff]
      %v2167 = vld [vmem:[%s2148 + $0x90] sm:$0xff]
      %v2168 = vld [vmem:[%s2148 + $0x98] sm:$0xff]
      %v2169 = vld [vmem:[%s2148 + $0xa0] sm:$0xff]
      %v2170 = vld [vmem:[%s2148 + $0xa8] sm:$0xff]
      %v2171 = vld [vmem:[%s2148 + $0xb0] sm:$0xff]
      %v2172 = vld [vmem:[%s2148 + $0xb8] sm:$0xff]
      %v2173 = vld [vmem:[%s2148 + $0xc0] sm:$0xff]
      %v2174 = vld [vmem:[%s2148 + $0xc8] sm:$0xff]
      %v2175 = vld [vmem:[%s2148 + $0xd0] sm:$0xff]
      %v2176 = vld [vmem:[%s2148 + $0xd8] sm:$0xff]
      %v2177 = vld [vmem:[%s2148 + $0xe0] sm:$0xff]
      %v2178 = vld [vmem:[%s2148 + $0xe8] sm:$0xff]
      %v2179 = vld [vmem:[%s2148 + $0xf0] sm:$0xff]
      %v2180 = vld [vmem:[%s2148 + $0xf8] sm:$0xff]
      %s2181 = scalar_lea.vmem %s1, 448
      %v2182 = vld [vmem:[%s2181] sm:$0xff]
      %v2183 = vld [vmem:[%s2181 + $0x8] sm:$0xff]
      %v2184 = vld [vmem:[%s2181 + $0x10] sm:$0xff]
      %v2185 = vld [vmem:[%s2181 + $0x18] sm:$0xff]
      %v2186 = vld [vmem:[%s2181 + $0x20] sm:$0xff]
      %v2187 = vld [vmem:[%s2181 + $0x28] sm:$0xff]
      %v2188 = vld [vmem:[%s2181 + $0x30] sm:$0xff]
      %v2189 = vld [vmem:[%s2181 + $0x38] sm:$0xff]
      %v2191 = vsel %vm308, %v2149, 0
      %v2194 = vsel %vm308, %v2150, 0
      %v2197 = vsel %vm308, %v2151, 0
      %v2200 = vsel %vm308, %v2152, 0
      %v2203 = vsel %vm308, %v2153, 0
      %v2206 = vsel %vm308, %v2154, 0
      %v2209 = vsel %vm308, %v2155, 0
      %v2212 = vsel %vm308, %v2156, 0
      %v2215 = vsel %vm308, %v2157, 0
      %v2218 = vsel %vm308, %v2158, 0
      %v2221 = vsel %vm308, %v2159, 0
      %v2224 = vsel %vm308, %v2160, 0
      %v2227 = vsel %vm308, %v2161, 0
      %v2230 = vsel %vm308, %v2162, 0
      %v2233 = vsel %vm308, %v2163, 0
      %v2236 = vsel %vm308, %v2164, 0
      %v2239 = vsel %vm308, %v2165, 0
      %v2242 = vsel %vm308, %v2166, 0
      %v2245 = vsel %vm308, %v2167, 0
      %v2248 = vsel %vm308, %v2168, 0
      %v2251 = vsel %vm308, %v2169, 0
      %v2254 = vsel %vm308, %v2170, 0
      %v2257 = vsel %vm308, %v2171, 0
      %v2260 = vsel %vm308, %v2172, 0
      %v2263 = vsel %vm308, %v2173, 0
      %v2266 = vsel %vm308, %v2174, 0
      %v2269 = vsel %vm308, %v2175, 0
      %v2272 = vsel %vm308, %v2176, 0
      %v2275 = vsel %vm308, %v2177, 0
      %v2278 = vsel %vm308, %v2178, 0
      %v2281 = vsel %vm308, %v2179, 0
      %v2284 = vsel %vm308, %v2180, 0
      %2286 = vmatpush.msra.mxu0 0.0
      %2287 = vmatpush.msra.mxu0 0.0
      %2288 = vmatpush.msra.mxu0 0.0
      %2289 = vmatpush.msra.mxu0 0.0
      %2290 = vmatpush.msra.mxu0 0.0
      %2291 = vmatpush.msra.mxu0 0.0
      %2292 = vmatpush.msra.mxu0 0.0
      %2293 = vmatpush.msra.mxu0 0.0
      %2294 = vmatpush.msra.mxu0 %v2189
      %2295 = vmatpush.msra.mxu0 %v2188
      %2296 = vmatpush.msra.mxu0 %v2187
      %2297 = vmatpush.msra.mxu0 %v2186
      %2298 = vmatpush.msra.mxu0 %v2185
      %2299 = vmatpush.msra.mxu0 %v2184
      %2300 = vmatpush.msra.mxu0 %v2183
      %2301 = vmatpush.msra.mxu0 %v2182
      %2302 = vmatmul.f32.gmra.mxu0 %v2191
      %v2303 = vpop.f32.mrf.mxu0
      %v2304 = vadd.f32 0.0, %v2303
      %2305 = vmatmul.f32.gmra.mxu0 %v2194
      %v2306 = vpop.f32.mrf.mxu0
      %v2307 = vadd.f32 0.0, %v2306
      %2308 = vmatmul.f32.gmra.mxu0 %v2197
      %v2309 = vpop.f32.mrf.mxu0
      %v2310 = vadd.f32 0.0, %v2309
      %2311 = vmatmul.f32.gmra.mxu0 %v2200
      %v2312 = vpop.f32.mrf.mxu0
      %v2313 = vadd.f32 0.0, %v2312
      %2314 = vmatmul.f32.gmra.mxu0 %v2203
      %v2315 = vpop.f32.mrf.mxu0
      %v2316 = vadd.f32 0.0, %v2315
      %2317 = vmatmul.f32.gmra.mxu0 %v2206
      %v2318 = vpop.f32.mrf.mxu0
      %v2319 = vadd.f32 0.0, %v2318
      %2320 = vmatmul.f32.gmra.mxu0 %v2209
      %v2321 = vpop.f32.mrf.mxu0
      %v2322 = vadd.f32 0.0, %v2321
      %2323 = vmatmul.f32.gmra.mxu0 %v2212
      %v2324 = vpop.f32.mrf.mxu0
      %v2325 = vadd.f32 0.0, %v2324
      %2326 = vmatmul.f32.gmra.mxu0 %v2215
      %v2327 = vpop.f32.mrf.mxu0
      %v2328 = vadd.f32 0.0, %v2327
      %2329 = vmatmul.f32.gmra.mxu0 %v2218
      %v2330 = vpop.f32.mrf.mxu0
      %v2331 = vadd.f32 0.0, %v2330
      %2332 = vmatmul.f32.gmra.mxu0 %v2221
      %v2333 = vpop.f32.mrf.mxu0
      %v2334 = vadd.f32 0.0, %v2333
      %2335 = vmatmul.f32.gmra.mxu0 %v2224
      %v2336 = vpop.f32.mrf.mxu0
      %v2337 = vadd.f32 0.0, %v2336
      %2338 = vmatmul.f32.gmra.mxu0 %v2227
      %v2339 = vpop.f32.mrf.mxu0
      %v2340 = vadd.f32 0.0, %v2339
      %2341 = vmatmul.f32.gmra.mxu0 %v2230
      %v2342 = vpop.f32.mrf.mxu0
      %v2343 = vadd.f32 0.0, %v2342
      %2344 = vmatmul.f32.gmra.mxu0 %v2233
      %v2345 = vpop.f32.mrf.mxu0
      %v2346 = vadd.f32 0.0, %v2345
      %2347 = vmatmul.f32.gmra.mxu0 %v2236
      %v2348 = vpop.f32.mrf.mxu0
      %v2349 = vadd.f32 0.0, %v2348
      %2350 = vmatmul.f32.gmra.mxu0 %v2239
      %v2351 = vpop.f32.mrf.mxu0
      %v2352 = vadd.f32 0.0, %v2351
      %2353 = vmatmul.f32.gmra.mxu0 %v2242
      %v2354 = vpop.f32.mrf.mxu0
      %v2355 = vadd.f32 0.0, %v2354
      %2356 = vmatmul.f32.gmra.mxu0 %v2245
      %v2357 = vpop.f32.mrf.mxu0
      %v2358 = vadd.f32 0.0, %v2357
      %2359 = vmatmul.f32.gmra.mxu0 %v2248
      %v2360 = vpop.f32.mrf.mxu0
      %v2361 = vadd.f32 0.0, %v2360
      %2362 = vmatmul.f32.gmra.mxu0 %v2251
      %v2363 = vpop.f32.mrf.mxu0
      %v2364 = vadd.f32 0.0, %v2363
      %2365 = vmatmul.f32.gmra.mxu0 %v2254
      %v2366 = vpop.f32.mrf.mxu0
      %v2367 = vadd.f32 0.0, %v2366
      %2368 = vmatmul.f32.gmra.mxu0 %v2257
      %v2369 = vpop.f32.mrf.mxu0
      %v2370 = vadd.f32 0.0, %v2369
      %2371 = vmatmul.f32.gmra.mxu0 %v2260
      %v2372 = vpop.f32.mrf.mxu0
      %v2373 = vadd.f32 0.0, %v2372
      %2374 = vmatmul.f32.gmra.mxu0 %v2263
      %v2375 = vpop.f32.mrf.mxu0
      %v2376 = vadd.f32 0.0, %v2375
      %2377 = vmatmul.f32.gmra.mxu0 %v2266
      %v2378 = vpop.f32.mrf.mxu0
      %v2379 = vadd.f32 0.0, %v2378
      %2380 = vmatmul.f32.gmra.mxu0 %v2269
      %v2381 = vpop.f32.mrf.mxu0
      %v2382 = vadd.f32 0.0, %v2381
      %2383 = vmatmul.f32.gmra.mxu0 %v2272
      %v2384 = vpop.f32.mrf.mxu0
      %v2385 = vadd.f32 0.0, %v2384
      %2386 = vmatmul.f32.gmra.mxu0 %v2275
      %v2387 = vpop.f32.mrf.mxu0
      %v2388 = vadd.f32 0.0, %v2387
      %2389 = vmatmul.f32.gmra.mxu0 %v2278
      %v2390 = vpop.f32.mrf.mxu0
      %v2391 = vadd.f32 0.0, %v2390
      %2392 = vmatmul.f32.gmra.mxu0 %v2281
      %v2393 = vpop.f32.mrf.mxu0
      %v2394 = vadd.f32 0.0, %v2393
      %2395 = vmatmul.f32.gmra.mxu0 %v2284
      %v2396 = vpop.f32.mrf.mxu0
      %v2397 = vadd.f32 0.0, %v2396
      %2398 = vdwg.mxu0
      %v2399 = vadd.f32 %v2115, %v2304
      %v2400 = vadd.f32 %v2116, %v2307
      %v2401 = vadd.f32 %v2117, %v2310
      %v2402 = vadd.f32 %v2118, %v2313
      %v2403 = vadd.f32 %v2119, %v2316
      %v2404 = vadd.f32 %v2120, %v2319
      %v2405 = vadd.f32 %v2121, %v2322
      %v2406 = vadd.f32 %v2122, %v2325
      %v2407 = vadd.f32 %v2123, %v2328
      %v2408 = vadd.f32 %v2124, %v2331
      %v2409 = vadd.f32 %v2125, %v2334
      %v2410 = vadd.f32 %v2126, %v2337
      %v2411 = vadd.f32 %v2127, %v2340
      %v2412 = vadd.f32 %v2128, %v2343
      %v2413 = vadd.f32 %v2129, %v2346
      %v2414 = vadd.f32 %v2130, %v2349
      %v2415 = vadd.f32 %v2131, %v2352
      %v2416 = vadd.f32 %v2132, %v2355
      %v2417 = vadd.f32 %v2133, %v2358
      %v2418 = vadd.f32 %v2134, %v2361
      %v2419 = vadd.f32 %v2135, %v2364
      %v2420 = vadd.f32 %v2136, %v2367
      %v2421 = vadd.f32 %v2137, %v2370
      %v2422 = vadd.f32 %v2138, %v2373
      %v2423 = vadd.f32 %v2139, %v2376
      %v2424 = vadd.f32 %v2140, %v2379
      %v2425 = vadd.f32 %v2141, %v2382
      %v2426 = vadd.f32 %v2142, %v2385
      %v2427 = vadd.f32 %v2143, %v2388
      %v2428 = vadd.f32 %v2144, %v2391
      %v2429 = vadd.f32 %v2145, %v2394
      %v2430 = vadd.f32 %v2146, %v2397
      %s2431 = sadd.s32 %s223, 66
      %s2432 = scalar_lea.vmem %s211, %s2431
      %v2433 = vld [vmem:[%s2432] sm:$0xff]
      %v2434 = vld [vmem:[%s2432 + $0x8] sm:$0xff]
      %v2435 = vld [vmem:[%s2432 + $0x10] sm:$0xff]
      %v2436 = vld [vmem:[%s2432 + $0x18] sm:$0xff]
      %v2437 = vld [vmem:[%s2432 + $0x20] sm:$0xff]
      %v2438 = vld [vmem:[%s2432 + $0x28] sm:$0xff]
      %v2439 = vld [vmem:[%s2432 + $0x30] sm:$0xff]
      %v2440 = vld [vmem:[%s2432 + $0x38] sm:$0xff]
      %v2441 = vld [vmem:[%s2432 + $0x40] sm:$0xff]
      %v2442 = vld [vmem:[%s2432 + $0x48] sm:$0xff]
      %v2443 = vld [vmem:[%s2432 + $0x50] sm:$0xff]
      %v2444 = vld [vmem:[%s2432 + $0x58] sm:$0xff]
      %v2445 = vld [vmem:[%s2432 + $0x60] sm:$0xff]
      %v2446 = vld [vmem:[%s2432 + $0x68] sm:$0xff]
      %v2447 = vld [vmem:[%s2432 + $0x70] sm:$0xff]
      %v2448 = vld [vmem:[%s2432 + $0x78] sm:$0xff]
      %v2449 = vld [vmem:[%s2432 + $0x80] sm:$0xff]
      %v2450 = vld [vmem:[%s2432 + $0x88] sm:$0xff]
      %v2451 = vld [vmem:[%s2432 + $0x90] sm:$0xff]
      %v2452 = vld [vmem:[%s2432 + $0x98] sm:$0xff]
      %v2453 = vld [vmem:[%s2432 + $0xa0] sm:$0xff]
      %v2454 = vld [vmem:[%s2432 + $0xa8] sm:$0xff]
      %v2455 = vld [vmem:[%s2432 + $0xb0] sm:$0xff]
      %v2456 = vld [vmem:[%s2432 + $0xb8] sm:$0xff]
      %v2457 = vld [vmem:[%s2432 + $0xc0] sm:$0xff]
      %v2458 = vld [vmem:[%s2432 + $0xc8] sm:$0xff]
      %v2459 = vld [vmem:[%s2432 + $0xd0] sm:$0xff]
      %v2460 = vld [vmem:[%s2432 + $0xd8] sm:$0xff]
      %v2461 = vld [vmem:[%s2432 + $0xe0] sm:$0xff]
      %v2462 = vld [vmem:[%s2432 + $0xe8] sm:$0xff]
      %v2463 = vld [vmem:[%s2432 + $0xf0] sm:$0xff]
      %v2464 = vld [vmem:[%s2432 + $0xf8] sm:$0xff]
      %s2465 = scalar_lea.vmem %s1, 512
      %v2466 = vld [vmem:[%s2465] sm:$0xff]
      %v2467 = vld [vmem:[%s2465 + $0x8] sm:$0xff]
      %v2468 = vld [vmem:[%s2465 + $0x10] sm:$0xff]
      %v2469 = vld [vmem:[%s2465 + $0x18] sm:$0xff]
      %v2470 = vld [vmem:[%s2465 + $0x20] sm:$0xff]
      %v2471 = vld [vmem:[%s2465 + $0x28] sm:$0xff]
      %v2472 = vld [vmem:[%s2465 + $0x30] sm:$0xff]
      %v2473 = vld [vmem:[%s2465 + $0x38] sm:$0xff]
      %v2475 = vsel %vm308, %v2433, 0
      %v2478 = vsel %vm308, %v2434, 0
      %v2481 = vsel %vm308, %v2435, 0
      %v2484 = vsel %vm308, %v2436, 0
      %v2487 = vsel %vm308, %v2437, 0
      %v2490 = vsel %vm308, %v2438, 0
      %v2493 = vsel %vm308, %v2439, 0
      %v2496 = vsel %vm308, %v2440, 0
      %v2499 = vsel %vm308, %v2441, 0
      %v2502 = vsel %vm308, %v2442, 0
      %v2505 = vsel %vm308, %v2443, 0
      %v2508 = vsel %vm308, %v2444, 0
      %v2511 = vsel %vm308, %v2445, 0
      %v2514 = vsel %vm308, %v2446, 0
      %v2517 = vsel %vm308, %v2447, 0
      %v2520 = vsel %vm308, %v2448, 0
      %v2523 = vsel %vm308, %v2449, 0
      %v2526 = vsel %vm308, %v2450, 0
      %v2529 = vsel %vm308, %v2451, 0
      %v2532 = vsel %vm308, %v2452, 0
      %v2535 = vsel %vm308, %v2453, 0
      %v2538 = vsel %vm308, %v2454, 0
      %v2541 = vsel %vm308, %v2455, 0
      %v2544 = vsel %vm308, %v2456, 0
      %v2547 = vsel %vm308, %v2457, 0
      %v2550 = vsel %vm308, %v2458, 0
      %v2553 = vsel %vm308, %v2459, 0
      %v2556 = vsel %vm308, %v2460, 0
      %v2559 = vsel %vm308, %v2461, 0
      %v2562 = vsel %vm308, %v2462, 0
      %v2565 = vsel %vm308, %v2463, 0
      %v2568 = vsel %vm308, %v2464, 0
      %2570 = vmatpush.msra.mxu0 0.0
      %2571 = vmatpush.msra.mxu0 0.0
      %2572 = vmatpush.msra.mxu0 0.0
      %2573 = vmatpush.msra.mxu0 0.0
      %2574 = vmatpush.msra.mxu0 0.0
      %2575 = vmatpush.msra.mxu0 0.0
      %2576 = vmatpush.msra.mxu0 0.0
      %2577 = vmatpush.msra.mxu0 0.0
      %2578 = vmatpush.msra.mxu0 %v2473
      %2579 = vmatpush.msra.mxu0 %v2472
      %2580 = vmatpush.msra.mxu0 %v2471
      %2581 = vmatpush.msra.mxu0 %v2470
      %2582 = vmatpush.msra.mxu0 %v2469
      %2583 = vmatpush.msra.mxu0 %v2468
      %2584 = vmatpush.msra.mxu0 %v2467
      %2585 = vmatpush.msra.mxu0 %v2466
      %2586 = vmatmul.f32.gmra.mxu0 %v2475
      %v2587 = vpop.f32.mrf.mxu0
      %v2588 = vadd.f32 0.0, %v2587
      %2589 = vmatmul.f32.gmra.mxu0 %v2478
      %v2590 = vpop.f32.mrf.mxu0
      %v2591 = vadd.f32 0.0, %v2590
      %2592 = vmatmul.f32.gmra.mxu0 %v2481
      %v2593 = vpop.f32.mrf.mxu0
      %v2594 = vadd.f32 0.0, %v2593
      %2595 = vmatmul.f32.gmra.mxu0 %v2484
      %v2596 = vpop.f32.mrf.mxu0
      %v2597 = vadd.f32 0.0, %v2596
      %2598 = vmatmul.f32.gmra.mxu0 %v2487
      %v2599 = vpop.f32.mrf.mxu0
      %v2600 = vadd.f32 0.0, %v2599
      %2601 = vmatmul.f32.gmra.mxu0 %v2490
      %v2602 = vpop.f32.mrf.mxu0
      %v2603 = vadd.f32 0.0, %v2602
      %2604 = vmatmul.f32.gmra.mxu0 %v2493
      %v2605 = vpop.f32.mrf.mxu0
      %v2606 = vadd.f32 0.0, %v2605
      %2607 = vmatmul.f32.gmra.mxu0 %v2496
      %v2608 = vpop.f32.mrf.mxu0
      %v2609 = vadd.f32 0.0, %v2608
      %2610 = vmatmul.f32.gmra.mxu0 %v2499
      %v2611 = vpop.f32.mrf.mxu0
      %v2612 = vadd.f32 0.0, %v2611
      %2613 = vmatmul.f32.gmra.mxu0 %v2502
      %v2614 = vpop.f32.mrf.mxu0
      %v2615 = vadd.f32 0.0, %v2614
      %2616 = vmatmul.f32.gmra.mxu0 %v2505
      %v2617 = vpop.f32.mrf.mxu0
      %v2618 = vadd.f32 0.0, %v2617
      %2619 = vmatmul.f32.gmra.mxu0 %v2508
      %v2620 = vpop.f32.mrf.mxu0
      %v2621 = vadd.f32 0.0, %v2620
      %2622 = vmatmul.f32.gmra.mxu0 %v2511
      %v2623 = vpop.f32.mrf.mxu0
      %v2624 = vadd.f32 0.0, %v2623
      %2625 = vmatmul.f32.gmra.mxu0 %v2514
      %v2626 = vpop.f32.mrf.mxu0
      %v2627 = vadd.f32 0.0, %v2626
      %2628 = vmatmul.f32.gmra.mxu0 %v2517
      %v2629 = vpop.f32.mrf.mxu0
      %v2630 = vadd.f32 0.0, %v2629
      %2631 = vmatmul.f32.gmra.mxu0 %v2520
      %v2632 = vpop.f32.mrf.mxu0
      %v2633 = vadd.f32 0.0, %v2632
      %2634 = vmatmul.f32.gmra.mxu0 %v2523
      %v2635 = vpop.f32.mrf.mxu0
      %v2636 = vadd.f32 0.0, %v2635
      %2637 = vmatmul.f32.gmra.mxu0 %v2526
      %v2638 = vpop.f32.mrf.mxu0
      %v2639 = vadd.f32 0.0, %v2638
      %2640 = vmatmul.f32.gmra.mxu0 %v2529
      %v2641 = vpop.f32.mrf.mxu0
      %v2642 = vadd.f32 0.0, %v2641
      %2643 = vmatmul.f32.gmra.mxu0 %v2532
      %v2644 = vpop.f32.mrf.mxu0
      %v2645 = vadd.f32 0.0, %v2644
      %2646 = vmatmul.f32.gmra.mxu0 %v2535
      %v2647 = vpop.f32.mrf.mxu0
      %v2648 = vadd.f32 0.0, %v2647
      %2649 = vmatmul.f32.gmra.mxu0 %v2538
      %v2650 = vpop.f32.mrf.mxu0
      %v2651 = vadd.f32 0.0, %v2650
      %2652 = vmatmul.f32.gmra.mxu0 %v2541
      %v2653 = vpop.f32.mrf.mxu0
      %v2654 = vadd.f32 0.0, %v2653
      %2655 = vmatmul.f32.gmra.mxu0 %v2544
      %v2656 = vpop.f32.mrf.mxu0
      %v2657 = vadd.f32 0.0, %v2656
      %2658 = vmatmul.f32.gmra.mxu0 %v2547
      %v2659 = vpop.f32.mrf.mxu0
      %v2660 = vadd.f32 0.0, %v2659
      %2661 = vmatmul.f32.gmra.mxu0 %v2550
      %v2662 = vpop.f32.mrf.mxu0
      %v2663 = vadd.f32 0.0, %v2662
      %2664 = vmatmul.f32.gmra.mxu0 %v2553
      %v2665 = vpop.f32.mrf.mxu0
      %v2666 = vadd.f32 0.0, %v2665
      %2667 = vmatmul.f32.gmra.mxu0 %v2556
      %v2668 = vpop.f32.mrf.mxu0
      %v2669 = vadd.f32 0.0, %v2668
      %2670 = vmatmul.f32.gmra.mxu0 %v2559
      %v2671 = vpop.f32.mrf.mxu0
      %v2672 = vadd.f32 0.0, %v2671
      %2673 = vmatmul.f32.gmra.mxu0 %v2562
      %v2674 = vpop.f32.mrf.mxu0
      %v2675 = vadd.f32 0.0, %v2674
      %2676 = vmatmul.f32.gmra.mxu0 %v2565
      %v2677 = vpop.f32.mrf.mxu0
      %v2678 = vadd.f32 0.0, %v2677
      %2679 = vmatmul.f32.gmra.mxu0 %v2568
      %v2680 = vpop.f32.mrf.mxu0
      %v2681 = vadd.f32 0.0, %v2680
      %2682 = vdwg.mxu0
      %v2683 = vadd.f32 %v2399, %v2588
      %v2684 = vadd.f32 %v2400, %v2591
      %v2685 = vadd.f32 %v2401, %v2594
      %v2686 = vadd.f32 %v2402, %v2597
      %v2687 = vadd.f32 %v2403, %v2600
      %v2688 = vadd.f32 %v2404, %v2603
      %v2689 = vadd.f32 %v2405, %v2606
      %v2690 = vadd.f32 %v2406, %v2609
      %v2691 = vadd.f32 %v2407, %v2612
      %v2692 = vadd.f32 %v2408, %v2615
      %v2693 = vadd.f32 %v2409, %v2618
      %v2694 = vadd.f32 %v2410, %v2621
      %v2695 = vadd.f32 %v2411, %v2624
      %v2696 = vadd.f32 %v2412, %v2627
      %v2697 = vadd.f32 %v2413, %v2630
      %v2698 = vadd.f32 %v2414, %v2633
      %v2699 = vadd.f32 %v2415, %v2636
      %v2700 = vadd.f32 %v2416, %v2639
      %v2701 = vadd.f32 %v2417, %v2642
      %v2702 = vadd.f32 %v2418, %v2645
      %v2703 = vadd.f32 %v2419, %v2648
      %v2704 = vadd.f32 %v2420, %v2651
      %v2705 = vadd.f32 %v2421, %v2654
      %v2706 = vadd.f32 %v2422, %v2657
      %v2707 = vadd.f32 %v2423, %v2660
      %v2708 = vadd.f32 %v2424, %v2663
      %v2709 = vadd.f32 %v2425, %v2666
      %v2710 = vadd.f32 %v2426, %v2669
      %v2711 = vadd.f32 %v2427, %v2672
      %v2712 = vadd.f32 %v2428, %v2675
      %v2713 = vadd.f32 %v2429, %v2678
      %v2714 = vadd.f32 %v2430, %v2681
      %v2715 = vld [vmem:[%s2] sm:$0x1]
      %v2717 = vperm.slane %v2715, 0
      %v2719 = vmul.f32 %v2683, %v2717
      %v2720 = vmul.f32 %v2684, %v2717
      %v2721 = vmul.f32 %v2685, %v2717
      %v2722 = vmul.f32 %v2686, %v2717
      %v2723 = vmul.f32 %v2687, %v2717
      %v2724 = vmul.f32 %v2688, %v2717
      %v2725 = vmul.f32 %v2689, %v2717
      %v2726 = vmul.f32 %v2690, %v2717
      %v2727 = vmul.f32 %v2691, %v2717
      %v2728 = vmul.f32 %v2692, %v2717
      %v2729 = vmul.f32 %v2693, %v2717
      %v2730 = vmul.f32 %v2694, %v2717
      %v2731 = vmul.f32 %v2695, %v2717
      %v2732 = vmul.f32 %v2696, %v2717
      %v2733 = vmul.f32 %v2697, %v2717
      %v2734 = vmul.f32 %v2698, %v2717
      %v2735 = vmul.f32 %v2699, %v2717
      %v2736 = vmul.f32 %v2700, %v2717
      %v2737 = vmul.f32 %v2701, %v2717
      %v2738 = vmul.f32 %v2702, %v2717
      %v2739 = vmul.f32 %v2703, %v2717
      %v2740 = vmul.f32 %v2704, %v2717
      %v2741 = vmul.f32 %v2705, %v2717
      %v2742 = vmul.f32 %v2706, %v2717
      %v2743 = vmul.f32 %v2707, %v2717
      %v2744 = vmul.f32 %v2708, %v2717
      %v2745 = vmul.f32 %v2709, %v2717
      %v2746 = vmul.f32 %v2710, %v2717
      %v2747 = vmul.f32 %v2711, %v2717
      %v2748 = vmul.f32 %v2712, %v2717
      %v2749 = vmul.f32 %v2713, %v2717
      %v2750 = vmul.f32 %v2714, %v2717
      %v2751 = vld [vmem:[%s3] sm:$0x1]
      %v2753 = vperm.slane %v2751, 0
      %v2755 = vadd.f32 %v2719, %v2753
      %v2756 = vadd.f32 %v2720, %v2753
      %v2757 = vadd.f32 %v2721, %v2753
      %v2758 = vadd.f32 %v2722, %v2753
      %v2759 = vadd.f32 %v2723, %v2753
      %v2760 = vadd.f32 %v2724, %v2753
      %v2761 = vadd.f32 %v2725, %v2753
      %v2762 = vadd.f32 %v2726, %v2753
      %v2763 = vadd.f32 %v2727, %v2753
      %v2764 = vadd.f32 %v2728, %v2753
      %v2765 = vadd.f32 %v2729, %v2753
      %v2766 = vadd.f32 %v2730, %v2753
      %v2767 = vadd.f32 %v2731, %v2753
      %v2768 = vadd.f32 %v2732, %v2753
      %v2769 = vadd.f32 %v2733, %v2753
      %v2770 = vadd.f32 %v2734, %v2753
      %v2771 = vadd.f32 %v2735, %v2753
      %v2772 = vadd.f32 %v2736, %v2753
      %v2773 = vadd.f32 %v2737, %v2753
      %v2774 = vadd.f32 %v2738, %v2753
      %v2775 = vadd.f32 %v2739, %v2753
      %v2776 = vadd.f32 %v2740, %v2753
      %v2777 = vadd.f32 %v2741, %v2753
      %v2778 = vadd.f32 %v2742, %v2753
      %v2779 = vadd.f32 %v2743, %v2753
      %v2780 = vadd.f32 %v2744, %v2753
      %v2781 = vadd.f32 %v2745, %v2753
      %v2782 = vadd.f32 %v2746, %v2753
      %v2783 = vadd.f32 %v2747, %v2753
      %v2784 = vadd.f32 %v2748, %v2753
      %v2785 = vadd.f32 %v2749, %v2753
      %v2786 = vadd.f32 %v2750, %v2753
      %v2787 = vmax.f32 %v2755, 0.0
      %v2788 = vmax.f32 %v2756, 0.0
      %v2789 = vmax.f32 %v2757, 0.0
      %v2790 = vmax.f32 %v2758, 0.0
      %v2791 = vmax.f32 %v2759, 0.0
      %v2792 = vmax.f32 %v2760, 0.0
      %v2793 = vmax.f32 %v2761, 0.0
      %v2794 = vmax.f32 %v2762, 0.0
      %v2795 = vmax.f32 %v2763, 0.0
      %v2796 = vmax.f32 %v2764, 0.0
      %v2797 = vmax.f32 %v2765, 0.0
      %v2798 = vmax.f32 %v2766, 0.0
      %v2799 = vmax.f32 %v2767, 0.0
      %v2800 = vmax.f32 %v2768, 0.0
      %v2801 = vmax.f32 %v2769, 0.0
      %v2802 = vmax.f32 %v2770, 0.0
      %v2803 = vmax.f32 %v2771, 0.0
      %v2804 = vmax.f32 %v2772, 0.0
      %v2805 = vmax.f32 %v2773, 0.0
      %v2806 = vmax.f32 %v2774, 0.0
      %v2807 = vmax.f32 %v2775, 0.0
      %v2808 = vmax.f32 %v2776, 0.0
      %v2809 = vmax.f32 %v2777, 0.0
      %v2810 = vmax.f32 %v2778, 0.0
      %v2811 = vmax.f32 %v2779, 0.0
      %v2812 = vmax.f32 %v2780, 0.0
      %v2813 = vmax.f32 %v2781, 0.0
      %v2814 = vmax.f32 %v2782, 0.0
      %v2815 = vmax.f32 %v2783, 0.0
      %v2816 = vmax.f32 %v2784, 0.0
      %v2817 = vmax.f32 %v2785, 0.0
      %v2818 = vmax.f32 %v2786, 0.0
      %v2819 = vmax.f32 %v2787, %v2791
      %v2820 = vmax.f32 %v2788, %v2792
      %v2821 = vmax.f32 %v2789, %v2793
      %v2822 = vmax.f32 %v2790, %v2794
      %v2823 = vmax.f32 %v2795, %v2799
      %v2824 = vmax.f32 %v2796, %v2800
      %v2825 = vmax.f32 %v2797, %v2801
      %v2826 = vmax.f32 %v2798, %v2802
      %v2827 = vmax.f32 %v2803, %v2807
      %v2828 = vmax.f32 %v2804, %v2808
      %v2829 = vmax.f32 %v2805, %v2809
      %v2830 = vmax.f32 %v2806, %v2810
      %v2831 = vmax.f32 %v2811, %v2815
      %v2832 = vmax.f32 %v2812, %v2816
      %v2833 = vmax.f32 %v2813, %v2817
      %v2834 = vmax.f32 %v2814, %v2818
      %2835 = vst [vmem:[#allocation2] sm:$0xff] %v2819
      %2836 = vst [vmem:[#allocation2 + $0x8] sm:$0xff] %v2820
      %2837 = vst [vmem:[#allocation2 + $0x10] sm:$0xff] %v2821
      %2838 = vst [vmem:[#allocation2 + $0x18] sm:$0xff] %v2822
      %2839 = vst [vmem:[#allocation2 + $0x20] sm:$0xff] %v2823
      %2840 = vst [vmem:[#allocation2 + $0x28] sm:$0xff] %v2824
      %2841 = vst [vmem:[#allocation2 + $0x30] sm:$0xff] %v2825
      %2842 = vst [vmem:[#allocation2 + $0x38] sm:$0xff] %v2826
      %2843 = vst [vmem:[#allocation2 + $0x40] sm:$0xff] %v2827
      %2844 = vst [vmem:[#allocation2 + $0x48] sm:$0xff] %v2828
      %2845 = vst [vmem:[#allocation2 + $0x50] sm:$0xff] %v2829
      %2846 = vst [vmem:[#allocation2 + $0x58] sm:$0xff] %v2830
      %2847 = vst [vmem:[#allocation2 + $0x60] sm:$0xff] %v2831
      %2848 = vst [vmem:[#allocation2 + $0x68] sm:$0xff] %v2832
      %2849 = vst [vmem:[#allocation2 + $0x70] sm:$0xff] %v2833
      %2850 = vst [vmem:[#allocation2 + $0x78] sm:$0xff] %v2834
      %v2851 = vld [vmem:[#allocation2] ss:$2 sm:$0xff]
      %s2852 = scalar_lea.vmem [#allocation2], 16
      %v2853 = vld [vmem:[%s2852] ss:$2 sm:$0xf]
      %s2854 = scalar_lea.vmem [#allocation2], 32
      %v2855 = vld [vmem:[%s2854] ss:$2 sm:$0xff]
      %s2856 = scalar_lea.vmem [#allocation2], 48
      %v2857 = vld [vmem:[%s2856] ss:$2 sm:$0xf]
      %s2858 = scalar_lea.vmem [#allocation2], 64
      %v2859 = vld [vmem:[%s2858] ss:$2 sm:$0xff]
      %s2860 = scalar_lea.vmem [#allocation2], 80
      %v2861 = vld [vmem:[%s2860] ss:$2 sm:$0xf]
      %s2862 = scalar_lea.vmem [#allocation2], 96
      %v2863 = vld [vmem:[%s2862] ss:$2 sm:$0xff]
      %s2864 = scalar_lea.vmem [#allocation2], 112
      %v2865 = vld [vmem:[%s2864] ss:$2 sm:$0xf]
      %s2866 = scalar_lea.vmem [#allocation2], 1
      %v2867 = vld [vmem:[%s2866] ss:$2 sm:$0xff]
      %s2868 = scalar_lea.vmem [#allocation2], 17
      %v2869 = vld [vmem:[%s2868] ss:$2 sm:$0xf]
      %s2870 = scalar_lea.vmem [#allocation2], 33
      %v2871 = vld [vmem:[%s2870] ss:$2 sm:$0xff]
      %s2872 = scalar_lea.vmem [#allocation2], 49
      %v2873 = vld [vmem:[%s2872] ss:$2 sm:$0xf]
      %s2874 = scalar_lea.vmem [#allocation2], 65
      %v2875 = vld [vmem:[%s2874] ss:$2 sm:$0xff]
      %s2876 = scalar_lea.vmem [#allocation2], 81
      %v2877 = vld [vmem:[%s2876] ss:$2 sm:$0xf]
      %s2878 = scalar_lea.vmem [#allocation2], 97
      %v2879 = vld [vmem:[%s2878] ss:$2 sm:$0xff]
      %s2880 = scalar_lea.vmem [#allocation2], 113
      %v2881 = vld [vmem:[%s2880] ss:$2 sm:$0xf]
      %v2882 = vmax.f32 %v2851, %v2867
      %v2883 = vmax.f32 %v2853, %v2869
      %v2884 = vmax.f32 %v2855, %v2871
      %v2885 = vmax.f32 %v2857, %v2873
      %v2886 = vmax.f32 %v2859, %v2875
      %v2887 = vmax.f32 %v2861, %v2877
      %v2888 = vmax.f32 %v2863, %v2879
      %v2889 = vmax.f32 %v2865, %v2881
      %2890 = vst [vmem:[%s221] sm:$0xff] %v2882
      %2891 = vst [vmem:[%s221 + $0x8] sm:$0xf] %v2883
      %2892 = vst [vmem:[%s221 + $0x10] sm:$0xff] %v2884
      %2893 = vst [vmem:[%s221 + $0x18] sm:$0xf] %v2885
      %2894 = vst [vmem:[%s221 + $0x20] sm:$0xff] %v2886
      %2895 = vst [vmem:[%s221 + $0x28] sm:$0xf] %v2887
      %2896 = vst [vmem:[%s221 + $0x30] sm:$0xff] %v2888
      %2897 = vst [vmem:[%s221 + $0x38] sm:$0xf] %v2889
      %s2898 = smul.u32 4, %s20
      %p2899 = scmp.lt.s32.totalorder %s19, 1
      %s2900 = scalar_select %p2899, %s19, 1
      %p2901 = scmp.lt.s32.totalorder %s2898, 11
      %s2902 = scalar_select %p2901, %s2898, 11
      %s2903 = smul.addr %s2902, 2
      %s2904 = smul.addr %s2900, 24
      %s2905 = sadd.s32 %s2903, %s2904
      %s2906 = smul.addr %s2905, 8
      %s2907 = scalar_lea.vmem %s4, %s2906
      // Predicated region
      $region37: #{vgg16_forward.5} parent=35 // pred_check
        %p2908 = pneg %p136
      $region38: #{vgg16_forward.5} parent=35 // pred_check_branch
        %2910 = sbr.rel (%p2908) target = $region40
      $region39: #{vgg16_forward.5} parent=35 // pred_region
        %s2911 = smul.u32 4, %s20
      $region40: #{vgg16_forward.5} parent=35 // pred_fallthru
        _
    $region36: #{vgg16_forward.5} parent=5 // pred_fallthru
      _
    %p2912 = scmp.le.s32.totalorder 2, %s10
    // Predicated region
    $region41: #{vgg16_forward.5} parent=5 // pred_check
      %p2913 = pneg %p2912
    $region42: #{vgg16_forward.5} parent=5 // pred_check_branch
      %2915 = sbr.rel (%p2913) target = $region44
    $region43: #{vgg16_forward.5} parent=5 // pred_region
      %s2916 = ssub.s32 %s10, 2
      // Predicated region
      $region45: #{vgg16_forward.5} parent=43 // pred_check
        %p2917 = pneg %p142
      $region46: #{vgg16_forward.5} parent=43 // pred_check_branch
        %2919 = sbr.rel (%p2917) target = $region48
      $region47: #{vgg16_forward.5} parent=43 // pred_region
        %s2920 = smul.u32 4, %s22
        %p2921 = scmp.lt.s32.totalorder %s21, 1
        %s2922 = scalar_select %p2921, %s21, 1
        %p2923 = scmp.lt.s32.totalorder %s2920, 11
        %s2924 = scalar_select %p2923, %s2920, 11
        %s2925 = smul.addr %s2924, 2
        %s2926 = smul.addr %s2922, 24
        %s2927 = sadd.s32 %s2925, %s2926
        %s2928 = smul.addr %s2927, 8
        %s2929 = scalar_lea.vmem %s4, %s2928
      $region48: #{vgg16_forward.5} parent=43 // pred_fallthru
        _
    $region44: #{vgg16_forward.5} parent=5 // pred_fallthru
      _
  $region6: #{vgg16_forward.5} parent=0 // loop_footer
    %s14 = sadd.s32 1, %s10
  $region7: #{vgg16_forward.5} parent=0 // loop_footer_branch
    %9 = sbr.rel target = $region3
  $region8: #{vgg16_forward.5} parent=0 // loop_exit
    _

// kernel: vgg16_forward.6
$region0: #{vgg16_forward.6}
  #allocation0 [shape = 'u32[]', space=smem, size = 0x4, offset = 0x4, fixed_abs, tag = 'smem constant byte address 0x4 - core index']
  #allocation1 [shape = 'u32[72,128]{1,0:T(1,128)}', space=vmem, size = 0x9000, scoped, tag = 'internal scratch']
  #allocation2 [shape = 'f32[6,16,128]{2,1,0:T(8,128)}', space=vmem, size = 0xc000, scoped, tag = 'scratch operand']
  %s0 = inlined_call_operand.vmem [shape: f32[2,240,128], index: 0, kind: input, shape index: {}]
  %s1 = inlined_call_operand.vmem [shape: f32[3,3,128,128], index: 1, kind: input, shape index: {}]
  %s2 = inlined_call_operand.vmem [shape: f32[1,128], index: 2, kind: input, shape index: {}]
  %s3 = inlined_call_operand.vmem [shape: f32[1,128], index: 3, kind: input, shape index: {}]
  %s4 = inlined_call_operand.vmem [shape: f32[2,6,6,128], index: 4, kind: output, shape index: {}]
  %s5 = sld [smem:[#allocation0]]
  $region49: #{vgg16_forward.6} parent=0
    _
  %s7 = ssub.s32 1, %s5
  %s8 = scalar_select 0, %s7, %s5
  loop: start=0, step=1, limit=4
  $region2: #{vgg16_forward.6} parent=0 // loop_pre_header
    _
  $region3: #{vgg16_forward.6} parent=0 // loop_header
    %s10 = sphi 0, %s14
    %p11 = scmp.ge.s32.totalorder %s10, 4
    %s17 = sphi 0, %s29
    %s18 = sphi 0, %s25
    %s19 = sphi 0, %s17
    %s20 = sphi 0, %s18
    %s21 = sphi 0, %s19
    %s22 = sphi 0, %s20
    %s32 = sphi 0, %s34
    %s35 = sphi 0, %s32
    %s36 = sphi 0, %s35
    %s52 = sphi 0, %s36
    %s56 = sphi 0, %s56
    %s58 = sphi 0, %s56
    %s59 = sphi 0, %s58
    %s73 = sphi 0, %s59
    %s77 = sphi 0, %s77
    %s79 = sphi 0, %s77
    %s80 = sphi 0, %s79
    %s94 = sphi 0, %s80
    %s98 = sphi 0, %s98
    %s100 = sphi 0, %s98
    %s101 = sphi 0, %s100
    %s115 = sphi 0, %s101
    %s123 = sphi 0, %s125
    %s126 = sphi 0, %s123
    %s127 = sphi 0, %s126
    %s143 = sphi 0, %s127
  $region4: #{vgg16_forward.6} parent=0 // loop_header_branch
    %13 = sbr.rel (%p11) target = $region8
  $region5: #{vgg16_forward.6} parent=0 // loop_body
    %s15 = ssub.s32 %s10, 1
    %s16 = ssub.s32 %s10, 2
    %s23 = sadd.s32 1, %s18
    %p24 = scmp.ge.s32.totalorder %s23, 1
    %s25 = scalar_select %p24, 0, %s23
    %s26 = sadd.s32 1, %s17
    %s27 = scalar_select %p24, %s26, %s17
    %p28 = scmp.ge.s32.totalorder %s27, 2
    %s29 = scalar_select %p28, 0, %s27
    %s30 = ssub.s32 %s17, %s29
    %p31 = scmp.eq.s32.totalorder %s30, 0
    %s33 = sadd.s32 %s32, 1
    %s34 = scalar_select %p31, %s32, %s33
    %p37 = pneg %p31
    %p38 = scmp.eq.s32.totalorder %s10, 1
    %p39 = por %p37, %p38
    %p40 = scmp.ne.s32.totalorder %s32, %s35
    %p41 = scmp.eq.s32.totalorder %s10, 0
    %p42 = por %p40, %p41
    %p43 = scmp.ne.s32.totalorder %s32, %s35
    %p44 = scmp.eq.s32.totalorder %s15, 1
    %p45 = por %p43, %p44
    %p46 = scmp.ne.s32.totalorder %s35, %s36
    %p47 = scmp.eq.s32.totalorder %s15, 0
    %p48 = por %p46, %p47
    %p49 = scmp.ne.s32.totalorder %s35, %s36
    %p50 = scmp.eq.s32.totalorder %s16, 1
    %p51 = por %p49, %p50
    %p53 = scmp.ne.s32.totalorder %s36, %s52
    %p54 = scmp.eq.s32.totalorder %s16, 0
    %p55 = por %p53, %p54
    %s57 = sadd.s32 %s56, 1
    %p60 = scmp.eq.s32.totalorder %s10, 1
    %p61 = scmp.ne.s32.totalorder %s56, %s58
    %p62 = scmp.eq.s32.totalorder %s10, 0
    %p63 = por %p61, %p62
    %p64 = scmp.ne.s32.totalorder %s56, %s58
    %p65 = scmp.eq.s32.totalorder %s15, 1
    %p66 = por %p64, %p65
    %p67 = scmp.ne.s32.totalorder %s58, %s59
    %p68 = scmp.eq.s32.totalorder %s15, 0
    %p69 = por %p67, %p68
    %p70 = scmp.ne.s32.totalorder %s58, %s59
    %p71 = scmp.eq.s32.totalorder %s16, 1
    %p72 = por %p70, %p71
    %p74 = scmp.ne.s32.totalorder %s59, %s73
    %p75 = scmp.eq.s32.totalorder %s16, 0
    %p76 = por %p74, %p75
    %s78 = sadd.s32 %s77, 1
    %p81 = scmp.eq.s32.totalorder %s10, 1
    %p82 = scmp.ne.s32.totalorder %s77, %s79
    %p83 = scmp.eq.s32.totalorder %s10, 0
    %p84 = por %p82, %p83
    %p85 = scmp.ne.s32.totalorder %s77, %s79
    %p86 = scmp.eq.s32.totalorder %s15, 1
    %p87 = por %p85, %p86
    %p88 = scmp.ne.s32.totalorder %s79, %s80
    %p89 = scmp.eq.s32.totalorder %s15, 0
    %p90 = por %p88, %p89
    %p91 = scmp.ne.s32.totalorder %s79, %s80
    %p92 = scmp.eq.s32.totalorder %s16, 1
    %p93 = por %p91, %p92
    %p95 = scmp.ne.s32.totalorder %s80, %s94
    %p96 = scmp.eq.s32.totalorder %s16, 0
    %p97 = por %p95, %p96
    %s99 = sadd.s32 %s98, 1
    %p102 = scmp.eq.s32.totalorder %s10, 1
    %p103 = scmp.ne.s32.totalorder %s98, %s100
    %p104 = scmp.eq.s32.totalorder %s10, 0
    %p105 = por %p103, %p104
    %p106 = scmp.ne.s32.totalorder %s98, %s100
    %p107 = scmp.eq.s32.totalorder %s15, 1
    %p108 = por %p106, %p107
    %p109 = scmp.ne.s32.totalorder %s100, %s101
    %p110 = scmp.eq.s32.totalorder %s15, 0
    %p111 = por %p109, %p110
    %p112 = scmp.ne.s32.totalorder %s100, %s101
    %p113 = scmp.eq.s32.totalorder %s16, 1
    %p114 = por %p112, %p113
    %p116 = scmp.ne.s32.totalorder %s101, %s115
    %p117 = scmp.eq.s32.totalorder %s16, 0
    %p118 = por %p116, %p117
    %s119 = ssub.s32 %s17, %s29
    %s120 = ssub.s32 %s18, %s25
    %s121 = sor.u32 %s119, %s120
    %p122 = scmp.eq.s32.totalorder %s121, 0
    %s124 = sadd.s32 %s123, 1
    %s125 = scalar_select %p122, %s123, %s124
    %p128 = pneg %p122
    %p129 = scmp.eq.s32.totalorder %s10, 1
    %p130 = por %p128, %p129
    %p131 = scmp.ne.s32.totalorder %s123, %s126
    %p132 = scmp.eq.s32.totalorder %s10, 0
    %p133 = por %p131, %p132
    %p134 = scmp.ne.s32.totalorder %s123, %s126
    %p135 = scmp.eq.s32.totalorder %s15, 1
    %p136 = por %p134, %p135
    %p137 = scmp.ne.s32.totalorder %s126, %s127
    %p138 = scmp.eq.s32.totalorder %s15, 0
    %p139 = por %p137, %p138
    %p140 = scmp.ne.s32.totalorder %s126, %s127
    %p141 = scmp.eq.s32.totalorder %s16, 1
    %p142 = por %p140, %p141
    %p144 = scmp.ne.s32.totalorder %s127, %s143
    %p145 = scmp.eq.s32.totalorder %s16, 0
    %p146 = por %p144, %p145
    %p147 = scmp.le.s32.totalorder 1, %s10
    %p148 = scmp.lt.s32.totalorder %s10, 3
    %p149 = pnand %p147, %p148
    %p150 = pneg %p149
    // Predicated region
    $region9: #{vgg16_forward.6} parent=5 // pred_check
      _
    $region10: #{vgg16_forward.6} parent=5 // pred_check_branch
      %152 = sbr.rel (%p149) target = $region12
    $region11: #{vgg16_forward.6} parent=5 // pred_region
      %s153 = ssub.s32 %s10, 1
      // Predicated region
      $region13: #{vgg16_forward.6} parent=11 // pred_check
        %p154 = pneg %p69
      $region14: #{vgg16_forward.6} parent=11 // pred_check_branch
        %156 = sbr.rel (%p154) target = $region16
      $region15: #{vgg16_forward.6} parent=11 // pred_region
        _
      $region16: #{vgg16_forward.6} parent=11 // pred_fallthru
        _
      // Predicated region
      $region17: #{vgg16_forward.6} parent=11 // pred_check
        %p157 = pneg %p90
      $region18: #{vgg16_forward.6} parent=11 // pred_check_branch
        %159 = sbr.rel (%p157) target = $region20
      $region19: #{vgg16_forward.6} parent=11 // pred_region
        _
      $region20: #{vgg16_forward.6} parent=11 // pred_fallthru
        _
      // Predicated region
      $region21: #{vgg16_forward.6} parent=11 // pred_check
        %p160 = pneg %p111
      $region22: #{vgg16_forward.6} parent=11 // pred_check_branch
        %162 = sbr.rel (%p160) target = $region24
      $region23: #{vgg16_forward.6} parent=11 // pred_region
        _
      $region24: #{vgg16_forward.6} parent=11 // pred_fallthru
        _
    $region12: #{vgg16_forward.6} parent=5 // pred_fallthru
      _
    %p163 = scmp.lt.s32.totalorder %s10, 2
    // Predicated region
    $region25: #{vgg16_forward.6} parent=5 // pred_check
      %p164 = pneg %p163
    $region26: #{vgg16_forward.6} parent=5 // pred_check_branch
      %166 = sbr.rel (%p164) target = $region28
    $region27: #{vgg16_forward.6} parent=5 // pred_region
      // Predicated region
      $region29: #{vgg16_forward.6} parent=27 // pred_check
        %p167 = pneg %p42
      $region30: #{vgg16_forward.6} parent=27 // pred_check_branch
        %169 = sbr.rel (%p167) target = $region32
      $region31: #{vgg16_forward.6} parent=27 // pred_region
        %p170 = scmp.lt.s32.totalorder %s17, 1
        %s171 = scalar_select %p170, %s17, 1
        %s172 = smul.addr %s171, 30
        %s173 = smul.addr %s172, 8
        %s174 = scalar_lea.vmem %s0, %s173
      $region32: #{vgg16_forward.6} parent=27 // pred_fallthru
        _
    $region28: #{vgg16_forward.6} parent=5 // pred_fallthru
      _
    %p175 = scmp.le.s32.totalorder 1, %s10
    %p176 = scmp.lt.s32.totalorder %s10, 3
    %p177 = pnand %p175, %p176
    %p178 = pneg %p177
    // Predicated region
    $region33: #{vgg16_forward.6} parent=5 // pred_check
      _
    $region34: #{vgg16_forward.6} parent=5 // pred_check_branch
      %180 = sbr.rel (%p177) target = $region36
    $region35: #{vgg16_forward.6} parent=5 // pred_region
      %s181 = ssub.s32 %s10, 1
      %p182 = scmp.lt.s32.totalorder %s19, 1
      %s183 = scalar_select %p182, %s19, 1
      %s184 = smul.addr %s183, 30
      %s185 = smul.addr %s184, 8
      %s186 = scalar_lea.vmem %s0, %s185
      %p187 = pneg %p48
      %p188 = pneg %p45
      %p189 = pneg %p69
      %p190 = pneg %p66
      %p191 = pneg %p90
      %p192 = pneg %p87
      %p193 = pneg %p111
      %p194 = pneg %p108
      %p195 = pneg %p139
      %p196 = pneg %p136
      %s197 = smul.u32 6, %s20
      %p198 = scmp.lt.s32.totalorder %s19, 1
      %s199 = scalar_select %p198, %s19, 1
      %p200 = scmp.lt.s32.totalorder %s197, 5
      %s201 = scalar_select %p200, %s197, 5
      %s202 = smul.addr %s199, 6
      %s203 = sadd.s32 %s201, %s202
      %s204 = smul.addr %s203, 8
      %s205 = scalar_lea.vmem %s4, %s204
      %p206 = scmp.lt.s32.totalorder %s19, 1
      %s207 = scalar_select %p206, %s19, 1
      %s208 = smul.addr %s207, 30
      %s209 = smul.addr %s208, 8
      %s210 = scalar_lea.vmem %s0, %s209
      %s211 = smul.u32 6, %s20
      %p212 = scmp.lt.s32.totalorder %s19, 1
      %s213 = scalar_select %p212, %s19, 1
      %p214 = scmp.lt.s32.totalorder %s211, 5
      %s215 = scalar_select %p214, %s211, 5
      %s216 = smul.addr %s213, 6
      %s217 = sadd.s32 %s215, %s216
      %s218 = smul.addr %s217, 8
      %s219 = scalar_lea.vmem %s4, %s218
      %s220 = smul.u32 6, %s20
      %s221 = smul.u32 %s20, 192
      %s222 = scalar_lea.vmem %s210, %s221
      %v223 = vld [vmem:[%s222] sm:$0xff]
      %v224 = vld [vmem:[%s222 + $0x8] sm:$0xff]
      %v225 = vld [vmem:[%s222 + $0x10] sm:$0xff]
      %v226 = vld [vmem:[%s222 + $0x18] sm:$0xff]
      %v227 = vld [vmem:[%s222 + $0x20] sm:$0xff]
      %v228 = vld [vmem:[%s222 + $0x28] sm:$0xff]
      %v229 = vld [vmem:[%s222 + $0x30] sm:$0xff]
      %v230 = vld [vmem:[%s222 + $0x38] sm:$0xff]
      %v231 = vld [vmem:[%s222 + $0x40] sm:$0xff]
      %v232 = vld [vmem:[%s222 + $0x48] sm:$0xff]
      %v233 = vld [vmem:[%s222 + $0x50] sm:$0xff]
      %v234 = vld [vmem:[%s222 + $0x58] sm:$0xff]
      %v235 = vld [vmem:[%s222 + $0x60] sm:$0xff]
      %v236 = vld [vmem:[%s222 + $0x68] sm:$0xff]
      %v237 = vld [vmem:[%s222 + $0x70] sm:$0xff]
      %v238 = vld [vmem:[%s222 + $0x78] sm:$0xff]
      %v239 = vld [vmem:[%s222 + $0x80] sm:$0xff]
      %v240 = vld [vmem:[%s222 + $0x88] sm:$0xff]
      %v241 = vld [vmem:[%s222 + $0x90] sm:$0xff]
      %v242 = vld [vmem:[%s222 + $0x98] sm:$0xff]
      %v243 = vld [vmem:[%s222 + $0xa0] sm:$0xff]
      %v244 = vld [vmem:[%s222 + $0xa8] sm:$0xff]
      %v245 = vld [vmem:[%s222 + $0xb0] sm:$0xff]
      %v246 = vld [vmem:[%s222 + $0xb8] sm:$0xff]
      %v247 = vld [vmem:[%s1] sm:$0xff]
      %v248 = vld [vmem:[%s1 + $0x8] sm:$0xff]
      %v249 = vld [vmem:[%s1 + $0x10] sm:$0xff]
      %v250 = vld [vmem:[%s1 + $0x18] sm:$0xff]
      %v251 = vld [vmem:[%s1 + $0x20] sm:$0xff]
      %v252 = vld [vmem:[%s1 + $0x28] sm:$0xff]
      %v253 = vld [vmem:[%s1 + $0x30] sm:$0xff]
      %v254 = vld [vmem:[%s1 + $0x38] sm:$0xff]
      %v255 = vld [vmem:[%s1 + $0x40] sm:$0xff]
      %v256 = vld [vmem:[%s1 + $0x48] sm:$0xff]
      %v257 = vld [vmem:[%s1 + $0x50] sm:$0xff]
      %v258 = vld [vmem:[%s1 + $0x58] sm:$0xff]
      %v259 = vld [vmem:[%s1 + $0x60] sm:$0xff]
      %v260 = vld [vmem:[%s1 + $0x68] sm:$0xff]
      %v261 = vld [vmem:[%s1 + $0x70] sm:$0xff]
      %v262 = vld [vmem:[%s1 + $0x78] sm:$0xff]
      %s263 = sadd.s32 %s221, 1
      %s264 = scalar_lea.vmem %s210, %s263
      %v265 = vld [vmem:[%s264] sm:$0xff]
      %v266 = vld [vmem:[%s264 + $0x8] sm:$0xff]
      %v267 = vld [vmem:[%s264 + $0x10] sm:$0xff]
      %v268 = vld [vmem:[%s264 + $0x18] sm:$0xff]
      %v269 = vld [vmem:[%s264 + $0x20] sm:$0xff]
      %v270 = vld [vmem:[%s264 + $0x28] sm:$0xff]
      %v271 = vld [vmem:[%s264 + $0x30] sm:$0xff]
      %v272 = vld [vmem:[%s264 + $0x38] sm:$0xff]
      %v273 = vld [vmem:[%s264 + $0x40] sm:$0xff]
      %v274 = vld [vmem:[%s264 + $0x48] sm:$0xff]
      %v275 = vld [vmem:[%s264 + $0x50] sm:$0xff]
      %v276 = vld [vmem:[%s264 + $0x58] sm:$0xff]
      %v277 = vld [vmem:[%s264 + $0x60] sm:$0xff]
      %v278 = vld [vmem:[%s264 + $0x68] sm:$0xff]
      %v279 = vld [vmem:[%s264 + $0x70] sm:$0xff]
      %v280 = vld [vmem:[%s264 + $0x78] sm:$0xff]
      %v281 = vld [vmem:[%s264 + $0x80] sm:$0xff]
      %v282 = vld [vmem:[%s264 + $0x88] sm:$0xff]
      %v283 = vld [vmem:[%s264 + $0x90] sm:$0xff]
      %v284 = vld [vmem:[%s264 + $0x98] sm:$0xff]
      %v285 = vld [vmem:[%s264 + $0xa0] sm:$0xff]
      %v286 = vld [vmem:[%s264 + $0xa8] sm:$0xff]
      %v287 = vld [vmem:[%s264 + $0xb0] sm:$0xff]
      %v288 = vld [vmem:[%s264 + $0xb8] sm:$0xff]
      %s289 = scalar_lea.vmem %s1, 128
      %v290 = vld [vmem:[%s289] sm:$0xff]
      %v291 = vld [vmem:[%s289 + $0x8] sm:$0xff]
      %v292 = vld [vmem:[%s289 + $0x10] sm:$0xff]
      %v293 = vld [vmem:[%s289 + $0x18] sm:$0xff]
      %v294 = vld [vmem:[%s289 + $0x20] sm:$0xff]
      %v295 = vld [vmem:[%s289 + $0x28] sm:$0xff]
      %v296 = vld [vmem:[%s289 + $0x30] sm:$0xff]
      %v297 = vld [vmem:[%s289 + $0x38] sm:$0xff]
      %v298 = vld [vmem:[%s289 + $0x40] sm:$0xff]
      %v299 = vld [vmem:[%s289 + $0x48] sm:$0xff]
      %v300 = vld [vmem:[%s289 + $0x50] sm:$0xff]
      %v301 = vld [vmem:[%s289 + $0x58] sm:$0xff]
      %v302 = vld [vmem:[%s289 + $0x60] sm:$0xff]
      %v303 = vld [vmem:[%s289 + $0x68] sm:$0xff]
      %v304 = vld [vmem:[%s289 + $0x70] sm:$0xff]
      %v305 = vld [vmem:[%s289 + $0x78] sm:$0xff]
      %306 = vmatpush.msra.mxu0 %v305
      %307 = vmatpush.msra.mxu0 %v304
      %308 = vmatpush.msra.mxu0 %v303
      %309 = vmatpush.msra.mxu0 %v302
      %310 = vmatpush.msra.mxu0 %v301
      %311 = vmatpush.msra.mxu0 %v300
      %312 = vmatpush.msra.mxu0 %v299
      %313 = vmatpush.msra.mxu0 %v298
      %314 = vmatpush.msra.mxu0 %v297
      %315 = vmatpush.msra.mxu0 %v296
      %316 = vmatpush.msra.mxu0 %v295
      %317 = vmatpush.msra.mxu0 %v294
      %318 = vmatpush.msra.mxu0 %v293
      %319 = vmatpush.msra.mxu0 %v292
      %320 = vmatpush.msra.mxu0 %v291
      %321 = vmatpush.msra.mxu0 %v290
      %322 = vmatmul.f32.gmra.mxu0 %v265
      %v323 = vpop.f32.mrf.mxu0
      %v324 = vadd.f32 0.0, %v323
      %325 = vmatmul.f32.gmra.mxu0 %v266
      %v326 = vpop.f32.mrf.mxu0
      %v327 = vadd.f32 0.0, %v326
      %328 = vmatmul.f32.gmra.mxu0 %v267
      %v329 = vpop.f32.mrf.mxu0
      %v330 = vadd.f32 0.0, %v329
      %331 = vmatmul.f32.gmra.mxu0 %v268
      %v332 = vpop.f32.mrf.mxu0
      %v333 = vadd.f32 0.0, %v332
      %334 = vmatmul.f32.gmra.mxu0 %v269
      %v335 = vpop.f32.mrf.mxu0
      %v336 = vadd.f32 0.0, %v335
      %337 = vmatmul.f32.gmra.mxu0 %v270
      %v338 = vpop.f32.mrf.mxu0
      %v339 = vadd.f32 0.0, %v338
      %340 = vmatmul.f32.gmra.mxu0 %v271
      %v341 = vpop.f32.mrf.mxu0
      %v342 = vadd.f32 0.0, %v341
      %343 = vmatmul.f32.gmra.mxu0 %v272
      %v344 = vpop.f32.mrf.mxu0
      %v345 = vadd.f32 0.0, %v344
      %346 = vmatmul.f32.gmra.mxu0 %v273
      %v347 = vpop.f32.mrf.mxu0
      %v348 = vadd.f32 0.0, %v347
      %349 = vmatmul.f32.gmra.mxu0 %v274
      %v350 = vpop.f32.mrf.mxu0
      %v351 = vadd.f32 0.0, %v350
      %352 = vmatmul.f32.gmra.mxu0 %v275
      %v353 = vpop.f32.mrf.mxu0
      %v354 = vadd.f32 0.0, %v353
      %355 = vmatmul.f32.gmra.mxu0 %v276
      %v356 = vpop.f32.mrf.mxu0
      %v357 = vadd.f32 0.0, %v356
      %358 = vmatmul.f32.gmra.mxu0 %v277
      %v359 = vpop.f32.mrf.mxu0
      %v360 = vadd.f32 0.0, %v359
      %361 = vmatmul.f32.gmra.mxu0 %v278
      %v362 = vpop.f32.mrf.mxu0
      %v363 = vadd.f32 0.0, %v362
      %364 = vmatmul.f32.gmra.mxu0 %v279
      %v365 = vpop.f32.mrf.mxu0
      %v366 = vadd.f32 0.0, %v365
      %367 = vmatmul.f32.gmra.mxu0 %v280
      %v368 = vpop.f32.mrf.mxu0
      %v369 = vadd.f32 0.0, %v368
      %370 = vmatmul.f32.gmra.mxu0 %v281
      %v371 = vpop.f32.mrf.mxu0
      %v372 = vadd.f32 0.0, %v371
      %373 = vmatmul.f32.gmra.mxu0 %v282
      %v374 = vpop.f32.mrf.mxu0
      %v375 = vadd.f32 0.0, %v374
      %376 = vmatmul.f32.gmra.mxu0 %v283
      %v377 = vpop.f32.mrf.mxu0
      %v378 = vadd.f32 0.0, %v377
      %379 = vmatmul.f32.gmra.mxu0 %v284
      %v380 = vpop.f32.mrf.mxu0
      %v381 = vadd.f32 0.0, %v380
      %382 = vmatmul.f32.gmra.mxu0 %v285
      %v383 = vpop.f32.mrf.mxu0
      %v384 = vadd.f32 0.0, %v383
      %385 = vmatmul.f32.gmra.mxu0 %v286
      %v386 = vpop.f32.mrf.mxu0
      %v387 = vadd.f32 0.0, %v386
      %388 = vmatmul.f32.gmra.mxu0 %v287
      %v389 = vpop.f32.mrf.mxu0
      %v390 = vadd.f32 0.0, %v389
      %391 = vmatmul.f32.gmra.mxu0 %v288
      %v392 = vpop.f32.mrf.mxu0
      %v393 = vadd.f32 0.0, %v392
      %394 = vdwg.mxu0
      %395 = vmatpush.msra.mxu0 %v262
      %396 = vmatpush.msra.mxu0 %v261
      %397 = vmatpush.msra.mxu0 %v260
      %398 = vmatpush.msra.mxu0 %v259
      %399 = vmatpush.msra.mxu0 %v258
      %400 = vmatpush.msra.mxu0 %v257
      %401 = vmatpush.msra.mxu0 %v256
      %402 = vmatpush.msra.mxu0 %v255
      %403 = vmatpush.msra.mxu0 %v254
      %404 = vmatpush.msra.mxu0 %v253
      %405 = vmatpush.msra.mxu0 %v252
      %406 = vmatpush.msra.mxu0 %v251
      %407 = vmatpush.msra.mxu0 %v250
      %408 = vmatpush.msra.mxu0 %v249
      %409 = vmatpush.msra.mxu0 %v248
      %410 = vmatpush.msra.mxu0 %v247
      %411 = vmatmul.f32.gmra.mxu0 %v223
      %v412 = vpop.f32.mrf.mxu0
      %v413 = vadd.f32 %v324, %v412
      %414 = vmatmul.f32.gmra.mxu0 %v224
      %v415 = vpop.f32.mrf.mxu0
      %v416 = vadd.f32 %v327, %v415
      %417 = vmatmul.f32.gmra.mxu0 %v225
      %v418 = vpop.f32.mrf.mxu0
      %v419 = vadd.f32 %v330, %v418
      %420 = vmatmul.f32.gmra.mxu0 %v226
      %v421 = vpop.f32.mrf.mxu0
      %v422 = vadd.f32 %v333, %v421
      %423 = vmatmul.f32.gmra.mxu0 %v227
      %v424 = vpop.f32.mrf.mxu0
      %v425 = vadd.f32 %v336, %v424
      %426 = vmatmul.f32.gmra.mxu0 %v228
      %v427 = vpop.f32.mrf.mxu0
      %v428 = vadd.f32 %v339, %v427
      %429 = vmatmul.f32.gmra.mxu0 %v229
      %v430 = vpop.f32.mrf.mxu0
      %v431 = vadd.f32 %v342, %v430
      %432 = vmatmul.f32.gmra.mxu0 %v230
      %v433 = vpop.f32.mrf.mxu0
      %v434 = vadd.f32 %v345, %v433
      %435 = vmatmul.f32.gmra.mxu0 %v231
      %v436 = vpop.f32.mrf.mxu0
      %v437 = vadd.f32 %v348, %v436
      %438 = vmatmul.f32.gmra.mxu0 %v232
      %v439 = vpop.f32.mrf.mxu0
      %v440 = vadd.f32 %v351, %v439
      %441 = vmatmul.f32.gmra.mxu0 %v233
      %v442 = vpop.f32.mrf.mxu0
      %v443 = vadd.f32 %v354, %v442
      %444 = vmatmul.f32.gmra.mxu0 %v234
      %v445 = vpop.f32.mrf.mxu0
      %v446 = vadd.f32 %v357, %v445
      %447 = vmatmul.f32.gmra.mxu0 %v235
      %v448 = vpop.f32.mrf.mxu0
      %v449 = vadd.f32 %v360, %v448
      %450 = vmatmul.f32.gmra.mxu0 %v236
      %v451 = vpop.f32.mrf.mxu0
      %v452 = vadd.f32 %v363, %v451
      %453 = vmatmul.f32.gmra.mxu0 %v237
      %v454 = vpop.f32.mrf.mxu0
      %v455 = vadd.f32 %v366, %v454
      %456 = vmatmul.f32.gmra.mxu0 %v238
      %v457 = vpop.f32.mrf.mxu0
      %v458 = vadd.f32 %v369, %v457
      %459 = vmatmul.f32.gmra.mxu0 %v239
      %v460 = vpop.f32.mrf.mxu0
      %v461 = vadd.f32 %v372, %v460
      %462 = vmatmul.f32.gmra.mxu0 %v240
      %v463 = vpop.f32.mrf.mxu0
      %v464 = vadd.f32 %v375, %v463
      %465 = vmatmul.f32.gmra.mxu0 %v241
      %v466 = vpop.f32.mrf.mxu0
      %v467 = vadd.f32 %v378, %v466
      %468 = vmatmul.f32.gmra.mxu0 %v242
      %v469 = vpop.f32.mrf.mxu0
      %v470 = vadd.f32 %v381, %v469
      %471 = vmatmul.f32.gmra.mxu0 %v243
      %v472 = vpop.f32.mrf.mxu0
      %v473 = vadd.f32 %v384, %v472
      %474 = vmatmul.f32.gmra.mxu0 %v244
      %v475 = vpop.f32.mrf.mxu0
      %v476 = vadd.f32 %v387, %v475
      %477 = vmatmul.f32.gmra.mxu0 %v245
      %v478 = vpop.f32.mrf.mxu0
      %v479 = vadd.f32 %v390, %v478
      %480 = vmatmul.f32.gmra.mxu0 %v246
      %v481 = vpop.f32.mrf.mxu0
      %v482 = vadd.f32 %v393, %v481
      %483 = vdwg.mxu0
      %s484 = sadd.s32 %s221, 2
      %s485 = scalar_lea.vmem %s210, %s484
      %v486 = vld [vmem:[%s485] sm:$0xff]
      %v487 = vld [vmem:[%s485 + $0x8] sm:$0xff]
      %v488 = vld [vmem:[%s485 + $0x10] sm:$0xff]
      %v489 = vld [vmem:[%s485 + $0x18] sm:$0xff]
      %v490 = vld [vmem:[%s485 + $0x20] sm:$0xff]
      %v491 = vld [vmem:[%s485 + $0x28] sm:$0xff]
      %v492 = vld [vmem:[%s485 + $0x30] sm:$0xff]
      %v493 = vld [vmem:[%s485 + $0x38] sm:$0xff]
      %v494 = vld [vmem:[%s485 + $0x40] sm:$0xff]
      %v495 = vld [vmem:[%s485 + $0x48] sm:$0xff]
      %v496 = vld [vmem:[%s485 + $0x50] sm:$0xff]
      %v497 = vld [vmem:[%s485 + $0x58] sm:$0xff]
      %v498 = vld [vmem:[%s485 + $0x60] sm:$0xff]
      %v499 = vld [vmem:[%s485 + $0x68] sm:$0xff]
      %v500 = vld [vmem:[%s485 + $0x70] sm:$0xff]
      %v501 = vld [vmem:[%s485 + $0x78] sm:$0xff]
      %v502 = vld [vmem:[%s485 + $0x80] sm:$0xff]
      %v503 = vld [vmem:[%s485 + $0x88] sm:$0xff]
      %v504 = vld [vmem:[%s485 + $0x90] sm:$0xff]
      %v505 = vld [vmem:[%s485 + $0x98] sm:$0xff]
      %v506 = vld [vmem:[%s485 + $0xa0] sm:$0xff]
      %v507 = vld [vmem:[%s485 + $0xa8] sm:$0xff]
      %v508 = vld [vmem:[%s485 + $0xb0] sm:$0xff]
      %v509 = vld [vmem:[%s485 + $0xb8] sm:$0xff]
      %s510 = scalar_lea.vmem %s1, 256
      %v511 = vld [vmem:[%s510] sm:$0xff]
      %v512 = vld [vmem:[%s510 + $0x8] sm:$0xff]
      %v513 = vld [vmem:[%s510 + $0x10] sm:$0xff]
      %v514 = vld [vmem:[%s510 + $0x18] sm:$0xff]
      %v515 = vld [vmem:[%s510 + $0x20] sm:$0xff]
      %v516 = vld [vmem:[%s510 + $0x28] sm:$0xff]
      %v517 = vld [vmem:[%s510 + $0x30] sm:$0xff]
      %v518 = vld [vmem:[%s510 + $0x38] sm:$0xff]
      %v519 = vld [vmem:[%s510 + $0x40] sm:$0xff]
      %v520 = vld [vmem:[%s510 + $0x48] sm:$0xff]
      %v521 = vld [vmem:[%s510 + $0x50] sm:$0xff]
      %v522 = vld [vmem:[%s510 + $0x58] sm:$0xff]
      %v523 = vld [vmem:[%s510 + $0x60] sm:$0xff]
      %v524 = vld [vmem:[%s510 + $0x68] sm:$0xff]
      %v525 = vld [vmem:[%s510 + $0x70] sm:$0xff]
      %v526 = vld [vmem:[%s510 + $0x78] sm:$0xff]
      %527 = vmatpush.msra.mxu0 %v526
      %528 = vmatpush.msra.mxu0 %v525
      %529 = vmatpush.msra.mxu0 %v524
      %530 = vmatpush.msra.mxu0 %v523
      %531 = vmatpush.msra.mxu0 %v522
      %532 = vmatpush.msra.mxu0 %v521
      %533 = vmatpush.msra.mxu0 %v520
      %534 = vmatpush.msra.mxu0 %v519
      %535 = vmatpush.msra.mxu0 %v518
      %536 = vmatpush.msra.mxu0 %v517
      %537 = vmatpush.msra.mxu0 %v516
      %538 = vmatpush.msra.mxu0 %v515
      %539 = vmatpush.msra.mxu0 %v514
      %540 = vmatpush.msra.mxu0 %v513
      %541 = vmatpush.msra.mxu0 %v512
      %542 = vmatpush.msra.mxu0 %v511
      %543 = vmatmul.f32.gmra.mxu0 %v486
      %v544 = vpop.f32.mrf.mxu0
      %v545 = vadd.f32 0.0, %v544
      %546 = vmatmul.f32.gmra.mxu0 %v487
      %v547 = vpop.f32.mrf.mxu0
      %v548 = vadd.f32 0.0, %v547
      %549 = vmatmul.f32.gmra.mxu0 %v488
      %v550 = vpop.f32.mrf.mxu0
      %v551 = vadd.f32 0.0, %v550
      %552 = vmatmul.f32.gmra.mxu0 %v489
      %v553 = vpop.f32.mrf.mxu0
      %v554 = vadd.f32 0.0, %v553
      %555 = vmatmul.f32.gmra.mxu0 %v490
      %v556 = vpop.f32.mrf.mxu0
      %v557 = vadd.f32 0.0, %v556
      %558 = vmatmul.f32.gmra.mxu0 %v491
      %v559 = vpop.f32.mrf.mxu0
      %v560 = vadd.f32 0.0, %v559
      %561 = vmatmul.f32.gmra.mxu0 %v492
      %v562 = vpop.f32.mrf.mxu0
      %v563 = vadd.f32 0.0, %v562
      %564 = vmatmul.f32.gmra.mxu0 %v493
      %v565 = vpop.f32.mrf.mxu0
      %v566 = vadd.f32 0.0, %v565
      %567 = vmatmul.f32.gmra.mxu0 %v494
      %v568 = vpop.f32.mrf.mxu0
      %v569 = vadd.f32 0.0, %v568
      %570 = vmatmul.f32.gmra.mxu0 %v495
      %v571 = vpop.f32.mrf.mxu0
      %v572 = vadd.f32 0.0, %v571
      %573 = vmatmul.f32.gmra.mxu0 %v496
      %v574 = vpop.f32.mrf.mxu0
      %v575 = vadd.f32 0.0, %v574
      %576 = vmatmul.f32.gmra.mxu0 %v497
      %v577 = vpop.f32.mrf.mxu0
      %v578 = vadd.f32 0.0, %v577
      %579 = vmatmul.f32.gmra.mxu0 %v498
      %v580 = vpop.f32.mrf.mxu0
      %v581 = vadd.f32 0.0, %v580
      %582 = vmatmul.f32.gmra.mxu0 %v499
      %v583 = vpop.f32.mrf.mxu0
      %v584 = vadd.f32 0.0, %v583
      %585 = vmatmul.f32.gmra.mxu0 %v500
      %v586 = vpop.f32.mrf.mxu0
      %v587 = vadd.f32 0.0, %v586
      %588 = vmatmul.f32.gmra.mxu0 %v501
      %v589 = vpop.f32.mrf.mxu0
      %v590 = vadd.f32 0.0, %v589
      %591 = vmatmul.f32.gmra.mxu0 %v502
      %v592 = vpop.f32.mrf.mxu0
      %v593 = vadd.f32 0.0, %v592
      %594 = vmatmul.f32.gmra.mxu0 %v503
      %v595 = vpop.f32.mrf.mxu0
      %v596 = vadd.f32 0.0, %v595
      %597 = vmatmul.f32.gmra.mxu0 %v504
      %v598 = vpop.f32.mrf.mxu0
      %v599 = vadd.f32 0.0, %v598
      %600 = vmatmul.f32.gmra.mxu0 %v505
      %v601 = vpop.f32.mrf.mxu0
      %v602 = vadd.f32 0.0, %v601
      %603 = vmatmul.f32.gmra.mxu0 %v506
      %v604 = vpop.f32.mrf.mxu0
      %v605 = vadd.f32 0.0, %v604
      %606 = vmatmul.f32.gmra.mxu0 %v507
      %v607 = vpop.f32.mrf.mxu0
      %v608 = vadd.f32 0.0, %v607
      %609 = vmatmul.f32.gmra.mxu0 %v508
      %v610 = vpop.f32.mrf.mxu0
      %v611 = vadd.f32 0.0, %v610
      %612 = vmatmul.f32.gmra.mxu0 %v509
      %v613 = vpop.f32.mrf.mxu0
      %v614 = vadd.f32 0.0, %v613
      %615 = vdwg.mxu0
      %v616 = vadd.f32 %v413, %v545
      %v617 = vadd.f32 %v416, %v548
      %v618 = vadd.f32 %v419, %v551
      %v619 = vadd.f32 %v422, %v554
      %v620 = vadd.f32 %v425, %v557
      %v621 = vadd.f32 %v428, %v560
      %v622 = vadd.f32 %v431, %v563
      %v623 = vadd.f32 %v434, %v566
      %v624 = vadd.f32 %v437, %v569
      %v625 = vadd.f32 %v440, %v572
      %v626 = vadd.f32 %v443, %v575
      %v627 = vadd.f32 %v446, %v578
      %v628 = vadd.f32 %v449, %v581
      %v629 = vadd.f32 %v452, %v584
      %v630 = vadd.f32 %v455, %v587
      %v631 = vadd.f32 %v458, %v590
      %v632 = vadd.f32 %v461, %v593
      %v633 = vadd.f32 %v464, %v596
      %v634 = vadd.f32 %v467, %v599
      %v635 = vadd.f32 %v470, %v602
      %v636 = vadd.f32 %v473, %v605
      %v637 = vadd.f32 %v476, %v608
      %v638 = vadd.f32 %v479, %v611
      %v639 = vadd.f32 %v482, %v614
      %s640 = sadd.s32 %s221, 16
      %s641 = scalar_lea.vmem %s210, %s640
      %v642 = vld [vmem:[%s641] sm:$0xff]
      %v643 = vld [vmem:[%s641 + $0x8] sm:$0xff]
      %v644 = vld [vmem:[%s641 + $0x10] sm:$0xff]
      %v645 = vld [vmem:[%s641 + $0x18] sm:$0xff]
      %v646 = vld [vmem:[%s641 + $0x20] sm:$0xff]
      %v647 = vld [vmem:[%s641 + $0x28] sm:$0xff]
      %v648 = vld [vmem:[%s641 + $0x30] sm:$0xff]
      %v649 = vld [vmem:[%s641 + $0x38] sm:$0xff]
      %v650 = vld [vmem:[%s641 + $0x40] sm:$0xff]
      %v651 = vld [vmem:[%s641 + $0x48] sm:$0xff]
      %v652 = vld [vmem:[%s641 + $0x50] sm:$0xff]
      %v653 = vld [vmem:[%s641 + $0x58] sm:$0xff]
      %v654 = vld [vmem:[%s641 + $0x60] sm:$0xff]
      %v655 = vld [vmem:[%s641 + $0x68] sm:$0xff]
      %v656 = vld [vmem:[%s641 + $0x70] sm:$0xff]
      %v657 = vld [vmem:[%s641 + $0x78] sm:$0xff]
      %v658 = vld [vmem:[%s641 + $0x80] sm:$0xff]
      %v659 = vld [vmem:[%s641 + $0x88] sm:$0xff]
      %v660 = vld [vmem:[%s641 + $0x90] sm:$0xff]
      %v661 = vld [vmem:[%s641 + $0x98] sm:$0xff]
      %v662 = vld [vmem:[%s641 + $0xa0] sm:$0xff]
      %v663 = vld [vmem:[%s641 + $0xa8] sm:$0xff]
      %v664 = vld [vmem:[%s641 + $0xb0] sm:$0xff]
      %v665 = vld [vmem:[%s641 + $0xb8] sm:$0xff]
      %s666 = scalar_lea.vmem %s1, 384
      %v667 = vld [vmem:[%s666] sm:$0xff]
      %v668 = vld [vmem:[%s666 + $0x8] sm:$0xff]
      %v669 = vld [vmem:[%s666 + $0x10] sm:$0xff]
      %v670 = vld [vmem:[%s666 + $0x18] sm:$0xff]
      %v671 = vld [vmem:[%s666 + $0x20] sm:$0xff]
      %v672 = vld [vmem:[%s666 + $0x28] sm:$0xff]
      %v673 = vld [vmem:[%s666 + $0x30] sm:$0xff]
      %v674 = vld [vmem:[%s666 + $0x38] sm:$0xff]
      %v675 = vld [vmem:[%s666 + $0x40] sm:$0xff]
      %v676 = vld [vmem:[%s666 + $0x48] sm:$0xff]
      %v677 = vld [vmem:[%s666 + $0x50] sm:$0xff]
      %v678 = vld [vmem:[%s666 + $0x58] sm:$0xff]
      %v679 = vld [vmem:[%s666 + $0x60] sm:$0xff]
      %v680 = vld [vmem:[%s666 + $0x68] sm:$0xff]
      %v681 = vld [vmem:[%s666 + $0x70] sm:$0xff]
      %v682 = vld [vmem:[%s666 + $0x78] sm:$0xff]
      %683 = vmatpush.msra.mxu0 %v682
      %684 = vmatpush.msra.mxu0 %v681
      %685 = vmatpush.msra.mxu0 %v680
      %686 = vmatpush.msra.mxu0 %v679
      %687 = vmatpush.msra.mxu0 %v678
      %688 = vmatpush.msra.mxu0 %v677
      %689 = vmatpush.msra.mxu0 %v676
      %690 = vmatpush.msra.mxu0 %v675
      %691 = vmatpush.msra.mxu0 %v674
      %692 = vmatpush.msra.mxu0 %v673
      %693 = vmatpush.msra.mxu0 %v672
      %694 = vmatpush.msra.mxu0 %v671
      %695 = vmatpush.msra.mxu0 %v670
      %696 = vmatpush.msra.mxu0 %v669
      %697 = vmatpush.msra.mxu0 %v668
      %698 = vmatpush.msra.mxu0 %v667
      %699 = vmatmul.f32.gmra.mxu0 %v642
      %v700 = vpop.f32.mrf.mxu0
      %v701 = vadd.f32 0.0, %v700
      %702 = vmatmul.f32.gmra.mxu0 %v643
      %v703 = vpop.f32.mrf.mxu0
      %v704 = vadd.f32 0.0, %v703
      %705 = vmatmul.f32.gmra.mxu0 %v644
      %v706 = vpop.f32.mrf.mxu0
      %v707 = vadd.f32 0.0, %v706
      %708 = vmatmul.f32.gmra.mxu0 %v645
      %v709 = vpop.f32.mrf.mxu0
      %v710 = vadd.f32 0.0, %v709
      %711 = vmatmul.f32.gmra.mxu0 %v646
      %v712 = vpop.f32.mrf.mxu0
      %v713 = vadd.f32 0.0, %v712
      %714 = vmatmul.f32.gmra.mxu0 %v647
      %v715 = vpop.f32.mrf.mxu0
      %v716 = vadd.f32 0.0, %v715
      %717 = vmatmul.f32.gmra.mxu0 %v648
      %v718 = vpop.f32.mrf.mxu0
      %v719 = vadd.f32 0.0, %v718
      %720 = vmatmul.f32.gmra.mxu0 %v649
      %v721 = vpop.f32.mrf.mxu0
      %v722 = vadd.f32 0.0, %v721
      %723 = vmatmul.f32.gmra.mxu0 %v650
      %v724 = vpop.f32.mrf.mxu0
      %v725 = vadd.f32 0.0, %v724
      %726 = vmatmul.f32.gmra.mxu0 %v651
      %v727 = vpop.f32.mrf.mxu0
      %v728 = vadd.f32 0.0, %v727
      %729 = vmatmul.f32.gmra.mxu0 %v652
      %v730 = vpop.f32.mrf.mxu0
      %v731 = vadd.f32 0.0, %v730
      %732 = vmatmul.f32.gmra.mxu0 %v653
      %v733 = vpop.f32.mrf.mxu0
      %v734 = vadd.f32 0.0, %v733
      %735 = vmatmul.f32.gmra.mxu0 %v654
      %v736 = vpop.f32.mrf.mxu0
      %v737 = vadd.f32 0.0, %v736
      %738 = vmatmul.f32.gmra.mxu0 %v655
      %v739 = vpop.f32.mrf.mxu0
      %v740 = vadd.f32 0.0, %v739
      %741 = vmatmul.f32.gmra.mxu0 %v656
      %v742 = vpop.f32.mrf.mxu0
      %v743 = vadd.f32 0.0, %v742
      %744 = vmatmul.f32.gmra.mxu0 %v657
      %v745 = vpop.f32.mrf.mxu0
      %v746 = vadd.f32 0.0, %v745
      %747 = vmatmul.f32.gmra.mxu0 %v658
      %v748 = vpop.f32.mrf.mxu0
      %v749 = vadd.f32 0.0, %v748
      %750 = vmatmul.f32.gmra.mxu0 %v659
      %v751 = vpop.f32.mrf.mxu0
      %v752 = vadd.f32 0.0, %v751
      %753 = vmatmul.f32.gmra.mxu0 %v660
      %v754 = vpop.f32.mrf.mxu0
      %v755 = vadd.f32 0.0, %v754
      %756 = vmatmul.f32.gmra.mxu0 %v661
      %v757 = vpop.f32.mrf.mxu0
      %v758 = vadd.f32 0.0, %v757
      %759 = vmatmul.f32.gmra.mxu0 %v662
      %v760 = vpop.f32.mrf.mxu0
      %v761 = vadd.f32 0.0, %v760
      %762 = vmatmul.f32.gmra.mxu0 %v663
      %v763 = vpop.f32.mrf.mxu0
      %v764 = vadd.f32 0.0, %v763
      %765 = vmatmul.f32.gmra.mxu0 %v664
      %v766 = vpop.f32.mrf.mxu0
      %v767 = vadd.f32 0.0, %v766
      %768 = vmatmul.f32.gmra.mxu0 %v665
      %v769 = vpop.f32.mrf.mxu0
      %v770 = vadd.f32 0.0, %v769
      %771 = vdwg.mxu0
      %v772 = vadd.f32 %v616, %v701
      %v773 = vadd.f32 %v617, %v704
      %v774 = vadd.f32 %v618, %v707
      %v775 = vadd.f32 %v619, %v710
      %v776 = vadd.f32 %v620, %v713
      %v777 = vadd.f32 %v621, %v716
      %v778 = vadd.f32 %v622, %v719
      %v779 = vadd.f32 %v623, %v722
      %v780 = vadd.f32 %v624, %v725
      %v781 = vadd.f32 %v625, %v728
      %v782 = vadd.f32 %v626, %v731
      %v783 = vadd.f32 %v627, %v734
      %v784 = vadd.f32 %v628, %v737
      %v785 = vadd.f32 %v629, %v740
      %v786 = vadd.f32 %v630, %v743
      %v787 = vadd.f32 %v631, %v746
      %v788 = vadd.f32 %v632, %v749
      %v789 = vadd.f32 %v633, %v752
      %v790 = vadd.f32 %v634, %v755
      %v791 = vadd.f32 %v635, %v758
      %v792 = vadd.f32 %v636, %v761
      %v793 = vadd.f32 %v637, %v764
      %v794 = vadd.f32 %v638, %v767
      %v795 = vadd.f32 %v639, %v770
      %s796 = sadd.s32 %s221, 17
      %s797 = scalar_lea.vmem %s210, %s796
      %v798 = vld [vmem:[%s797] sm:$0xff]
      %v799 = vld [vmem:[%s797 + $0x8] sm:$0xff]
      %v800 = vld [vmem:[%s797 + $0x10] sm:$0xff]
      %v801 = vld [vmem:[%s797 + $0x18] sm:$0xff]
      %v802 = vld [vmem:[%s797 + $0x20] sm:$0xff]
      %v803 = vld [vmem:[%s797 + $0x28] sm:$0xff]
      %v804 = vld [vmem:[%s797 + $0x30] sm:$0xff]
      %v805 = vld [vmem:[%s797 + $0x38] sm:$0xff]
      %v806 = vld [vmem:[%s797 + $0x40] sm:$0xff]
      %v807 = vld [vmem:[%s797 + $0x48] sm:$0xff]
      %v808 = vld [vmem:[%s797 + $0x50] sm:$0xff]
      %v809 = vld [vmem:[%s797 + $0x58] sm:$0xff]
      %v810 = vld [vmem:[%s797 + $0x60] sm:$0xff]
      %v811 = vld [vmem:[%s797 + $0x68] sm:$0xff]
      %v812 = vld [vmem:[%s797 + $0x70] sm:$0xff]
      %v813 = vld [vmem:[%s797 + $0x78] sm:$0xff]
      %v814 = vld [vmem:[%s797 + $0x80] sm:$0xff]
      %v815 = vld [vmem:[%s797 + $0x88] sm:$0xff]
      %v816 = vld [vmem:[%s797 + $0x90] sm:$0xff]
      %v817 = vld [vmem:[%s797 + $0x98] sm:$0xff]
      %v818 = vld [vmem:[%s797 + $0xa0] sm:$0xff]
      %v819 = vld [vmem:[%s797 + $0xa8] sm:$0xff]
      %v820 = vld [vmem:[%s797 + $0xb0] sm:$0xff]
      %v821 = vld [vmem:[%s797 + $0xb8] sm:$0xff]
      %s822 = scalar_lea.vmem %s1, 512
      %v823 = vld [vmem:[%s822] sm:$0xff]
      %v824 = vld [vmem:[%s822 + $0x8] sm:$0xff]
      %v825 = vld [vmem:[%s822 + $0x10] sm:$0xff]
      %v826 = vld [vmem:[%s822 + $0x18] sm:$0xff]
      %v827 = vld [vmem:[%s822 + $0x20] sm:$0xff]
      %v828 = vld [vmem:[%s822 + $0x28] sm:$0xff]
      %v829 = vld [vmem:[%s822 + $0x30] sm:$0xff]
      %v830 = vld [vmem:[%s822 + $0x38] sm:$0xff]
      %v831 = vld [vmem:[%s822 + $0x40] sm:$0xff]
      %v832 = vld [vmem:[%s822 + $0x48] sm:$0xff]
      %v833 = vld [vmem:[%s822 + $0x50] sm:$0xff]
      %v834 = vld [vmem:[%s822 + $0x58] sm:$0xff]
      %v835 = vld [vmem:[%s822 + $0x60] sm:$0xff]
      %v836 = vld [vmem:[%s822 + $0x68] sm:$0xff]
      %v837 = vld [vmem:[%s822 + $0x70] sm:$0xff]
      %v838 = vld [vmem:[%s822 + $0x78] sm:$0xff]
      %839 = vmatpush.msra.mxu0 %v838
      %840 = vmatpush.msra.mxu0 %v837
      %841 = vmatpush.msra.mxu0 %v836
      %842 = vmatpush.msra.mxu0 %v835
      %843 = vmatpush.msra.mxu0 %v834
      %844 = vmatpush.msra.mxu0 %v833
      %845 = vmatpush.msra.mxu0 %v832
      %846 = vmatpush.msra.mxu0 %v831
      %847 = vmatpush.msra.mxu0 %v830
      %848 = vmatpush.msra.mxu0 %v829
      %849 = vmatpush.msra.mxu0 %v828
      %850 = vmatpush.msra.mxu0 %v827
      %851 = vmatpush.msra.mxu0 %v826
      %852 = vmatpush.msra.mxu0 %v825
      %853 = vmatpush.msra.mxu0 %v824
      %854 = vmatpush.msra.mxu0 %v823
      %855 = vmatmul.f32.gmra.mxu0 %v798
      %v856 = vpop.f32.mrf.mxu0
      %v857 = vadd.f32 0.0, %v856
      %858 = vmatmul.f32.gmra.mxu0 %v799
      %v859 = vpop.f32.mrf.mxu0
      %v860 = vadd.f32 0.0, %v859
      %861 = vmatmul.f32.gmra.mxu0 %v800
      %v862 = vpop.f32.mrf.mxu0
      %v863 = vadd.f32 0.0, %v862
      %864 = vmatmul.f32.gmra.mxu0 %v801
      %v865 = vpop.f32.mrf.mxu0
      %v866 = vadd.f32 0.0, %v865
      %867 = vmatmul.f32.gmra.mxu0 %v802
      %v868 = vpop.f32.mrf.mxu0
      %v869 = vadd.f32 0.0, %v868
      %870 = vmatmul.f32.gmra.mxu0 %v803
      %v871 = vpop.f32.mrf.mxu0
      %v872 = vadd.f32 0.0, %v871
      %873 = vmatmul.f32.gmra.mxu0 %v804
      %v874 = vpop.f32.mrf.mxu0
      %v875 = vadd.f32 0.0, %v874
      %876 = vmatmul.f32.gmra.mxu0 %v805
      %v877 = vpop.f32.mrf.mxu0
      %v878 = vadd.f32 0.0, %v877
      %879 = vmatmul.f32.gmra.mxu0 %v806
      %v880 = vpop.f32.mrf.mxu0
      %v881 = vadd.f32 0.0, %v880
      %882 = vmatmul.f32.gmra.mxu0 %v807
      %v883 = vpop.f32.mrf.mxu0
      %v884 = vadd.f32 0.0, %v883
      %885 = vmatmul.f32.gmra.mxu0 %v808
      %v886 = vpop.f32.mrf.mxu0
      %v887 = vadd.f32 0.0, %v886
      %888 = vmatmul.f32.gmra.mxu0 %v809
      %v889 = vpop.f32.mrf.mxu0
      %v890 = vadd.f32 0.0, %v889
      %891 = vmatmul.f32.gmra.mxu0 %v810
      %v892 = vpop.f32.mrf.mxu0
      %v893 = vadd.f32 0.0, %v892
      %894 = vmatmul.f32.gmra.mxu0 %v811
      %v895 = vpop.f32.mrf.mxu0
      %v896 = vadd.f32 0.0, %v895
      %897 = vmatmul.f32.gmra.mxu0 %v812
      %v898 = vpop.f32.mrf.mxu0
      %v899 = vadd.f32 0.0, %v898
      %900 = vmatmul.f32.gmra.mxu0 %v813
      %v901 = vpop.f32.mrf.mxu0
      %v902 = vadd.f32 0.0, %v901
      %903 = vmatmul.f32.gmra.mxu0 %v814
      %v904 = vpop.f32.mrf.mxu0
      %v905 = vadd.f32 0.0, %v904
      %906 = vmatmul.f32.gmra.mxu0 %v815
      %v907 = vpop.f32.mrf.mxu0
      %v908 = vadd.f32 0.0, %v907
      %909 = vmatmul.f32.gmra.mxu0 %v816
      %v910 = vpop.f32.mrf.mxu0
      %v911 = vadd.f32 0.0, %v910
      %912 = vmatmul.f32.gmra.mxu0 %v817
      %v913 = vpop.f32.mrf.mxu0
      %v914 = vadd.f32 0.0, %v913
      %915 = vmatmul.f32.gmra.mxu0 %v818
      %v916 = vpop.f32.mrf.mxu0
      %v917 = vadd.f32 0.0, %v916
      %918 = vmatmul.f32.gmra.mxu0 %v819
      %v919 = vpop.f32.mrf.mxu0
      %v920 = vadd.f32 0.0, %v919
      %921 = vmatmul.f32.gmra.mxu0 %v820
      %v922 = vpop.f32.mrf.mxu0
      %v923 = vadd.f32 0.0, %v922
      %924 = vmatmul.f32.gmra.mxu0 %v821
      %v925 = vpop.f32.mrf.mxu0
      %v926 = vadd.f32 0.0, %v925
      %927 = vdwg.mxu0
      %v928 = vadd.f32 %v772, %v857
      %v929 = vadd.f32 %v773, %v860
      %v930 = vadd.f32 %v774, %v863
      %v931 = vadd.f32 %v775, %v866
      %v932 = vadd.f32 %v776, %v869
      %v933 = vadd.f32 %v777, %v872
      %v934 = vadd.f32 %v778, %v875
      %v935 = vadd.f32 %v779, %v878
      %v936 = vadd.f32 %v780, %v881
      %v937 = vadd.f32 %v781, %v884
      %v938 = vadd.f32 %v782, %v887
      %v939 = vadd.f32 %v783, %v890
      %v940 = vadd.f32 %v784, %v893
      %v941 = vadd.f32 %v785, %v896
      %v942 = vadd.f32 %v786, %v899
      %v943 = vadd.f32 %v787, %v902
      %v944 = vadd.f32 %v788, %v905
      %v945 = vadd.f32 %v789, %v908
      %v946 = vadd.f32 %v790, %v911
      %v947 = vadd.f32 %v791, %v914
      %v948 = vadd.f32 %v792, %v917
      %v949 = vadd.f32 %v793, %v920
      %v950 = vadd.f32 %v794, %v923
      %v951 = vadd.f32 %v795, %v926
      %s952 = sadd.s32 %s221, 18
      %s953 = scalar_lea.vmem %s210, %s952
      %v954 = vld [vmem:[%s953] sm:$0xff]
      %v955 = vld [vmem:[%s953 + $0x8] sm:$0xff]
      %v956 = vld [vmem:[%s953 + $0x10] sm:$0xff]
      %v957 = vld [vmem:[%s953 + $0x18] sm:$0xff]
      %v958 = vld [vmem:[%s953 + $0x20] sm:$0xff]
      %v959 = vld [vmem:[%s953 + $0x28] sm:$0xff]
      %v960 = vld [vmem:[%s953 + $0x30] sm:$0xff]
      %v961 = vld [vmem:[%s953 + $0x38] sm:$0xff]
      %v962 = vld [vmem:[%s953 + $0x40] sm:$0xff]
      %v963 = vld [vmem:[%s953 + $0x48] sm:$0xff]
      %v964 = vld [vmem:[%s953 + $0x50] sm:$0xff]
      %v965 = vld [vmem:[%s953 + $0x58] sm:$0xff]
      %v966 = vld [vmem:[%s953 + $0x60] sm:$0xff]
      %v967 = vld [vmem:[%s953 + $0x68] sm:$0xff]
      %v968 = vld [vmem:[%s953 + $0x70] sm:$0xff]
      %v969 = vld [vmem:[%s953 + $0x78] sm:$0xff]
      %v970 = vld [vmem:[%s953 + $0x80] sm:$0xff]
      %v971 = vld [vmem:[%s953 + $0x88] sm:$0xff]
      %v972 = vld [vmem:[%s953 + $0x90] sm:$0xff]
      %v973 = vld [vmem:[%s953 + $0x98] sm:$0xff]
      %v974 = vld [vmem:[%s953 + $0xa0] sm:$0xff]
      %v975 = vld [vmem:[%s953 + $0xa8] sm:$0xff]
      %v976 = vld [vmem:[%s953 + $0xb0] sm:$0xff]
      %v977 = vld [vmem:[%s953 + $0xb8] sm:$0xff]
      %s978 = scalar_lea.vmem %s1, 640
      %v979 = vld [vmem:[%s978] sm:$0xff]
      %v980 = vld [vmem:[%s978 + $0x8] sm:$0xff]
      %v981 = vld [vmem:[%s978 + $0x10] sm:$0xff]
      %v982 = vld [vmem:[%s978 + $0x18] sm:$0xff]
      %v983 = vld [vmem:[%s978 + $0x20] sm:$0xff]
      %v984 = vld [vmem:[%s978 + $0x28] sm:$0xff]
      %v985 = vld [vmem:[%s978 + $0x30] sm:$0xff]
      %v986 = vld [vmem:[%s978 + $0x38] sm:$0xff]
      %v987 = vld [vmem:[%s978 + $0x40] sm:$0xff]
      %v988 = vld [vmem:[%s978 + $0x48] sm:$0xff]
      %v989 = vld [vmem:[%s978 + $0x50] sm:$0xff]
      %v990 = vld [vmem:[%s978 + $0x58] sm:$0xff]
      %v991 = vld [vmem:[%s978 + $0x60] sm:$0xff]
      %v992 = vld [vmem:[%s978 + $0x68] sm:$0xff]
      %v993 = vld [vmem:[%s978 + $0x70] sm:$0xff]
      %v994 = vld [vmem:[%s978 + $0x78] sm:$0xff]
      %995 = vmatpush.msra.mxu0 %v994
      %996 = vmatpush.msra.mxu0 %v993
      %997 = vmatpush.msra.mxu0 %v992
      %998 = vmatpush.msra.mxu0 %v991
      %999 = vmatpush.msra.mxu0 %v990
      %1000 = vmatpush.msra.mxu0 %v989
      %1001 = vmatpush.msra.mxu0 %v988
      %1002 = vmatpush.msra.mxu0 %v987
      %1003 = vmatpush.msra.mxu0 %v986
      %1004 = vmatpush.msra.mxu0 %v985
      %1005 = vmatpush.msra.mxu0 %v984
      %1006 = vmatpush.msra.mxu0 %v983
      %1007 = vmatpush.msra.mxu0 %v982
      %1008 = vmatpush.msra.mxu0 %v981
      %1009 = vmatpush.msra.mxu0 %v980
      %1010 = vmatpush.msra.mxu0 %v979
      %1011 = vmatmul.f32.gmra.mxu0 %v954
      %v1012 = vpop.f32.mrf.mxu0
      %v1013 = vadd.f32 0.0, %v1012
      %1014 = vmatmul.f32.gmra.mxu0 %v955
      %v1015 = vpop.f32.mrf.mxu0
      %v1016 = vadd.f32 0.0, %v1015
      %1017 = vmatmul.f32.gmra.mxu0 %v956
      %v1018 = vpop.f32.mrf.mxu0
      %v1019 = vadd.f32 0.0, %v1018
      %1020 = vmatmul.f32.gmra.mxu0 %v957
      %v1021 = vpop.f32.mrf.mxu0
      %v1022 = vadd.f32 0.0, %v1021
      %1023 = vmatmul.f32.gmra.mxu0 %v958
      %v1024 = vpop.f32.mrf.mxu0
      %v1025 = vadd.f32 0.0, %v1024
      %1026 = vmatmul.f32.gmra.mxu0 %v959
      %v1027 = vpop.f32.mrf.mxu0
      %v1028 = vadd.f32 0.0, %v1027
      %1029 = vmatmul.f32.gmra.mxu0 %v960
      %v1030 = vpop.f32.mrf.mxu0
      %v1031 = vadd.f32 0.0, %v1030
      %1032 = vmatmul.f32.gmra.mxu0 %v961
      %v1033 = vpop.f32.mrf.mxu0
      %v1034 = vadd.f32 0.0, %v1033
      %1035 = vmatmul.f32.gmra.mxu0 %v962
      %v1036 = vpop.f32.mrf.mxu0
      %v1037 = vadd.f32 0.0, %v1036
      %1038 = vmatmul.f32.gmra.mxu0 %v963
      %v1039 = vpop.f32.mrf.mxu0
      %v1040 = vadd.f32 0.0, %v1039
      %1041 = vmatmul.f32.gmra.mxu0 %v964
      %v1042 = vpop.f32.mrf.mxu0
      %v1043 = vadd.f32 0.0, %v1042
      %1044 = vmatmul.f32.gmra.mxu0 %v965
      %v1045 = vpop.f32.mrf.mxu0
      %v1046 = vadd.f32 0.0, %v1045
      %1047 = vmatmul.f32.gmra.mxu0 %v966
      %v1048 = vpop.f32.mrf.mxu0
      %v1049 = vadd.f32 0.0, %v1048
      %1050 = vmatmul.f32.gmra.mxu0 %v967
      %v1051 = vpop.f32.mrf.mxu0
      %v1052 = vadd.f32 0.0, %v1051
      %1053 = vmatmul.f32.gmra.mxu0 %v968
      %v1054 = vpop.f32.mrf.mxu0
      %v1055 = vadd.f32 0.0, %v1054
      %1056 = vmatmul.f32.gmra.mxu0 %v969
      %v1057 = vpop.f32.mrf.mxu0
      %v1058 = vadd.f32 0.0, %v1057
      %1059 = vmatmul.f32.gmra.mxu0 %v970
      %v1060 = vpop.f32.mrf.mxu0
      %v1061 = vadd.f32 0.0, %v1060
      %1062 = vmatmul.f32.gmra.mxu0 %v971
      %v1063 = vpop.f32.mrf.mxu0
      %v1064 = vadd.f32 0.0, %v1063
      %1065 = vmatmul.f32.gmra.mxu0 %v972
      %v1066 = vpop.f32.mrf.mxu0
      %v1067 = vadd.f32 0.0, %v1066
      %1068 = vmatmul.f32.gmra.mxu0 %v973
      %v1069 = vpop.f32.mrf.mxu0
      %v1070 = vadd.f32 0.0, %v1069
      %1071 = vmatmul.f32.gmra.mxu0 %v974
      %v1072 = vpop.f32.mrf.mxu0
      %v1073 = vadd.f32 0.0, %v1072
      %1074 = vmatmul.f32.gmra.mxu0 %v975
      %v1075 = vpop.f32.mrf.mxu0
      %v1076 = vadd.f32 0.0, %v1075
      %1077 = vmatmul.f32.gmra.mxu0 %v976
      %v1078 = vpop.f32.mrf.mxu0
      %v1079 = vadd.f32 0.0, %v1078
      %1080 = vmatmul.f32.gmra.mxu0 %v977
      %v1081 = vpop.f32.mrf.mxu0
      %v1082 = vadd.f32 0.0, %v1081
      %1083 = vdwg.mxu0
      %v1084 = vadd.f32 %v928, %v1013
      %v1085 = vadd.f32 %v929, %v1016
      %v1086 = vadd.f32 %v930, %v1019
      %v1087 = vadd.f32 %v931, %v1022
      %v1088 = vadd.f32 %v932, %v1025
      %v1089 = vadd.f32 %v933, %v1028
      %v1090 = vadd.f32 %v934, %v1031
      %v1091 = vadd.f32 %v935, %v1034
      %v1092 = vadd.f32 %v936, %v1037
      %v1093 = vadd.f32 %v937, %v1040
      %v1094 = vadd.f32 %v938, %v1043
      %v1095 = vadd.f32 %v939, %v1046
      %v1096 = vadd.f32 %v940, %v1049
      %v1097 = vadd.f32 %v941, %v1052
      %v1098 = vadd.f32 %v942, %v1055
      %v1099 = vadd.f32 %v943, %v1058
      %v1100 = vadd.f32 %v944, %v1061
      %v1101 = vadd.f32 %v945, %v1064
      %v1102 = vadd.f32 %v946, %v1067
      %v1103 = vadd.f32 %v947, %v1070
      %v1104 = vadd.f32 %v948, %v1073
      %v1105 = vadd.f32 %v949, %v1076
      %v1106 = vadd.f32 %v950, %v1079
      %v1107 = vadd.f32 %v951, %v1082
      %s1108 = sadd.s32 %s221, 32
      %s1109 = scalar_lea.vmem %s210, %s1108
      %v1110 = vld [vmem:[%s1109] sm:$0xff]
      %v1111 = vld [vmem:[%s1109 + $0x8] sm:$0xff]
      %v1112 = vld [vmem:[%s1109 + $0x10] sm:$0xff]
      %v1113 = vld [vmem:[%s1109 + $0x18] sm:$0xff]
      %v1114 = vld [vmem:[%s1109 + $0x20] sm:$0xff]
      %v1115 = vld [vmem:[%s1109 + $0x28] sm:$0xff]
      %v1116 = vld [vmem:[%s1109 + $0x30] sm:$0xff]
      %v1117 = vld [vmem:[%s1109 + $0x38] sm:$0xff]
      %v1118 = vld [vmem:[%s1109 + $0x40] sm:$0xff]
      %v1119 = vld [vmem:[%s1109 + $0x48] sm:$0xff]
      %v1120 = vld [vmem:[%s1109 + $0x50] sm:$0xff]
      %v1121 = vld [vmem:[%s1109 + $0x58] sm:$0xff]
      %v1122 = vld [vmem:[%s1109 + $0x60] sm:$0xff]
      %v1123 = vld [vmem:[%s1109 + $0x68] sm:$0xff]
      %v1124 = vld [vmem:[%s1109 + $0x70] sm:$0xff]
      %v1125 = vld [vmem:[%s1109 + $0x78] sm:$0xff]
      %v1126 = vld [vmem:[%s1109 + $0x80] sm:$0xff]
      %v1127 = vld [vmem:[%s1109 + $0x88] sm:$0xff]
      %v1128 = vld [vmem:[%s1109 + $0x90] sm:$0xff]
      %v1129 = vld [vmem:[%s1109 + $0x98] sm:$0xff]
      %v1130 = vld [vmem:[%s1109 + $0xa0] sm:$0xff]
      %v1131 = vld [vmem:[%s1109 + $0xa8] sm:$0xff]
      %v1132 = vld [vmem:[%s1109 + $0xb0] sm:$0xff]
      %v1133 = vld [vmem:[%s1109 + $0xb8] sm:$0xff]
      %s1134 = scalar_lea.vmem %s1, 768
      %v1135 = vld [vmem:[%s1134] sm:$0xff]
      %v1136 = vld [vmem:[%s1134 + $0x8] sm:$0xff]
      %v1137 = vld [vmem:[%s1134 + $0x10] sm:$0xff]
      %v1138 = vld [vmem:[%s1134 + $0x18] sm:$0xff]
      %v1139 = vld [vmem:[%s1134 + $0x20] sm:$0xff]
      %v1140 = vld [vmem:[%s1134 + $0x28] sm:$0xff]
      %v1141 = vld [vmem:[%s1134 + $0x30] sm:$0xff]
      %v1142 = vld [vmem:[%s1134 + $0x38] sm:$0xff]
      %v1143 = vld [vmem:[%s1134 + $0x40] sm:$0xff]
      %v1144 = vld [vmem:[%s1134 + $0x48] sm:$0xff]
      %v1145 = vld [vmem:[%s1134 + $0x50] sm:$0xff]
      %v1146 = vld [vmem:[%s1134 + $0x58] sm:$0xff]
      %v1147 = vld [vmem:[%s1134 + $0x60] sm:$0xff]
      %v1148 = vld [vmem:[%s1134 + $0x68] sm:$0xff]
      %v1149 = vld [vmem:[%s1134 + $0x70] sm:$0xff]
      %v1150 = vld [vmem:[%s1134 + $0x78] sm:$0xff]
      %1151 = vmatpush.msra.mxu0 %v1150
      %1152 = vmatpush.msra.mxu0 %v1149
      %1153 = vmatpush.msra.mxu0 %v1148
      %1154 = vmatpush.msra.mxu0 %v1147
      %1155 = vmatpush.msra.mxu0 %v1146
      %1156 = vmatpush.msra.mxu0 %v1145
      %1157 = vmatpush.msra.mxu0 %v1144
      %1158 = vmatpush.msra.mxu0 %v1143
      %1159 = vmatpush.msra.mxu0 %v1142
      %1160 = vmatpush.msra.mxu0 %v1141
      %1161 = vmatpush.msra.mxu0 %v1140
      %1162 = vmatpush.msra.mxu0 %v1139
      %1163 = vmatpush.msra.mxu0 %v1138
      %1164 = vmatpush.msra.mxu0 %v1137
      %1165 = vmatpush.msra.mxu0 %v1136
      %1166 = vmatpush.msra.mxu0 %v1135
      %1167 = vmatmul.f32.gmra.mxu0 %v1110
      %v1168 = vpop.f32.mrf.mxu0
      %v1169 = vadd.f32 0.0, %v1168
      %1170 = vmatmul.f32.gmra.mxu0 %v1111
      %v1171 = vpop.f32.mrf.mxu0
      %v1172 = vadd.f32 0.0, %v1171
      %1173 = vmatmul.f32.gmra.mxu0 %v1112
      %v1174 = vpop.f32.mrf.mxu0
      %v1175 = vadd.f32 0.0, %v1174
      %1176 = vmatmul.f32.gmra.mxu0 %v1113
      %v1177 = vpop.f32.mrf.mxu0
      %v1178 = vadd.f32 0.0, %v1177
      %1179 = vmatmul.f32.gmra.mxu0 %v1114
      %v1180 = vpop.f32.mrf.mxu0
      %v1181 = vadd.f32 0.0, %v1180
      %1182 = vmatmul.f32.gmra.mxu0 %v1115
      %v1183 = vpop.f32.mrf.mxu0
      %v1184 = vadd.f32 0.0, %v1183
      %1185 = vmatmul.f32.gmra.mxu0 %v1116
      %v1186 = vpop.f32.mrf.mxu0
      %v1187 = vadd.f32 0.0, %v1186
      %1188 = vmatmul.f32.gmra.mxu0 %v1117
      %v1189 = vpop.f32.mrf.mxu0
      %v1190 = vadd.f32 0.0, %v1189
      %1191 = vmatmul.f32.gmra.mxu0 %v1118
      %v1192 = vpop.f32.mrf.mxu0
      %v1193 = vadd.f32 0.0, %v1192
      %1194 = vmatmul.f32.gmra.mxu0 %v1119
      %v1195 = vpop.f32.mrf.mxu0
      %v1196 = vadd.f32 0.0, %v1195
      %1197 = vmatmul.f32.gmra.mxu0 %v1120
      %v1198 = vpop.f32.mrf.mxu0
      %v1199 = vadd.f32 0.0, %v1198
      %1200 = vmatmul.f32.gmra.mxu0 %v1121
      %v1201 = vpop.f32.mrf.mxu0
      %v1202 = vadd.f32 0.0, %v1201
      %1203 = vmatmul.f32.gmra.mxu0 %v1122
      %v1204 = vpop.f32.mrf.mxu0
      %v1205 = vadd.f32 0.0, %v1204
      %1206 = vmatmul.f32.gmra.mxu0 %v1123
      %v1207 = vpop.f32.mrf.mxu0
      %v1208 = vadd.f32 0.0, %v1207
      %1209 = vmatmul.f32.gmra.mxu0 %v1124
      %v1210 = vpop.f32.mrf.mxu0
      %v1211 = vadd.f32 0.0, %v1210
      %1212 = vmatmul.f32.gmra.mxu0 %v1125
      %v1213 = vpop.f32.mrf.mxu0
      %v1214 = vadd.f32 0.0, %v1213
      %1215 = vmatmul.f32.gmra.mxu0 %v1126
      %v1216 = vpop.f32.mrf.mxu0
      %v1217 = vadd.f32 0.0, %v1216
      %1218 = vmatmul.f32.gmra.mxu0 %v1127
      %v1219 = vpop.f32.mrf.mxu0
      %v1220 = vadd.f32 0.0, %v1219
      %1221 = vmatmul.f32.gmra.mxu0 %v1128
      %v1222 = vpop.f32.mrf.mxu0
      %v1223 = vadd.f32 0.0, %v1222
      %1224 = vmatmul.f32.gmra.mxu0 %v1129
      %v1225 = vpop.f32.mrf.mxu0
      %v1226 = vadd.f32 0.0, %v1225
      %1227 = vmatmul.f32.gmra.mxu0 %v1130
      %v1228 = vpop.f32.mrf.mxu0
      %v1229 = vadd.f32 0.0, %v1228
      %1230 = vmatmul.f32.gmra.mxu0 %v1131
      %v1231 = vpop.f32.mrf.mxu0
      %v1232 = vadd.f32 0.0, %v1231
      %1233 = vmatmul.f32.gmra.mxu0 %v1132
      %v1234 = vpop.f32.mrf.mxu0
      %v1235 = vadd.f32 0.0, %v1234
      %1236 = vmatmul.f32.gmra.mxu0 %v1133
      %v1237 = vpop.f32.mrf.mxu0
      %v1238 = vadd.f32 0.0, %v1237
      %1239 = vdwg.mxu0
      %v1240 = vadd.f32 %v1084, %v1169
      %v1241 = vadd.f32 %v1085, %v1172
      %v1242 = vadd.f32 %v1086, %v1175
      %v1243 = vadd.f32 %v1087, %v1178
      %v1244 = vadd.f32 %v1088, %v1181
      %v1245 = vadd.f32 %v1089, %v1184
      %v1246 = vadd.f32 %v1090, %v1187
      %v1247 = vadd.f32 %v1091, %v1190
      %v1248 = vadd.f32 %v1092, %v1193
      %v1249 = vadd.f32 %v1093, %v1196
      %v1250 = vadd.f32 %v1094, %v1199
      %v1251 = vadd.f32 %v1095, %v1202
      %v1252 = vadd.f32 %v1096, %v1205
      %v1253 = vadd.f32 %v1097, %v1208
      %v1254 = vadd.f32 %v1098, %v1211
      %v1255 = vadd.f32 %v1099, %v1214
      %v1256 = vadd.f32 %v1100, %v1217
      %v1257 = vadd.f32 %v1101, %v1220
      %v1258 = vadd.f32 %v1102, %v1223
      %v1259 = vadd.f32 %v1103, %v1226
      %v1260 = vadd.f32 %v1104, %v1229
      %v1261 = vadd.f32 %v1105, %v1232
      %v1262 = vadd.f32 %v1106, %v1235
      %v1263 = vadd.f32 %v1107, %v1238
      %s1264 = sadd.s32 %s221, 33
      %s1265 = scalar_lea.vmem %s210, %s1264
      %v1266 = vld [vmem:[%s1265] sm:$0xff]
      %v1267 = vld [vmem:[%s1265 + $0x8] sm:$0xff]
      %v1268 = vld [vmem:[%s1265 + $0x10] sm:$0xff]
      %v1269 = vld [vmem:[%s1265 + $0x18] sm:$0xff]
      %v1270 = vld [vmem:[%s1265 + $0x20] sm:$0xff]
      %v1271 = vld [vmem:[%s1265 + $0x28] sm:$0xff]
      %v1272 = vld [vmem:[%s1265 + $0x30] sm:$0xff]
      %v1273 = vld [vmem:[%s1265 + $0x38] sm:$0xff]
      %v1274 = vld [vmem:[%s1265 + $0x40] sm:$0xff]
      %v1275 = vld [vmem:[%s1265 + $0x48] sm:$0xff]
      %v1276 = vld [vmem:[%s1265 + $0x50] sm:$0xff]
      %v1277 = vld [vmem:[%s1265 + $0x58] sm:$0xff]
      %v1278 = vld [vmem:[%s1265 + $0x60] sm:$0xff]
      %v1279 = vld [vmem:[%s1265 + $0x68] sm:$0xff]
      %v1280 = vld [vmem:[%s1265 + $0x70] sm:$0xff]
      %v1281 = vld [vmem:[%s1265 + $0x78] sm:$0xff]
      %v1282 = vld [vmem:[%s1265 + $0x80] sm:$0xff]
      %v1283 = vld [vmem:[%s1265 + $0x88] sm:$0xff]
      %v1284 = vld [vmem:[%s1265 + $0x90] sm:$0xff]
      %v1285 = vld [vmem:[%s1265 + $0x98] sm:$0xff]
      %v1286 = vld [vmem:[%s1265 + $0xa0] sm:$0xff]
      %v1287 = vld [vmem:[%s1265 + $0xa8] sm:$0xff]
      %v1288 = vld [vmem:[%s1265 + $0xb0] sm:$0xff]
      %v1289 = vld [vmem:[%s1265 + $0xb8] sm:$0xff]
      %s1290 = scalar_lea.vmem %s1, 896
      %v1291 = vld [vmem:[%s1290] sm:$0xff]
      %v1292 = vld [vmem:[%s1290 + $0x8] sm:$0xff]
      %v1293 = vld [vmem:[%s1290 + $0x10] sm:$0xff]
      %v1294 = vld [vmem:[%s1290 + $0x18] sm:$0xff]
      %v1295 = vld [vmem:[%s1290 + $0x20] sm:$0xff]
      %v1296 = vld [vmem:[%s1290 + $0x28] sm:$0xff]
      %v1297 = vld [vmem:[%s1290 + $0x30] sm:$0xff]
      %v1298 = vld [vmem:[%s1290 + $0x38] sm:$0xff]
      %v1299 = vld [vmem:[%s1290 + $0x40] sm:$0xff]
      %v1300 = vld [vmem:[%s1290 + $0x48] sm:$0xff]
      %v1301 = vld [vmem:[%s1290 + $0x50] sm:$0xff]
      %v1302 = vld [vmem:[%s1290 + $0x58] sm:$0xff]
      %v1303 = vld [vmem:[%s1290 + $0x60] sm:$0xff]
      %v1304 = vld [vmem:[%s1290 + $0x68] sm:$0xff]
      %v1305 = vld [vmem:[%s1290 + $0x70] sm:$0xff]
      %v1306 = vld [vmem:[%s1290 + $0x78] sm:$0xff]
      %1307 = vmatpush.msra.mxu0 %v1306
      %1308 = vmatpush.msra.mxu0 %v1305
      %1309 = vmatpush.msra.mxu0 %v1304
      %1310 = vmatpush.msra.mxu0 %v1303
      %1311 = vmatpush.msra.mxu0 %v1302
      %1312 = vmatpush.msra.mxu0 %v1301
      %1313 = vmatpush.msra.mxu0 %v1300
      %1314 = vmatpush.msra.mxu0 %v1299
      %1315 = vmatpush.msra.mxu0 %v1298
      %1316 = vmatpush.msra.mxu0 %v1297
      %1317 = vmatpush.msra.mxu0 %v1296
      %1318 = vmatpush.msra.mxu0 %v1295
      %1319 = vmatpush.msra.mxu0 %v1294
      %1320 = vmatpush.msra.mxu0 %v1293
      %1321 = vmatpush.msra.mxu0 %v1292
      %1322 = vmatpush.msra.mxu0 %v1291
      %1323 = vmatmul.f32.gmra.mxu0 %v1266
      %v1324 = vpop.f32.mrf.mxu0
      %v1325 = vadd.f32 0.0, %v1324
      %1326 = vmatmul.f32.gmra.mxu0 %v1267
      %v1327 = vpop.f32.mrf.mxu0
      %v1328 = vadd.f32 0.0, %v1327
      %1329 = vmatmul.f32.gmra.mxu0 %v1268
      %v1330 = vpop.f32.mrf.mxu0
      %v1331 = vadd.f32 0.0, %v1330
      %1332 = vmatmul.f32.gmra.mxu0 %v1269
      %v1333 = vpop.f32.mrf.mxu0
      %v1334 = vadd.f32 0.0, %v1333
      %1335 = vmatmul.f32.gmra.mxu0 %v1270
      %v1336 = vpop.f32.mrf.mxu0
      %v1337 = vadd.f32 0.0, %v1336
      %1338 = vmatmul.f32.gmra.mxu0 %v1271
      %v1339 = vpop.f32.mrf.mxu0
      %v1340 = vadd.f32 0.0, %v1339
      %1341 = vmatmul.f32.gmra.mxu0 %v1272
      %v1342 = vpop.f32.mrf.mxu0
      %v1343 = vadd.f32 0.0, %v1342
      %1344 = vmatmul.f32.gmra.mxu0 %v1273
      %v1345 = vpop.f32.mrf.mxu0
      %v1346 = vadd.f32 0.0, %v1345
      %1347 = vmatmul.f32.gmra.mxu0 %v1274
      %v1348 = vpop.f32.mrf.mxu0
      %v1349 = vadd.f32 0.0, %v1348
      %1350 = vmatmul.f32.gmra.mxu0 %v1275
      %v1351 = vpop.f32.mrf.mxu0
      %v1352 = vadd.f32 0.0, %v1351
      %1353 = vmatmul.f32.gmra.mxu0 %v1276
      %v1354 = vpop.f32.mrf.mxu0
      %v1355 = vadd.f32 0.0, %v1354
      %1356 = vmatmul.f32.gmra.mxu0 %v1277
      %v1357 = vpop.f32.mrf.mxu0
      %v1358 = vadd.f32 0.0, %v1357
      %1359 = vmatmul.f32.gmra.mxu0 %v1278
      %v1360 = vpop.f32.mrf.mxu0
      %v1361 = vadd.f32 0.0, %v1360
      %1362 = vmatmul.f32.gmra.mxu0 %v1279
      %v1363 = vpop.f32.mrf.mxu0
      %v1364 = vadd.f32 0.0, %v1363
      %1365 = vmatmul.f32.gmra.mxu0 %v1280
      %v1366 = vpop.f32.mrf.mxu0
      %v1367 = vadd.f32 0.0, %v1366
      %1368 = vmatmul.f32.gmra.mxu0 %v1281
      %v1369 = vpop.f32.mrf.mxu0
      %v1370 = vadd.f32 0.0, %v1369
      %1371 = vmatmul.f32.gmra.mxu0 %v1282
      %v1372 = vpop.f32.mrf.mxu0
      %v1373 = vadd.f32 0.0, %v1372
      %1374 = vmatmul.f32.gmra.mxu0 %v1283
      %v1375 = vpop.f32.mrf.mxu0
      %v1376 = vadd.f32 0.0, %v1375
      %1377 = vmatmul.f32.gmra.mxu0 %v1284
      %v1378 = vpop.f32.mrf.mxu0
      %v1379 = vadd.f32 0.0, %v1378
      %1380 = vmatmul.f32.gmra.mxu0 %v1285
      %v1381 = vpop.f32.mrf.mxu0
      %v1382 = vadd.f32 0.0, %v1381
      %1383 = vmatmul.f32.gmra.mxu0 %v1286
      %v1384 = vpop.f32.mrf.mxu0
      %v1385 = vadd.f32 0.0, %v1384
      %1386 = vmatmul.f32.gmra.mxu0 %v1287
      %v1387 = vpop.f32.mrf.mxu0
      %v1388 = vadd.f32 0.0, %v1387
      %1389 = vmatmul.f32.gmra.mxu0 %v1288
      %v1390 = vpop.f32.mrf.mxu0
      %v1391 = vadd.f32 0.0, %v1390
      %1392 = vmatmul.f32.gmra.mxu0 %v1289
      %v1393 = vpop.f32.mrf.mxu0
      %v1394 = vadd.f32 0.0, %v1393
      %1395 = vdwg.mxu0
      %v1396 = vadd.f32 %v1240, %v1325
      %v1397 = vadd.f32 %v1241, %v1328
      %v1398 = vadd.f32 %v1242, %v1331
      %v1399 = vadd.f32 %v1243, %v1334
      %v1400 = vadd.f32 %v1244, %v1337
      %v1401 = vadd.f32 %v1245, %v1340
      %v1402 = vadd.f32 %v1246, %v1343
      %v1403 = vadd.f32 %v1247, %v1346
      %v1404 = vadd.f32 %v1248, %v1349
      %v1405 = vadd.f32 %v1249, %v1352
      %v1406 = vadd.f32 %v1250, %v1355
      %v1407 = vadd.f32 %v1251, %v1358
      %v1408 = vadd.f32 %v1252, %v1361
      %v1409 = vadd.f32 %v1253, %v1364
      %v1410 = vadd.f32 %v1254, %v1367
      %v1411 = vadd.f32 %v1255, %v1370
      %v1412 = vadd.f32 %v1256, %v1373
      %v1413 = vadd.f32 %v1257, %v1376
      %v1414 = vadd.f32 %v1258, %v1379
      %v1415 = vadd.f32 %v1259, %v1382
      %v1416 = vadd.f32 %v1260, %v1385
      %v1417 = vadd.f32 %v1261, %v1388
      %v1418 = vadd.f32 %v1262, %v1391
      %v1419 = vadd.f32 %v1263, %v1394
      %s1420 = sadd.s32 %s221, 34
      %s1421 = scalar_lea.vmem %s210, %s1420
      %v1422 = vld [vmem:[%s1421] sm:$0xff]
      %v1423 = vld [vmem:[%s1421 + $0x8] sm:$0xff]
      %v1424 = vld [vmem:[%s1421 + $0x10] sm:$0xff]
      %v1425 = vld [vmem:[%s1421 + $0x18] sm:$0xff]
      %v1426 = vld [vmem:[%s1421 + $0x20] sm:$0xff]
      %v1427 = vld [vmem:[%s1421 + $0x28] sm:$0xff]
      %v1428 = vld [vmem:[%s1421 + $0x30] sm:$0xff]
      %v1429 = vld [vmem:[%s1421 + $0x38] sm:$0xff]
      %v1430 = vld [vmem:[%s1421 + $0x40] sm:$0xff]
      %v1431 = vld [vmem:[%s1421 + $0x48] sm:$0xff]
      %v1432 = vld [vmem:[%s1421 + $0x50] sm:$0xff]
      %v1433 = vld [vmem:[%s1421 + $0x58] sm:$0xff]
      %v1434 = vld [vmem:[%s1421 + $0x60] sm:$0xff]
      %v1435 = vld [vmem:[%s1421 + $0x68] sm:$0xff]
      %v1436 = vld [vmem:[%s1421 + $0x70] sm:$0xff]
      %v1437 = vld [vmem:[%s1421 + $0x78] sm:$0xff]
      %v1438 = vld [vmem:[%s1421 + $0x80] sm:$0xff]
      %v1439 = vld [vmem:[%s1421 + $0x88] sm:$0xff]
      %v1440 = vld [vmem:[%s1421 + $0x90] sm:$0xff]
      %v1441 = vld [vmem:[%s1421 + $0x98] sm:$0xff]
      %v1442 = vld [vmem:[%s1421 + $0xa0] sm:$0xff]
      %v1443 = vld [vmem:[%s1421 + $0xa8] sm:$0xff]
      %v1444 = vld [vmem:[%s1421 + $0xb0] sm:$0xff]
      %v1445 = vld [vmem:[%s1421 + $0xb8] sm:$0xff]
      %s1446 = scalar_lea.vmem %s1, 1024
      %v1447 = vld [vmem:[%s1446] sm:$0xff]
      %v1448 = vld [vmem:[%s1446 + $0x8] sm:$0xff]
      %v1449 = vld [vmem:[%s1446 + $0x10] sm:$0xff]
      %v1450 = vld [vmem:[%s1446 + $0x18] sm:$0xff]
      %v1451 = vld [vmem:[%s1446 + $0x20] sm:$0xff]
      %v1452 = vld [vmem:[%s1446 + $0x28] sm:$0xff]
      %v1453 = vld [vmem:[%s1446 + $0x30] sm:$0xff]
      %v1454 = vld [vmem:[%s1446 + $0x38] sm:$0xff]
      %v1455 = vld [vmem:[%s1446 + $0x40] sm:$0xff]
      %v1456 = vld [vmem:[%s1446 + $0x48] sm:$0xff]
      %v1457 = vld [vmem:[%s1446 + $0x50] sm:$0xff]
      %v1458 = vld [vmem:[%s1446 + $0x58] sm:$0xff]
      %v1459 = vld [vmem:[%s1446 + $0x60] sm:$0xff]
      %v1460 = vld [vmem:[%s1446 + $0x68] sm:$0xff]
      %v1461 = vld [vmem:[%s1446 + $0x70] sm:$0xff]
      %v1462 = vld [vmem:[%s1446 + $0x78] sm:$0xff]
      %1463 = vmatpush.msra.mxu0 %v1462
      %1464 = vmatpush.msra.mxu0 %v1461
      %1465 = vmatpush.msra.mxu0 %v1460
      %1466 = vmatpush.msra.mxu0 %v1459
      %1467 = vmatpush.msra.mxu0 %v1458
      %1468 = vmatpush.msra.mxu0 %v1457
      %1469 = vmatpush.msra.mxu0 %v1456
      %1470 = vmatpush.msra.mxu0 %v1455
      %1471 = vmatpush.msra.mxu0 %v1454
      %1472 = vmatpush.msra.mxu0 %v1453
      %1473 = vmatpush.msra.mxu0 %v1452
      %1474 = vmatpush.msra.mxu0 %v1451
      %1475 = vmatpush.msra.mxu0 %v1450
      %1476 = vmatpush.msra.mxu0 %v1449
      %1477 = vmatpush.msra.mxu0 %v1448
      %1478 = vmatpush.msra.mxu0 %v1447
      %1479 = vmatmul.f32.gmra.mxu0 %v1422
      %v1480 = vpop.f32.mrf.mxu0
      %v1481 = vadd.f32 0.0, %v1480
      %1482 = vmatmul.f32.gmra.mxu0 %v1423
      %v1483 = vpop.f32.mrf.mxu0
      %v1484 = vadd.f32 0.0, %v1483
      %1485 = vmatmul.f32.gmra.mxu0 %v1424
      %v1486 = vpop.f32.mrf.mxu0
      %v1487 = vadd.f32 0.0, %v1486
      %1488 = vmatmul.f32.gmra.mxu0 %v1425
      %v1489 = vpop.f32.mrf.mxu0
      %v1490 = vadd.f32 0.0, %v1489
      %1491 = vmatmul.f32.gmra.mxu0 %v1426
      %v1492 = vpop.f32.mrf.mxu0
      %v1493 = vadd.f32 0.0, %v1492
      %1494 = vmatmul.f32.gmra.mxu0 %v1427
      %v1495 = vpop.f32.mrf.mxu0
      %v1496 = vadd.f32 0.0, %v1495
      %1497 = vmatmul.f32.gmra.mxu0 %v1428
      %v1498 = vpop.f32.mrf.mxu0
      %v1499 = vadd.f32 0.0, %v1498
      %1500 = vmatmul.f32.gmra.mxu0 %v1429
      %v1501 = vpop.f32.mrf.mxu0
      %v1502 = vadd.f32 0.0, %v1501
      %1503 = vmatmul.f32.gmra.mxu0 %v1430
      %v1504 = vpop.f32.mrf.mxu0
      %v1505 = vadd.f32 0.0, %v1504
      %1506 = vmatmul.f32.gmra.mxu0 %v1431
      %v1507 = vpop.f32.mrf.mxu0
      %v1508 = vadd.f32 0.0, %v1507
      %1509 = vmatmul.f32.gmra.mxu0 %v1432
      %v1510 = vpop.f32.mrf.mxu0
      %v1511 = vadd.f32 0.0, %v1510
      %1512 = vmatmul.f32.gmra.mxu0 %v1433
      %v1513 = vpop.f32.mrf.mxu0
      %v1514 = vadd.f32 0.0, %v1513
      %1515 = vmatmul.f32.gmra.mxu0 %v1434
      %v1516 = vpop.f32.mrf.mxu0
      %v1517 = vadd.f32 0.0, %v1516
      %1518 = vmatmul.f32.gmra.mxu0 %v1435
      %v1519 = vpop.f32.mrf.mxu0
      %v1520 = vadd.f32 0.0, %v1519
      %1521 = vmatmul.f32.gmra.mxu0 %v1436
      %v1522 = vpop.f32.mrf.mxu0
      %v1523 = vadd.f32 0.0, %v1522
      %1524 = vmatmul.f32.gmra.mxu0 %v1437
      %v1525 = vpop.f32.mrf.mxu0
      %v1526 = vadd.f32 0.0, %v1525
      %1527 = vmatmul.f32.gmra.mxu0 %v1438
      %v1528 = vpop.f32.mrf.mxu0
      %v1529 = vadd.f32 0.0, %v1528
      %1530 = vmatmul.f32.gmra.mxu0 %v1439
      %v1531 = vpop.f32.mrf.mxu0
      %v1532 = vadd.f32 0.0, %v1531
      %1533 = vmatmul.f32.gmra.mxu0 %v1440
      %v1534 = vpop.f32.mrf.mxu0
      %v1535 = vadd.f32 0.0, %v1534
      %1536 = vmatmul.f32.gmra.mxu0 %v1441
      %v1537 = vpop.f32.mrf.mxu0
      %v1538 = vadd.f32 0.0, %v1537
      %1539 = vmatmul.f32.gmra.mxu0 %v1442
      %v1540 = vpop.f32.mrf.mxu0
      %v1541 = vadd.f32 0.0, %v1540
      %1542 = vmatmul.f32.gmra.mxu0 %v1443
      %v1543 = vpop.f32.mrf.mxu0
      %v1544 = vadd.f32 0.0, %v1543
      %1545 = vmatmul.f32.gmra.mxu0 %v1444
      %v1546 = vpop.f32.mrf.mxu0
      %v1547 = vadd.f32 0.0, %v1546
      %1548 = vmatmul.f32.gmra.mxu0 %v1445
      %v1549 = vpop.f32.mrf.mxu0
      %v1550 = vadd.f32 0.0, %v1549
      %1551 = vdwg.mxu0
      %v1552 = vadd.f32 %v1396, %v1481
      %v1553 = vadd.f32 %v1397, %v1484
      %v1554 = vadd.f32 %v1398, %v1487
      %v1555 = vadd.f32 %v1399, %v1490
      %v1556 = vadd.f32 %v1400, %v1493
      %v1557 = vadd.f32 %v1401, %v1496
      %v1558 = vadd.f32 %v1402, %v1499
      %v1559 = vadd.f32 %v1403, %v1502
      %v1560 = vadd.f32 %v1404, %v1505
      %v1561 = vadd.f32 %v1405, %v1508
      %v1562 = vadd.f32 %v1406, %v1511
      %v1563 = vadd.f32 %v1407, %v1514
      %v1564 = vadd.f32 %v1408, %v1517
      %v1565 = vadd.f32 %v1409, %v1520
      %v1566 = vadd.f32 %v1410, %v1523
      %v1567 = vadd.f32 %v1411, %v1526
      %v1568 = vadd.f32 %v1412, %v1529
      %v1569 = vadd.f32 %v1413, %v1532
      %v1570 = vadd.f32 %v1414, %v1535
      %v1571 = vadd.f32 %v1415, %v1538
      %v1572 = vadd.f32 %v1416, %v1541
      %v1573 = vadd.f32 %v1417, %v1544
      %v1574 = vadd.f32 %v1418, %v1547
      %v1575 = vadd.f32 %v1419, %v1550
      %v1576 = vld [vmem:[%s2] sm:$0x1]
      %v1578 = vperm.slane %v1576, 0
      %v1580 = vmul.f32 %v1552, %v1578
      %v1581 = vmul.f32 %v1553, %v1578
      %v1582 = vmul.f32 %v1554, %v1578
      %v1583 = vmul.f32 %v1555, %v1578
      %v1584 = vmul.f32 %v1556, %v1578
      %v1585 = vmul.f32 %v1557, %v1578
      %v1586 = vmul.f32 %v1558, %v1578
      %v1587 = vmul.f32 %v1559, %v1578
      %v1588 = vmul.f32 %v1560, %v1578
      %v1589 = vmul.f32 %v1561, %v1578
      %v1590 = vmul.f32 %v1562, %v1578
      %v1591 = vmul.f32 %v1563, %v1578
      %v1592 = vmul.f32 %v1564, %v1578
      %v1593 = vmul.f32 %v1565, %v1578
      %v1594 = vmul.f32 %v1566, %v1578
      %v1595 = vmul.f32 %v1567, %v1578
      %v1596 = vmul.f32 %v1568, %v1578
      %v1597 = vmul.f32 %v1569, %v1578
      %v1598 = vmul.f32 %v1570, %v1578
      %v1599 = vmul.f32 %v1571, %v1578
      %v1600 = vmul.f32 %v1572, %v1578
      %v1601 = vmul.f32 %v1573, %v1578
      %v1602 = vmul.f32 %v1574, %v1578
      %v1603 = vmul.f32 %v1575, %v1578
      %v1604 = vld [vmem:[%s3] sm:$0x1]
      %v1606 = vperm.slane %v1604, 0
      %v1608 = vadd.f32 %v1580, %v1606
      %v1609 = vadd.f32 %v1581, %v1606
      %v1610 = vadd.f32 %v1582, %v1606
      %v1611 = vadd.f32 %v1583, %v1606
      %v1612 = vadd.f32 %v1584, %v1606
      %v1613 = vadd.f32 %v1585, %v1606
      %v1614 = vadd.f32 %v1586, %v1606
      %v1615 = vadd.f32 %v1587, %v1606
      %v1616 = vadd.f32 %v1588, %v1606
      %v1617 = vadd.f32 %v1589, %v1606
      %v1618 = vadd.f32 %v1590, %v1606
      %v1619 = vadd.f32 %v1591, %v1606
      %v1620 = vadd.f32 %v1592, %v1606
      %v1621 = vadd.f32 %v1593, %v1606
      %v1622 = vadd.f32 %v1594, %v1606
      %v1623 = vadd.f32 %v1595, %v1606
      %v1624 = vadd.f32 %v1596, %v1606
      %v1625 = vadd.f32 %v1597, %v1606
      %v1626 = vadd.f32 %v1598, %v1606
      %v1627 = vadd.f32 %v1599, %v1606
      %v1628 = vadd.f32 %v1600, %v1606
      %v1629 = vadd.f32 %v1601, %v1606
      %v1630 = vadd.f32 %v1602, %v1606
      %v1631 = vadd.f32 %v1603, %v1606
      %v1632 = vmax.f32 %v1608, 0.0
      %v1633 = vmax.f32 %v1609, 0.0
      %v1634 = vmax.f32 %v1610, 0.0
      %v1635 = vmax.f32 %v1611, 0.0
      %v1636 = vmax.f32 %v1612, 0.0
      %v1637 = vmax.f32 %v1613, 0.0
      %v1638 = vmax.f32 %v1614, 0.0
      %v1639 = vmax.f32 %v1615, 0.0
      %v1640 = vmax.f32 %v1616, 0.0
      %v1641 = vmax.f32 %v1617, 0.0
      %v1642 = vmax.f32 %v1618, 0.0
      %v1643 = vmax.f32 %v1619, 0.0
      %v1644 = vmax.f32 %v1620, 0.0
      %v1645 = vmax.f32 %v1621, 0.0
      %v1646 = vmax.f32 %v1622, 0.0
      %v1647 = vmax.f32 %v1623, 0.0
      %v1648 = vmax.f32 %v1624, 0.0
      %v1649 = vmax.f32 %v1625, 0.0
      %v1650 = vmax.f32 %v1626, 0.0
      %v1651 = vmax.f32 %v1627, 0.0
      %v1652 = vmax.f32 %v1628, 0.0
      %v1653 = vmax.f32 %v1629, 0.0
      %v1654 = vmax.f32 %v1630, 0.0
      %v1655 = vmax.f32 %v1631, 0.0
      %v1656 = vmax.f32 %v1632, %v1634
      %v1657 = vmax.f32 %v1633, %v1635
      %v1658 = vmax.f32 %v1636, %v1638
      %v1659 = vmax.f32 %v1637, %v1639
      %v1660 = vmax.f32 %v1640, %v1642
      %v1661 = vmax.f32 %v1641, %v1643
      %v1662 = vmax.f32 %v1644, %v1646
      %v1663 = vmax.f32 %v1645, %v1647
      %v1664 = vmax.f32 %v1648, %v1650
      %v1665 = vmax.f32 %v1649, %v1651
      %v1666 = vmax.f32 %v1652, %v1654
      %v1667 = vmax.f32 %v1653, %v1655
      %1668 = vst [vmem:[#allocation2] sm:$0xff] %v1656
      %1669 = vst [vmem:[#allocation2 + $0x8] sm:$0xff] %v1657
      %1670 = vst [vmem:[#allocation2 + $0x10] sm:$0xff] %v1658
      %1671 = vst [vmem:[#allocation2 + $0x18] sm:$0xff] %v1659
      %1672 = vst [vmem:[#allocation2 + $0x20] sm:$0xff] %v1660
      %1673 = vst [vmem:[#allocation2 + $0x28] sm:$0xff] %v1661
      %1674 = vst [vmem:[#allocation2 + $0x30] sm:$0xff] %v1662
      %1675 = vst [vmem:[#allocation2 + $0x38] sm:$0xff] %v1663
      %1676 = vst [vmem:[#allocation2 + $0x40] sm:$0xff] %v1664
      %1677 = vst [vmem:[#allocation2 + $0x48] sm:$0xff] %v1665
      %1678 = vst [vmem:[#allocation2 + $0x50] sm:$0xff] %v1666
      %1679 = vst [vmem:[#allocation2 + $0x58] sm:$0xff] %v1667
      %v1680 = vld [vmem:[#allocation2] ss:$2 sm:$0x3f]
      %s1681 = scalar_lea.vmem [#allocation2], 16
      %v1682 = vld [vmem:[%s1681] ss:$2 sm:$0x3f]
      %s1683 = scalar_lea.vmem [#allocation2], 32
      %v1684 = vld [vmem:[%s1683] ss:$2 sm:$0x3f]
      %s1685 = scalar_lea.vmem [#allocation2], 48
      %v1686 = vld [vmem:[%s1685] ss:$2 sm:$0x3f]
      %s1687 = scalar_lea.vmem [#allocation2], 64
      %v1688 = vld [vmem:[%s1687] ss:$2 sm:$0x3f]
      %s1689 = scalar_lea.vmem [#allocation2], 80
      %v1690 = vld [vmem:[%s1689] ss:$2 sm:$0x3f]
      %s1691 = scalar_lea.vmem [#allocation2], 1
      %v1692 = vld [vmem:[%s1691] ss:$2 sm:$0x3f]
      %s1693 = scalar_lea.vmem [#allocation2], 17
      %v1694 = vld [vmem:[%s1693] ss:$2 sm:$0x3f]
      %s1695 = scalar_lea.vmem [#allocation2], 33
      %v1696 = vld [vmem:[%s1695] ss:$2 sm:$0x3f]
      %s1697 = scalar_lea.vmem [#allocation2], 49
      %v1698 = vld [vmem:[%s1697] ss:$2 sm:$0x3f]
      %s1699 = scalar_lea.vmem [#allocation2], 65
      %v1700 = vld [vmem:[%s1699] ss:$2 sm:$0x3f]
      %s1701 = scalar_lea.vmem [#allocation2], 81
      %v1702 = vld [vmem:[%s1701] ss:$2 sm:$0x3f]
      %v1703 = vmax.f32 %v1680, %v1692
      %v1704 = vmax.f32 %v1682, %v1694
      %v1705 = vmax.f32 %v1684, %v1696
      %v1706 = vmax.f32 %v1686, %v1698
      %v1707 = vmax.f32 %v1688, %v1700
      %v1708 = vmax.f32 %v1690, %v1702
      %1709 = vst [vmem:[%s219] sm:$0x3f] %v1703
      %1710 = vst [vmem:[%s219 + $0x8] sm:$0x3f] %v1704
      %1711 = vst [vmem:[%s219 + $0x10] sm:$0x3f] %v1705
      %1712 = vst [vmem:[%s219 + $0x18] sm:$0x3f] %v1706
      %1713 = vst [vmem:[%s219 + $0x20] sm:$0x3f] %v1707
      %1714 = vst [vmem:[%s219 + $0x28] sm:$0x3f] %v1708
      %s1715 = smul.u32 6, %s20
      %p1716 = scmp.lt.s32.totalorder %s19, 1
      %s1717 = scalar_select %p1716, %s19, 1
      %p1718 = scmp.lt.s32.totalorder %s1715, 5
      %s1719 = scalar_select %p1718, %s1715, 5
      %s1720 = smul.addr %s1717, 6
      %s1721 = sadd.s32 %s1719, %s1720
      %s1722 = smul.addr %s1721, 8
      %s1723 = scalar_lea.vmem %s4, %s1722
      // Predicated region
      $region37: #{vgg16_forward.6} parent=35 // pred_check
        %p1724 = pneg %p136
      $region38: #{vgg16_forward.6} parent=35 // pred_check_branch
        %1726 = sbr.rel (%p1724) target = $region40
      $region39: #{vgg16_forward.6} parent=35 // pred_region
        %s1727 = smul.u32 6, %s20
      $region40: #{vgg16_forward.6} parent=35 // pred_fallthru
        _
    $region36: #{vgg16_forward.6} parent=5 // pred_fallthru
      _
    %p1728 = scmp.le.s32.totalorder 2, %s10
    // Predicated region
    $region41: #{vgg16_forward.6} parent=5 // pred_check
      %p1729 = pneg %p1728
    $region42: #{vgg16_forward.6} parent=5 // pred_check_branch
      %1731 = sbr.rel (%p1729) target = $region44
    $region43: #{vgg16_forward.6} parent=5 // pred_region
      %s1732 = ssub.s32 %s10, 2
      // Predicated region
      $region45: #{vgg16_forward.6} parent=43 // pred_check
        %p1733 = pneg %p142
      $region46: #{vgg16_forward.6} parent=43 // pred_check_branch
        %1735 = sbr.rel (%p1733) target = $region48
      $region47: #{vgg16_forward.6} parent=43 // pred_region
        %s1736 = smul.u32 6, %s22
        %p1737 = scmp.lt.s32.totalorder %s21, 1
        %s1738 = scalar_select %p1737, %s21, 1
        %p1739 = scmp.lt.s32.totalorder %s1736, 5
        %s1740 = scalar_select %p1739, %s1736, 5
        %s1741 = smul.addr %s1738, 6
        %s1742 = sadd.s32 %s1740, %s1741
        %s1743 = smul.addr %s1742, 8
        %s1744 = scalar_lea.vmem %s4, %s1743
      $region48: #{vgg16_forward.6} parent=43 // pred_fallthru
        _
    $region44: #{vgg16_forward.6} parent=5 // pred_fallthru
      _
  $region6: #{vgg16_forward.6} parent=0 // loop_footer
    %s14 = sadd.s32 1, %s10
  $region7: #{vgg16_forward.6} parent=0 // loop_footer_branch
    %9 = sbr.rel target = $region3
  $region8: #{vgg16_forward.6} parent=0 // loop_exit
    _

// kernel: vgg16_forward.7
$region0: #{vgg16_forward.7}
  #allocation0 [shape = 'u32[]', space=smem, size = 0x4, offset = 0x4, fixed_abs, tag = 'smem constant byte address 0x4 - core index']
  #allocation1 [shape = 'u32[72,128]{1,0:T(1,128)}', space=vmem, size = 0x9000, scoped, tag = 'internal scratch']
  #allocation2 [shape = 'f32[2,512]{1,0:T(2,128)}', space=vmem, size = 0x1000, scoped, tag = 'scratch operand']
  %s0 = inlined_call_operand.vmem [shape: f32[2,4608], index: 0, kind: input, shape index: {}]
  %s1 = inlined_call_operand.hbm [shape: f32[4608,512], index: 1, kind: input, shape index: {}]
  %s2 = inlined_call_operand.vmem [shape: f32[1,512], index: 2, kind: input, shape index: {}]
  %s3 = inlined_call_operand.vmem [shape: f32[512,256], index: 3, kind: input, shape index: {}]
  %s4 = inlined_call_operand.vmem [shape: f32[1,256], index: 4, kind: input, shape index: {}]
  %s5 = inlined_call_operand.vmem [shape: f32[256,7], index: 5, kind: input, shape index: {}]
  %s6 = inlined_call_operand.vmem [shape: f32[1,7], index: 6, kind: input, shape index: {}]
  %s7 = inlined_call_operand.hbm [shape: f32[2,7], index: 7, kind: output, shape index: {}]
  %s8 = sld [smem:[#allocation0]]
  $region73: #{vgg16_forward.7} parent=0
    _
  %s10 = ssub.s32 1, %s8
  %s11 = scalar_select 0, %s10, %s8
  $region1: #{vgg16_forward.7} parent=0
    #allocation3 [shape = 'u8[4718592]{0}', space=vmem, size = 0x480000, scoped, tag = 'input window, operand 1']
    #allocation4 [shape = 's32[2]{0}', space=sflag, size = 0x8, scoped, tag = 'scoped memory for vgg16_forward.7']
    #allocation5 [shape = 's32[2]{0}', space=sflag, size = 0x8, scoped, tag = 'scoped memory for vgg16_forward.7']
    #allocation6 [shape = 'u8[1024]{0}', space=vmem, size = 0x400, scoped, tag = 'output window, operand 0, single buffered']
    %12 = vsyncpa [#allocation4], 0
    %s13 = scalar_lea.sflag [#allocation4], 1
    %14 = vsyncpa %s13, 0
    %15 = vsyncpa [#allocation5], 0
    loop: start=0, step=1, limit=6
    $region2: #{vgg16_forward.7} parent=1 // loop_pre_header
      _
    $region3: #{vgg16_forward.7} parent=1 // loop_header
      %s17 = sphi 0, %s21
      %p18 = scmp.ge.s32.totalorder %s17, 6
      %s27 = sphi 0, %s29
      %s30 = sphi 0, %s27
      %s31 = sphi 0, %s30
      %s47 = sphi 0, %s31
      %s53 = sphi 0, %s55
      %s56 = sphi 0, %s53
      %s57 = sphi 0, %s56
      %s73 = sphi 0, %s57
      %s77 = sphi 0, %s77
      %s79 = sphi 0, %s77
      %s80 = sphi 0, %s79
      %s94 = sphi 0, %s80
      %s98 = sphi 0, %s98
      %s100 = sphi 0, %s98
      %s101 = sphi 0, %s100
      %s115 = sphi 0, %s101
      %s119 = sphi 0, %s119
      %s121 = sphi 0, %s119
      %s122 = sphi 0, %s121
      %s136 = sphi 0, %s122
      %s140 = sphi 0, %s140
      %s142 = sphi 0, %s140
      %s143 = sphi 0, %s142
      %s157 = sphi 0, %s143
      %s161 = sphi 0, %s161
      %s163 = sphi 0, %s161
      %s164 = sphi 0, %s163
      %s178 = sphi 0, %s164
      %s182 = sphi 0, %s182
      %s184 = sphi 0, %s182
      %s185 = sphi 0, %s184
      %s199 = sphi 0, %s185
    $region4: #{vgg16_forward.7} parent=1 // loop_header_branch
      %20 = sbr.rel (%p18) target = $region8
    $region5: #{vgg16_forward.7} parent=1 // loop_body
      %s22 = ssub.s32 %s17, 1
      %s23 = ssub.s32 %s17, 2
      %s24 = sadd.s32 %s17, 1
      %s25 = ssub.s32 %s17, %s24
      %p26 = scmp.eq.s32.totalorder %s25, 0
      %s28 = sadd.s32 %s27, 1
      %s29 = scalar_select %p26, %s27, %s28
      %p32 = pneg %p26
      %p33 = scmp.eq.s32.totalorder %s17, 3
      %p34 = por %p32, %p33
      %p35 = scmp.ne.s32.totalorder %s27, %s30
      %p36 = scmp.eq.s32.totalorder %s17, 0
      %p37 = por %p35, %p36
      %p38 = scmp.ne.s32.totalorder %s27, %s30
      %p39 = scmp.eq.s32.totalorder %s22, 3
      %p40 = por %p38, %p39
      %p41 = scmp.ne.s32.totalorder %s30, %s31
      %p42 = scmp.eq.s32.totalorder %s22, 0
      %p43 = por %p41, %p42
      %p44 = scmp.ne.s32.totalorder %s30, %s31
      %p45 = scmp.eq.s32.totalorder %s23, 3
      %p46 = por %p44, %p45
      %p48 = scmp.ne.s32.totalorder %s31, %s47
      %p49 = scmp.eq.s32.totalorder %s23, 0
      %p50 = por %p48, %p49
      %s51 = ssub.s32 %s17, %s24
      %p52 = scmp.eq.s32.totalorder %s51, 0
      %s54 = sadd.s32 %s53, 1
      %s55 = scalar_select %p52, %s53, %s54
      %p58 = pneg %p52
      %p59 = scmp.eq.s32.totalorder %s17, 3
      %p60 = por %p58, %p59
      %p61 = scmp.ne.s32.totalorder %s53, %s56
      %p62 = scmp.eq.s32.totalorder %s17, 0
      %p63 = por %p61, %p62
      %p64 = scmp.ne.s32.totalorder %s53, %s56
      %p65 = scmp.eq.s32.totalorder %s22, 3
      %p66 = por %p64, %p65
      %p67 = scmp.ne.s32.totalorder %s56, %s57
      %p68 = scmp.eq.s32.totalorder %s22, 0
      %p69 = por %p67, %p68
      %p70 = scmp.ne.s32.totalorder %s56, %s57
      %p71 = scmp.eq.s32.totalorder %s23, 3
      %p72 = por %p70, %p71
      %p74 = scmp.ne.s32.totalorder %s57, %s73
      %p75 = scmp.eq.s32.totalorder %s23, 0
      %p76 = por %p74, %p75
      %s78 = sadd.s32 %s77, 1
      %p81 = scmp.eq.s32.totalorder %s17, 3
      %p82 = scmp.ne.s32.totalorder %s77, %s79
      %p83 = scmp.eq.s32.totalorder %s17, 0
      %p84 = por %p82, %p83
      %p85 = scmp.ne.s32.totalorder %s77, %s79
      %p86 = scmp.eq.s32.totalorder %s22, 3
      %p87 = por %p85, %p86
      %p88 = scmp.ne.s32.totalorder %s79, %s80
      %p89 = scmp.eq.s32.totalorder %s22, 0
      %p90 = por %p88, %p89
      %p91 = scmp.ne.s32.totalorder %s79, %s80
      %p92 = scmp.eq.s32.totalorder %s23, 3
      %p93 = por %p91, %p92
      %p95 = scmp.ne.s32.totalorder %s80, %s94
      %p96 = scmp.eq.s32.totalorder %s23, 0
      %p97 = por %p95, %p96
      %s99 = sadd.s32 %s98, 1
      %p102 = scmp.eq.s32.totalorder %s17, 3
      %p103 = scmp.ne.s32.totalorder %s98, %s100
      %p104 = scmp.eq.s32.totalorder %s17, 0
      %p105 = por %p103, %p104
      %p106 = scmp.ne.s32.totalorder %s98, %s100
      %p107 = scmp.eq.s32.totalorder %s22, 3
      %p108 = por %p106, %p107
      %p109 = scmp.ne.s32.totalorder %s100, %s101
      %p110 = scmp.eq.s32.totalorder %s22, 0
      %p111 = por %p109, %p110
      %p112 = scmp.ne.s32.totalorder %s100, %s101
      %p113 = scmp.eq.s32.totalorder %s23, 3
      %p114 = por %p112, %p113
      %p116 = scmp.ne.s32.totalorder %s101, %s115
      %p117 = scmp.eq.s32.totalorder %s23, 0
      %p118 = por %p116, %p117
      %s120 = sadd.s32 %s119, 1
      %p123 = scmp.eq.s32.totalorder %s17, 3
      %p124 = scmp.ne.s32.totalorder %s119, %s121
      %p125 = scmp.eq.s32.totalorder %s17, 0
      %p126 = por %p124, %p125
      %p127 = scmp.ne.s32.totalorder %s119, %s121
      %p128 = scmp.eq.s32.totalorder %s22, 3
      %p129 = por %p127, %p128
      %p130 = scmp.ne.s32.totalorder %s121, %s122
      %p131 = scmp.eq.s32.totalorder %s22, 0
      %p132 = por %p130, %p131
      %p133 = scmp.ne.s32.totalorder %s121, %s122
      %p134 = scmp.eq.s32.totalorder %s23, 3
      %p135 = por %p133, %p134
      %p137 = scmp.ne.s32.totalorder %s122, %s136
      %p138 = scmp.eq.s32.totalorder %s23, 0
      %p139 = por %p137, %p138
      %s141 = sadd.s32 %s140, 1
      %p144 = scmp.eq.s32.totalorder %s17, 3
      %p145 = scmp.ne.s32.totalorder %s140, %s142
      %p146 = scmp.eq.s32.totalorder %s17, 0
      %p147 = por %p145, %p146
      %p148 = scmp.ne.s32.totalorder %s140, %s142
      %p149 = scmp.eq.s32.totalorder %s22, 3
      %p150 = por %p148, %p149
      %p151 = scmp.ne.s32.totalorder %s142, %s143
      %p152 = scmp.eq.s32.totalorder %s22, 0
      %p153 = por %p151, %p152
      %p154 = scmp.ne.s32.totalorder %s142, %s143
      %p155 = scmp.eq.s32.totalorder %s23, 3
      %p156 = por %p154, %p155
      %p158 = scmp.ne.s32.totalorder %s143, %s157
      %p159 = scmp.eq.s32.totalorder %s23, 0
      %p160 = por %p158, %p159
      %s162 = sadd.s32 %s161, 1
      %p165 = scmp.eq.s32.totalorder %s17, 3
      %p166 = scmp.ne.s32.totalorder %s161, %s163
      %p167 = scmp.eq.s32.totalorder %s17, 0
      %p168 = por %p166, %p167
      %p169 = scmp.ne.s32.totalorder %s161, %s163
      %p170 = scmp.eq.s32.totalorder %s22, 3
      %p171 = por %p169, %p170
      %p172 = scmp.ne.s32.totalorder %s163, %s164
      %p173 = scmp.eq.s32.totalorder %s22, 0
      %p174 = por %p172, %p173
      %p175 = scmp.ne.s32.totalorder %s163, %s164
      %p176 = scmp.eq.s32.totalorder %s23, 3
      %p177 = por %p175, %p176
      %p179 = scmp.ne.s32.totalorder %s164, %s178
      %p180 = scmp.eq.s32.totalorder %s23, 0
      %p181 = por %p179, %p180
      %s183 = sadd.s32 %s182, 1
      %p186 = scmp.eq.s32.totalorder %s17, 3
      %p187 = scmp.ne.s32.totalorder %s182, %s184
      %p188 = scmp.eq.s32.totalorder %s17, 0
      %p189 = por %p187, %p188
      %p190 = scmp.ne.s32.totalorder %s182, %s184
      %p191 = scmp.eq.s32.totalorder %s22, 3
      %p192 = por %p190, %p191
      %p193 = scmp.ne.s32.totalorder %s184, %s185
      %p194 = scmp.eq.s32.totalorder %s22, 0
      %p195 = por %p193, %p194
      %p196 = scmp.ne.s32.totalorder %s184, %s185
      %p197 = scmp.eq.s32.totalorder %s23, 3
      %p198 = por %p196, %p197
      %p200 = scmp.ne.s32.totalorder %s185, %s199
      %p201 = scmp.eq.s32.totalorder %s23, 0
      %p202 = por %p200, %p201
      %p203 = scmp.le.s32.totalorder 1, %s17
      %p204 = scmp.lt.s32.totalorder %s17, 5
      %p205 = pnand %p203, %p204
      %p206 = pneg %p205
      // Predicated region
      $region9: #{vgg16_forward.7} parent=5 // pred_check
        _
      $region10: #{vgg16_forward.7} parent=5 // pred_check_branch
        %208 = sbr.rel (%p205) target = $region12
      $region11: #{vgg16_forward.7} parent=5 // pred_region
        %s209 = ssub.s32 %s17, 1
        // Predicated region
        $region13: #{vgg16_forward.7} parent=11 // pred_check
          %p210 = pneg %p90
        $region14: #{vgg16_forward.7} parent=11 // pred_check_branch
          %212 = sbr.rel (%p210) target = $region16
        $region15: #{vgg16_forward.7} parent=11 // pred_region
          _
        $region16: #{vgg16_forward.7} parent=11 // pred_fallthru
          _
        // Predicated region
        $region17: #{vgg16_forward.7} parent=11 // pred_check
          %p213 = pneg %p111
        $region18: #{vgg16_forward.7} parent=11 // pred_check_branch
          %215 = sbr.rel (%p213) target = $region20
        $region19: #{vgg16_forward.7} parent=11 // pred_region
          _
        $region20: #{vgg16_forward.7} parent=11 // pred_fallthru
          _
        // Predicated region
        $region21: #{vgg16_forward.7} parent=11 // pred_check
          %p216 = pneg %p132
        $region22: #{vgg16_forward.7} parent=11 // pred_check_branch
          %218 = sbr.rel (%p216) target = $region24
        $region23: #{vgg16_forward.7} parent=11 // pred_region
          _
        $region24: #{vgg16_forward.7} parent=11 // pred_fallthru
          _
        // Predicated region
        $region25: #{vgg16_forward.7} parent=11 // pred_check
          %p219 = pneg %p153
        $region26: #{vgg16_forward.7} parent=11 // pred_check_branch
          %221 = sbr.rel (%p219) target = $region28
        $region27: #{vgg16_forward.7} parent=11 // pred_region
          _
        $region28: #{vgg16_forward.7} parent=11 // pred_fallthru
          _
        // Predicated region
        $region29: #{vgg16_forward.7} parent=11 // pred_check
          %p222 = pneg %p174
        $region30: #{vgg16_forward.7} parent=11 // pred_check_branch
          %224 = sbr.rel (%p222) target = $region32
        $region31: #{vgg16_forward.7} parent=11 // pred_region
          _
        $region32: #{vgg16_forward.7} parent=11 // pred_fallthru
          _
      $region12: #{vgg16_forward.7} parent=5 // pred_fallthru
        _
      %p225 = scmp.lt.s32.totalorder %s17, 4
      // Predicated region
      $region33: #{vgg16_forward.7} parent=5 // pred_check
        %p226 = pneg %p225
      $region34: #{vgg16_forward.7} parent=5 // pred_check_branch
        %228 = sbr.rel (%p226) target = $region36
      $region35: #{vgg16_forward.7} parent=5 // pred_region
        // Predicated region
        $region37: #{vgg16_forward.7} parent=35 // pred_check
          %p229 = pneg %p37
        $region38: #{vgg16_forward.7} parent=35 // pred_check_branch
          %231 = sbr.rel (%p229) target = $region40
        $region39: #{vgg16_forward.7} parent=35 // pred_region
          %s232 = smul.u32 9, %s17
          %p233 = scmp.lt.s32.totalorder %s232, 35
          %s234 = scalar_select %p233, %s232, 35
          %s235 = smul.addr %s234, 2
          %s236 = scalar_lea.vmem %s0, %s235
          %s237 = smul.u32 9, %s17
        $region40: #{vgg16_forward.7} parent=35 // pred_fallthru
          _
        // Predicated region
        $region41: #{vgg16_forward.7} parent=35 // pred_check
          %p238 = pneg %p63
        $region42: #{vgg16_forward.7} parent=35 // pred_check_branch
          %240 = sbr.rel (%p238) target = $region44
        $region43: #{vgg16_forward.7} parent=35 // pred_region
          %s241 = sand.u32 %s53, 1
          %s242 = scalar_lea.sflag [#allocation4], %s241
          %s243 = sand.u32 %s53, 1
          %s244 = smul.addr %s243, 4608
          %s245 = scalar_lea.vmem [#allocation3], %s244
          %s246 = smul.u32 144, %s17
          %248 = vsyncadd %s242, 0
          %s249 = smul.addr %s246, 4
          %s250 = smul.addr %s249, 8
          %s251 = scalar_lea.hbm %s1, %s250
          %s252 = sshll.u32 %s251, 4
          %s253 = int_to_ptr.hbm [resolvable:$true] %s252
          %s254 = sshll.u32 %s245, 4
          %s255 = int_to_ptr.vmem [resolvable:$true] %s254
          %260 = dma.hbm_to_vmem [thread:$0]  %s253, 73728, %s255, %s242, 512, 512, 32
        $region44: #{vgg16_forward.7} parent=35 // pred_fallthru
          _
      $region36: #{vgg16_forward.7} parent=5 // pred_fallthru
        _
      %p261 = scmp.le.s32.totalorder 1, %s17
      %p262 = scmp.lt.s32.totalorder %s17, 5
      %p263 = pnand %p261, %p262
      %p264 = pneg %p263
      // Predicated region
      $region45: #{vgg16_forward.7} parent=5 // pred_check
        _
      $region46: #{vgg16_forward.7} parent=5 // pred_check_branch
        %266 = sbr.rel (%p263) target = $region48
      $region47: #{vgg16_forward.7} parent=5 // pred_region
        %s267 = ssub.s32 %s17, 1
        %s268 = sand.u32 %s56, 1
        %s269 = scalar_lea.sflag [#allocation4], %s268
        %s270 = sand.u32 %s56, 1
        %s271 = smul.addr %s270, 4608
        %s272 = scalar_lea.vmem [#allocation3], %s271
        // Predicated region
        $region49: #{vgg16_forward.7} parent=47 // pred_check
          %p273 = pneg %p69
        $region50: #{vgg16_forward.7} parent=47 // pred_check_branch
          %275 = sbr.rel (%p273) target = $region52
        $region51: #{vgg16_forward.7} parent=47 // pred_region
          %277 = dma.done %s269, 73728
        $region52: #{vgg16_forward.7} parent=47 // pred_fallthru
          _
        %s278 = smul.u32 9, %s22
        %p279 = scmp.lt.s32.totalorder %s278, 35
        %s280 = scalar_select %p279, %s278, 35
        %s281 = smul.addr %s280, 2
        %s282 = scalar_lea.vmem %s0, %s281
        %p283 = pneg %p43
        %p284 = pneg %p40
        %s285 = sand.u32 %s56, 1
        %s286 = scalar_lea.sflag [#allocation4], %s285
        %s287 = sand.u32 %s56, 1
        %s288 = smul.addr %s287, 4608
        %s289 = scalar_lea.vmem [#allocation3], %s288
        %p290 = pneg %p69
        %p291 = pneg %p66
        %p292 = pneg %p90
        %p293 = pneg %p87
        %p294 = pneg %p111
        %p295 = pneg %p108
        %p296 = pneg %p132
        %p297 = pneg %p129
        %p298 = pneg %p153
        %p299 = pneg %p150
        %p300 = pneg %p174
        %p301 = pneg %p171
        %p302 = pneg %p195
        %p303 = pneg %p192
        %s304 = smul.u32 9, %s22
        %p305 = scmp.lt.s32.totalorder %s304, 35
        %s306 = scalar_select %p305, %s304, 35
        %s307 = smul.addr %s306, 2
        %s308 = scalar_lea.vmem %s0, %s307
        %s309 = smul.u32 9, %s22
        %s310 = smul.u32 144, %s22
        %p311 = scmp.eq.s32.totalorder %s22, 0
        // Predicated region
        $region53: #{vgg16_forward.7} parent=47 // pred_check
          %p312 = pneg %p311
        $region54: #{vgg16_forward.7} parent=47 // pred_check_branch
          %314 = sbr.rel (%p312) target = $region56
        $region55: #{vgg16_forward.7} parent=47 // pred_region
          %315 = vst [vmem:[#allocation2] sm:$0xff] 0.0
        $region56: #{vgg16_forward.7} parent=47 // pred_fallthru
          _
        %v316 = vld [vmem:[#allocation2] sm:$0xff]
        %v317 = vld [vmem:[%s308] sm:$0xff]
        %v318 = vld [vmem:[%s308 + $0x8] sm:$0xff]
        %v319 = vld [vmem:[%s308 + $0x10] sm:$0x3]
        %v320 = vld [vmem:[%s272] sm:$0xff]
        %v321 = vld [vmem:[%s272 + $0x8] sm:$0xff]
        %v322 = vld [vmem:[%s272 + $0x10] sm:$0xff]
        %v323 = vld [vmem:[%s272 + $0x18] sm:$0xff]
        %v324 = vld [vmem:[%s272 + $0x20] sm:$0xff]
        %v325 = vld [vmem:[%s272 + $0x28] sm:$0xff]
        %v326 = vld [vmem:[%s272 + $0x30] sm:$0xff]
        %v327 = vld [vmem:[%s272 + $0x38] sm:$0xff]
        %v328 = vld [vmem:[%s272 + $0x40] sm:$0xff]
        %v329 = vld [vmem:[%s272 + $0x48] sm:$0xff]
        %v330 = vld [vmem:[%s272 + $0x50] sm:$0xff]
        %v331 = vld [vmem:[%s272 + $0x58] sm:$0xff]
        %v332 = vld [vmem:[%s272 + $0x60] sm:$0xff]
        %v333 = vld [vmem:[%s272 + $0x68] sm:$0xff]
        %v334 = vld [vmem:[%s272 + $0x70] sm:$0xff]
        %v335 = vld [vmem:[%s272 + $0x78] sm:$0xff]
        %v336 = vld [vmem:[%s272 + $0x80] sm:$0xff]
        %v337 = vld [vmem:[%s272 + $0x88] sm:$0xff]
        %v338 = vld [vmem:[%s272 + $0x90] sm:$0xff]
        %v339 = vld [vmem:[%s272 + $0x98] sm:$0xff]
        %v340 = vld [vmem:[%s272 + $0xa0] sm:$0xff]
        %v341 = vld [vmem:[%s272 + $0xa8] sm:$0xff]
        %v342 = vld [vmem:[%s272 + $0xb0] sm:$0xff]
        %v343 = vld [vmem:[%s272 + $0xb8] sm:$0xff]
        %v344 = vld [vmem:[%s272 + $0xc0] sm:$0xff]
        %v345 = vld [vmem:[%s272 + $0xc8] sm:$0xff]
        %v346 = vld [vmem:[%s272 + $0xd0] sm:$0xff]
        %v347 = vld [vmem:[%s272 + $0xd8] sm:$0xff]
        %v348 = vld [vmem:[%s272 + $0xe0] sm:$0xff]
        %v349 = vld [vmem:[%s272 + $0xe8] sm:$0xff]
        %v350 = vld [vmem:[%s272 + $0xf0] sm:$0xff]
        %v351 = vld [vmem:[%s272 + $0xf8] sm:$0xff]
        %v352 = vld [vmem:[%s272 + $0x100] sm:$0xff]
        %v353 = vld [vmem:[%s272 + $0x108] sm:$0xff]
        %v354 = vld [vmem:[%s272 + $0x110] sm:$0xff]
        %v355 = vld [vmem:[%s272 + $0x118] sm:$0xff]
        %v356 = vld [vmem:[%s272 + $0x120] sm:$0xff]
        %v357 = vld [vmem:[%s272 + $0x128] sm:$0xff]
        %v358 = vld [vmem:[%s272 + $0x130] sm:$0xff]
        %v359 = vld [vmem:[%s272 + $0x138] sm:$0xff]
        %v360 = vld [vmem:[%s272 + $0x140] sm:$0xff]
        %v361 = vld [vmem:[%s272 + $0x148] sm:$0xff]
        %v362 = vld [vmem:[%s272 + $0x150] sm:$0xff]
        %v363 = vld [vmem:[%s272 + $0x158] sm:$0xff]
        %v364 = vld [vmem:[%s272 + $0x160] sm:$0xff]
        %v365 = vld [vmem:[%s272 + $0x168] sm:$0xff]
        %v366 = vld [vmem:[%s272 + $0x170] sm:$0xff]
        %v367 = vld [vmem:[%s272 + $0x178] sm:$0xff]
        %v368 = vld [vmem:[%s272 + $0x180] sm:$0xff]
        %v369 = vld [vmem:[%s272 + $0x188] sm:$0xff]
        %v370 = vld [vmem:[%s272 + $0x190] sm:$0xff]
        %v371 = vld [vmem:[%s272 + $0x198] sm:$0xff]
        %v372 = vld [vmem:[%s272 + $0x1a0] sm:$0xff]
        %v373 = vld [vmem:[%s272 + $0x1a8] sm:$0xff]
        %v374 = vld [vmem:[%s272 + $0x1b0] sm:$0xff]
        %v375 = vld [vmem:[%s272 + $0x1b8] sm:$0xff]
        %v376 = vld [vmem:[%s272 + $0x1c0] sm:$0xff]
        %v377 = vld [vmem:[%s272 + $0x1c8] sm:$0xff]
        %v378 = vld [vmem:[%s272 + $0x1d0] sm:$0xff]
        %v379 = vld [vmem:[%s272 + $0x1d8] sm:$0xff]
        %v380 = vld [vmem:[%s272 + $0x1e0] sm:$0xff]
        %v381 = vld [vmem:[%s272 + $0x1e8] sm:$0xff]
        %v382 = vld [vmem:[%s272 + $0x1f0] sm:$0xff]
        %v383 = vld [vmem:[%s272 + $0x1f8] sm:$0xff]
        %v384 = vld [vmem:[%s272 + $0x200] sm:$0xff]
        %v385 = vld [vmem:[%s272 + $0x208] sm:$0xff]
        %v386 = vld [vmem:[%s272 + $0x210] sm:$0xff]
        %v387 = vld [vmem:[%s272 + $0x218] sm:$0xff]
        %v388 = vld [vmem:[%s272 + $0x220] sm:$0xff]
        %v389 = vld [vmem:[%s272 + $0x228] sm:$0xff]
        %v390 = vld [vmem:[%s272 + $0x230] sm:$0xff]
        %v391 = vld [vmem:[%s272 + $0x238] sm:$0xff]
        %v392 = vld [vmem:[%s272 + $0x240] sm:$0xff]
        %v393 = vld [vmem:[%s272 + $0x248] sm:$0xff]
        %v394 = vld [vmem:[%s272 + $0x250] sm:$0xff]
        %v395 = vld [vmem:[%s272 + $0x258] sm:$0xff]
        %v396 = vld [vmem:[%s272 + $0x260] sm:$0xff]
        %v397 = vld [vmem:[%s272 + $0x268] sm:$0xff]
        %v398 = vld [vmem:[%s272 + $0x270] sm:$0xff]
        %v399 = vld [vmem:[%s272 + $0x278] sm:$0xff]
        %v400 = vld [vmem:[%s272 + $0x280] sm:$0xff]
        %v401 = vld [vmem:[%s272 + $0x288] sm:$0xff]
        %v402 = vld [vmem:[%s272 + $0x290] sm:$0xff]
        %v403 = vld [vmem:[%s272 + $0x298] sm:$0xff]
        %v404 = vld [vmem:[%s272 + $0x2a0] sm:$0xff]
        %v405 = vld [vmem:[%s272 + $0x2a8] sm:$0xff]
        %v406 = vld [vmem:[%s272 + $0x2b0] sm:$0xff]
        %v407 = vld [vmem:[%s272 + $0x2b8] sm:$0xff]
        %v408 = vld [vmem:[%s272 + $0x2c0] sm:$0xff]
        %v409 = vld [vmem:[%s272 + $0x2c8] sm:$0xff]
        %v410 = vld [vmem:[%s272 + $0x2d0] sm:$0xff]
        %v411 = vld [vmem:[%s272 + $0x2d8] sm:$0xff]
        %v412 = vld [vmem:[%s272 + $0x2e0] sm:$0xff]
        %v413 = vld [vmem:[%s272 + $0x2e8] sm:$0xff]
        %v414 = vld [vmem:[%s272 + $0x2f0] sm:$0xff]
        %v415 = vld [vmem:[%s272 + $0x2f8] sm:$0xff]
        %v416 = vld [vmem:[%s272 + $0x300] sm:$0xff]
        %v417 = vld [vmem:[%s272 + $0x308] sm:$0xff]
        %v418 = vld [vmem:[%s272 + $0x310] sm:$0xff]
        %v419 = vld [vmem:[%s272 + $0x318] sm:$0xff]
        %v420 = vld [vmem:[%s272 + $0x320] sm:$0xff]
        %v421 = vld [vmem:[%s272 + $0x328] sm:$0xff]
        %v422 = vld [vmem:[%s272 + $0x330] sm:$0xff]
        %v423 = vld [vmem:[%s272 + $0x338] sm:$0xff]
        %v424 = vld [vmem:[%s272 + $0x340] sm:$0xff]
        %v425 = vld [vmem:[%s272 + $0x348] sm:$0xff]
        %v426 = vld [vmem:[%s272 + $0x350] sm:$0xff]
        %v427 = vld [vmem:[%s272 + $0x358] sm:$0xff]
        %v428 = vld [vmem:[%s272 + $0x360] sm:$0xff]
        %v429 = vld [vmem:[%s272 + $0x368] sm:$0xff]
        %v430 = vld [vmem:[%s272 + $0x370] sm:$0xff]
        %v431 = vld [vmem:[%s272 + $0x378] sm:$0xff]
        %v432 = vld [vmem:[%s272 + $0x380] sm:$0xff]
        %v433 = vld [vmem:[%s272 + $0x388] sm:$0xff]
        %v434 = vld [vmem:[%s272 + $0x390] sm:$0xff]
        %v435 = vld [vmem:[%s272 + $0x398] sm:$0xff]
        %v436 = vld [vmem:[%s272 + $0x3a0] sm:$0xff]
        %v437 = vld [vmem:[%s272 + $0x3a8] sm:$0xff]
        %v438 = vld [vmem:[%s272 + $0x3b0] sm:$0xff]
        %v439 = vld [vmem:[%s272 + $0x3b8] sm:$0xff]
        %v440 = vld [vmem:[%s272 + $0x3c0] sm:$0xff]
        %v441 = vld [vmem:[%s272 + $0x3c8] sm:$0xff]
        %v442 = vld [vmem:[%s272 + $0x3d0] sm:$0xff]
        %v443 = vld [vmem:[%s272 + $0x3d8] sm:$0xff]
        %v444 = vld [vmem:[%s272 + $0x3e0] sm:$0xff]
        %v445 = vld [vmem:[%s272 + $0x3e8] sm:$0xff]
        %v446 = vld [vmem:[%s272 + $0x3f0] sm:$0xff]
        %v447 = vld [vmem:[%s272 + $0x3f8] sm:$0xff]
        %v448 = vld [vmem:[%s272 + $0x400] sm:$0xff]
        %v449 = vld [vmem:[%s272 + $0x408] sm:$0xff]
        %v450 = vld [vmem:[%s272 + $0x410] sm:$0xff]
        %v451 = vld [vmem:[%s272 + $0x418] sm:$0xff]
        %v452 = vld [vmem:[%s272 + $0x420] sm:$0xff]
        %v453 = vld [vmem:[%s272 + $0x428] sm:$0xff]
        %v454 = vld [vmem:[%s272 + $0x430] sm:$0xff]
        %v455 = vld [vmem:[%s272 + $0x438] sm:$0xff]
        %v456 = vld [vmem:[%s272 + $0x440] sm:$0xff]
        %v457 = vld [vmem:[%s272 + $0x448] sm:$0xff]
        %v458 = vld [vmem:[%s272 + $0x450] sm:$0xff]
        %v459 = vld [vmem:[%s272 + $0x458] sm:$0xff]
        %v460 = vld [vmem:[%s272 + $0x460] sm:$0xff]
        %v461 = vld [vmem:[%s272 + $0x468] sm:$0xff]
        %v462 = vld [vmem:[%s272 + $0x470] sm:$0xff]
        %v463 = vld [vmem:[%s272 + $0x478] sm:$0xff]
        %v464 = vld [vmem:[%s272 + $0x480] sm:$0xff]
        %v465 = vld [vmem:[%s272 + $0x488] sm:$0xff]
        %v466 = vld [vmem:[%s272 + $0x490] sm:$0xff]
        %v467 = vld [vmem:[%s272 + $0x498] sm:$0xff]
        %v468 = vld [vmem:[%s272 + $0x4a0] sm:$0xff]
        %v469 = vld [vmem:[%s272 + $0x4a8] sm:$0xff]
        %v470 = vld [vmem:[%s272 + $0x4b0] sm:$0xff]
        %v471 = vld [vmem:[%s272 + $0x4b8] sm:$0xff]
        %v472 = vld [vmem:[%s272 + $0x4c0] sm:$0xff]
        %v473 = vld [vmem:[%s272 + $0x4c8] sm:$0xff]
        %v474 = vld [vmem:[%s272 + $0x4d0] sm:$0xff]
        %v475 = vld [vmem:[%s272 + $0x4d8] sm:$0xff]
        %v476 = vld [vmem:[%s272 + $0x4e0] sm:$0xff]
        %v477 = vld [vmem:[%s272 + $0x4e8] sm:$0xff]
        %v478 = vld [vmem:[%s272 + $0x4f0] sm:$0xff]
        %v479 = vld [vmem:[%s272 + $0x4f8] sm:$0xff]
        %v480 = vld [vmem:[%s272 + $0x500] sm:$0xff]
        %v481 = vld [vmem:[%s272 + $0x508] sm:$0xff]
        %v482 = vld [vmem:[%s272 + $0x510] sm:$0xff]
        %v483 = vld [vmem:[%s272 + $0x518] sm:$0xff]
        %v484 = vld [vmem:[%s272 + $0x520] sm:$0xff]
        %v485 = vld [vmem:[%s272 + $0x528] sm:$0xff]
        %v486 = vld [vmem:[%s272 + $0x530] sm:$0xff]
        %v487 = vld [vmem:[%s272 + $0x538] sm:$0xff]
        %v488 = vld [vmem:[%s272 + $0x540] sm:$0xff]
        %v489 = vld [vmem:[%s272 + $0x548] sm:$0xff]
        %v490 = vld [vmem:[%s272 + $0x550] sm:$0xff]
        %v491 = vld [vmem:[%s272 + $0x558] sm:$0xff]
        %v492 = vld [vmem:[%s272 + $0x560] sm:$0xff]
        %v493 = vld [vmem:[%s272 + $0x568] sm:$0xff]
        %v494 = vld [vmem:[%s272 + $0x570] sm:$0xff]
        %v495 = vld [vmem:[%s272 + $0x578] sm:$0xff]
        %v496 = vld [vmem:[%s272 + $0x580] sm:$0xff]
        %v497 = vld [vmem:[%s272 + $0x588] sm:$0xff]
        %v498 = vld [vmem:[%s272 + $0x590] sm:$0xff]
        %v499 = vld [vmem:[%s272 + $0x598] sm:$0xff]
        %v500 = vld [vmem:[%s272 + $0x5a0] sm:$0xff]
        %v501 = vld [vmem:[%s272 + $0x5a8] sm:$0xff]
        %v502 = vld [vmem:[%s272 + $0x5b0] sm:$0xff]
        %v503 = vld [vmem:[%s272 + $0x5b8] sm:$0xff]
        %v504 = vld [vmem:[%s272 + $0x5c0] sm:$0xff]
        %v505 = vld [vmem:[%s272 + $0x5c8] sm:$0xff]
        %v506 = vld [vmem:[%s272 + $0x5d0] sm:$0xff]
        %v507 = vld [vmem:[%s272 + $0x5d8] sm:$0xff]
        %v508 = vld [vmem:[%s272 + $0x5e0] sm:$0xff]
        %v509 = vld [vmem:[%s272 + $0x5e8] sm:$0xff]
        %v510 = vld [vmem:[%s272 + $0x5f0] sm:$0xff]
        %v511 = vld [vmem:[%s272 + $0x5f8] sm:$0xff]
        %v512 = vld [vmem:[%s272 + $0x600] sm:$0xff]
        %v513 = vld [vmem:[%s272 + $0x608] sm:$0xff]
        %v514 = vld [vmem:[%s272 + $0x610] sm:$0xff]
        %v515 = vld [vmem:[%s272 + $0x618] sm:$0xff]
        %v516 = vld [vmem:[%s272 + $0x620] sm:$0xff]
        %v517 = vld [vmem:[%s272 + $0x628] sm:$0xff]
        %v518 = vld [vmem:[%s272 + $0x630] sm:$0xff]
        %v519 = vld [vmem:[%s272 + $0x638] sm:$0xff]
        %v520 = vld [vmem:[%s272 + $0x640] sm:$0xff]
        %v521 = vld [vmem:[%s272 + $0x648] sm:$0xff]
        %v522 = vld [vmem:[%s272 + $0x650] sm:$0xff]
        %v523 = vld [vmem:[%s272 + $0x658] sm:$0xff]
        %v524 = vld [vmem:[%s272 + $0x660] sm:$0xff]
        %v525 = vld [vmem:[%s272 + $0x668] sm:$0xff]
        %v526 = vld [vmem:[%s272 + $0x670] sm:$0xff]
        %v527 = vld [vmem:[%s272 + $0x678] sm:$0xff]
        %v528 = vld [vmem:[%s272 + $0x680] sm:$0xff]
        %v529 = vld [vmem:[%s272 + $0x688] sm:$0xff]
        %v530 = vld [vmem:[%s272 + $0x690] sm:$0xff]
        %v531 = vld [vmem:[%s272 + $0x698] sm:$0xff]
        %v532 = vld [vmem:[%s272 + $0x6a0] sm:$0xff]
        %v533 = vld [vmem:[%s272 + $0x6a8] sm:$0xff]
        %v534 = vld [vmem:[%s272 + $0x6b0] sm:$0xff]
        %v535 = vld [vmem:[%s272 + $0x6b8] sm:$0xff]
        %v536 = vld [vmem:[%s272 + $0x6c0] sm:$0xff]
        %v537 = vld [vmem:[%s272 + $0x6c8] sm:$0xff]
        %v538 = vld [vmem:[%s272 + $0x6d0] sm:$0xff]
        %v539 = vld [vmem:[%s272 + $0x6d8] sm:$0xff]
        %v540 = vld [vmem:[%s272 + $0x6e0] sm:$0xff]
        %v541 = vld [vmem:[%s272 + $0x6e8] sm:$0xff]
        %v542 = vld [vmem:[%s272 + $0x6f0] sm:$0xff]
        %v543 = vld [vmem:[%s272 + $0x6f8] sm:$0xff]
        %v544 = vld [vmem:[%s272 + $0x700] sm:$0xff]
        %v545 = vld [vmem:[%s272 + $0x708] sm:$0xff]
        %v546 = vld [vmem:[%s272 + $0x710] sm:$0xff]
        %v547 = vld [vmem:[%s272 + $0x718] sm:$0xff]
        %v548 = vld [vmem:[%s272 + $0x720] sm:$0xff]
        %v549 = vld [vmem:[%s272 + $0x728] sm:$0xff]
        %v550 = vld [vmem:[%s272 + $0x730] sm:$0xff]
        %v551 = vld [vmem:[%s272 + $0x738] sm:$0xff]
        %v552 = vld [vmem:[%s272 + $0x740] sm:$0xff]
        %v553 = vld [vmem:[%s272 + $0x748] sm:$0xff]
        %v554 = vld [vmem:[%s272 + $0x750] sm:$0xff]
        %v555 = vld [vmem:[%s272 + $0x758] sm:$0xff]
        %v556 = vld [vmem:[%s272 + $0x760] sm:$0xff]
        %v557 = vld [vmem:[%s272 + $0x768] sm:$0xff]
        %v558 = vld [vmem:[%s272 + $0x770] sm:$0xff]
        %v559 = vld [vmem:[%s272 + $0x778] sm:$0xff]
        %v560 = vld [vmem:[%s272 + $0x780] sm:$0xff]
        %v561 = vld [vmem:[%s272 + $0x788] sm:$0xff]
        %v562 = vld [vmem:[%s272 + $0x790] sm:$0xff]
        %v563 = vld [vmem:[%s272 + $0x798] sm:$0xff]
        %v564 = vld [vmem:[%s272 + $0x7a0] sm:$0xff]
        %v565 = vld [vmem:[%s272 + $0x7a8] sm:$0xff]
        %v566 = vld [vmem:[%s272 + $0x7b0] sm:$0xff]
        %v567 = vld [vmem:[%s272 + $0x7b8] sm:$0xff]
        %v568 = vld [vmem:[%s272 + $0x7c0] sm:$0xff]
        %v569 = vld [vmem:[%s272 + $0x7c8] sm:$0xff]
        %v570 = vld [vmem:[%s272 + $0x7d0] sm:$0xff]
        %v571 = vld [vmem:[%s272 + $0x7d8] sm:$0xff]
        %v572 = vld [vmem:[%s272 + $0x7e0] sm:$0xff]
        %v573 = vld [vmem:[%s272 + $0x7e8] sm:$0xff]
        %v574 = vld [vmem:[%s272 + $0x7f0] sm:$0xff]
        %v575 = vld [vmem:[%s272 + $0x7f8] sm:$0xff]
        %v576 = vld [vmem:[%s272 + $0x800] sm:$0xff]
        %v577 = vld [vmem:[%s272 + $0x808] sm:$0xff]
        %v578 = vld [vmem:[%s272 + $0x810] sm:$0xff]
        %v579 = vld [vmem:[%s272 + $0x818] sm:$0xff]
        %v580 = vld [vmem:[%s272 + $0x820] sm:$0xff]
        %v581 = vld [vmem:[%s272 + $0x828] sm:$0xff]
        %v582 = vld [vmem:[%s272 + $0x830] sm:$0xff]
        %v583 = vld [vmem:[%s272 + $0x838] sm:$0xff]
        %v584 = vld [vmem:[%s272 + $0x840] sm:$0xff]
        %v585 = vld [vmem:[%s272 + $0x848] sm:$0xff]
        %v586 = vld [vmem:[%s272 + $0x850] sm:$0xff]
        %v587 = vld [vmem:[%s272 + $0x858] sm:$0xff]
        %v588 = vld [vmem:[%s272 + $0x860] sm:$0xff]
        %v589 = vld [vmem:[%s272 + $0x868] sm:$0xff]
        %v590 = vld [vmem:[%s272 + $0x870] sm:$0xff]
        %v591 = vld [vmem:[%s272 + $0x878] sm:$0xff]
        %v592 = vld [vmem:[%s272 + $0x880] sm:$0xff]
        %v593 = vld [vmem:[%s272 + $0x888] sm:$0xff]
        %v594 = vld [vmem:[%s272 + $0x890] sm:$0xff]
        %v595 = vld [vmem:[%s272 + $0x898] sm:$0xff]
        %v596 = vld [vmem:[%s272 + $0x8a0] sm:$0xff]
        %v597 = vld [vmem:[%s272 + $0x8a8] sm:$0xff]
        %v598 = vld [vmem:[%s272 + $0x8b0] sm:$0xff]
        %v599 = vld [vmem:[%s272 + $0x8b8] sm:$0xff]
        %v600 = vld [vmem:[%s272 + $0x8c0] sm:$0xff]
        %v601 = vld [vmem:[%s272 + $0x8c8] sm:$0xff]
        %v602 = vld [vmem:[%s272 + $0x8d0] sm:$0xff]
        %v603 = vld [vmem:[%s272 + $0x8d8] sm:$0xff]
        %v604 = vld [vmem:[%s272 + $0x8e0] sm:$0xff]
        %v605 = vld [vmem:[%s272 + $0x8e8] sm:$0xff]
        %v606 = vld [vmem:[%s272 + $0x8f0] sm:$0xff]
        %v607 = vld [vmem:[%s272 + $0x8f8] sm:$0xff]
        %v608 = vld [vmem:[%s272 + $0x900] sm:$0xff]
        %v609 = vld [vmem:[%s272 + $0x908] sm:$0xff]
        %v610 = vld [vmem:[%s272 + $0x910] sm:$0xff]
        %v611 = vld [vmem:[%s272 + $0x918] sm:$0xff]
        %v612 = vld [vmem:[%s272 + $0x920] sm:$0xff]
        %v613 = vld [vmem:[%s272 + $0x928] sm:$0xff]
        %v614 = vld [vmem:[%s272 + $0x930] sm:$0xff]
        %v615 = vld [vmem:[%s272 + $0x938] sm:$0xff]
        %v616 = vld [vmem:[%s272 + $0x940] sm:$0xff]
        %v617 = vld [vmem:[%s272 + $0x948] sm:$0xff]
        %v618 = vld [vmem:[%s272 + $0x950] sm:$0xff]
        %v619 = vld [vmem:[%s272 + $0x958] sm:$0xff]
        %v620 = vld [vmem:[%s272 + $0x960] sm:$0xff]
        %v621 = vld [vmem:[%s272 + $0x968] sm:$0xff]
        %v622 = vld [vmem:[%s272 + $0x970] sm:$0xff]
        %v623 = vld [vmem:[%s272 + $0x978] sm:$0xff]
        %v624 = vld [vmem:[%s272 + $0x980] sm:$0xff]
        %v625 = vld [vmem:[%s272 + $0x988] sm:$0xff]
        %v626 = vld [vmem:[%s272 + $0x990] sm:$0xff]
        %v627 = vld [vmem:[%s272 + $0x998] sm:$0xff]
        %v628 = vld [vmem:[%s272 + $0x9a0] sm:$0xff]
        %v629 = vld [vmem:[%s272 + $0x9a8] sm:$0xff]
        %v630 = vld [vmem:[%s272 + $0x9b0] sm:$0xff]
        %v631 = vld [vmem:[%s272 + $0x9b8] sm:$0xff]
        %v632 = vld [vmem:[%s272 + $0x9c0] sm:$0xff]
        %v633 = vld [vmem:[%s272 + $0x9c8] sm:$0xff]
        %v634 = vld [vmem:[%s272 + $0x9d0] sm:$0xff]
        %v635 = vld [vmem:[%s272 + $0x9d8] sm:$0xff]
        %v636 = vld [vmem:[%s272 + $0x9e0] sm:$0xff]
        %v637 = vld [vmem:[%s272 + $0x9e8] sm:$0xff]
        %v638 = vld [vmem:[%s272 + $0x9f0] sm:$0xff]
        %v639 = vld [vmem:[%s272 + $0x9f8] sm:$0xff]
        %v640 = vld [vmem:[%s272 + $0xa00] sm:$0xff]
        %v641 = vld [vmem:[%s272 + $0xa08] sm:$0xff]
        %v642 = vld [vmem:[%s272 + $0xa10] sm:$0xff]
        %v643 = vld [vmem:[%s272 + $0xa18] sm:$0xff]
        %v644 = vld [vmem:[%s272 + $0xa20] sm:$0xff]
        %v645 = vld [vmem:[%s272 + $0xa28] sm:$0xff]
        %v646 = vld [vmem:[%s272 + $0xa30] sm:$0xff]
        %v647 = vld [vmem:[%s272 + $0xa38] sm:$0xff]
        %v648 = vld [vmem:[%s272 + $0xa40] sm:$0xff]
        %v649 = vld [vmem:[%s272 + $0xa48] sm:$0xff]
        %v650 = vld [vmem:[%s272 + $0xa50] sm:$0xff]
        %v651 = vld [vmem:[%s272 + $0xa58] sm:$0xff]
        %v652 = vld [vmem:[%s272 + $0xa60] sm:$0xff]
        %v653 = vld [vmem:[%s272 + $0xa68] sm:$0xff]
        %v654 = vld [vmem:[%s272 + $0xa70] sm:$0xff]
        %v655 = vld [vmem:[%s272 + $0xa78] sm:$0xff]
        %v656 = vld [vmem:[%s272 + $0xa80] sm:$0xff]
        %v657 = vld [vmem:[%s272 + $0xa88] sm:$0xff]
        %v658 = vld [vmem:[%s272 + $0xa90] sm:$0xff]
        %v659 = vld [vmem:[%s272 + $0xa98] sm:$0xff]
        %v660 = vld [vmem:[%s272 + $0xaa0] sm:$0xff]
        %v661 = vld [vmem:[%s272 + $0xaa8] sm:$0xff]
        %v662 = vld [vmem:[%s272 + $0xab0] sm:$0xff]
        %v663 = vld [vmem:[%s272 + $0xab8] sm:$0xff]
        %v664 = vld [vmem:[%s272 + $0xac0] sm:$0xff]
        %v665 = vld [vmem:[%s272 + $0xac8] sm:$0xff]
        %v666 = vld [vmem:[%s272 + $0xad0] sm:$0xff]
        %v667 = vld [vmem:[%s272 + $0xad8] sm:$0xff]
        %v668 = vld [vmem:[%s272 + $0xae0] sm:$0xff]
        %v669 = vld [vmem:[%s272 + $0xae8] sm:$0xff]
        %v670 = vld [vmem:[%s272 + $0xaf0] sm:$0xff]
        %v671 = vld [vmem:[%s272 + $0xaf8] sm:$0xff]
        %v672 = vld [vmem:[%s272 + $0xb00] sm:$0xff]
        %v673 = vld [vmem:[%s272 + $0xb08] sm:$0xff]
        %v674 = vld [vmem:[%s272 + $0xb10] sm:$0xff]
        %v675 = vld [vmem:[%s272 + $0xb18] sm:$0xff]
        %v676 = vld [vmem:[%s272 + $0xb20] sm:$0xff]
        %v677 = vld [vmem:[%s272 + $0xb28] sm:$0xff]
        %v678 = vld [vmem:[%s272 + $0xb30] sm:$0xff]
        %v679 = vld [vmem:[%s272 + $0xb38] sm:$0xff]
        %v680 = vld [vmem:[%s272 + $0xb40] sm:$0xff]
        %v681 = vld [vmem:[%s272 + $0xb48] sm:$0xff]
        %v682 = vld [vmem:[%s272 + $0xb50] sm:$0xff]
        %v683 = vld [vmem:[%s272 + $0xb58] sm:$0xff]
        %v684 = vld [vmem:[%s272 + $0xb60] sm:$0xff]
        %v685 = vld [vmem:[%s272 + $0xb68] sm:$0xff]
        %v686 = vld [vmem:[%s272 + $0xb70] sm:$0xff]
        %v687 = vld [vmem:[%s272 + $0xb78] sm:$0xff]
        %v688 = vld [vmem:[%s272 + $0xb80] sm:$0xff]
        %v689 = vld [vmem:[%s272 + $0xb88] sm:$0xff]
        %v690 = vld [vmem:[%s272 + $0xb90] sm:$0xff]
        %v691 = vld [vmem:[%s272 + $0xb98] sm:$0xff]
        %v692 = vld [vmem:[%s272 + $0xba0] sm:$0xff]
        %v693 = vld [vmem:[%s272 + $0xba8] sm:$0xff]
        %v694 = vld [vmem:[%s272 + $0xbb0] sm:$0xff]
        %v695 = vld [vmem:[%s272 + $0xbb8] sm:$0xff]
        %v696 = vld [vmem:[%s272 + $0xbc0] sm:$0xff]
        %v697 = vld [vmem:[%s272 + $0xbc8] sm:$0xff]
        %v698 = vld [vmem:[%s272 + $0xbd0] sm:$0xff]
        %v699 = vld [vmem:[%s272 + $0xbd8] sm:$0xff]
        %v700 = vld [vmem:[%s272 + $0xbe0] sm:$0xff]
        %v701 = vld [vmem:[%s272 + $0xbe8] sm:$0xff]
        %v702 = vld [vmem:[%s272 + $0xbf0] sm:$0xff]
        %v703 = vld [vmem:[%s272 + $0xbf8] sm:$0xff]
        %v704 = vld [vmem:[%s272 + $0xc00] sm:$0xff]
        %v705 = vld [vmem:[%s272 + $0xc08] sm:$0xff]
        %v706 = vld [vmem:[%s272 + $0xc10] sm:$0xff]
        %v707 = vld [vmem:[%s272 + $0xc18] sm:$0xff]
        %v708 = vld [vmem:[%s272 + $0xc20] sm:$0xff]
        %v709 = vld [vmem:[%s272 + $0xc28] sm:$0xff]
        %v710 = vld [vmem:[%s272 + $0xc30] sm:$0xff]
        %v711 = vld [vmem:[%s272 + $0xc38] sm:$0xff]
        %v712 = vld [vmem:[%s272 + $0xc40] sm:$0xff]
        %v713 = vld [vmem:[%s272 + $0xc48] sm:$0xff]
        %v714 = vld [vmem:[%s272 + $0xc50] sm:$0xff]
        %v715 = vld [vmem:[%s272 + $0xc58] sm:$0xff]
        %v716 = vld [vmem:[%s272 + $0xc60] sm:$0xff]
        %v717 = vld [vmem:[%s272 + $0xc68] sm:$0xff]
        %v718 = vld [vmem:[%s272 + $0xc70] sm:$0xff]
        %v719 = vld [vmem:[%s272 + $0xc78] sm:$0xff]
        %v720 = vld [vmem:[%s272 + $0xc80] sm:$0xff]
        %v721 = vld [vmem:[%s272 + $0xc88] sm:$0xff]
        %v722 = vld [vmem:[%s272 + $0xc90] sm:$0xff]
        %v723 = vld [vmem:[%s272 + $0xc98] sm:$0xff]
        %v724 = vld [vmem:[%s272 + $0xca0] sm:$0xff]
        %v725 = vld [vmem:[%s272 + $0xca8] sm:$0xff]
        %v726 = vld [vmem:[%s272 + $0xcb0] sm:$0xff]
        %v727 = vld [vmem:[%s272 + $0xcb8] sm:$0xff]
        %v728 = vld [vmem:[%s272 + $0xcc0] sm:$0xff]
        %v729 = vld [vmem:[%s272 + $0xcc8] sm:$0xff]
        %v730 = vld [vmem:[%s272 + $0xcd0] sm:$0xff]
        %v731 = vld [vmem:[%s272 + $0xcd8] sm:$0xff]
        %v732 = vld [vmem:[%s272 + $0xce0] sm:$0xff]
        %v733 = vld [vmem:[%s272 + $0xce8] sm:$0xff]
        %v734 = vld [vmem:[%s272 + $0xcf0] sm:$0xff]
        %v735 = vld [vmem:[%s272 + $0xcf8] sm:$0xff]
        %v736 = vld [vmem:[%s272 + $0xd00] sm:$0xff]
        %v737 = vld [vmem:[%s272 + $0xd08] sm:$0xff]
        %v738 = vld [vmem:[%s272 + $0xd10] sm:$0xff]
        %v739 = vld [vmem:[%s272 + $0xd18] sm:$0xff]
        %v740 = vld [vmem:[%s272 + $0xd20] sm:$0xff]
        %v741 = vld [vmem:[%s272 + $0xd28] sm:$0xff]
        %v742 = vld [vmem:[%s272 + $0xd30] sm:$0xff]
        %v743 = vld [vmem:[%s272 + $0xd38] sm:$0xff]
        %v744 = vld [vmem:[%s272 + $0xd40] sm:$0xff]
        %v745 = vld [vmem:[%s272 + $0xd48] sm:$0xff]
        %v746 = vld [vmem:[%s272 + $0xd50] sm:$0xff]
        %v747 = vld [vmem:[%s272 + $0xd58] sm:$0xff]
        %v748 = vld [vmem:[%s272 + $0xd60] sm:$0xff]
        %v749 = vld [vmem:[%s272 + $0xd68] sm:$0xff]
        %v750 = vld [vmem:[%s272 + $0xd70] sm:$0xff]
        %v751 = vld [vmem:[%s272 + $0xd78] sm:$0xff]
        %v752 = vld [vmem:[%s272 + $0xd80] sm:$0xff]
        %v753 = vld [vmem:[%s272 + $0xd88] sm:$0xff]
        %v754 = vld [vmem:[%s272 + $0xd90] sm:$0xff]
        %v755 = vld [vmem:[%s272 + $0xd98] sm:$0xff]
        %v756 = vld [vmem:[%s272 + $0xda0] sm:$0xff]
        %v757 = vld [vmem:[%s272 + $0xda8] sm:$0xff]
        %v758 = vld [vmem:[%s272 + $0xdb0] sm:$0xff]
        %v759 = vld [vmem:[%s272 + $0xdb8] sm:$0xff]
        %v760 = vld [vmem:[%s272 + $0xdc0] sm:$0xff]
        %v761 = vld [vmem:[%s272 + $0xdc8] sm:$0xff]
        %v762 = vld [vmem:[%s272 + $0xdd0] sm:$0xff]
        %v763 = vld [vmem:[%s272 + $0xdd8] sm:$0xff]
        %v764 = vld [vmem:[%s272 + $0xde0] sm:$0xff]
        %v765 = vld [vmem:[%s272 + $0xde8] sm:$0xff]
        %v766 = vld [vmem:[%s272 + $0xdf0] sm:$0xff]
        %v767 = vld [vmem:[%s272 + $0xdf8] sm:$0xff]
        %v768 = vld [vmem:[%s272 + $0xe00] sm:$0xff]
        %v769 = vld [vmem:[%s272 + $0xe08] sm:$0xff]
        %v770 = vld [vmem:[%s272 + $0xe10] sm:$0xff]
        %v771 = vld [vmem:[%s272 + $0xe18] sm:$0xff]
        %v772 = vld [vmem:[%s272 + $0xe20] sm:$0xff]
        %v773 = vld [vmem:[%s272 + $0xe28] sm:$0xff]
        %v774 = vld [vmem:[%s272 + $0xe30] sm:$0xff]
        %v775 = vld [vmem:[%s272 + $0xe38] sm:$0xff]
        %v776 = vld [vmem:[%s272 + $0xe40] sm:$0xff]
        %v777 = vld [vmem:[%s272 + $0xe48] sm:$0xff]
        %v778 = vld [vmem:[%s272 + $0xe50] sm:$0xff]
        %v779 = vld [vmem:[%s272 + $0xe58] sm:$0xff]
        %v780 = vld [vmem:[%s272 + $0xe60] sm:$0xff]
        %v781 = vld [vmem:[%s272 + $0xe68] sm:$0xff]
        %v782 = vld [vmem:[%s272 + $0xe70] sm:$0xff]
        %v783 = vld [vmem:[%s272 + $0xe78] sm:$0xff]
        %v784 = vld [vmem:[%s272 + $0xe80] sm:$0xff]
        %v785 = vld [vmem:[%s272 + $0xe88] sm:$0xff]
        %v786 = vld [vmem:[%s272 + $0xe90] sm:$0xff]
        %v787 = vld [vmem:[%s272 + $0xe98] sm:$0xff]
        %v788 = vld [vmem:[%s272 + $0xea0] sm:$0xff]
        %v789 = vld [vmem:[%s272 + $0xea8] sm:$0xff]
        %v790 = vld [vmem:[%s272 + $0xeb0] sm:$0xff]
        %v791 = vld [vmem:[%s272 + $0xeb8] sm:$0xff]
        %v792 = vld [vmem:[%s272 + $0xec0] sm:$0xff]
        %v793 = vld [vmem:[%s272 + $0xec8] sm:$0xff]
        %v794 = vld [vmem:[%s272 + $0xed0] sm:$0xff]
        %v795 = vld [vmem:[%s272 + $0xed8] sm:$0xff]
        %v796 = vld [vmem:[%s272 + $0xee0] sm:$0xff]
        %v797 = vld [vmem:[%s272 + $0xee8] sm:$0xff]
        %v798 = vld [vmem:[%s272 + $0xef0] sm:$0xff]
        %v799 = vld [vmem:[%s272 + $0xef8] sm:$0xff]
        %v800 = vld [vmem:[%s272 + $0xf00] sm:$0xff]
        %v801 = vld [vmem:[%s272 + $0xf08] sm:$0xff]
        %v802 = vld [vmem:[%s272 + $0xf10] sm:$0xff]
        %v803 = vld [vmem:[%s272 + $0xf18] sm:$0xff]
        %v804 = vld [vmem:[%s272 + $0xf20] sm:$0xff]
        %v805 = vld [vmem:[%s272 + $0xf28] sm:$0xff]
        %v806 = vld [vmem:[%s272 + $0xf30] sm:$0xff]
        %v807 = vld [vmem:[%s272 + $0xf38] sm:$0xff]
        %v808 = vld [vmem:[%s272 + $0xf40] sm:$0xff]
        %v809 = vld [vmem:[%s272 + $0xf48] sm:$0xff]
        %v810 = vld [vmem:[%s272 + $0xf50] sm:$0xff]
        %v811 = vld [vmem:[%s272 + $0xf58] sm:$0xff]
        %v812 = vld [vmem:[%s272 + $0xf60] sm:$0xff]
        %v813 = vld [vmem:[%s272 + $0xf68] sm:$0xff]
        %v814 = vld [vmem:[%s272 + $0xf70] sm:$0xff]
        %v815 = vld [vmem:[%s272 + $0xf78] sm:$0xff]
        %v816 = vld [vmem:[%s272 + $0xf80] sm:$0xff]
        %v817 = vld [vmem:[%s272 + $0xf88] sm:$0xff]
        %v818 = vld [vmem:[%s272 + $0xf90] sm:$0xff]
        %v819 = vld [vmem:[%s272 + $0xf98] sm:$0xff]
        %v820 = vld [vmem:[%s272 + $0xfa0] sm:$0xff]
        %v821 = vld [vmem:[%s272 + $0xfa8] sm:$0xff]
        %v822 = vld [vmem:[%s272 + $0xfb0] sm:$0xff]
        %v823 = vld [vmem:[%s272 + $0xfb8] sm:$0xff]
        %v824 = vld [vmem:[%s272 + $0xfc0] sm:$0xff]
        %v825 = vld [vmem:[%s272 + $0xfc8] sm:$0xff]
        %v826 = vld [vmem:[%s272 + $0xfd0] sm:$0xff]
        %v827 = vld [vmem:[%s272 + $0xfd8] sm:$0xff]
        %v828 = vld [vmem:[%s272 + $0xfe0] sm:$0xff]
        %v829 = vld [vmem:[%s272 + $0xfe8] sm:$0xff]
        %v830 = vld [vmem:[%s272 + $0xff0] sm:$0xff]
        %v831 = vld [vmem:[%s272 + $0xff8] sm:$0xff]
        %v832 = vld [vmem:[%s272 + $0x1000] sm:$0xff]
        %v833 = vld [vmem:[%s272 + $0x1008] sm:$0xff]
        %v834 = vld [vmem:[%s272 + $0x1010] sm:$0xff]
        %v835 = vld [vmem:[%s272 + $0x1018] sm:$0xff]
        %v836 = vld [vmem:[%s272 + $0x1020] sm:$0xff]
        %v837 = vld [vmem:[%s272 + $0x1028] sm:$0xff]
        %v838 = vld [vmem:[%s272 + $0x1030] sm:$0xff]
        %v839 = vld [vmem:[%s272 + $0x1038] sm:$0xff]
        %v840 = vld [vmem:[%s272 + $0x1040] sm:$0xff]
        %v841 = vld [vmem:[%s272 + $0x1048] sm:$0xff]
        %v842 = vld [vmem:[%s272 + $0x1050] sm:$0xff]
        %v843 = vld [vmem:[%s272 + $0x1058] sm:$0xff]
        %v844 = vld [vmem:[%s272 + $0x1060] sm:$0xff]
        %v845 = vld [vmem:[%s272 + $0x1068] sm:$0xff]
        %v846 = vld [vmem:[%s272 + $0x1070] sm:$0xff]
        %v847 = vld [vmem:[%s272 + $0x1078] sm:$0xff]
        %v848 = vld [vmem:[%s272 + $0x1080] sm:$0xff]
        %v849 = vld [vmem:[%s272 + $0x1088] sm:$0xff]
        %v850 = vld [vmem:[%s272 + $0x1090] sm:$0xff]
        %v851 = vld [vmem:[%s272 + $0x1098] sm:$0xff]
        %v852 = vld [vmem:[%s272 + $0x10a0] sm:$0xff]
        %v853 = vld [vmem:[%s272 + $0x10a8] sm:$0xff]
        %v854 = vld [vmem:[%s272 + $0x10b0] sm:$0xff]
        %v855 = vld [vmem:[%s272 + $0x10b8] sm:$0xff]
        %v856 = vld [vmem:[%s272 + $0x10c0] sm:$0xff]
        %v857 = vld [vmem:[%s272 + $0x10c8] sm:$0xff]
        %v858 = vld [vmem:[%s272 + $0x10d0] sm:$0xff]
        %v859 = vld [vmem:[%s272 + $0x10d8] sm:$0xff]
        %v860 = vld [vmem:[%s272 + $0x10e0] sm:$0xff]
        %v861 = vld [vmem:[%s272 + $0x10e8] sm:$0xff]
        %v862 = vld [vmem:[%s272 + $0x10f0] sm:$0xff]
        %v863 = vld [vmem:[%s272 + $0x10f8] sm:$0xff]
        %v864 = vld [vmem:[%s272 + $0x1100] sm:$0xff]
        %v865 = vld [vmem:[%s272 + $0x1108] sm:$0xff]
        %v866 = vld [vmem:[%s272 + $0x1110] sm:$0xff]
        %v867 = vld [vmem:[%s272 + $0x1118] sm:$0xff]
        %v868 = vld [vmem:[%s272 + $0x1120] sm:$0xff]
        %v869 = vld [vmem:[%s272 + $0x1128] sm:$0xff]
        %v870 = vld [vmem:[%s272 + $0x1130] sm:$0xff]
        %v871 = vld [vmem:[%s272 + $0x1138] sm:$0xff]
        %v872 = vld [vmem:[%s272 + $0x1140] sm:$0xff]
        %v873 = vld [vmem:[%s272 + $0x1148] sm:$0xff]
        %v874 = vld [vmem:[%s272 + $0x1150] sm:$0xff]
        %v875 = vld [vmem:[%s272 + $0x1158] sm:$0xff]
        %v876 = vld [vmem:[%s272 + $0x1160] sm:$0xff]
        %v877 = vld [vmem:[%s272 + $0x1168] sm:$0xff]
        %v878 = vld [vmem:[%s272 + $0x1170] sm:$0xff]
        %v879 = vld [vmem:[%s272 + $0x1178] sm:$0xff]
        %v880 = vld [vmem:[%s272 + $0x1180] sm:$0xff]
        %v881 = vld [vmem:[%s272 + $0x1188] sm:$0xff]
        %v882 = vld [vmem:[%s272 + $0x1190] sm:$0xff]
        %v883 = vld [vmem:[%s272 + $0x1198] sm:$0xff]
        %v884 = vld [vmem:[%s272 + $0x11a0] sm:$0xff]
        %v885 = vld [vmem:[%s272 + $0x11a8] sm:$0xff]
        %v886 = vld [vmem:[%s272 + $0x11b0] sm:$0xff]
        %v887 = vld [vmem:[%s272 + $0x11b8] sm:$0xff]
        %v888 = vld [vmem:[%s272 + $0x11c0] sm:$0xff]
        %v889 = vld [vmem:[%s272 + $0x11c8] sm:$0xff]
        %v890 = vld [vmem:[%s272 + $0x11d0] sm:$0xff]
        %v891 = vld [vmem:[%s272 + $0x11d8] sm:$0xff]
        %v892 = vld [vmem:[%s272 + $0x11e0] sm:$0xff]
        %v893 = vld [vmem:[%s272 + $0x11e8] sm:$0xff]
        %v894 = vld [vmem:[%s272 + $0x11f0] sm:$0xff]
        %v895 = vld [vmem:[%s272 + $0x11f8] sm:$0xff]
        %899 = vst [vmem:[#allocation1] ss:$4 sm:$0xff] %v317
        %s900 = scalar_lea.vmem [#allocation1], 32
        %901 = vst [vmem:[%s900] ss:$4 sm:$0xff] %v318
        %v902 = vld.sshfl [vmem:[#allocation1] sm:$0xff pattern:$0x73625140]
        %v903 = vld.sshfl [vmem:[#allocation1 + $0x8] sm:$0xff pattern:$0x73625140]
        %v904 = vld.sshfl [vmem:[#allocation1 + $0x10] sm:$0xff pattern:$0x73625140]
        %v905 = vld.sshfl [vmem:[#allocation1 + $0x18] sm:$0xff pattern:$0x73625140]
        %v906 = vld.sshfl [vmem:[#allocation1 + $0x20] sm:$0xff pattern:$0x73625140]
        %v907 = vld.sshfl [vmem:[#allocation1 + $0x28] sm:$0xff pattern:$0x73625140]
        %v908 = vld.sshfl [vmem:[#allocation1 + $0x30] sm:$0xff pattern:$0x73625140]
        %v909 = vld.sshfl [vmem:[#allocation1 + $0x38] sm:$0xff pattern:$0x73625140]
        %910 = vst [vmem:[#allocation1] ss:$4 sm:$0xff] %v319
        %v911 = vld.sshfl [vmem:[#allocation1] sm:$0xff pattern:$0x73625140]
        %921 = vmatpush.msra.mxu0 %v380
        %922 = vmatpush.msra.mxu0 %v376
        %923 = vmatpush.msra.mxu0 %v372
        %924 = vmatpush.msra.mxu0 %v368
        %925 = vmatpush.msra.mxu0 %v364
        %926 = vmatpush.msra.mxu0 %v360
        %927 = vmatpush.msra.mxu0 %v356
        %928 = vmatpush.msra.mxu0 %v352
        %929 = vmatpush.msra.mxu0 %v348
        %930 = vmatpush.msra.mxu0 %v344
        %931 = vmatpush.msra.mxu0 %v340
        %932 = vmatpush.msra.mxu0 %v336
        %933 = vmatpush.msra.mxu0 %v332
        %934 = vmatpush.msra.mxu0 %v328
        %935 = vmatpush.msra.mxu0 %v324
        %936 = vmatpush.msra.mxu0 %v320
        %937 = vmatmul.f32.gmra.mxu0 %v902
        %v938 = vpop.f32.mrf.mxu0
        %v939 = vadd.f32 0.0, %v938
        %940 = vdwg.mxu0
        %941 = vmatpush.msra.mxu0 %v444
        %942 = vmatpush.msra.mxu0 %v440
        %943 = vmatpush.msra.mxu0 %v436
        %944 = vmatpush.msra.mxu0 %v432
        %945 = vmatpush.msra.mxu0 %v428
        %946 = vmatpush.msra.mxu0 %v424
        %947 = vmatpush.msra.mxu0 %v420
        %948 = vmatpush.msra.mxu0 %v416
        %949 = vmatpush.msra.mxu0 %v412
        %950 = vmatpush.msra.mxu0 %v408
        %951 = vmatpush.msra.mxu0 %v404
        %952 = vmatpush.msra.mxu0 %v400
        %953 = vmatpush.msra.mxu0 %v396
        %954 = vmatpush.msra.mxu0 %v392
        %955 = vmatpush.msra.mxu0 %v388
        %956 = vmatpush.msra.mxu0 %v384
        %957 = vmatmul.f32.gmra.mxu0 %v903
        %v958 = vpop.f32.mrf.mxu0
        %v959 = vadd.f32 %v939, %v958
        %960 = vdwg.mxu0
        %961 = vmatpush.msra.mxu0 %v508
        %962 = vmatpush.msra.mxu0 %v504
        %963 = vmatpush.msra.mxu0 %v500
        %964 = vmatpush.msra.mxu0 %v496
        %965 = vmatpush.msra.mxu0 %v492
        %966 = vmatpush.msra.mxu0 %v488
        %967 = vmatpush.msra.mxu0 %v484
        %968 = vmatpush.msra.mxu0 %v480
        %969 = vmatpush.msra.mxu0 %v476
        %970 = vmatpush.msra.mxu0 %v472
        %971 = vmatpush.msra.mxu0 %v468
        %972 = vmatpush.msra.mxu0 %v464
        %973 = vmatpush.msra.mxu0 %v460
        %974 = vmatpush.msra.mxu0 %v456
        %975 = vmatpush.msra.mxu0 %v452
        %976 = vmatpush.msra.mxu0 %v448
        %977 = vmatmul.f32.gmra.mxu0 %v904
        %v978 = vpop.f32.mrf.mxu0
        %v979 = vadd.f32 %v959, %v978
        %980 = vdwg.mxu0
        %981 = vmatpush.msra.mxu0 %v572
        %982 = vmatpush.msra.mxu0 %v568
        %983 = vmatpush.msra.mxu0 %v564
        %984 = vmatpush.msra.mxu0 %v560
        %985 = vmatpush.msra.mxu0 %v556
        %986 = vmatpush.msra.mxu0 %v552
        %987 = vmatpush.msra.mxu0 %v548
        %988 = vmatpush.msra.mxu0 %v544
        %989 = vmatpush.msra.mxu0 %v540
        %990 = vmatpush.msra.mxu0 %v536
        %991 = vmatpush.msra.mxu0 %v532
        %992 = vmatpush.msra.mxu0 %v528
        %993 = vmatpush.msra.mxu0 %v524
        %994 = vmatpush.msra.mxu0 %v520
        %995 = vmatpush.msra.mxu0 %v516
        %996 = vmatpush.msra.mxu0 %v512
        %997 = vmatmul.f32.gmra.mxu0 %v905
        %v998 = vpop.f32.mrf.mxu0
        %v999 = vadd.f32 %v979, %v998
        %1000 = vdwg.mxu0
        %1001 = vmatpush.msra.mxu0 %v636
        %1002 = vmatpush.msra.mxu0 %v632
        %1003 = vmatpush.msra.mxu0 %v628
        %1004 = vmatpush.msra.mxu0 %v624
        %1005 = vmatpush.msra.mxu0 %v620
        %1006 = vmatpush.msra.mxu0 %v616
        %1007 = vmatpush.msra.mxu0 %v612
        %1008 = vmatpush.msra.mxu0 %v608
        %1009 = vmatpush.msra.mxu0 %v604
        %1010 = vmatpush.msra.mxu0 %v600
        %1011 = vmatpush.msra.mxu0 %v596
        %1012 = vmatpush.msra.mxu0 %v592
        %1013 = vmatpush.msra.mxu0 %v588
        %1014 = vmatpush.msra.mxu0 %v584
        %1015 = vmatpush.msra.mxu0 %v580
        %1016 = vmatpush.msra.mxu0 %v576
        %1017 = vmatmul.f32.gmra.mxu0 %v906
        %v1018 = vpop.f32.mrf.mxu0
        %v1019 = vadd.f32 %v999, %v1018
        %1020 = vdwg.mxu0
        %1021 = vmatpush.msra.mxu0 %v700
        %1022 = vmatpush.msra.mxu0 %v696
        %1023 = vmatpush.msra.mxu0 %v692
        %1024 = vmatpush.msra.mxu0 %v688
        %1025 = vmatpush.msra.mxu0 %v684
        %1026 = vmatpush.msra.mxu0 %v680
        %1027 = vmatpush.msra.mxu0 %v676
        %1028 = vmatpush.msra.mxu0 %v672
        %1029 = vmatpush.msra.mxu0 %v668
        %1030 = vmatpush.msra.mxu0 %v664
        %1031 = vmatpush.msra.mxu0 %v660
        %1032 = vmatpush.msra.mxu0 %v656
        %1033 = vmatpush.msra.mxu0 %v652
        %1034 = vmatpush.msra.mxu0 %v648
        %1035 = vmatpush.msra.mxu0 %v644
        %1036 = vmatpush.msra.mxu0 %v640
        %1037 = vmatmul.f32.gmra.mxu0 %v907
        %v1038 = vpop.f32.mrf.mxu0
        %v1039 = vadd.f32 %v1019, %v1038
        %1040 = vdwg.mxu0
        %1041 = vmatpush.msra.mxu0 %v764
        %1042 = vmatpush.msra.mxu0 %v760
        %1043 = vmatpush.msra.mxu0 %v756
        %1044 = vmatpush.msra.mxu0 %v752
        %1045 = vmatpush.msra.mxu0 %v748
        %1046 = vmatpush.msra.mxu0 %v744
        %1047 = vmatpush.msra.mxu0 %v740
        %1048 = vmatpush.msra.mxu0 %v736
        %1049 = vmatpush.msra.mxu0 %v732
        %1050 = vmatpush.msra.mxu0 %v728
        %1051 = vmatpush.msra.mxu0 %v724
        %1052 = vmatpush.msra.mxu0 %v720
        %1053 = vmatpush.msra.mxu0 %v716
        %1054 = vmatpush.msra.mxu0 %v712
        %1055 = vmatpush.msra.mxu0 %v708
        %1056 = vmatpush.msra.mxu0 %v704
        %1057 = vmatmul.f32.gmra.mxu0 %v908
        %v1058 = vpop.f32.mrf.mxu0
        %v1059 = vadd.f32 %v1039, %v1058
        %1060 = vdwg.mxu0
        %1061 = vmatpush.msra.mxu0 %v828
        %1062 = vmatpush.msra.mxu0 %v824
        %1063 = vmatpush.msra.mxu0 %v820
        %1064 = vmatpush.msra.mxu0 %v816
        %1065 = vmatpush.msra.mxu0 %v812
        %1066 = vmatpush.msra.mxu0 %v808
        %1067 = vmatpush.msra.mxu0 %v804
        %1068 = vmatpush.msra.mxu0 %v800
        %1069 = vmatpush.msra.mxu0 %v796
        %1070 = vmatpush.msra.mxu0 %v792
        %1071 = vmatpush.msra.mxu0 %v788
        %1072 = vmatpush.msra.mxu0 %v784
        %1073 = vmatpush.msra.mxu0 %v780
        %1074 = vmatpush.msra.mxu0 %v776
        %1075 = vmatpush.msra.mxu0 %v772
        %1076 = vmatpush.msra.mxu0 %v768
        %1077 = vmatmul.f32.gmra.mxu0 %v909
        %v1078 = vpop.f32.mrf.mxu0
        %v1079 = vadd.f32 %v1059, %v1078
        %1080 = vdwg.mxu0
        %1081 = vmatpush.msra.mxu0 %v892
        %1082 = vmatpush.msra.mxu0 %v888
        %1083 = vmatpush.msra.mxu0 %v884
        %1084 = vmatpush.msra.mxu0 %v880
        %1085 = vmatpush.msra.mxu0 %v876
        %1086 = vmatpush.msra.mxu0 %v872
        %1087 = vmatpush.msra.mxu0 %v868
        %1088 = vmatpush.msra.mxu0 %v864
        %1089 = vmatpush.msra.mxu0 %v860
        %1090 = vmatpush.msra.mxu0 %v856
        %1091 = vmatpush.msra.mxu0 %v852
        %1092 = vmatpush.msra.mxu0 %v848
        %1093 = vmatpush.msra.mxu0 %v844
        %1094 = vmatpush.msra.mxu0 %v840
        %1095 = vmatpush.msra.mxu0 %v836
        %1096 = vmatpush.msra.mxu0 %v832
        %1097 = vmatmul.f32.gmra.mxu0 %v911
        %v1098 = vpop.f32.mrf.mxu0
        %v1099 = vadd.f32 %v1079, %v1098
        %1100 = vdwg.mxu0
        %1101 = vmatpush.msra.mxu0 %v381
        %1102 = vmatpush.msra.mxu0 %v377
        %1103 = vmatpush.msra.mxu0 %v373
        %1104 = vmatpush.msra.mxu0 %v369
        %1105 = vmatpush.msra.mxu0 %v365
        %1106 = vmatpush.msra.mxu0 %v361
        %1107 = vmatpush.msra.mxu0 %v357
        %1108 = vmatpush.msra.mxu0 %v353
        %1109 = vmatpush.msra.mxu0 %v349
        %1110 = vmatpush.msra.mxu0 %v345
        %1111 = vmatpush.msra.mxu0 %v341
        %1112 = vmatpush.msra.mxu0 %v337
        %1113 = vmatpush.msra.mxu0 %v333
        %1114 = vmatpush.msra.mxu0 %v329
        %1115 = vmatpush.msra.mxu0 %v325
        %1116 = vmatpush.msra.mxu0 %v321
        %1117 = vmatmul.f32.gmra.mxu0 %v902
        %v1118 = vpop.f32.mrf.mxu0
        %v1119 = vadd.f32 0.0, %v1118
        %1120 = vdwg.mxu0
        %1121 = vmatpush.msra.mxu0 %v445
        %1122 = vmatpush.msra.mxu0 %v441
        %1123 = vmatpush.msra.mxu0 %v437
        %1124 = vmatpush.msra.mxu0 %v433
        %1125 = vmatpush.msra.mxu0 %v429
        %1126 = vmatpush.msra.mxu0 %v425
        %1127 = vmatpush.msra.mxu0 %v421
        %1128 = vmatpush.msra.mxu0 %v417
        %1129 = vmatpush.msra.mxu0 %v413
        %1130 = vmatpush.msra.mxu0 %v409
        %1131 = vmatpush.msra.mxu0 %v405
        %1132 = vmatpush.msra.mxu0 %v401
        %1133 = vmatpush.msra.mxu0 %v397
        %1134 = vmatpush.msra.mxu0 %v393
        %1135 = vmatpush.msra.mxu0 %v389
        %1136 = vmatpush.msra.mxu0 %v385
        %1137 = vmatmul.f32.gmra.mxu0 %v903
        %v1138 = vpop.f32.mrf.mxu0
        %v1139 = vadd.f32 %v1119, %v1138
        %1140 = vdwg.mxu0
        %1141 = vmatpush.msra.mxu0 %v509
        %1142 = vmatpush.msra.mxu0 %v505
        %1143 = vmatpush.msra.mxu0 %v501
        %1144 = vmatpush.msra.mxu0 %v497
        %1145 = vmatpush.msra.mxu0 %v493
        %1146 = vmatpush.msra.mxu0 %v489
        %1147 = vmatpush.msra.mxu0 %v485
        %1148 = vmatpush.msra.mxu0 %v481
        %1149 = vmatpush.msra.mxu0 %v477
        %1150 = vmatpush.msra.mxu0 %v473
        %1151 = vmatpush.msra.mxu0 %v469
        %1152 = vmatpush.msra.mxu0 %v465
        %1153 = vmatpush.msra.mxu0 %v461
        %1154 = vmatpush.msra.mxu0 %v457
        %1155 = vmatpush.msra.mxu0 %v453
        %1156 = vmatpush.msra.mxu0 %v449
        %1157 = vmatmul.f32.gmra.mxu0 %v904
        %v1158 = vpop.f32.mrf.mxu0
        %v1159 = vadd.f32 %v1139, %v1158
        %1160 = vdwg.mxu0
        %1161 = vmatpush.msra.mxu0 %v573
        %1162 = vmatpush.msra.mxu0 %v569
        %1163 = vmatpush.msra.mxu0 %v565
        %1164 = vmatpush.msra.mxu0 %v561
        %1165 = vmatpush.msra.mxu0 %v557
        %1166 = vmatpush.msra.mxu0 %v553
        %1167 = vmatpush.msra.mxu0 %v549
        %1168 = vmatpush.msra.mxu0 %v545
        %1169 = vmatpush.msra.mxu0 %v541
        %1170 = vmatpush.msra.mxu0 %v537
        %1171 = vmatpush.msra.mxu0 %v533
        %1172 = vmatpush.msra.mxu0 %v529
        %1173 = vmatpush.msra.mxu0 %v525
        %1174 = vmatpush.msra.mxu0 %v521
        %1175 = vmatpush.msra.mxu0 %v517
        %1176 = vmatpush.msra.mxu0 %v513
        %1177 = vmatmul.f32.gmra.mxu0 %v905
        %v1178 = vpop.f32.mrf.mxu0
        %v1179 = vadd.f32 %v1159, %v1178
        %1180 = vdwg.mxu0
        %1181 = vmatpush.msra.mxu0 %v637
        %1182 = vmatpush.msra.mxu0 %v633
        %1183 = vmatpush.msra.mxu0 %v629
        %1184 = vmatpush.msra.mxu0 %v625
        %1185 = vmatpush.msra.mxu0 %v621
        %1186 = vmatpush.msra.mxu0 %v617
        %1187 = vmatpush.msra.mxu0 %v613
        %1188 = vmatpush.msra.mxu0 %v609
        %1189 = vmatpush.msra.mxu0 %v605
        %1190 = vmatpush.msra.mxu0 %v601
        %1191 = vmatpush.msra.mxu0 %v597
        %1192 = vmatpush.msra.mxu0 %v593
        %1193 = vmatpush.msra.mxu0 %v589
        %1194 = vmatpush.msra.mxu0 %v585
        %1195 = vmatpush.msra.mxu0 %v581
        %1196 = vmatpush.msra.mxu0 %v577
        %1197 = vmatmul.f32.gmra.mxu0 %v906
        %v1198 = vpop.f32.mrf.mxu0
        %v1199 = vadd.f32 %v1179, %v1198
        %1200 = vdwg.mxu0
        %1201 = vmatpush.msra.mxu0 %v701
        %1202 = vmatpush.msra.mxu0 %v697
        %1203 = vmatpush.msra.mxu0 %v693
        %1204 = vmatpush.msra.mxu0 %v689
        %1205 = vmatpush.msra.mxu0 %v685
        %1206 = vmatpush.msra.mxu0 %v681
        %1207 = vmatpush.msra.mxu0 %v677
        %1208 = vmatpush.msra.mxu0 %v673
        %1209 = vmatpush.msra.mxu0 %v669
        %1210 = vmatpush.msra.mxu0 %v665
        %1211 = vmatpush.msra.mxu0 %v661
        %1212 = vmatpush.msra.mxu0 %v657
        %1213 = vmatpush.msra.mxu0 %v653
        %1214 = vmatpush.msra.mxu0 %v649
        %1215 = vmatpush.msra.mxu0 %v645
        %1216 = vmatpush.msra.mxu0 %v641
        %1217 = vmatmul.f32.gmra.mxu0 %v907
        %v1218 = vpop.f32.mrf.mxu0
        %v1219 = vadd.f32 %v1199, %v1218
        %1220 = vdwg.mxu0
        %1221 = vmatpush.msra.mxu0 %v765
        %1222 = vmatpush.msra.mxu0 %v761
        %1223 = vmatpush.msra.mxu0 %v757
        %1224 = vmatpush.msra.mxu0 %v753
        %1225 = vmatpush.msra.mxu0 %v749
        %1226 = vmatpush.msra.mxu0 %v745
        %1227 = vmatpush.msra.mxu0 %v741
        %1228 = vmatpush.msra.mxu0 %v737
        %1229 = vmatpush.msra.mxu0 %v733
        %1230 = vmatpush.msra.mxu0 %v729
        %1231 = vmatpush.msra.mxu0 %v725
        %1232 = vmatpush.msra.mxu0 %v721
        %1233 = vmatpush.msra.mxu0 %v717
        %1234 = vmatpush.msra.mxu0 %v713
        %1235 = vmatpush.msra.mxu0 %v709
        %1236 = vmatpush.msra.mxu0 %v705
        %1237 = vmatmul.f32.gmra.mxu0 %v908
        %v1238 = vpop.f32.mrf.mxu0
        %v1239 = vadd.f32 %v1219, %v1238
        %1240 = vdwg.mxu0
        %1241 = vmatpush.msra.mxu0 %v829
        %1242 = vmatpush.msra.mxu0 %v825
        %1243 = vmatpush.msra.mxu0 %v821
        %1244 = vmatpush.msra.mxu0 %v817
        %1245 = vmatpush.msra.mxu0 %v813
        %1246 = vmatpush.msra.mxu0 %v809
        %1247 = vmatpush.msra.mxu0 %v805
        %1248 = vmatpush.msra.mxu0 %v801
        %1249 = vmatpush.msra.mxu0 %v797
        %1250 = vmatpush.msra.mxu0 %v793
        %1251 = vmatpush.msra.mxu0 %v789
        %1252 = vmatpush.msra.mxu0 %v785
        %1253 = vmatpush.msra.mxu0 %v781
        %1254 = vmatpush.msra.mxu0 %v777
        %1255 = vmatpush.msra.mxu0 %v773
        %1256 = vmatpush.msra.mxu0 %v769
        %1257 = vmatmul.f32.gmra.mxu0 %v909
        %v1258 = vpop.f32.mrf.mxu0
        %v1259 = vadd.f32 %v1239, %v1258
        %1260 = vdwg.mxu0
        %1261 = vmatpush.msra.mxu0 %v893
        %1262 = vmatpush.msra.mxu0 %v889
        %1263 = vmatpush.msra.mxu0 %v885
        %1264 = vmatpush.msra.mxu0 %v881
        %1265 = vmatpush.msra.mxu0 %v877
        %1266 = vmatpush.msra.mxu0 %v873
        %1267 = vmatpush.msra.mxu0 %v869
        %1268 = vmatpush.msra.mxu0 %v865
        %1269 = vmatpush.msra.mxu0 %v861
        %1270 = vmatpush.msra.mxu0 %v857
        %1271 = vmatpush.msra.mxu0 %v853
        %1272 = vmatpush.msra.mxu0 %v849
        %1273 = vmatpush.msra.mxu0 %v845
        %1274 = vmatpush.msra.mxu0 %v841
        %1275 = vmatpush.msra.mxu0 %v837
        %1276 = vmatpush.msra.mxu0 %v833
        %1277 = vmatmul.f32.gmra.mxu0 %v911
        %v1278 = vpop.f32.mrf.mxu0
        %v1279 = vadd.f32 %v1259, %v1278
        %1280 = vdwg.mxu0
        %1281 = vmatpush.msra.mxu0 %v382
        %1282 = vmatpush.msra.mxu0 %v378
        %1283 = vmatpush.msra.mxu0 %v374
        %1284 = vmatpush.msra.mxu0 %v370
        %1285 = vmatpush.msra.mxu0 %v366
        %1286 = vmatpush.msra.mxu0 %v362
        %1287 = vmatpush.msra.mxu0 %v358
        %1288 = vmatpush.msra.mxu0 %v354
        %1289 = vmatpush.msra.mxu0 %v350
        %1290 = vmatpush.msra.mxu0 %v346
        %1291 = vmatpush.msra.mxu0 %v342
        %1292 = vmatpush.msra.mxu0 %v338
        %1293 = vmatpush.msra.mxu0 %v334
        %1294 = vmatpush.msra.mxu0 %v330
        %1295 = vmatpush.msra.mxu0 %v326
        %1296 = vmatpush.msra.mxu0 %v322
        %1297 = vmatmul.f32.gmra.mxu0 %v902
        %v1298 = vpop.f32.mrf.mxu0
        %v1299 = vadd.f32 0.0, %v1298
        %1300 = vdwg.mxu0
        %1301 = vmatpush.msra.mxu0 %v446
        %1302 = vmatpush.msra.mxu0 %v442
        %1303 = vmatpush.msra.mxu0 %v438
        %1304 = vmatpush.msra.mxu0 %v434
        %1305 = vmatpush.msra.mxu0 %v430
        %1306 = vmatpush.msra.mxu0 %v426
        %1307 = vmatpush.msra.mxu0 %v422
        %1308 = vmatpush.msra.mxu0 %v418
        %1309 = vmatpush.msra.mxu0 %v414
        %1310 = vmatpush.msra.mxu0 %v410
        %1311 = vmatpush.msra.mxu0 %v406
        %1312 = vmatpush.msra.mxu0 %v402
        %1313 = vmatpush.msra.mxu0 %v398
        %1314 = vmatpush.msra.mxu0 %v394
        %1315 = vmatpush.msra.mxu0 %v390
        %1316 = vmatpush.msra.mxu0 %v386
        %1317 = vmatmul.f32.gmra.mxu0 %v903
        %v1318 = vpop.f32.mrf.mxu0
        %v1319 = vadd.f32 %v1299, %v1318
        %1320 = vdwg.mxu0
        %1321 = vmatpush.msra.mxu0 %v510
        %1322 = vmatpush.msra.mxu0 %v506
        %1323 = vmatpush.msra.mxu0 %v502
        %1324 = vmatpush.msra.mxu0 %v498
        %1325 = vmatpush.msra.mxu0 %v494
        %1326 = vmatpush.msra.mxu0 %v490
        %1327 = vmatpush.msra.mxu0 %v486
        %1328 = vmatpush.msra.mxu0 %v482
        %1329 = vmatpush.msra.mxu0 %v478
        %1330 = vmatpush.msra.mxu0 %v474
        %1331 = vmatpush.msra.mxu0 %v470
        %1332 = vmatpush.msra.mxu0 %v466
        %1333 = vmatpush.msra.mxu0 %v462
        %1334 = vmatpush.msra.mxu0 %v458
        %1335 = vmatpush.msra.mxu0 %v454
        %1336 = vmatpush.msra.mxu0 %v450
        %1337 = vmatmul.f32.gmra.mxu0 %v904
        %v1338 = vpop.f32.mrf.mxu0
        %v1339 = vadd.f32 %v1319, %v1338
        %1340 = vdwg.mxu0
        %1341 = vmatpush.msra.mxu0 %v574
        %1342 = vmatpush.msra.mxu0 %v570
        %1343 = vmatpush.msra.mxu0 %v566
        %1344 = vmatpush.msra.mxu0 %v562
        %1345 = vmatpush.msra.mxu0 %v558
        %1346 = vmatpush.msra.mxu0 %v554
        %1347 = vmatpush.msra.mxu0 %v550
        %1348 = vmatpush.msra.mxu0 %v546
        %1349 = vmatpush.msra.mxu0 %v542
        %1350 = vmatpush.msra.mxu0 %v538
        %1351 = vmatpush.msra.mxu0 %v534
        %1352 = vmatpush.msra.mxu0 %v530
        %1353 = vmatpush.msra.mxu0 %v526
        %1354 = vmatpush.msra.mxu0 %v522
        %1355 = vmatpush.msra.mxu0 %v518
        %1356 = vmatpush.msra.mxu0 %v514
        %1357 = vmatmul.f32.gmra.mxu0 %v905
        %v1358 = vpop.f32.mrf.mxu0
        %v1359 = vadd.f32 %v1339, %v1358
        %1360 = vdwg.mxu0
        %1361 = vmatpush.msra.mxu0 %v638
        %1362 = vmatpush.msra.mxu0 %v634
        %1363 = vmatpush.msra.mxu0 %v630
        %1364 = vmatpush.msra.mxu0 %v626
        %1365 = vmatpush.msra.mxu0 %v622
        %1366 = vmatpush.msra.mxu0 %v618
        %1367 = vmatpush.msra.mxu0 %v614
        %1368 = vmatpush.msra.mxu0 %v610
        %1369 = vmatpush.msra.mxu0 %v606
        %1370 = vmatpush.msra.mxu0 %v602
        %1371 = vmatpush.msra.mxu0 %v598
        %1372 = vmatpush.msra.mxu0 %v594
        %1373 = vmatpush.msra.mxu0 %v590
        %1374 = vmatpush.msra.mxu0 %v586
        %1375 = vmatpush.msra.mxu0 %v582
        %1376 = vmatpush.msra.mxu0 %v578
        %1377 = vmatmul.f32.gmra.mxu0 %v906
        %v1378 = vpop.f32.mrf.mxu0
        %v1379 = vadd.f32 %v1359, %v1378
        %1380 = vdwg.mxu0
        %1381 = vmatpush.msra.mxu0 %v702
        %1382 = vmatpush.msra.mxu0 %v698
        %1383 = vmatpush.msra.mxu0 %v694
        %1384 = vmatpush.msra.mxu0 %v690
        %1385 = vmatpush.msra.mxu0 %v686
        %1386 = vmatpush.msra.mxu0 %v682
        %1387 = vmatpush.msra.mxu0 %v678
        %1388 = vmatpush.msra.mxu0 %v674
        %1389 = vmatpush.msra.mxu0 %v670
        %1390 = vmatpush.msra.mxu0 %v666
        %1391 = vmatpush.msra.mxu0 %v662
        %1392 = vmatpush.msra.mxu0 %v658
        %1393 = vmatpush.msra.mxu0 %v654
        %1394 = vmatpush.msra.mxu0 %v650
        %1395 = vmatpush.msra.mxu0 %v646
        %1396 = vmatpush.msra.mxu0 %v642
        %1397 = vmatmul.f32.gmra.mxu0 %v907
        %v1398 = vpop.f32.mrf.mxu0
        %v1399 = vadd.f32 %v1379, %v1398
        %1400 = vdwg.mxu0
        %1401 = vmatpush.msra.mxu0 %v766
        %1402 = vmatpush.msra.mxu0 %v762
        %1403 = vmatpush.msra.mxu0 %v758
        %1404 = vmatpush.msra.mxu0 %v754
        %1405 = vmatpush.msra.mxu0 %v750
        %1406 = vmatpush.msra.mxu0 %v746
        %1407 = vmatpush.msra.mxu0 %v742
        %1408 = vmatpush.msra.mxu0 %v738
        %1409 = vmatpush.msra.mxu0 %v734
        %1410 = vmatpush.msra.mxu0 %v730
        %1411 = vmatpush.msra.mxu0 %v726
        %1412 = vmatpush.msra.mxu0 %v722
        %1413 = vmatpush.msra.mxu0 %v718
        %1414 = vmatpush.msra.mxu0 %v714
        %1415 = vmatpush.msra.mxu0 %v710
        %1416 = vmatpush.msra.mxu0 %v706
        %1417 = vmatmul.f32.gmra.mxu0 %v908
        %v1418 = vpop.f32.mrf.mxu0
        %v1419 = vadd.f32 %v1399, %v1418
        %1420 = vdwg.mxu0
        %1421 = vmatpush.msra.mxu0 %v830
        %1422 = vmatpush.msra.mxu0 %v826
        %1423 = vmatpush.msra.mxu0 %v822
        %1424 = vmatpush.msra.mxu0 %v818
        %1425 = vmatpush.msra.mxu0 %v814
        %1426 = vmatpush.msra.mxu0 %v810
        %1427 = vmatpush.msra.mxu0 %v806
        %1428 = vmatpush.msra.mxu0 %v802
        %1429 = vmatpush.msra.mxu0 %v798
        %1430 = vmatpush.msra.mxu0 %v794
        %1431 = vmatpush.msra.mxu0 %v790
        %1432 = vmatpush.msra.mxu0 %v786
        %1433 = vmatpush.msra.mxu0 %v782
        %1434 = vmatpush.msra.mxu0 %v778
        %1435 = vmatpush.msra.mxu0 %v774
        %1436 = vmatpush.msra.mxu0 %v770
        %1437 = vmatmul.f32.gmra.mxu0 %v909
        %v1438 = vpop.f32.mrf.mxu0
        %v1439 = vadd.f32 %v1419, %v1438
        %1440 = vdwg.mxu0
        %1441 = vmatpush.msra.mxu0 %v894
        %1442 = vmatpush.msra.mxu0 %v890
        %1443 = vmatpush.msra.mxu0 %v886
        %1444 = vmatpush.msra.mxu0 %v882
        %1445 = vmatpush.msra.mxu0 %v878
        %1446 = vmatpush.msra.mxu0 %v874
        %1447 = vmatpush.msra.mxu0 %v870
        %1448 = vmatpush.msra.mxu0 %v866
        %1449 = vmatpush.msra.mxu0 %v862
        %1450 = vmatpush.msra.mxu0 %v858
        %1451 = vmatpush.msra.mxu0 %v854
        %1452 = vmatpush.msra.mxu0 %v850
        %1453 = vmatpush.msra.mxu0 %v846
        %1454 = vmatpush.msra.mxu0 %v842
        %1455 = vmatpush.msra.mxu0 %v838
        %1456 = vmatpush.msra.mxu0 %v834
        %1457 = vmatmul.f32.gmra.mxu0 %v911
        %v1458 = vpop.f32.mrf.mxu0
        %v1459 = vadd.f32 %v1439, %v1458
        %1460 = vdwg.mxu0
        %1461 = vmatpush.msra.mxu0 %v383
        %1462 = vmatpush.msra.mxu0 %v379
        %1463 = vmatpush.msra.mxu0 %v375
        %1464 = vmatpush.msra.mxu0 %v371
        %1465 = vmatpush.msra.mxu0 %v367
        %1466 = vmatpush.msra.mxu0 %v363
        %1467 = vmatpush.msra.mxu0 %v359
        %1468 = vmatpush.msra.mxu0 %v355
        %1469 = vmatpush.msra.mxu0 %v351
        %1470 = vmatpush.msra.mxu0 %v347
        %1471 = vmatpush.msra.mxu0 %v343
        %1472 = vmatpush.msra.mxu0 %v339
        %1473 = vmatpush.msra.mxu0 %v335
        %1474 = vmatpush.msra.mxu0 %v331
        %1475 = vmatpush.msra.mxu0 %v327
        %1476 = vmatpush.msra.mxu0 %v323
        %1477 = vmatmul.f32.gmra.mxu0 %v902
        %v1478 = vpop.f32.mrf.mxu0
        %v1479 = vadd.f32 0.0, %v1478
        %1480 = vdwg.mxu0
        %1481 = vmatpush.msra.mxu0 %v447
        %1482 = vmatpush.msra.mxu0 %v443
        %1483 = vmatpush.msra.mxu0 %v439
        %1484 = vmatpush.msra.mxu0 %v435
        %1485 = vmatpush.msra.mxu0 %v431
        %1486 = vmatpush.msra.mxu0 %v427
        %1487 = vmatpush.msra.mxu0 %v423
        %1488 = vmatpush.msra.mxu0 %v419
        %1489 = vmatpush.msra.mxu0 %v415
        %1490 = vmatpush.msra.mxu0 %v411
        %1491 = vmatpush.msra.mxu0 %v407
        %1492 = vmatpush.msra.mxu0 %v403
        %1493 = vmatpush.msra.mxu0 %v399
        %1494 = vmatpush.msra.mxu0 %v395
        %1495 = vmatpush.msra.mxu0 %v391
        %1496 = vmatpush.msra.mxu0 %v387
        %1497 = vmatmul.f32.gmra.mxu0 %v903
        %v1498 = vpop.f32.mrf.mxu0
        %v1499 = vadd.f32 %v1479, %v1498
        %1500 = vdwg.mxu0
        %1501 = vmatpush.msra.mxu0 %v511
        %1502 = vmatpush.msra.mxu0 %v507
        %1503 = vmatpush.msra.mxu0 %v503
        %1504 = vmatpush.msra.mxu0 %v499
        %1505 = vmatpush.msra.mxu0 %v495
        %1506 = vmatpush.msra.mxu0 %v491
        %1507 = vmatpush.msra.mxu0 %v487
        %1508 = vmatpush.msra.mxu0 %v483
        %1509 = vmatpush.msra.mxu0 %v479
        %1510 = vmatpush.msra.mxu0 %v475
        %1511 = vmatpush.msra.mxu0 %v471
        %1512 = vmatpush.msra.mxu0 %v467
        %1513 = vmatpush.msra.mxu0 %v463
        %1514 = vmatpush.msra.mxu0 %v459
        %1515 = vmatpush.msra.mxu0 %v455
        %1516 = vmatpush.msra.mxu0 %v451
        %1517 = vmatmul.f32.gmra.mxu0 %v904
        %v1518 = vpop.f32.mrf.mxu0
        %v1519 = vadd.f32 %v1499, %v1518
        %1520 = vdwg.mxu0
        %1521 = vmatpush.msra.mxu0 %v575
        %1522 = vmatpush.msra.mxu0 %v571
        %1523 = vmatpush.msra.mxu0 %v567
        %1524 = vmatpush.msra.mxu0 %v563
        %1525 = vmatpush.msra.mxu0 %v559
        %1526 = vmatpush.msra.mxu0 %v555
        %1527 = vmatpush.msra.mxu0 %v551
        %1528 = vmatpush.msra.mxu0 %v547
        %1529 = vmatpush.msra.mxu0 %v543
        %1530 = vmatpush.msra.mxu0 %v539
        %1531 = vmatpush.msra.mxu0 %v535
        %1532 = vmatpush.msra.mxu0 %v531
        %1533 = vmatpush.msra.mxu0 %v527
        %1534 = vmatpush.msra.mxu0 %v523
        %1535 = vmatpush.msra.mxu0 %v519
        %1536 = vmatpush.msra.mxu0 %v515
        %1537 = vmatmul.f32.gmra.mxu0 %v905
        %v1538 = vpop.f32.mrf.mxu0
        %v1539 = vadd.f32 %v1519, %v1538
        %1540 = vdwg.mxu0
        %1541 = vmatpush.msra.mxu0 %v639
        %1542 = vmatpush.msra.mxu0 %v635
        %1543 = vmatpush.msra.mxu0 %v631
        %1544 = vmatpush.msra.mxu0 %v627
        %1545 = vmatpush.msra.mxu0 %v623
        %1546 = vmatpush.msra.mxu0 %v619
        %1547 = vmatpush.msra.mxu0 %v615
        %1548 = vmatpush.msra.mxu0 %v611
        %1549 = vmatpush.msra.mxu0 %v607
        %1550 = vmatpush.msra.mxu0 %v603
        %1551 = vmatpush.msra.mxu0 %v599
        %1552 = vmatpush.msra.mxu0 %v595
        %1553 = vmatpush.msra.mxu0 %v591
        %1554 = vmatpush.msra.mxu0 %v587
        %1555 = vmatpush.msra.mxu0 %v583
        %1556 = vmatpush.msra.mxu0 %v579
        %1557 = vmatmul.f32.gmra.mxu0 %v906
        %v1558 = vpop.f32.mrf.mxu0
        %v1559 = vadd.f32 %v1539, %v1558
        %1560 = vdwg.mxu0
        %1561 = vmatpush.msra.mxu0 %v703
        %1562 = vmatpush.msra.mxu0 %v699
        %1563 = vmatpush.msra.mxu0 %v695
        %1564 = vmatpush.msra.mxu0 %v691
        %1565 = vmatpush.msra.mxu0 %v687
        %1566 = vmatpush.msra.mxu0 %v683
        %1567 = vmatpush.msra.mxu0 %v679
        %1568 = vmatpush.msra.mxu0 %v675
        %1569 = vmatpush.msra.mxu0 %v671
        %1570 = vmatpush.msra.mxu0 %v667
        %1571 = vmatpush.msra.mxu0 %v663
        %1572 = vmatpush.msra.mxu0 %v659
        %1573 = vmatpush.msra.mxu0 %v655
        %1574 = vmatpush.msra.mxu0 %v651
        %1575 = vmatpush.msra.mxu0 %v647
        %1576 = vmatpush.msra.mxu0 %v643
        %1577 = vmatmul.f32.gmra.mxu0 %v907
        %v1578 = vpop.f32.mrf.mxu0
        %v1579 = vadd.f32 %v1559, %v1578
        %1580 = vdwg.mxu0
        %1581 = vmatpush.msra.mxu0 %v767
        %1582 = vmatpush.msra.mxu0 %v763
        %1583 = vmatpush.msra.mxu0 %v759
        %1584 = vmatpush.msra.mxu0 %v755
        %1585 = vmatpush.msra.mxu0 %v751
        %1586 = vmatpush.msra.mxu0 %v747
        %1587 = vmatpush.msra.mxu0 %v743
        %1588 = vmatpush.msra.mxu0 %v739
        %1589 = vmatpush.msra.mxu0 %v735
        %1590 = vmatpush.msra.mxu0 %v731
        %1591 = vmatpush.msra.mxu0 %v727
        %1592 = vmatpush.msra.mxu0 %v723
        %1593 = vmatpush.msra.mxu0 %v719
        %1594 = vmatpush.msra.mxu0 %v715
        %1595 = vmatpush.msra.mxu0 %v711
        %1596 = vmatpush.msra.mxu0 %v707
        %1597 = vmatmul.f32.gmra.mxu0 %v908
        %v1598 = vpop.f32.mrf.mxu0
        %v1599 = vadd.f32 %v1579, %v1598
        %1600 = vdwg.mxu0
        %1601 = vmatpush.msra.mxu0 %v831
        %1602 = vmatpush.msra.mxu0 %v827
        %1603 = vmatpush.msra.mxu0 %v823
        %1604 = vmatpush.msra.mxu0 %v819
        %1605 = vmatpush.msra.mxu0 %v815
        %1606 = vmatpush.msra.mxu0 %v811
        %1607 = vmatpush.msra.mxu0 %v807
        %1608 = vmatpush.msra.mxu0 %v803
        %1609 = vmatpush.msra.mxu0 %v799
        %1610 = vmatpush.msra.mxu0 %v795
        %1611 = vmatpush.msra.mxu0 %v791
        %1612 = vmatpush.msra.mxu0 %v787
        %1613 = vmatpush.msra.mxu0 %v783
        %1614 = vmatpush.msra.mxu0 %v779
        %1615 = vmatpush.msra.mxu0 %v775
        %1616 = vmatpush.msra.mxu0 %v771
        %1617 = vmatmul.f32.gmra.mxu0 %v909
        %v1618 = vpop.f32.mrf.mxu0
        %v1619 = vadd.f32 %v1599, %v1618
        %1620 = vdwg.mxu0
        %1621 = vmatpush.msra.mxu0 %v895
        %1622 = vmatpush.msra.mxu0 %v891
        %1623 = vmatpush.msra.mxu0 %v887
        %1624 = vmatpush.msra.mxu0 %v883
        %1625 = vmatpush.msra.mxu0 %v879
        %1626 = vmatpush.msra.mxu0 %v875
        %1627 = vmatpush.msra.mxu0 %v871
        %1628 = vmatpush.msra.mxu0 %v867
        %1629 = vmatpush.msra.mxu0 %v863
        %1630 = vmatpush.msra.mxu0 %v859
        %1631 = vmatpush.msra.mxu0 %v855
        %1632 = vmatpush.msra.mxu0 %v851
        %1633 = vmatpush.msra.mxu0 %v847
        %1634 = vmatpush.msra.mxu0 %v843
        %1635 = vmatpush.msra.mxu0 %v839
        %1636 = vmatpush.msra.mxu0 %v835
        %1637 = vmatmul.f32.gmra.mxu0 %v911
        %v1638 = vpop.f32.mrf.mxu0
        %v1639 = vadd.f32 %v1619, %v1638
        %1640 = vdwg.mxu0
        %v1645 = vrot.slane %v1279, 6
        %v1646 = vrot.slane %v1459, 4
        %v1647 = vrot.slane %v1639, 2
        %vm1648 = vcmask 1041408
        %v1649 = vsel %vm1648, %v1099, %v1645
        %vm1650 = vcmask 1045508
        %v1651 = vsel %vm1650, %v1646, %v1647
        %vm1652 = vcmask 1043456
        %v1653 = vsel %vm1652, %v1649, %v1651
        %v1655 = vadd.f32 %v316, %v1653
        %1656 = vst [vmem:[#allocation2] sm:$0xff] %v1655
        %p1657 = scmp.eq.s32.totalorder %s22, 3
        // Predicated region
        $region57: #{vgg16_forward.7} parent=47 // pred_check
          %p1658 = pneg %p1657
        $region58: #{vgg16_forward.7} parent=47 // pred_check_branch
          %1660 = sbr.rel (%p1658) target = $region60
        $region59: #{vgg16_forward.7} parent=47 // pred_region
          %v1661 = vld [vmem:[#allocation2] sm:$0xff]
          %v1662 = vld [vmem:[%s2] sm:$0xf]
          %v1664 = vperm.slane %v1662, 0
          %v1665 = vperm.slane %v1662, 1
          %v1666 = vperm.slane %v1662, 2
          %v1667 = vperm.slane %v1662, 3
          %v1668 = vrot.slane %v1665, 6
          %v1669 = vrot.slane %v1666, 4
          %v1670 = vrot.slane %v1667, 2
          %v1671 = vsel %vm1648, %v1664, %v1668
          %v1672 = vsel %vm1650, %v1669, %v1670
          %v1673 = vsel %vm1652, %v1671, %v1672
          %v1675 = vadd.f32 %v1661, %v1673
          %v1676 = vmax.f32 %v1675, 0.0
          %v1677 = vld [vmem:[%s3] sm:$0xff]
          %v1678 = vld [vmem:[%s3 + $0x8] sm:$0xff]
          %v1679 = vld [vmem:[%s3 + $0x10] sm:$0xff]
          %v1680 = vld [vmem:[%s3 + $0x18] sm:$0xff]
          %v1681 = vld [vmem:[%s3 + $0x20] sm:$0xff]
          %v1682 = vld [vmem:[%s3 + $0x28] sm:$0xff]
          %v1683 = vld [vmem:[%s3 + $0x30] sm:$0xff]
          %v1684 = vld [vmem:[%s3 + $0x38] sm:$0xff]
          %v1685 = vld [vmem:[%s3 + $0x40] sm:$0xff]
          %v1686 = vld [vmem:[%s3 + $0x48] sm:$0xff]
          %v1687 = vld [vmem:[%s3 + $0x50] sm:$0xff]
          %v1688 = vld [vmem:[%s3 + $0x58] sm:$0xff]
          %v1689 = vld [vmem:[%s3 + $0x60] sm:$0xff]
          %v1690 = vld [vmem:[%s3 + $0x68] sm:$0xff]
          %v1691 = vld [vmem:[%s3 + $0x70] sm:$0xff]
          %v1692 = vld [vmem:[%s3 + $0x78] sm:$0xff]
          %v1693 = vld [vmem:[%s3 + $0x80] sm:$0xff]
          %v1694 = vld [vmem:[%s3 + $0x88] sm:$0xff]
          %v1695 = vld [vmem:[%s3 + $0x90] sm:$0xff]
          %v1696 = vld [vmem:[%s3 + $0x98] sm:$0xff]
          %v1697 = vld [vmem:[%s3 + $0xa0] sm:$0xff]
          %v1698 = vld [vmem:[%s3 + $0xa8] sm:$0xff]
          %v1699 = vld [vmem:[%s3 + $0xb0] sm:$0xff]
          %v1700 = vld [vmem:[%s3 + $0xb8] sm:$0xff]
          %v1701 = vld [vmem:[%s3 + $0xc0] sm:$0xff]
          %v1702 = vld [vmem:[%s3 + $0xc8] sm:$0xff]
          %v1703 = vld [vmem:[%s3 + $0xd0] sm:$0xff]
          %v1704 = vld [vmem:[%s3 + $0xd8] sm:$0xff]
          %v1705 = vld [vmem:[%s3 + $0xe0] sm:$0xff]
          %v1706 = vld [vmem:[%s3 + $0xe8] sm:$0xff]
          %v1707 = vld [vmem:[%s3 + $0xf0] sm:$0xff]
          %v1708 = vld [vmem:[%s3 + $0xf8] sm:$0xff]
          %v1709 = vld [vmem:[%s3 + $0x100] sm:$0xff]
          %v1710 = vld [vmem:[%s3 + $0x108] sm:$0xff]
          %v1711 = vld [vmem:[%s3 + $0x110] sm:$0xff]
          %v1712 = vld [vmem:[%s3 + $0x118] sm:$0xff]
          %v1713 = vld [vmem:[%s3 + $0x120] sm:$0xff]
          %v1714 = vld [vmem:[%s3 + $0x128] sm:$0xff]
          %v1715 = vld [vmem:[%s3 + $0x130] sm:$0xff]
          %v1716 = vld [vmem:[%s3 + $0x138] sm:$0xff]
          %v1717 = vld [vmem:[%s3 + $0x140] sm:$0xff]
          %v1718 = vld [vmem:[%s3 + $0x148] sm:$0xff]
          %v1719 = vld [vmem:[%s3 + $0x150] sm:$0xff]
          %v1720 = vld [vmem:[%s3 + $0x158] sm:$0xff]
          %v1721 = vld [vmem:[%s3 + $0x160] sm:$0xff]
          %v1722 = vld [vmem:[%s3 + $0x168] sm:$0xff]
          %v1723 = vld [vmem:[%s3 + $0x170] sm:$0xff]
          %v1724 = vld [vmem:[%s3 + $0x178] sm:$0xff]
          %v1725 = vld [vmem:[%s3 + $0x180] sm:$0xff]
          %v1726 = vld [vmem:[%s3 + $0x188] sm:$0xff]
          %v1727 = vld [vmem:[%s3 + $0x190] sm:$0xff]
          %v1728 = vld [vmem:[%s3 + $0x198] sm:$0xff]
          %v1729 = vld [vmem:[%s3 + $0x1a0] sm:$0xff]
          %v1730 = vld [vmem:[%s3 + $0x1a8] sm:$0xff]
          %v1731 = vld [vmem:[%s3 + $0x1b0] sm:$0xff]
          %v1732 = vld [vmem:[%s3 + $0x1b8] sm:$0xff]
          %v1733 = vld [vmem:[%s3 + $0x1c0] sm:$0xff]
          %v1734 = vld [vmem:[%s3 + $0x1c8] sm:$0xff]
          %v1735 = vld [vmem:[%s3 + $0x1d0] sm:$0xff]
          %v1736 = vld [vmem:[%s3 + $0x1d8] sm:$0xff]
          %v1737 = vld [vmem:[%s3 + $0x1e0] sm:$0xff]
          %v1738 = vld [vmem:[%s3 + $0x1e8] sm:$0xff]
          %v1739 = vld [vmem:[%s3 + $0x1f0] sm:$0xff]
          %v1740 = vld [vmem:[%s3 + $0x1f8] sm:$0xff]
          %v1741 = vld [vmem:[%s3 + $0x200] sm:$0xff]
          %v1742 = vld [vmem:[%s3 + $0x208] sm:$0xff]
          %v1743 = vld [vmem:[%s3 + $0x210] sm:$0xff]
          %v1744 = vld [vmem:[%s3 + $0x218] sm:$0xff]
          %v1745 = vld [vmem:[%s3 + $0x220] sm:$0xff]
          %v1746 = vld [vmem:[%s3 + $0x228] sm:$0xff]
          %v1747 = vld [vmem:[%s3 + $0x230] sm:$0xff]
          %v1748 = vld [vmem:[%s3 + $0x238] sm:$0xff]
          %v1749 = vld [vmem:[%s3 + $0x240] sm:$0xff]
          %v1750 = vld [vmem:[%s3 + $0x248] sm:$0xff]
          %v1751 = vld [vmem:[%s3 + $0x250] sm:$0xff]
          %v1752 = vld [vmem:[%s3 + $0x258] sm:$0xff]
          %v1753 = vld [vmem:[%s3 + $0x260] sm:$0xff]
          %v1754 = vld [vmem:[%s3 + $0x268] sm:$0xff]
          %v1755 = vld [vmem:[%s3 + $0x270] sm:$0xff]
          %v1756 = vld [vmem:[%s3 + $0x278] sm:$0xff]
          %v1757 = vld [vmem:[%s3 + $0x280] sm:$0xff]
          %v1758 = vld [vmem:[%s3 + $0x288] sm:$0xff]
          %v1759 = vld [vmem:[%s3 + $0x290] sm:$0xff]
          %v1760 = vld [vmem:[%s3 + $0x298] sm:$0xff]
          %v1761 = vld [vmem:[%s3 + $0x2a0] sm:$0xff]
          %v1762 = vld [vmem:[%s3 + $0x2a8] sm:$0xff]
          %v1763 = vld [vmem:[%s3 + $0x2b0] sm:$0xff]
          %v1764 = vld [vmem:[%s3 + $0x2b8] sm:$0xff]
          %v1765 = vld [vmem:[%s3 + $0x2c0] sm:$0xff]
          %v1766 = vld [vmem:[%s3 + $0x2c8] sm:$0xff]
          %v1767 = vld [vmem:[%s3 + $0x2d0] sm:$0xff]
          %v1768 = vld [vmem:[%s3 + $0x2d8] sm:$0xff]
          %v1769 = vld [vmem:[%s3 + $0x2e0] sm:$0xff]
          %v1770 = vld [vmem:[%s3 + $0x2e8] sm:$0xff]
          %v1771 = vld [vmem:[%s3 + $0x2f0] sm:$0xff]
          %v1772 = vld [vmem:[%s3 + $0x2f8] sm:$0xff]
          %v1773 = vld [vmem:[%s3 + $0x300] sm:$0xff]
          %v1774 = vld [vmem:[%s3 + $0x308] sm:$0xff]
          %v1775 = vld [vmem:[%s3 + $0x310] sm:$0xff]
          %v1776 = vld [vmem:[%s3 + $0x318] sm:$0xff]
          %v1777 = vld [vmem:[%s3 + $0x320] sm:$0xff]
          %v1778 = vld [vmem:[%s3 + $0x328] sm:$0xff]
          %v1779 = vld [vmem:[%s3 + $0x330] sm:$0xff]
          %v1780 = vld [vmem:[%s3 + $0x338] sm:$0xff]
          %v1781 = vld [vmem:[%s3 + $0x340] sm:$0xff]
          %v1782 = vld [vmem:[%s3 + $0x348] sm:$0xff]
          %v1783 = vld [vmem:[%s3 + $0x350] sm:$0xff]
          %v1784 = vld [vmem:[%s3 + $0x358] sm:$0xff]
          %v1785 = vld [vmem:[%s3 + $0x360] sm:$0xff]
          %v1786 = vld [vmem:[%s3 + $0x368] sm:$0xff]
          %v1787 = vld [vmem:[%s3 + $0x370] sm:$0xff]
          %v1788 = vld [vmem:[%s3 + $0x378] sm:$0xff]
          %v1789 = vld [vmem:[%s3 + $0x380] sm:$0xff]
          %v1790 = vld [vmem:[%s3 + $0x388] sm:$0xff]
          %v1791 = vld [vmem:[%s3 + $0x390] sm:$0xff]
          %v1792 = vld [vmem:[%s3 + $0x398] sm:$0xff]
          %v1793 = vld [vmem:[%s3 + $0x3a0] sm:$0xff]
          %v1794 = vld [vmem:[%s3 + $0x3a8] sm:$0xff]
          %v1795 = vld [vmem:[%s3 + $0x3b0] sm:$0xff]
          %v1796 = vld [vmem:[%s3 + $0x3b8] sm:$0xff]
          %v1797 = vld [vmem:[%s3 + $0x3c0] sm:$0xff]
          %v1798 = vld [vmem:[%s3 + $0x3c8] sm:$0xff]
          %v1799 = vld [vmem:[%s3 + $0x3d0] sm:$0xff]
          %v1800 = vld [vmem:[%s3 + $0x3d8] sm:$0xff]
          %v1801 = vld [vmem:[%s3 + $0x3e0] sm:$0xff]
          %v1802 = vld [vmem:[%s3 + $0x3e8] sm:$0xff]
          %v1803 = vld [vmem:[%s3 + $0x3f0] sm:$0xff]
          %v1804 = vld [vmem:[%s3 + $0x3f8] sm:$0xff]
          %v1805 = vld [vmem:[%s4] sm:$0x3]
          %v1807 = vperm.slane %v1805, 0
          %v1808 = vperm.slane %v1805, 1
          %1812 = vst [vmem:[#allocation1] ss:$4 sm:$0xff] %v1676
          %v1813 = vld.sshfl [vmem:[#allocation1] sm:$0xff pattern:$0x73625140]
          %v1814 = vld.sshfl [vmem:[#allocation1 + $0x8] sm:$0xff pattern:$0x73625140]
          %v1815 = vld.sshfl [vmem:[#allocation1 + $0x10] sm:$0xff pattern:$0x73625140]
          %v1816 = vld.sshfl [vmem:[#allocation1 + $0x18] sm:$0xff pattern:$0x73625140]
          %1821 = vmatpush.msra.mxu0 %v1707
          %1822 = vmatpush.msra.mxu0 %v1705
          %1823 = vmatpush.msra.mxu0 %v1703
          %1824 = vmatpush.msra.mxu0 %v1701
          %1825 = vmatpush.msra.mxu0 %v1699
          %1826 = vmatpush.msra.mxu0 %v1697
          %1827 = vmatpush.msra.mxu0 %v1695
          %1828 = vmatpush.msra.mxu0 %v1693
          %1829 = vmatpush.msra.mxu0 %v1691
          %1830 = vmatpush.msra.mxu0 %v1689
          %1831 = vmatpush.msra.mxu0 %v1687
          %1832 = vmatpush.msra.mxu0 %v1685
          %1833 = vmatpush.msra.mxu0 %v1683
          %1834 = vmatpush.msra.mxu0 %v1681
          %1835 = vmatpush.msra.mxu0 %v1679
          %1836 = vmatpush.msra.mxu0 %v1677
          %1837 = vmatmul.f32.gmra.mxu0 %v1813
          %v1838 = vpop.f32.mrf.mxu0
          %v1839 = vadd.f32 %v1807, %v1838
          %1840 = vdwg.mxu0
          %1841 = vmatpush.msra.mxu0 %v1739
          %1842 = vmatpush.msra.mxu0 %v1737
          %1843 = vmatpush.msra.mxu0 %v1735
          %1844 = vmatpush.msra.mxu0 %v1733
          %1845 = vmatpush.msra.mxu0 %v1731
          %1846 = vmatpush.msra.mxu0 %v1729
          %1847 = vmatpush.msra.mxu0 %v1727
          %1848 = vmatpush.msra.mxu0 %v1725
          %1849 = vmatpush.msra.mxu0 %v1723
          %1850 = vmatpush.msra.mxu0 %v1721
          %1851 = vmatpush.msra.mxu0 %v1719
          %1852 = vmatpush.msra.mxu0 %v1717
          %1853 = vmatpush.msra.mxu0 %v1715
          %1854 = vmatpush.msra.mxu0 %v1713
          %1855 = vmatpush.msra.mxu0 %v1711
          %1856 = vmatpush.msra.mxu0 %v1709
          %1857 = vmatmul.f32.gmra.mxu0 %v1814
          %v1858 = vpop.f32.mrf.mxu0
          %v1859 = vadd.f32 %v1839, %v1858
          %1860 = vdwg.mxu0
          %1861 = vmatpush.msra.mxu0 %v1771
          %1862 = vmatpush.msra.mxu0 %v1769
          %1863 = vmatpush.msra.mxu0 %v1767
          %1864 = vmatpush.msra.mxu0 %v1765
          %1865 = vmatpush.msra.mxu0 %v1763
          %1866 = vmatpush.msra.mxu0 %v1761
          %1867 = vmatpush.msra.mxu0 %v1759
          %1868 = vmatpush.msra.mxu0 %v1757
          %1869 = vmatpush.msra.mxu0 %v1755
          %1870 = vmatpush.msra.mxu0 %v1753
          %1871 = vmatpush.msra.mxu0 %v1751
          %1872 = vmatpush.msra.mxu0 %v1749
          %1873 = vmatpush.msra.mxu0 %v1747
          %1874 = vmatpush.msra.mxu0 %v1745
          %1875 = vmatpush.msra.mxu0 %v1743
          %1876 = vmatpush.msra.mxu0 %v1741
          %1877 = vmatmul.f32.gmra.mxu0 %v1815
          %v1878 = vpop.f32.mrf.mxu0
          %v1879 = vadd.f32 %v1859, %v1878
          %1880 = vdwg.mxu0
          %1881 = vmatpush.msra.mxu0 %v1803
          %1882 = vmatpush.msra.mxu0 %v1801
          %1883 = vmatpush.msra.mxu0 %v1799
          %1884 = vmatpush.msra.mxu0 %v1797
          %1885 = vmatpush.msra.mxu0 %v1795
          %1886 = vmatpush.msra.mxu0 %v1793
          %1887 = vmatpush.msra.mxu0 %v1791
          %1888 = vmatpush.msra.mxu0 %v1789
          %1889 = vmatpush.msra.mxu0 %v1787
          %1890 = vmatpush.msra.mxu0 %v1785
          %1891 = vmatpush.msra.mxu0 %v1783
          %1892 = vmatpush.msra.mxu0 %v1781
          %1893 = vmatpush.msra.mxu0 %v1779
          %1894 = vmatpush.msra.mxu0 %v1777
          %1895 = vmatpush.msra.mxu0 %v1775
          %1896 = vmatpush.msra.mxu0 %v1773
          %1897 = vmatmul.f32.gmra.mxu0 %v1816
          %v1898 = vpop.f32.mrf.mxu0
          %v1899 = vadd.f32 %v1879, %v1898
          %1900 = vdwg.mxu0
          %1901 = vmatpush.msra.mxu0 %v1708
          %1902 = vmatpush.msra.mxu0 %v1706
          %1903 = vmatpush.msra.mxu0 %v1704
          %1904 = vmatpush.msra.mxu0 %v1702
          %1905 = vmatpush.msra.mxu0 %v1700
          %1906 = vmatpush.msra.mxu0 %v1698
          %1907 = vmatpush.msra.mxu0 %v1696
          %1908 = vmatpush.msra.mxu0 %v1694
          %1909 = vmatpush.msra.mxu0 %v1692
          %1910 = vmatpush.msra.mxu0 %v1690
          %1911 = vmatpush.msra.mxu0 %v1688
          %1912 = vmatpush.msra.mxu0 %v1686
          %1913 = vmatpush.msra.mxu0 %v1684
          %1914 = vmatpush.msra.mxu0 %v1682
          %1915 = vmatpush.msra.mxu0 %v1680
          %1916 = vmatpush.msra.mxu0 %v1678
          %1917 = vmatmul.f32.gmra.mxu0 %v1813
          %v1918 = vpop.f32.mrf.mxu0
          %v1919 = vadd.f32 %v1808, %v1918
          %1920 = vdwg.mxu0
          %1921 = vmatpush.msra.mxu0 %v1740
          %1922 = vmatpush.msra.mxu0 %v1738
          %1923 = vmatpush.msra.mxu0 %v1736
          %1924 = vmatpush.msra.mxu0 %v1734
          %1925 = vmatpush.msra.mxu0 %v1732
          %1926 = vmatpush.msra.mxu0 %v1730
          %1927 = vmatpush.msra.mxu0 %v1728
          %1928 = vmatpush.msra.mxu0 %v1726
          %1929 = vmatpush.msra.mxu0 %v1724
          %1930 = vmatpush.msra.mxu0 %v1722
          %1931 = vmatpush.msra.mxu0 %v1720
          %1932 = vmatpush.msra.mxu0 %v1718
          %1933 = vmatpush.msra.mxu0 %v1716
          %1934 = vmatpush.msra.mxu0 %v1714
          %1935 = vmatpush.msra.mxu0 %v1712
          %1936 = vmatpush.msra.mxu0 %v1710
          %1937 = vmatmul.f32.gmra.mxu0 %v1814
          %v1938 = vpop.f32.mrf.mxu0
          %v1939 = vadd.f32 %v1919, %v1938
          %1940 = vdwg.mxu0
          %1941 = vmatpush.msra.mxu0 %v1772
          %1942 = vmatpush.msra.mxu0 %v1770
          %1943 = vmatpush.msra.mxu0 %v1768
          %1944 = vmatpush.msra.mxu0 %v1766
          %1945 = vmatpush.msra.mxu0 %v1764
          %1946 = vmatpush.msra.mxu0 %v1762
          %1947 = vmatpush.msra.mxu0 %v1760
          %1948 = vmatpush.msra.mxu0 %v1758
          %1949 = vmatpush.msra.mxu0 %v1756
          %1950 = vmatpush.msra.mxu0 %v1754
          %1951 = vmatpush.msra.mxu0 %v1752
          %1952 = vmatpush.msra.mxu0 %v1750
          %1953 = vmatpush.msra.mxu0 %v1748
          %1954 = vmatpush.msra.mxu0 %v1746
          %1955 = vmatpush.msra.mxu0 %v1744
          %1956 = vmatpush.msra.mxu0 %v1742
          %1957 = vmatmul.f32.gmra.mxu0 %v1815
          %v1958 = vpop.f32.mrf.mxu0
          %v1959 = vadd.f32 %v1939, %v1958
          %1960 = vdwg.mxu0
          %1961 = vmatpush.msra.mxu0 %v1804
          %1962 = vmatpush.msra.mxu0 %v1802
          %1963 = vmatpush.msra.mxu0 %v1800
          %1964 = vmatpush.msra.mxu0 %v1798
          %1965 = vmatpush.msra.mxu0 %v1796
          %1966 = vmatpush.msra.mxu0 %v1794
          %1967 = vmatpush.msra.mxu0 %v1792
          %1968 = vmatpush.msra.mxu0 %v1790
          %1969 = vmatpush.msra.mxu0 %v1788
          %1970 = vmatpush.msra.mxu0 %v1786
          %1971 = vmatpush.msra.mxu0 %v1784
          %1972 = vmatpush.msra.mxu0 %v1782
          %1973 = vmatpush.msra.mxu0 %v1780
          %1974 = vmatpush.msra.mxu0 %v1778
          %1975 = vmatpush.msra.mxu0 %v1776
          %1976 = vmatpush.msra.mxu0 %v1774
          %1977 = vmatmul.f32.gmra.mxu0 %v1816
          %v1978 = vpop.f32.mrf.mxu0
          %v1979 = vadd.f32 %v1959, %v1978
          %1980 = vdwg.mxu0
          %v1981 = vmax.f32 %v1899, 0.0
          %v1982 = vmax.f32 %v1979, 0.0
          %v1983 = vld [vmem:[%s5] sm:$0xff]
          %v1984 = vld [vmem:[%s5 + $0x8] sm:$0xff]
          %v1985 = vld [vmem:[%s5 + $0x10] sm:$0xff]
          %v1986 = vld [vmem:[%s5 + $0x18] sm:$0xff]
          %v1987 = vld [vmem:[%s5 + $0x20] sm:$0xff]
          %v1988 = vld [vmem:[%s5 + $0x28] sm:$0xff]
          %v1989 = vld [vmem:[%s5 + $0x30] sm:$0xff]
          %v1990 = vld [vmem:[%s5 + $0x38] sm:$0xff]
          %v1991 = vld [vmem:[%s5 + $0x40] sm:$0xff]
          %v1992 = vld [vmem:[%s5 + $0x48] sm:$0xff]
          %v1993 = vld [vmem:[%s5 + $0x50] sm:$0xff]
          %v1994 = vld [vmem:[%s5 + $0x58] sm:$0xff]
          %v1995 = vld [vmem:[%s5 + $0x60] sm:$0xff]
          %v1996 = vld [vmem:[%s5 + $0x68] sm:$0xff]
          %v1997 = vld [vmem:[%s5 + $0x70] sm:$0xff]
          %v1998 = vld [vmem:[%s5 + $0x78] sm:$0xff]
          %v1999 = vld [vmem:[%s5 + $0x80] sm:$0xff]
          %v2000 = vld [vmem:[%s5 + $0x88] sm:$0xff]
          %v2001 = vld [vmem:[%s5 + $0x90] sm:$0xff]
          %v2002 = vld [vmem:[%s5 + $0x98] sm:$0xff]
          %v2003 = vld [vmem:[%s5 + $0xa0] sm:$0xff]
          %v2004 = vld [vmem:[%s5 + $0xa8] sm:$0xff]
          %v2005 = vld [vmem:[%s5 + $0xb0] sm:$0xff]
          %v2006 = vld [vmem:[%s5 + $0xb8] sm:$0xff]
          %v2007 = vld [vmem:[%s5 + $0xc0] sm:$0xff]
          %v2008 = vld [vmem:[%s5 + $0xc8] sm:$0xff]
          %v2009 = vld [vmem:[%s5 + $0xd0] sm:$0xff]
          %v2010 = vld [vmem:[%s5 + $0xd8] sm:$0xff]
          %v2011 = vld [vmem:[%s5 + $0xe0] sm:$0xff]
          %v2012 = vld [vmem:[%s5 + $0xe8] sm:$0xff]
          %v2013 = vld [vmem:[%s5 + $0xf0] sm:$0xff]
          %v2014 = vld [vmem:[%s5 + $0xf8] sm:$0xff]
          %v2015 = vld [vmem:[%s6] sm:$0x1]
          %v2017 = vperm.slane %v2015, 0
          %2019 = vmatpush.msra.mxu0 %v1998
          %2020 = vmatpush.msra.mxu0 %v1997
          %2021 = vmatpush.msra.mxu0 %v1996
          %2022 = vmatpush.msra.mxu0 %v1995
          %2023 = vmatpush.msra.mxu0 %v1994
          %2024 = vmatpush.msra.mxu0 %v1993
          %2025 = vmatpush.msra.mxu0 %v1992
          %2026 = vmatpush.msra.mxu0 %v1991
          %2027 = vmatpush.msra.mxu0 %v1990
          %2028 = vmatpush.msra.mxu0 %v1989
          %2029 = vmatpush.msra.mxu0 %v1988
          %2030 = vmatpush.msra.mxu0 %v1987
          %2031 = vmatpush.msra.mxu0 %v1986
          %2032 = vmatpush.msra.mxu0 %v1985
          %2033 = vmatpush.msra.mxu0 %v1984
          %2034 = vmatpush.msra.mxu0 %v1983
          %2035 = vmatmul.f32.gmra.mxu0 %v1981
          %v2036 = vpop.f32.mrf.mxu0
          %v2037 = vadd.f32 %v2017, %v2036
          %2038 = vdwg.mxu0
          %2039 = vmatpush.msra.mxu0 %v2014
          %2040 = vmatpush.msra.mxu0 %v2013
          %2041 = vmatpush.msra.mxu0 %v2012
          %2042 = vmatpush.msra.mxu0 %v2011
          %2043 = vmatpush.msra.mxu0 %v2010
          %2044 = vmatpush.msra.mxu0 %v2009
          %2045 = vmatpush.msra.mxu0 %v2008
          %2046 = vmatpush.msra.mxu0 %v2007
          %2047 = vmatpush.msra.mxu0 %v2006
          %2048 = vmatpush.msra.mxu0 %v2005
          %2049 = vmatpush.msra.mxu0 %v2004
          %2050 = vmatpush.msra.mxu0 %v2003
          %2051 = vmatpush.msra.mxu0 %v2002
          %2052 = vmatpush.msra.mxu0 %v2001
          %2053 = vmatpush.msra.mxu0 %v2000
          %2054 = vmatpush.msra.mxu0 %v1999
          %2055 = vmatmul.f32.gmra.mxu0 %v1982
          %v2056 = vpop.f32.mrf.mxu0
          %v2057 = vadd.f32 %v2037, %v2056
          %2058 = vdwg.mxu0
          %vm2059 = vcmask 50176
          %2060 = vst.msk [vmem:[#allocation6] sm:$0x3] %vm2059, %v2057
        $region60: #{vgg16_forward.7} parent=47 // pred_fallthru
          _
        // Predicated region
        $region61: #{vgg16_forward.7} parent=47 // pred_check
          %p2061 = pneg %p192
        $region62: #{vgg16_forward.7} parent=47 // pred_check_branch
          %2063 = sbr.rel (%p2061) target = $region64
        $region63: #{vgg16_forward.7} parent=47 // pred_region
          %2065 = vsyncadd [#allocation5], 0
          %s2067 = sshll.u32 [#allocation6], 4
          %s2068 = int_to_ptr.vmem [resolvable:$true] %s2067
          %s2069 = sshll.u32 %s7, 4
          %s2070 = int_to_ptr.hbm [resolvable:$true] %s2069
          %2072 = dma.vmem_to_hbm [thread:$0]  %s2068, 32, %s2070, [#allocation5]
        $region64: #{vgg16_forward.7} parent=47 // pred_fallthru
          _
        // Predicated region
        $region65: #{vgg16_forward.7} parent=47 // pred_check
          %p2073 = pneg %p192
        $region66: #{vgg16_forward.7} parent=47 // pred_check_branch
          %2075 = sbr.rel (%p2073) target = $region68
        $region67: #{vgg16_forward.7} parent=47 // pred_region
          %2077 = dma.done [#allocation5], 32
        $region68: #{vgg16_forward.7} parent=47 // pred_fallthru
          _
      $region48: #{vgg16_forward.7} parent=5 // pred_fallthru
        _
      %p2078 = scmp.le.s32.totalorder 2, %s17
      // Predicated region
      $region69: #{vgg16_forward.7} parent=5 // pred_check
        %p2079 = pneg %p2078
      $region70: #{vgg16_forward.7} parent=5 // pred_check_branch
        %2081 = sbr.rel (%p2079) target = $region72
      $region71: #{vgg16_forward.7} parent=5 // pred_region
        %s2082 = ssub.s32 %s17, 2
      $region72: #{vgg16_forward.7} parent=5 // pred_fallthru
        _
    $region6: #{vgg16_forward.7} parent=1 // loop_footer
      %s21 = sadd.s32 1, %s17
    $region7: #{vgg16_forward.7} parent=1 // loop_footer_branch
      %16 = sbr.rel target = $region3
    $region8: #{vgg16_forward.7} parent=1 // loop_exit
      _
    %2083 = vsyncpa [#allocation4], 1
    %s2084 = scalar_lea.sflag [#allocation4], 1
    %2085 = vsyncpa %s2084, 1
    %2086 = vsyncpa [#allocation5], 1
    %s2087 = scalar_lea.sflag [#allocation5], 1
    %2088 = vsyncpa %s2087, 1

</llo_original>
